<compile_context>
chip_gen: v6e
topology: v6e:2x2x1
jax: 0.10.0
libtpu: 0.0.40
codegen_flags: <defaults>
</compile_context>

<pallas_src>
import functools

import jax
import jax.numpy as jnp
from jax.experimental import pallas as pl
from jax.experimental.pallas import tpu as pltpu

_BN_EPS = 1e-5


# ----------------------------------------------------------------------------
# Pallas kernels
# ----------------------------------------------------------------------------
def _matmul_bias_kernel(a_ref, b_ref, bias_ref, o_ref, *, relu_cols):
    """o = relu?(A @ B + bias).  BN scale is pre-folded into B.

    relu_cols: None  -> ReLU on all output columns.
               int c -> ReLU only on columns < c (used when the no-ReLU downsample
                        path is concatenated along Cout).
    """
    acc = jnp.dot(a_ref[...], b_ref[...], preferred_element_type=jnp.float32)
    y = acc + bias_ref[...]
    if relu_cols is None:
        y = jnp.maximum(y, 0.0)
    else:
        col = jax.lax.broadcasted_iota(jnp.int32, y.shape, 1)
        y = jnp.where(col < relu_cols, jnp.maximum(y, 0.0), y)
    o_ref[...] = y.astype(o_ref.dtype)


def _conv3x3_s1_kernel(*refs, h, w, cin, cout, has_residual):
    """3x3 / stride-1 conv + BN bias (+ residual) + ReLU for one image.

    Activations use a 'padded-flat' layout: rows = (h + 3) * wp with wp = w + 2
    (1 zero column each side, 1 zero row on top, 2 on the bottom).  A conv tap
    (di, dj) is then a contiguous row window at offset di * wp + dj, so each tap
    is a plain (h*wp, cin) @ (cin, cout) MXU matmul accumulated in f32.  The
    wrap-around columns are masked to zero, so the stored output is already the
    next conv's zero-padded input (no XLA glue between chained convs).
    """
    if has_residual:
        xp_ref, w_ref, bias_ref, mask_ref, res_ref, o_ref = refs
    else:
        xp_ref, w_ref, bias_ref, mask_ref, o_ref = refs
        res_ref = None
    wp = w + 2
    hwp = h * wp
    rows = (h + 3) * wp

    acc = jnp.zeros((hwp, cout), jnp.float32)
    for t in range(9):                       # static, unrolled tap loop
        di, dj = t // 3, t % 3
        off = di * wp + dj
        a = xp_ref[0, off:off + hwp, :]                  # (hwp, cin) bf16
        wt = w_ref[t * cin:(t + 1) * cin, :]             # (cin, cout) bf16
        acc = acc + jnp.dot(a, wt, preferred_element_type=jnp.float32)

    y = acc + bias_ref[...]
    if has_residual:
        y = y + res_ref[0, wp + 1:wp + 1 + hwp, :].astype(jnp.float32)
    y = jnp.maximum(y, 0.0)
    y = y * mask_ref[...]                                # zero the wrap columns

    o_ref[0, 0:wp + 1, :] = jnp.zeros((wp + 1, cout), o_ref.dtype)
    o_ref[0, wp + 1:wp + 1 + hwp, :] = y.astype(o_ref.dtype)
    o_ref[0, wp + 1 + hwp:rows, :] = jnp.zeros((2 * wp - 1, cout), o_ref.dtype)


def _maxpool_kernel(x_ref, o_ref, *, ho, wo):
    """3x3 / stride-2 / pad-1 max pool of one image (no 9x tap stack in HBM).

    x_ref: (4, ho+1, wo+1, C) parity-split, -inf padded conv1 output where
           x_ref[2*rr + cr, rq, cq, :] = padded[2*rq + rr, 2*cq + cr, :].
    o_ref: (1, ho+3, wo+2, C) pooled map written directly in the zero-padded
           'padded-flat' layout consumed by the following 3x3/s1 conv kernel.
    """
    parts = ((0, 0), (1, 0), (0, 1))   # (parity, q shift) -> rows 2q, 2q+1, 2q+2
    best = None
    for rr, a in parts:
        for cr, b in parts:
            v = x_ref[2 * rr + cr, a:a + ho, b:b + wo, :].astype(jnp.float32)
            best = v if best is None else jnp.maximum(best, v)
    o_ref[0] = jnp.zeros(o_ref.shape[1:], o_ref.dtype)
    o_ref[0, 1:1 + ho, 1:1 + wo, :] = best.astype(o_ref.dtype)


# ----------------------------------------------------------------------------
# pallas_call wrappers
# ----------------------------------------------------------------------------
def _matmul_bias(a, b, bias, *, tm, relu_cols):
    m, k = a.shape
    cout = b.shape[1]
    return pl.pallas_call(
        functools.partial(_matmul_bias_kernel, relu_cols=relu_cols),
        out_shape=jax.ShapeDtypeStruct((m, cout), jnp.bfloat16),
        grid=(m // tm,),
        in_specs=[
            pl.BlockSpec((tm, k), lambda i: (i, 0)),
            pl.BlockSpec((k, cout), lambda i: (0, 0)),
            pl.BlockSpec((1, cout), lambda i: (0, 0)),
        ],
        out_specs=pl.BlockSpec((tm, cout), lambda i: (i, 0)),
        compiler_params=pltpu.CompilerParams(dimension_semantics=("parallel",)),
    )(a, b, bias)


def _conv3x3_s1(xp_flat, w_mat, bias, mask, res_flat, *, h, w, cin, cout):
    n = xp_flat.shape[0]
    wp = w + 2
    rows = (h + 3) * wp
    has_res = res_flat is not None
    in_specs = [
        pl.BlockSpec((1, rows, cin), lambda i: (i, 0, 0)),
        pl.BlockSpec((9 * cin, cout), lambda i: (0, 0)),
        pl.BlockSpec((1, cout), lambda i: (0, 0)),
        pl.BlockSpec((h * wp, 1), lambda i: (0, 0)),
    ]
    args = [xp_flat, w_mat, bias, mask]
    if has_res:
        in_specs.append(pl.BlockSpec((1, rows, cout), lambda i: (i, 0, 0)))
        args.append(res_flat)
    return pl.pallas_call(
        functools.partial(_conv3x3_s1_kernel, h=h, w=w, cin=cin, cout=cout,
                          has_residual=has_res),
        out_shape=jax.ShapeDtypeStruct((n, rows, cout), jnp.bfloat16),
        grid=(n,),
        in_specs=in_specs,
        out_specs=pl.BlockSpec((1, rows, cout), lambda i: (i, 0, 0)),
        compiler_params=pltpu.CompilerParams(dimension_semantics=("parallel",)),
    )(*args)


def _maxpool_3x3_s2_p1(y_nhwc):
    n, hh, ww, c = y_nhwc.shape
    ho, wo = hh // 2, ww // 2
    yp = jnp.pad(y_nhwc, ((0, 0), (1, 1), (1, 1), (0, 0)),
                 constant_values=-jnp.inf)
    # Parity-split both spatial dims so the kernel only needs integer indices and
    # contiguous slices (no strided / gathered access).
    yp = yp.reshape(n, ho + 1, 2, wo + 1, 2, c).transpose(0, 2, 4, 1, 3, 5)
    yp = yp.reshape(n * 4, ho + 1, wo + 1, c)
    out = pl.pallas_call(
        functools.partial(_maxpool_kernel, ho=ho, wo=wo),
        out_shape=jax.ShapeDtypeStruct((n, ho + 3, wo + 2, c), jnp.bfloat16),
        grid=(n,),
        in_specs=[pl.BlockSpec((4, ho + 1, wo + 1, c), lambda i: (i, 0, 0, 0))],
        out_specs=pl.BlockSpec((1, ho + 3, wo + 2, c), lambda i: (i, 0, 0, 0)),
        compiler_params=pltpu.CompilerParams(dimension_semantics=("parallel",)),
    )(yp)
    return out.reshape(n, (ho + 3) * (wo + 2), c)


# ----------------------------------------------------------------------------
# JAX-side glue helpers
# ----------------------------------------------------------------------------
def _im2col(x_nhwc, kh, kw, stride, pad):
    """Extract conv patches -> (N*Ho*Wo, kh*kw*Cin).  Only used for the stem and
    for the single stride-2 fused conv (tiny arrays)."""
    n, h, w, c = x_nhwc.shape
    xp = jnp.pad(x_nhwc, ((0, 0), (pad, pad), (pad, pad), (0, 0)))
    ho = (h + 2 * pad - kh) // stride + 1
    wo = (w + 2 * pad - kw) // stride + 1
    taps = []
    for i in range(kh):
        for j in range(kw):
            taps.append(xp[:, i:i + stride * (ho - 1) + 1:stride,
                           j:j + stride * (wo - 1) + 1:stride, :])
    cols = jnp.stack(taps, axis=3)                     # (N, Ho, Wo, kh*kw, Cin)
    return cols.reshape(n * ho * wo, kh * kw * c), ho, wo


def _fold_w(w, scale):
    """Fold the BN scale into the conv weights and flatten to a matmul operand."""
    kh, kw, cin, cout = w.shape
    return (w * scale).reshape(kh * kw * cin, cout).astype(jnp.bfloat16)


def _wrap_mask(h, w):
    wp = w + 2
    m = (jnp.arange(h * wp) % wp) < w
    return m.astype(jnp.float32).reshape(h * wp, 1)


def _to_padded_flat(x_nhwc):
    """(N, H, W, C) -> zero-padded flat (N, (H+3)*(W+2), C) layout."""
    n, h, w, c = x_nhwc.shape
    xp = jnp.pad(x_nhwc, ((0, 0), (1, 2), (1, 1), (0, 0)))
    return xp.reshape(n, (h + 3) * (w + 2), c)


# ----------------------------------------------------------------------------
# Parameter init (deterministic, synthetic)
# ----------------------------------------------------------------------------
def _bn_params(key, c):
    k1, k2, k3, k4 = jax.random.split(key, 4)
    gamma = 1.0 + 0.1 * jax.random.normal(k1, (c,))
    beta = 0.1 * jax.random.normal(k2, (c,))
    mean = 0.1 * jax.random.normal(k3, (c,))
    var = 1.0 + 0.1 * jnp.abs(jax.random.normal(k4, (c,)))
    scale = gamma / jnp.sqrt(var + _BN_EPS)
    bias = beta - mean * scale
    return scale.astype(jnp.float32), bias.astype(jnp.float32)


def _conv_w(key, kh, kw, cin, cout):
    fan_in = kh * kw * cin
    return (jax.random.normal(key, (kh, kw, cin, cout)) / jnp.sqrt(fan_in)).astype(jnp.float32)


def _basic_block_params(key, cin, cout, downsample):
    ks = jax.random.split(key, 6)
    p = {
        "conv1_w": _conv_w(ks[0], 3, 3, cin, cout),
        "bn1": _bn_params(ks[1], cout),
        "conv2_w": _conv_w(ks[2], 3, 3, cout, cout),
        "bn2": _bn_params(ks[3], cout),
    }
    if downsample:
        p["ds_w"] = _conv_w(ks[4], 1, 1, cin, cout)
        p["ds_bn"] = _bn_params(ks[5], cout)
    return p


def init_colornet_params(key):
    ks = jax.random.split(key, 8)
    return {
        # stem: conv1 weights summed to 1 input channel in PyTorch -> (7,7,1,64)
        "conv1_w": _conv_w(ks[0], 7, 7, 1, 64),
        "bn1": _bn_params(ks[1], 64),
        "layer1_0": _basic_block_params(ks[2], 64, 64, downsample=False),
        "layer1_1": _basic_block_params(ks[3], 64, 64, downsample=False),
        "layer2_0": _basic_block_params(ks[4], 64, 128, downsample=True),
        "layer2_1": _basic_block_params(ks[5], 128, 128, downsample=False),
    }


# ----------------------------------------------------------------------------
# Forward pass (ResNet-18 children[0:6])
# ----------------------------------------------------------------------------
def _basic_block_s1(x_flat, p, *, h, w, c, mask):
    """BasicBlock (stride 1, no downsample) on padded-flat activations.
    Residual add + final ReLU are fused into the second conv's epilogue."""
    y = _conv3x3_s1(x_flat, _fold_w(p["conv1_w"], p["bn1"][0]),
                    p["bn1"][1].reshape(1, c), mask, None,
                    h=h, w=w, cin=c, cout=c)
    return _conv3x3_s1(y, _fold_w(p["conv2_w"], p["bn2"][0]),
                       p["bn2"][1].reshape(1, c), mask, x_flat,
                       h=h, w=w, cin=c, cout=c)


def colornet_forward(params, x_nchw):
    n = x_nchw.shape[0]
    x = jnp.transpose(x_nchw, (0, 2, 3, 1)).astype(jnp.bfloat16)     # NHWC, bf16

    # --- stem: conv 7x7/2 + BN + ReLU (im2col matmul, BN scale folded) -------
    cols, ho, wo = _im2col(x, 7, 7, 2, 3)                   # (N*16*16, 49)
    cols = jnp.pad(cols, ((0, 0), (0, 7)))                  # K: 49 -> 56 (sublane align)
    w1 = _fold_w(params["conv1_w"], params["bn1"][0])       # (49, 64) bf16
    w1 = jnp.pad(w1, ((0, 7), (0, 0)))
    y = _matmul_bias(cols, w1, params["bn1"][1].reshape(1, 64),
                     tm=256, relu_cols=None)                # (N*256, 64) bf16
    y = y.reshape(n, ho, wo, 64)

    # --- maxpool 3x3/2: output lands directly in padded-flat layout ----------
    x1 = _maxpool_3x3_s2_p1(y)                              # (N, 110, 64)
    h1 = ho // 2                                            # 8

    # --- layer1: 2 basic blocks, 64 ch, stride 1 (zero XLA glue in between) --
    mask1 = _wrap_mask(h1, h1)
    x1 = _basic_block_s1(x1, params["layer1_0"], h=h1, w=h1, c=64, mask=mask1)
    x1 = _basic_block_s1(x1, params["layer1_1"], h=h1, w=h1, c=64, mask=mask1)

    # --- layer2_0: fused (3x3/s2 conv1 + 1x1/s2 downsample) matmul, then conv2
    h2 = h1 // 2                                            # 4
    p20 = params["layer2_0"]
    x1_3d = x1.reshape(n, h1 + 3, h1 + 2, 64)[:, :h1 + 1, :h1 + 1, :]   # (N,9,9,64)
    cols2, _, _ = _im2col(x1_3d, 3, 3, 2, 0)                # (N*16, 576)
    wm = (p20["conv1_w"] * p20["bn1"][0]).reshape(576, 128)
    wd = jnp.zeros((576, 128), wm.dtype)
    # 1x1/s2 downsample == center tap (t=4) of the 3x3/s2 im2col -> rows 256:320.
    wd = wd.at[4 * 64:5 * 64, :].set((p20["ds_w"] * p20["ds_bn"][0]).reshape(64, 128))
    wfused = jnp.concatenate([wm, wd], axis=1).astype(jnp.bfloat16)     # (576, 256)
    bfused = jnp.concatenate([p20["bn1"][1], p20["ds_bn"][1]]).reshape(1, 256)
    yf = _matmul_bias(cols2, wfused, bfused, tm=16, relu_cols=128)      # (N*16, 256)
    yf = yf.reshape(n, h2, h2, 256)
    y20 = _to_padded_flat(yf[..., :128])                    # conv1 path, (N, 42, 128)
    idn = _to_padded_flat(yf[..., 128:])                    # downsample identity

    mask2 = _wrap_mask(h2, h2)
    x2 = _conv3x3_s1(y20, _fold_w(p20["conv2_w"], p20["bn2"][0]),
                     p20["bn2"][1].reshape(1, 128), mask2, idn,
                     h=h2, w=h2, cin=128, cout=128)

    # --- layer2_1: basic block, 128 ch, stride 1 -----------------------------
    x2 = _basic_block_s1(x2, params["layer2_1"], h=h2, w=h2, c=128, mask=mask2)

    # --- strip padding, back to NCHW f32 (PyTorch output convention) ---------
    out = x2.reshape(n, h2 + 3, h2 + 2, 128)[:, 1:1 + h2, 1:1 + h2, :]
    return jnp.transpose(out, (0, 3, 1, 2)).astype(jnp.float32)


# ----------------------------------------------------------------------------
if __name__ == "__main__":
    key = jax.random.PRNGKey(0)
    pkey, xkey = jax.random.split(key)
    params = init_colornet_params(pkey)

    # Grayscale input image, NCHW, small spatial size.
    x = jax.random.normal(xkey, (2, 1, 32, 32), dtype=jnp.float32)

    out = jax.jit(colornet_forward)(params, x)
    out = jax.block_until_ready(out)

    assert out.shape == (2, 128, 4, 4), out.shape
    assert out.dtype == jnp.float32
    assert bool(jnp.all(jnp.isfinite(out)))
    print("KERNEL_OK")
</pallas_src>

<mosaic_0001>
module attributes {stable_mosaic.version = 11 : i64} {
  func.func @_matmul_bias_kernel(%arg0: i32, %arg1: memref<256x56xbf16, #tpu.memory_space<vmem>>, %arg2: memref<56x64xbf16, #tpu.memory_space<vmem>>, %arg3: memref<1x64xf32, #tpu.memory_space<vmem>>, %arg4: memref<256x64xbf16, #tpu.memory_space<vmem>>) attributes {dimension_semantics = [#tpu.dimension_semantics<parallel>], iteration_bounds = array<i64: 2>, scalar_prefetch = 0 : i64, scratch_operands = 0 : i64, tpu.core_type = #tpu.core_type<tc>, window_params = [{transform_indices = @transform_0, window_bounds = array<i64: 256, 56>}, {pipeline_mode = #tpu.pipeline_mode<synchronous>, transform_indices = @transform_1, window_bounds = array<i64: 56, 64>}, {pipeline_mode = #tpu.pipeline_mode<synchronous>, transform_indices = @transform_2, window_bounds = array<i64: 1, 64>}, {transform_indices = @transform_3, window_bounds = array<i64: 256, 64>}]} {
    %c0 = arith.constant 0 : index
    %c0_0 = arith.constant 0 : index
    %0 = vector.load %arg1[%c0, %c0_0] : memref<256x56xbf16, #tpu.memory_space<vmem>>, vector<256x56xbf16>
    %c0_1 = arith.constant 0 : index
    %c0_2 = arith.constant 0 : index
    %1 = vector.load %arg2[%c0_1, %c0_2] : memref<56x64xbf16, #tpu.memory_space<vmem>>, vector<56x64xbf16>
    %cst = arith.constant dense<0.000000e+00> : vector<256x64xf32>
    %2 = tpu.matmul %0, %1, %cst {dimension_numbers = #tpu.dot_dimension_numbers<[1], [0], [0], [1], [0, 0, 1, 1], [], []>} : vector<256x56xbf16>, vector<56x64xbf16>, vector<256x64xf32> -> vector<256x64xf32>
    %c0_3 = arith.constant 0 : index
    %c0_4 = arith.constant 0 : index
    %3 = vector.load %arg3[%c0_3, %c0_4] : memref<1x64xf32, #tpu.memory_space<vmem>>, vector<1x64xf32>
    %4 = vector.broadcast %3 : vector<1x64xf32> to vector<256x64xf32>
    %5 = arith.addf %2, %4 : vector<256x64xf32>
    %cst_5 = arith.constant 0.000000e+00 : f32
    %6 = vector.broadcast %cst_5 : f32 to vector<256x64xf32>
    %7 = arith.maximumf %5, %6 : vector<256x64xf32>
    %8 = arith.truncf %7 : vector<256x64xf32> to vector<256x64xbf16>
    %c0_6 = arith.constant 0 : index
    %c0_7 = arith.constant 0 : index
    %9 = vector.load %arg4[%c0_6, %c0_7] : memref<256x64xbf16, #tpu.memory_space<vmem>>, vector<256x64xbf16>
    tpu.vector_store %arg4[%c0_6, %c0_7], %8 {strides = array<i32>} : memref<256x64xbf16, #tpu.memory_space<vmem>>, vector<256x64xbf16>,
    return
  }
  func.func @transform_0(%arg0: i32) -> (i32, i32) {
    %c0_i32 = arith.constant 0 : i32
    %c0_i32_0 = arith.constant 0 : i32
    return %arg0, %c0_i32 : i32, i32
  }
  func.func @transform_1(%arg0: i32) -> (i32, i32) {
    %c0_i32 = arith.constant 0 : i32
    %c0_i32_0 = arith.constant 0 : i32
    %c0_i32_1 = arith.constant 0 : i32
    return %c0_i32, %c0_i32_0 : i32, i32
  }
  func.func @transform_2(%arg0: i32) -> (i32, i32) {
    %c0_i32 = arith.constant 0 : i32
    %c0_i32_0 = arith.constant 0 : i32
    %c0_i32_1 = arith.constant 0 : i32
    return %c0_i32, %c0_i32_0 : i32, i32
  }
  func.func @transform_3(%arg0: i32) -> (i32, i32) {
    %c0_i32 = arith.constant 0 : i32
    %c0_i32_0 = arith.constant 0 : i32
    return %arg0, %c0_i32 : i32, i32
  }
}

module attributes {stable_mosaic.version = 11 : i64} {
  func.func @_maxpool_kernel(%arg0: i32, %arg1: memref<4x9x9x64xbf16, #tpu.memory_space<vmem>>, %arg2: memref<1x11x10x64xbf16, #tpu.memory_space<vmem>>) attributes {dimension_semantics = [#tpu.dimension_semantics<parallel>], iteration_bounds = array<i64: 2>, scalar_prefetch = 0 : i64, scratch_operands = 0 : i64, tpu.core_type = #tpu.core_type<tc>, window_params = [{transform_indices = @transform_0, window_bounds = array<i64: 4, 9, 9, 64>}, {transform_indices = @transform_1, window_bounds = array<i64: 1, 11, 10, 64>}]} {
    %c0 = arith.constant 0 : index
    %c0_0 = arith.constant 0 : index
    %c0_1 = arith.constant 0 : index
    %c0_2 = arith.constant 0 : index
    %0 = vector.load %arg1[%c0, %c0_0, %c0_1, %c0_2] : memref<4x9x9x64xbf16, #tpu.memory_space<vmem>>, vector<1x8x8x64xbf16>
    %1 = vector.shape_cast %0 : vector<1x8x8x64xbf16> to vector<8x8x64xbf16>
    %2 = arith.extf %1 : vector<8x8x64xbf16> to vector<8x8x64xf32>
    %c1 = arith.constant 1 : index
    %c0_3 = arith.constant 0 : index
    %c0_4 = arith.constant 0 : index
    %c0_5 = arith.constant 0 : index
    %3 = vector.load %arg1[%c1, %c0_3, %c0_4, %c0_5] : memref<4x9x9x64xbf16, #tpu.memory_space<vmem>>, vector<1x8x8x64xbf16>
    %4 = vector.shape_cast %3 : vector<1x8x8x64xbf16> to vector<8x8x64xbf16>
    %5 = arith.extf %4 : vector<8x8x64xbf16> to vector<8x8x64xf32>
    %6 = arith.maximumf %2, %5 : vector<8x8x64xf32>
    %c0_6 = arith.constant 0 : index
    %c0_7 = arith.constant 0 : index
    %c1_8 = arith.constant 1 : index
    %c0_9 = arith.constant 0 : index
    %7 = vector.load %arg1[%c0_6, %c0_7, %c1_8, %c0_9] : memref<4x9x9x64xbf16, #tpu.memory_space<vmem>>, vector<1x8x8x64xbf16>
    %8 = vector.shape_cast %7 : vector<1x8x8x64xbf16> to vector<8x8x64xbf16>
    %9 = arith.extf %8 : vector<8x8x64xbf16> to vector<8x8x64xf32>
    %10 = arith.maximumf %6, %9 : vector<8x8x64xf32>
    %c2 = arith.constant 2 : index
    %c0_10 = arith.constant 0 : index
    %c0_11 = arith.constant 0 : index
    %c0_12 = arith.constant 0 : index
    %11 = vector.load %arg1[%c2, %c0_10, %c0_11, %c0_12] : memref<4x9x9x64xbf16, #tpu.memory_space<vmem>>, vector<1x8x8x64xbf16>
    %12 = vector.shape_cast %11 : vector<1x8x8x64xbf16> to vector<8x8x64xbf16>
    %13 = arith.extf %12 : vector<8x8x64xbf16> to vector<8x8x64xf32>
    %14 = arith.maximumf %10, %13 : vector<8x8x64xf32>
    %c3 = arith.constant 3 : index
    %c0_13 = arith.constant 0 : index
    %c0_14 = arith.constant 0 : index
    %c0_15 = arith.constant 0 : index
    %15 = vector.load %arg1[%c3, %c0_13, %c0_14, %c0_15] : memref<4x9x9x64xbf16, #tpu.memory_space<vmem>>, vector<1x8x8x64xbf16>
    %16 = vector.shape_cast %15 : vector<1x8x8x64xbf16> to vector<8x8x64xbf16>
    %17 = arith.extf %16 : vector<8x8x64xbf16> to vector<8x8x64xf32>
    %18 = arith.maximumf %14, %17 : vector<8x8x64xf32>
    %c2_16 = arith.constant 2 : index
    %c0_17 = arith.constant 0 : index
    %c1_18 = arith.constant 1 : index
    %c0_19 = arith.constant 0 : index
    %19 = vector.load %arg1[%c2_16, %c0_17, %c1_18, %c0_19] : memref<4x9x9x64xbf16, #tpu.memory_space<vmem>>, vector<1x8x8x64xbf16>
    %20 = vector.shape_cast %19 : vector<1x8x8x64xbf16> to vector<8x8x64xbf16>
    %21 = arith.extf %20 : vector<8x8x64xbf16> to vector<8x8x64xf32>
    %22 = arith.maximumf %18, %21 : vector<8x8x64xf32>
    %c0_20 = arith.constant 0 : index
    %c1_21 = arith.constant 1 : index
    %c0_22 = arith.constant 0 : index
    %c0_23 = arith.constant 0 : index
    %23 = vector.load %arg1[%c0_20, %c1_21, %c0_22, %c0_23] : memref<4x9x9x64xbf16, #tpu.memory_space<vmem>>, vector<1x8x8x64xbf16>
    %24 = vector.shape_cast %23 : vector<1x8x8x64xbf16> to vector<8x8x64xbf16>
    %25 = arith.extf %24 : vector<8x8x64xbf16> to vector<8x8x64xf32>
    %26 = arith.maximumf %22, %25 : vector<8x8x64xf32>
    %c1_24 = arith.constant 1 : index
    %c1_25 = arith.constant 1 : index
    %c0_26 = arith.constant 0 : index
    %c0_27 = arith.constant 0 : index
    %27 = vector.load %arg1[%c1_24, %c1_25, %c0_26, %c0_27] : memref<4x9x9x64xbf16, #tpu.memory_space<vmem>>, vector<1x8x8x64xbf16>
    %28 = vector.shape_cast %27 : vector<1x8x8x64xbf16> to vector<8x8x64xbf16>
    %29 = arith.extf %28 : vector<8x8x64xbf16> to vector<8x8x64xf32>
    %30 = arith.maximumf %26, %29 : vector<8x8x64xf32>
    %c0_28 = arith.constant 0 : index
    %c1_29 = arith.constant 1 : index
    %c1_30 = arith.constant 1 : index
    %c0_31 = arith.constant 0 : index
    %31 = vector.load %arg1[%c0_28, %c1_29, %c1_30, %c0_31] : memref<4x9x9x64xbf16, #tpu.memory_space<vmem>>, vector<1x8x8x64xbf16>
    %32 = vector.shape_cast %31 : vector<1x8x8x64xbf16> to vector<8x8x64xbf16>
    %33 = arith.extf %32 : vector<8x8x64xbf16> to vector<8x8x64xf32>
    %34 = arith.maximumf %30, %33 : vector<8x8x64xf32>
    %cst = arith.constant 0.000000e+00 : bf16
    %35 = vector.broadcast %cst : bf16 to vector<11x10x64xbf16>
    %c0_32 = arith.constant 0 : index
    %c0_33 = arith.constant 0 : index
    %c0_34 = arith.constant 0 : index
    %c0_35 = arith.constant 0 : index
    %36 = vector.load %arg2[%c0_32, %c0_33, %c0_34, %c0_35] : memref<1x11x10x64xbf16, #tpu.memory_space<vmem>>, vector<1x11x10x64xbf16>
    %37 = vector.shape_cast %36 : vector<1x11x10x64xbf16> to vector<11x10x64xbf16>
    %38 = vector.shape_cast %35 : vector<11x10x64xbf16> to vector<1x11x10x64xbf16>
    tpu.vector_store %arg2[%c0_32, %c0_33, %c0_34, %c0_35], %38 {strides = array<i32>} : memref<1x11x10x64xbf16, #tpu.memory_space<vmem>>, vector<1x11x10x64xbf16>,
    %39 = arith.truncf %34 : vector<8x8x64xf32> to vector<8x8x64xbf16>
    %c0_36 = arith.constant 0 : index
    %c1_37 = arith.constant 1 : index
    %c1_38 = arith.constant 1 : index
    %c0_39 = arith.constant 0 : index
    %40 = vector.load %arg2[%c0_36, %c1_37, %c1_38, %c0_39] : memref<1x11x10x64xbf16, #tpu.memory_space<vmem>>, vector<1x8x8x64xbf16>
    %41 = vector.shape_cast %40 : vector<1x8x8x64xbf16> to vector<8x8x64xbf16>
    %42 = vector.shape_cast %39 : vector<8x8x64xbf16> to vector<1x8x8x64xbf16>
    tpu.vector_store %arg2[%c0_36, %c1_37, %c1_38, %c0_39], %42 {strides = array<i32>} : memref<1x11x10x64xbf16, #tpu.memory_space<vmem>>, vector<1x8x8x64xbf16>,
    return
  }
  func.func @transform_0(%arg0: i32) -> (i32, i32, i32, i32) {
    %c0_i32 = arith.constant 0 : i32
    %c0_i32_0 = arith.constant 0 : i32
    %c0_i32_1 = arith.constant 0 : i32
    %c0_i32_2 = arith.constant 0 : i32
    return %arg0, %c0_i32, %c0_i32_0, %c0_i32_1 : i32, i32, i32, i32
  }
  func.func @transform_1(%arg0: i32) -> (i32, i32, i32, i32) {
    %c0_i32 = arith.constant 0 : i32
    %c0_i32_0 = arith.constant 0 : i32
    %c0_i32_1 = arith.constant 0 : i32
    %c0_i32_2 = arith.constant 0 : i32
    return %arg0, %c0_i32, %c0_i32_0, %c0_i32_1 : i32, i32, i32, i32
  }
}

module attributes {stable_mosaic.version = 11 : i64} {
  func.func @_conv3x3_s1_kernel(%arg0: i32, %arg1: memref<1x110x64xbf16, #tpu.memory_space<vmem>>, %arg2: memref<576x64xbf16, #tpu.memory_space<vmem>>, %arg3: memref<1x64xf32, #tpu.memory_space<vmem>>, %arg4: memref<80x1xf32, #tpu.memory_space<vmem>>, %arg5: memref<1x110x64xbf16, #tpu.memory_space<vmem>>) attributes {dimension_semantics = [#tpu.dimension_semantics<parallel>], iteration_bounds = array<i64: 2>, scalar_prefetch = 0 : i64, scratch_operands = 0 : i64, tpu.core_type = #tpu.core_type<tc>, window_params = [{transform_indices = @transform_0, window_bounds = array<i64: 1, 110, 64>}, {pipeline_mode = #tpu.pipeline_mode<synchronous>, transform_indices = @transform_1, window_bounds = array<i64: 576, 64>}, {pipeline_mode = #tpu.pipeline_mode<synchronous>, transform_indices = @transform_2, window_bounds = array<i64: 1, 64>}, {pipeline_mode = #tpu.pipeline_mode<synchronous>, transform_indices = @transform_3, window_bounds = array<i64: 80, 1>}, {transform_indices = @transform_4, window_bounds = array<i64: 1, 110, 64>}]} {
    %cst = arith.constant 0.000000e+00 : f32
    %0 = vector.broadcast %cst : f32 to vector<80x64xf32>
    %c0 = arith.constant 0 : index
    %c0_0 = arith.constant 0 : index
    %c0_1 = arith.constant 0 : index
    %1 = vector.load %arg1[%c0, %c0_0, %c0_1] : memref<1x110x64xbf16, #tpu.memory_space<vmem>>, vector<1x80x64xbf16>
    %2 = vector.shape_cast %1 : vector<1x80x64xbf16> to vector<80x64xbf16>
    %c0_2 = arith.constant 0 : index
    %c0_3 = arith.constant 0 : index
    %3 = vector.load %arg2[%c0_2, %c0_3] : memref<576x64xbf16, #tpu.memory_space<vmem>>, vector<64x64xbf16>
    %cst_4 = arith.constant dense<0.000000e+00> : vector<80x64xf32>
    %4 = tpu.matmul %2, %3, %cst_4 {dimension_numbers = #tpu.dot_dimension_numbers<[1], [0], [0], [1], [0, 0, 1, 1], [], []>} : vector<80x64xbf16>, vector<64x64xbf16>, vector<80x64xf32> -> vector<80x64xf32>
    %5 = arith.addf %0, %4 : vector<80x64xf32>
    %c0_5 = arith.constant 0 : index
    %c1 = arith.constant 1 : index
    %c0_6 = arith.constant 0 : index
    %6 = vector.load %arg1[%c0_5, %c1, %c0_6] : memref<1x110x64xbf16, #tpu.memory_space<vmem>>, vector<1x80x64xbf16>
    %7 = vector.shape_cast %6 : vector<1x80x64xbf16> to vector<80x64xbf16>
    %c64 = arith.constant 64 : index
    %c0_7 = arith.constant 0 : index
    %8 = vector.load %arg2[%c64, %c0_7] : memref<576x64xbf16, #tpu.memory_space<vmem>>, vector<64x64xbf16>
    %cst_8 = arith.constant dense<0.000000e+00> : vector<80x64xf32>
    %9 = tpu.matmul %7, %8, %cst_8 {dimension_numbers = #tpu.dot_dimension_numbers<[1], [0], [0], [1], [0, 0, 1, 1], [], []>} : vector<80x64xbf16>, vector<64x64xbf16>, vector<80x64xf32> -> vector<80x64xf32>
    %10 = arith.addf %5, %9 : vector<80x64xf32>
    %c0_9 = arith.constant 0 : index
    %c2 = arith.constant 2 : index
    %c0_10 = arith.constant 0 : index
    %11 = vector.load %arg1[%c0_9, %c2, %c0_10] : memref<1x110x64xbf16, #tpu.memory_space<vmem>>, vector<1x80x64xbf16>
    %12 = vector.shape_cast %11 : vector<1x80x64xbf16> to vector<80x64xbf16>
    %c128 = arith.constant 128 : index
    %c0_11 = arith.constant 0 : index
    %13 = vector.load %arg2[%c128, %c0_11] : memref<576x64xbf16, #tpu.memory_space<vmem>>, vector<64x64xbf16>
    %cst_12 = arith.constant dense<0.000000e+00> : vector<80x64xf32>
    %14 = tpu.matmul %12, %13, %cst_12 {dimension_numbers = #tpu.dot_dimension_numbers<[1], [0], [0], [1], [0, 0, 1, 1], [], []>} : vector<80x64xbf16>, vector<64x64xbf16>, vector<80x64xf32> -> vector<80x64xf32>
    %15 = arith.addf %10, %14 : vector<80x64xf32>
    %c0_13 = arith.constant 0 : index
    %c10 = arith.constant 10 : index
    %c0_14 = arith.constant 0 : index
    %16 = vector.load %arg1[%c0_13, %c10, %c0_14] : memref<1x110x64xbf16, #tpu.memory_space<vmem>>, vector<1x80x64xbf16>
    %17 = vector.shape_cast %16 : vector<1x80x64xbf16> to vector<80x64xbf16>
    %c192 = arith.constant 192 : index
    %c0_15 = arith.constant 0 : index
    %18 = vector.load %arg2[%c192, %c0_15] : memref<576x64xbf16, #tpu.memory_space<vmem>>, vector<64x64xbf16>
    %cst_16 = arith.constant dense<0.000000e+00> : vector<80x64xf32>
    %19 = tpu.matmul %17, %18, %cst_16 {dimension_numbers = #tpu.dot_dimension_numbers<[1], [0], [0], [1], [0, 0, 1, 1], [], []>} : vector<80x64xbf16>, vector<64x64xbf16>, vector<80x64xf32> -> vector<80x64xf32>
    %20 = arith.addf %15, %19 : vector<80x64xf32>
    %c0_17 = arith.constant 0 : index
    %c11 = arith.constant 11 : index
    %c0_18 = arith.constant 0 : index
    %21 = vector.load %arg1[%c0_17, %c11, %c0_18] : memref<1x110x64xbf16, #tpu.memory_space<vmem>>, vector<1x80x64xbf16>
    %22 = vector.shape_cast %21 : vector<1x80x64xbf16> to vector<80x64xbf16>
    %c256 = arith.constant 256 : index
    %c0_19 = arith.constant 0 : index
    %23 = vector.load %arg2[%c256, %c0_19] : memref<576x64xbf16, #tpu.memory_space<vmem>>, vector<64x64xbf16>
    %cst_20 = arith.constant dense<0.000000e+00> : vector<80x64xf32>
    %24 = tpu.matmul %22, %23, %cst_20 {dimension_numbers = #tpu.dot_dimension_numbers<[1], [0], [0], [1], [0, 0, 1, 1], [], []>} : vector<80x64xbf16>, vector<64x64xbf16>, vector<80x64xf32> -> vector<80x64xf32>
    %25 = arith.addf %20, %24 : vector<80x64xf32>
    %c0_21 = arith.constant 0 : index
    %c12 = arith.constant 12 : index
    %c0_22 = arith.constant 0 : index
    %26 = vector.load %arg1[%c0_21, %c12, %c0_22] : memref<1x110x64xbf16, #tpu.memory_space<vmem>>, vector<1x80x64xbf16>
    %27 = vector.shape_cast %26 : vector<1x80x64xbf16> to vector<80x64xbf16>
    %c320 = arith.constant 320 : index
    %c0_23 = arith.constant 0 : index
    %28 = vector.load %arg2[%c320, %c0_23] : memref<576x64xbf16, #tpu.memory_space<vmem>>, vector<64x64xbf16>
    %cst_24 = arith.constant dense<0.000000e+00> : vector<80x64xf32>
    %29 = tpu.matmul %27, %28, %cst_24 {dimension_numbers = #tpu.dot_dimension_numbers<[1], [0], [0], [1], [0, 0, 1, 1], [], []>} : vector<80x64xbf16>, vector<64x64xbf16>, vector<80x64xf32> -> vector<80x64xf32>
    %30 = arith.addf %25, %29 : vector<80x64xf32>
    %c0_25 = arith.constant 0 : index
    %c20 = arith.constant 20 : index
    %c0_26 = arith.constant 0 : index
    %31 = vector.load %arg1[%c0_25, %c20, %c0_26] : memref<1x110x64xbf16, #tpu.memory_space<vmem>>, vector<1x80x64xbf16>
    %32 = vector.shape_cast %31 : vector<1x80x64xbf16> to vector<80x64xbf16>
    %c384 = arith.constant 384 : index
    %c0_27 = arith.constant 0 : index
    %33 = vector.load %arg2[%c384, %c0_27] : memref<576x64xbf16, #tpu.memory_space<vmem>>, vector<64x64xbf16>
    %cst_28 = arith.constant dense<0.000000e+00> : vector<80x64xf32>
    %34 = tpu.matmul %32, %33, %cst_28 {dimension_numbers = #tpu.dot_dimension_numbers<[1], [0], [0], [1], [0, 0, 1, 1], [], []>} : vector<80x64xbf16>, vector<64x64xbf16>, vector<80x64xf32> -> vector<80x64xf32>
    %35 = arith.addf %30, %34 : vector<80x64xf32>
    %c0_29 = arith.constant 0 : index
    %c21 = arith.constant 21 : index
    %c0_30 = arith.constant 0 : index
    %36 = vector.load %arg1[%c0_29, %c21, %c0_30] : memref<1x110x64xbf16, #tpu.memory_space<vmem>>, vector<1x80x64xbf16>
    %37 = vector.shape_cast %36 : vector<1x80x64xbf16> to vector<80x64xbf16>
    %c448 = arith.constant 448 : index
    %c0_31 = arith.constant 0 : index
    %38 = vector.load %arg2[%c448, %c0_31] : memref<576x64xbf16, #tpu.memory_space<vmem>>, vector<64x64xbf16>
    %cst_32 = arith.constant dense<0.000000e+00> : vector<80x64xf32>
    %39 = tpu.matmul %37, %38, %cst_32 {dimension_numbers = #tpu.dot_dimension_numbers<[1], [0], [0], [1], [0, 0, 1, 1], [], []>} : vector<80x64xbf16>, vector<64x64xbf16>, vector<80x64xf32> -> vector<80x64xf32>
    %40 = arith.addf %35, %39 : vector<80x64xf32>
    %c0_33 = arith.constant 0 : index
    %c22 = arith.constant 22 : index
    %c0_34 = arith.constant 0 : index
    %41 = vector.load %arg1[%c0_33, %c22, %c0_34] : memref<1x110x64xbf16, #tpu.memory_space<vmem>>, vector<1x80x64xbf16>
    %42 = vector.shape_cast %41 : vector<1x80x64xbf16> to vector<80x64xbf16>
    %c512 = arith.constant 512 : index
    %c0_35 = arith.constant 0 : index
    %43 = vector.load %arg2[%c512, %c0_35] : memref<576x64xbf16, #tpu.memory_space<vmem>>, vector<64x64xbf16>
    %cst_36 = arith.constant dense<0.000000e+00> : vector<80x64xf32>
    %44 = tpu.matmul %42, %43, %cst_36 {dimension_numbers = #tpu.dot_dimension_numbers<[1], [0], [0], [1], [0, 0, 1, 1], [], []>} : vector<80x64xbf16>, vector<64x64xbf16>, vector<80x64xf32> -> vector<80x64xf32>
    %45 = arith.addf %40, %44 : vector<80x64xf32>
    %c0_37 = arith.constant 0 : index
    %c0_38 = arith.constant 0 : index
    %46 = vector.load %arg3[%c0_37, %c0_38] : memref<1x64xf32, #tpu.memory_space<vmem>>, vector<1x64xf32>
    %47 = vector.broadcast %46 : vector<1x64xf32> to vector<80x64xf32>
    %48 = arith.addf %45, %47 : vector<80x64xf32>
    %cst_39 = arith.constant 0.000000e+00 : f32
    %49 = vector.broadcast %cst_39 : f32 to vector<80x64xf32>
    %50 = arith.maximumf %48, %49 : vector<80x64xf32>
    %c0_40 = arith.constant 0 : index
    %c0_41 = arith.constant 0 : index
    %51 = vector.load %arg4[%c0_40, %c0_41] : memref<80x1xf32, #tpu.memory_space<vmem>>, vector<80x1xf32>
    %52 = vector.broadcast %51 : vector<80x1xf32> to vector<80x64xf32>
    %53 = arith.mulf %50, %52 : vector<80x64xf32>
    %cst_42 = arith.constant 0.000000e+00 : bf16
    %54 = vector.broadcast %cst_42 : bf16 to vector<11x64xbf16>
    %c0_43 = arith.constant 0 : index
    %c0_44 = arith.constant 0 : index
    %c0_45 = arith.constant 0 : index
    %55 = vector.load %arg5[%c0_43, %c0_44, %c0_45] : memref<1x110x64xbf16, #tpu.memory_space<vmem>>, vector<1x11x64xbf16>
    %56 = vector.shape_cast %55 : vector<1x11x64xbf16> to vector<11x64xbf16>
    %57 = vector.shape_cast %54 : vector<11x64xbf16> to vector<1x11x64xbf16>
    tpu.vector_store %arg5[%c0_43, %c0_44, %c0_45], %57 {strides = array<i32>} : memref<1x110x64xbf16, #tpu.memory_space<vmem>>, vector<1x11x64xbf16>,
    %58 = arith.truncf %53 : vector<80x64xf32> to vector<80x64xbf16>
    %c0_46 = arith.constant 0 : index
    %c11_47 = arith.constant 11 : index
    %c0_48 = arith.constant 0 : index
    %59 = vector.load %arg5[%c0_46, %c11_47, %c0_48] : memref<1x110x64xbf16, #tpu.memory_space<vmem>>, vector<1x80x64xbf16>
    %60 = vector.shape_cast %59 : vector<1x80x64xbf16> to vector<80x64xbf16>
    %61 = vector.shape_cast %58 : vector<80x64xbf16> to vector<1x80x64xbf16>
    tpu.vector_store %arg5[%c0_46, %c11_47, %c0_48], %61 {strides = array<i32>} : memref<1x110x64xbf16, #tpu.memory_space<vmem>>, vector<1x80x64xbf16>,
    %cst_49 = arith.constant 0.000000e+00 : bf16
    %62 = vector.broadcast %cst_49 : bf16 to vector<19x64xbf16>
    %c0_50 = arith.constant 0 : index
    %c91 = arith.constant 91 : index
    %c0_51 = arith.constant 0 : index
    %63 = vector.load %arg5[%c0_50, %c91, %c0_51] : memref<1x110x64xbf16, #tpu.memory_space<vmem>>, vector<1x19x64xbf16>
    %64 = vector.shape_cast %63 : vector<1x19x64xbf16> to vector<19x64xbf16>
    %65 = vector.shape_cast %62 : vector<19x64xbf16> to vector<1x19x64xbf16>
    tpu.vector_store %arg5[%c0_50, %c91, %c0_51], %65 {strides = array<i32>} : memref<1x110x64xbf16, #tpu.memory_space<vmem>>, vector<1x19x64xbf16>,
    return
  }
  func.func @transform_0(%arg0: i32) -> (i32, i32, i32) {
    %c0_i32 = arith.constant 0 : i32
    %c0_i32_0 = arith.constant 0 : i32
    %c0_i32_1 = arith.constant 0 : i32
    return %arg0, %c0_i32, %c0_i32_0 : i32, i32, i32
  }
  func.func @transform_1(%arg0: i32) -> (i32, i32) {
    %c0_i32 = arith.constant 0 : i32
    %c0_i32_0 = arith.constant 0 : i32
    %c0_i32_1 = arith.constant 0 : i32
    return %c0_i32, %c0_i32_0 : i32, i32
  }
  func.func @transform_2(%arg0: i32) -> (i32, i32) {
    %c0_i32 = arith.constant 0 : i32
    %c0_i32_0 = arith.constant 0 : i32
    %c0_i32_1 = arith.constant 0 : i32
    return %c0_i32, %c0_i32_0 : i32, i32
  }
  func.func @transform_3(%arg0: i32) -> (i32, i32) {
    %c0_i32 = arith.constant 0 : i32
    %c0_i32_0 = arith.constant 0 : i32
    %c0_i32_1 = arith.constant 0 : i32
    return %c0_i32, %c0_i32_0 : i32, i32
  }
  func.func @transform_4(%arg0: i32) -> (i32, i32, i32) {
    %c0_i32 = arith.constant 0 : i32
    %c0_i32_0 = arith.constant 0 : i32
    %c0_i32_1 = arith.constant 0 : i32
    return %arg0, %c0_i32, %c0_i32_0 : i32, i32, i32
  }
}

module attributes {stable_mosaic.version = 11 : i64} {
  func.func @_conv3x3_s1_kernel(%arg0: i32, %arg1: memref<1x110x64xbf16, #tpu.memory_space<vmem>>, %arg2: memref<576x64xbf16, #tpu.memory_space<vmem>>, %arg3: memref<1x64xf32, #tpu.memory_space<vmem>>, %arg4: memref<80x1xf32, #tpu.memory_space<vmem>>, %arg5: memref<1x110x64xbf16, #tpu.memory_space<vmem>>, %arg6: memref<1x110x64xbf16, #tpu.memory_space<vmem>>) attributes {dimension_semantics = [#tpu.dimension_semantics<parallel>], iteration_bounds = array<i64: 2>, scalar_prefetch = 0 : i64, scratch_operands = 0 : i64, tpu.core_type = #tpu.core_type<tc>, window_params = [{transform_indices = @transform_0, window_bounds = array<i64: 1, 110, 64>}, {pipeline_mode = #tpu.pipeline_mode<synchronous>, transform_indices = @transform_1, window_bounds = array<i64: 576, 64>}, {pipeline_mode = #tpu.pipeline_mode<synchronous>, transform_indices = @transform_2, window_bounds = array<i64: 1, 64>}, {pipeline_mode = #tpu.pipeline_mode<synchronous>, transform_indices = @transform_3, window_bounds = array<i64: 80, 1>}, {transform_indices = @transform_4, window_bounds = array<i64: 1, 110, 64>}, {transform_indices = @transform_5, window_bounds = array<i64: 1, 110, 64>}]} {
    %cst = arith.constant 0.000000e+00 : f32
    %0 = vector.broadcast %cst : f32 to vector<80x64xf32>
    %c0 = arith.constant 0 : index
    %c0_0 = arith.constant 0 : index
    %c0_1 = arith.constant 0 : index
    %1 = vector.load %arg1[%c0, %c0_0, %c0_1] : memref<1x110x64xbf16, #tpu.memory_space<vmem>>, vector<1x80x64xbf16>
    %2 = vector.shape_cast %1 : vector<1x80x64xbf16> to vector<80x64xbf16>
    %c0_2 = arith.constant 0 : index
    %c0_3 = arith.constant 0 : index
    %3 = vector.load %arg2[%c0_2, %c0_3] : memref<576x64xbf16, #tpu.memory_space<vmem>>, vector<64x64xbf16>
    %cst_4 = arith.constant dense<0.000000e+00> : vector<80x64xf32>
    %4 = tpu.matmul %2, %3, %cst_4 {dimension_numbers = #tpu.dot_dimension_numbers<[1], [0], [0], [1], [0, 0, 1, 1], [], []>} : vector<80x64xbf16>, vector<64x64xbf16>, vector<80x64xf32> -> vector<80x64xf32>
    %5 = arith.addf %0, %4 : vector<80x64xf32>
    %c0_5 = arith.constant 0 : index
    %c1 = arith.constant 1 : index
    %c0_6 = arith.constant 0 : index
    %6 = vector.load %arg1[%c0_5, %c1, %c0_6] : memref<1x110x64xbf16, #tpu.memory_space<vmem>>, vector<1x80x64xbf16>
    %7 = vector.shape_cast %6 : vector<1x80x64xbf16> to vector<80x64xbf16>
    %c64 = arith.constant 64 : index
    %c0_7 = arith.constant 0 : index
    %8 = vector.load %arg2[%c64, %c0_7] : memref<576x64xbf16, #tpu.memory_space<vmem>>, vector<64x64xbf16>
    %cst_8 = arith.constant dense<0.000000e+00> : vector<80x64xf32>
    %9 = tpu.matmul %7, %8, %cst_8 {dimension_numbers = #tpu.dot_dimension_numbers<[1], [0], [0], [1], [0, 0, 1, 1], [], []>} : vector<80x64xbf16>, vector<64x64xbf16>, vector<80x64xf32> -> vector<80x64xf32>
    %10 = arith.addf %5, %9 : vector<80x64xf32>
    %c0_9 = arith.constant 0 : index
    %c2 = arith.constant 2 : index
    %c0_10 = arith.constant 0 : index
    %11 = vector.load %arg1[%c0_9, %c2, %c0_10] : memref<1x110x64xbf16, #tpu.memory_space<vmem>>, vector<1x80x64xbf16>
    %12 = vector.shape_cast %11 : vector<1x80x64xbf16> to vector<80x64xbf16>
    %c128 = arith.constant 128 : index
    %c0_11 = arith.constant 0 : index
    %13 = vector.load %arg2[%c128, %c0_11] : memref<576x64xbf16, #tpu.memory_space<vmem>>, vector<64x64xbf16>
    %cst_12 = arith.constant dense<0.000000e+00> : vector<80x64xf32>
    %14 = tpu.matmul %12, %13, %cst_12 {dimension_numbers = #tpu.dot_dimension_numbers<[1], [0], [0], [1], [0, 0, 1, 1], [], []>} : vector<80x64xbf16>, vector<64x64xbf16>, vector<80x64xf32> -> vector<80x64xf32>
    %15 = arith.addf %10, %14 : vector<80x64xf32>
    %c0_13 = arith.constant 0 : index
    %c10 = arith.constant 10 : index
    %c0_14 = arith.constant 0 : index
    %16 = vector.load %arg1[%c0_13, %c10, %c0_14] : memref<1x110x64xbf16, #tpu.memory_space<vmem>>, vector<1x80x64xbf16>
    %17 = vector.shape_cast %16 : vector<1x80x64xbf16> to vector<80x64xbf16>
    %c192 = arith.constant 192 : index
    %c0_15 = arith.constant 0 : index
    %18 = vector.load %arg2[%c192, %c0_15] : memref<576x64xbf16, #tpu.memory_space<vmem>>, vector<64x64xbf16>
    %cst_16 = arith.constant dense<0.000000e+00> : vector<80x64xf32>
    %19 = tpu.matmul %17, %18, %cst_16 {dimension_numbers = #tpu.dot_dimension_numbers<[1], [0], [0], [1], [0, 0, 1, 1], [], []>} : vector<80x64xbf16>, vector<64x64xbf16>, vector<80x64xf32> -> vector<80x64xf32>
    %20 = arith.addf %15, %19 : vector<80x64xf32>
    %c0_17 = arith.constant 0 : index
    %c11 = arith.constant 11 : index
    %c0_18 = arith.constant 0 : index
    %21 = vector.load %arg1[%c0_17, %c11, %c0_18] : memref<1x110x64xbf16, #tpu.memory_space<vmem>>, vector<1x80x64xbf16>
    %22 = vector.shape_cast %21 : vector<1x80x64xbf16> to vector<80x64xbf16>
    %c256 = arith.constant 256 : index
    %c0_19 = arith.constant 0 : index
    %23 = vector.load %arg2[%c256, %c0_19] : memref<576x64xbf16, #tpu.memory_space<vmem>>, vector<64x64xbf16>
    %cst_20 = arith.constant dense<0.000000e+00> : vector<80x64xf32>
    %24 = tpu.matmul %22, %23, %cst_20 {dimension_numbers = #tpu.dot_dimension_numbers<[1], [0], [0], [1], [0, 0, 1, 1], [], []>} : vector<80x64xbf16>, vector<64x64xbf16>, vector<80x64xf32> -> vector<80x64xf32>
    %25 = arith.addf %20, %24 : vector<80x64xf32>
    %c0_21 = arith.constant 0 : index
    %c12 = arith.constant 12 : index
    %c0_22 = arith.constant 0 : index
    %26 = vector.load %arg1[%c0_21, %c12, %c0_22] : memref<1x110x64xbf16, #tpu.memory_space<vmem>>, vector<1x80x64xbf16>
    %27 = vector.shape_cast %26 : vector<1x80x64xbf16> to vector<80x64xbf16>
    %c320 = arith.constant 320 : index
    %c0_23 = arith.constant 0 : index
    %28 = vector.load %arg2[%c320, %c0_23] : memref<576x64xbf16, #tpu.memory_space<vmem>>, vector<64x64xbf16>
    %cst_24 = arith.constant dense<0.000000e+00> : vector<80x64xf32>
    %29 = tpu.matmul %27, %28, %cst_24 {dimension_numbers = #tpu.dot_dimension_numbers<[1], [0], [0], [1], [0, 0, 1, 1], [], []>} : vector<80x64xbf16>, vector<64x64xbf16>, vector<80x64xf32> -> vector<80x64xf32>
    %30 = arith.addf %25, %29 : vector<80x64xf32>
    %c0_25 = arith.constant 0 : index
    %c20 = arith.constant 20 : index
    %c0_26 = arith.constant 0 : index
    %31 = vector.load %arg1[%c0_25, %c20, %c0_26] : memref<1x110x64xbf16, #tpu.memory_space<vmem>>, vector<1x80x64xbf16>
    %32 = vector.shape_cast %31 : vector<1x80x64xbf16> to vector<80x64xbf16>
    %c384 = arith.constant 384 : index
    %c0_27 = arith.constant 0 : index
    %33 = vector.load %arg2[%c384, %c0_27] : memref<576x64xbf16, #tpu.memory_space<vmem>>, vector<64x64xbf16>
    %cst_28 = arith.constant dense<0.000000e+00> : vector<80x64xf32>
    %34 = tpu.matmul %32, %33, %cst_28 {dimension_numbers = #tpu.dot_dimension_numbers<[1], [0], [0], [1], [0, 0, 1, 1], [], []>} : vector<80x64xbf16>, vector<64x64xbf16>, vector<80x64xf32> -> vector<80x64xf32>
    %35 = arith.addf %30, %34 : vector<80x64xf32>
    %c0_29 = arith.constant 0 : index
    %c21 = arith.constant 21 : index
    %c0_30 = arith.constant 0 : index
    %36 = vector.load %arg1[%c0_29, %c21, %c0_30] : memref<1x110x64xbf16, #tpu.memory_space<vmem>>, vector<1x80x64xbf16>
    %37 = vector.shape_cast %36 : vector<1x80x64xbf16> to vector<80x64xbf16>
    %c448 = arith.constant 448 : index
    %c0_31 = arith.constant 0 : index
    %38 = vector.load %arg2[%c448, %c0_31] : memref<576x64xbf16, #tpu.memory_space<vmem>>, vector<64x64xbf16>
    %cst_32 = arith.constant dense<0.000000e+00> : vector<80x64xf32>
    %39 = tpu.matmul %37, %38, %cst_32 {dimension_numbers = #tpu.dot_dimension_numbers<[1], [0], [0], [1], [0, 0, 1, 1], [], []>} : vector<80x64xbf16>, vector<64x64xbf16>, vector<80x64xf32> -> vector<80x64xf32>
    %40 = arith.addf %35, %39 : vector<80x64xf32>
    %c0_33 = arith.constant 0 : index
    %c22 = arith.constant 22 : index
    %c0_34 = arith.constant 0 : index
    %41 = vector.load %arg1[%c0_33, %c22, %c0_34] : memref<1x110x64xbf16, #tpu.memory_space<vmem>>, vector<1x80x64xbf16>
    %42 = vector.shape_cast %41 : vector<1x80x64xbf16> to vector<80x64xbf16>
    %c512 = arith.constant 512 : index
    %c0_35 = arith.constant 0 : index
    %43 = vector.load %arg2[%c512, %c0_35] : memref<576x64xbf16, #tpu.memory_space<vmem>>, vector<64x64xbf16>
    %cst_36 = arith.constant dense<0.000000e+00> : vector<80x64xf32>
    %44 = tpu.matmul %42, %43, %cst_36 {dimension_numbers = #tpu.dot_dimension_numbers<[1], [0], [0], [1], [0, 0, 1, 1], [], []>} : vector<80x64xbf16>, vector<64x64xbf16>, vector<80x64xf32> -> vector<80x64xf32>
    %45 = arith.addf %40, %44 : vector<80x64xf32>
    %c0_37 = arith.constant 0 : index
    %c0_38 = arith.constant 0 : index
    %46 = vector.load %arg3[%c0_37, %c0_38] : memref<1x64xf32, #tpu.memory_space<vmem>>, vector<1x64xf32>
    %47 = vector.broadcast %46 : vector<1x64xf32> to vector<80x64xf32>
    %48 = arith.addf %45, %47 : vector<80x64xf32>
    %c0_39 = arith.constant 0 : index
    %c11_40 = arith.constant 11 : index
    %c0_41 = arith.constant 0 : index
    %49 = vector.load %arg5[%c0_39, %c11_40, %c0_41] : memref<1x110x64xbf16, #tpu.memory_space<vmem>>, vector<1x80x64xbf16>
    %50 = vector.shape_cast %49 : vector<1x80x64xbf16> to vector<80x64xbf16>
    %51 = arith.extf %50 : vector<80x64xbf16> to vector<80x64xf32>
    %52 = arith.addf %48, %51 : vector<80x64xf32>
    %cst_42 = arith.constant 0.000000e+00 : f32
    %53 = vector.broadcast %cst_42 : f32 to vector<80x64xf32>
    %54 = arith.maximumf %52, %53 : vector<80x64xf32>
    %c0_43 = arith.constant 0 : index
    %c0_44 = arith.constant 0 : index
    %55 = vector.load %arg4[%c0_43, %c0_44] : memref<80x1xf32, #tpu.memory_space<vmem>>, vector<80x1xf32>
    %56 = vector.broadcast %55 : vector<80x1xf32> to vector<80x64xf32>
    %57 = arith.mulf %54, %56 : vector<80x64xf32>
    %cst_45 = arith.constant 0.000000e+00 : bf16
    %58 = vector.broadcast %cst_45 : bf16 to vector<11x64xbf16>
    %c0_46 = arith.constant 0 : index
    %c0_47 = arith.constant 0 : index
    %c0_48 = arith.constant 0 : index
    %59 = vector.load %arg6[%c0_46, %c0_47, %c0_48] : memref<1x110x64xbf16, #tpu.memory_space<vmem>>, vector<1x11x64xbf16>
    %60 = vector.shape_cast %59 : vector<1x11x64xbf16> to vector<11x64xbf16>
    %61 = vector.shape_cast %58 : vector<11x64xbf16> to vector<1x11x64xbf16>
    tpu.vector_store %arg6[%c0_46, %c0_47, %c0_48], %61 {strides = array<i32>} : memref<1x110x64xbf16, #tpu.memory_space<vmem>>, vector<1x11x64xbf16>,
    %62 = arith.truncf %57 : vector<80x64xf32> to vector<80x64xbf16>
    %c0_49 = arith.constant 0 : index
    %c11_50 = arith.constant 11 : index
    %c0_51 = arith.constant 0 : index
    %63 = vector.load %arg6[%c0_49, %c11_50, %c0_51] : memref<1x110x64xbf16, #tpu.memory_space<vmem>>, vector<1x80x64xbf16>
    %64 = vector.shape_cast %63 : vector<1x80x64xbf16> to vector<80x64xbf16>
    %65 = vector.shape_cast %62 : vector<80x64xbf16> to vector<1x80x64xbf16>
    tpu.vector_store %arg6[%c0_49, %c11_50, %c0_51], %65 {strides = array<i32>} : memref<1x110x64xbf16, #tpu.memory_space<vmem>>, vector<1x80x64xbf16>,
    %cst_52 = arith.constant 0.000000e+00 : bf16
    %66 = vector.broadcast %cst_52 : bf16 to vector<19x64xbf16>
    %c0_53 = arith.constant 0 : index
    %c91 = arith.constant 91 : index
    %c0_54 = arith.constant 0 : index
    %67 = vector.load %arg6[%c0_53, %c91, %c0_54] : memref<1x110x64xbf16, #tpu.memory_space<vmem>>, vector<1x19x64xbf16>
    %68 = vector.shape_cast %67 : vector<1x19x64xbf16> to vector<19x64xbf16>
    %69 = vector.shape_cast %66 : vector<19x64xbf16> to vector<1x19x64xbf16>
    tpu.vector_store %arg6[%c0_53, %c91, %c0_54], %69 {strides = array<i32>} : memref<1x110x64xbf16, #tpu.memory_space<vmem>>, vector<1x19x64xbf16>,
    return
  }
  func.func @transform_0(%arg0: i32) -> (i32, i32, i32) {
    %c0_i32 = arith.constant 0 : i32
    %c0_i32_0 = arith.constant 0 : i32
    %c0_i32_1 = arith.constant 0 : i32
    return %arg0, %c0_i32, %c0_i32_0 : i32, i32, i32
  }
  func.func @transform_1(%arg0: i32) -> (i32, i32) {
    %c0_i32 = arith.constant 0 : i32
    %c0_i32_0 = arith.constant 0 : i32
    %c0_i32_1 = arith.constant 0 : i32
    return %c0_i32, %c0_i32_0 : i32, i32
  }
  func.func @transform_2(%arg0: i32) -> (i32, i32) {
    %c0_i32 = arith.constant 0 : i32
    %c0_i32_0 = arith.constant 0 : i32
    %c0_i32_1 = arith.constant 0 : i32
    return %c0_i32, %c0_i32_0 : i32, i32
  }
  func.func @transform_3(%arg0: i32) -> (i32, i32) {
    %c0_i32 = arith.constant 0 : i32
    %c0_i32_0 = arith.constant 0 : i32
    %c0_i32_1 = arith.constant 0 : i32
    return %c0_i32, %c0_i32_0 : i32, i32
  }
  func.func @transform_4(%arg0: i32) -> (i32, i32, i32) {
    %c0_i32 = arith.constant 0 : i32
    %c0_i32_0 = arith.constant 0 : i32
    %c0_i32_1 = arith.constant 0 : i32
    return %arg0, %c0_i32, %c0_i32_0 : i32, i32, i32
  }
  func.func @transform_5(%arg0: i32) -> (i32, i32, i32) {
    %c0_i32 = arith.constant 0 : i32
    %c0_i32_0 = arith.constant 0 : i32
    %c0_i32_1 = arith.constant 0 : i32
    return %arg0, %c0_i32, %c0_i32_0 : i32, i32, i32
  }
}

module attributes {stable_mosaic.version = 11 : i64} {
  func.func @_matmul_bias_kernel(%arg0: i32, %arg1: memref<16x576xbf16, #tpu.memory_space<vmem>>, %arg2: memref<576x256xbf16, #tpu.memory_space<vmem>>, %arg3: memref<1x256xf32, #tpu.memory_space<vmem>>, %arg4: memref<16x256xbf16, #tpu.memory_space<vmem>>) attributes {dimension_semantics = [#tpu.dimension_semantics<parallel>], iteration_bounds = array<i64: 2>, scalar_prefetch = 0 : i64, scratch_operands = 0 : i64, tpu.core_type = #tpu.core_type<tc>, window_params = [{transform_indices = @transform_0, window_bounds = array<i64: 16, 576>}, {pipeline_mode = #tpu.pipeline_mode<synchronous>, transform_indices = @transform_1, window_bounds = array<i64: 576, 256>}, {pipeline_mode = #tpu.pipeline_mode<synchronous>, transform_indices = @transform_2, window_bounds = array<i64: 1, 256>}, {transform_indices = @transform_3, window_bounds = array<i64: 16, 256>}]} {
    %c0 = arith.constant 0 : index
    %c0_0 = arith.constant 0 : index
    %0 = vector.load %arg1[%c0, %c0_0] : memref<16x576xbf16, #tpu.memory_space<vmem>>, vector<16x576xbf16>
    %c0_1 = arith.constant 0 : index
    %c0_2 = arith.constant 0 : index
    %1 = vector.load %arg2[%c0_1, %c0_2] : memref<576x256xbf16, #tpu.memory_space<vmem>>, vector<576x256xbf16>
    %cst = arith.constant dense<0.000000e+00> : vector<16x256xf32>
    %2 = tpu.matmul %0, %1, %cst {dimension_numbers = #tpu.dot_dimension_numbers<[1], [0], [0], [1], [0, 0, 1, 1], [], []>} : vector<16x576xbf16>, vector<576x256xbf16>, vector<16x256xf32> -> vector<16x256xf32>
    %c0_3 = arith.constant 0 : index
    %c0_4 = arith.constant 0 : index
    %3 = vector.load %arg3[%c0_3, %c0_4] : memref<1x256xf32, #tpu.memory_space<vmem>>, vector<1x256xf32>
    %4 = vector.broadcast %3 : vector<1x256xf32> to vector<16x256xf32>
    %5 = arith.addf %2, %4 : vector<16x256xf32>
    %6 = tpu.iota {dimensions = array<i32: 1>} : vector<16x256xi32>
    %c128_i32 = arith.constant 128 : i32
    %7 = vector.broadcast %c128_i32 : i32 to vector<16x256xi32>
    %8 = arith.cmpi slt, %6, %7 : vector<16x256xi32>
    %cst_5 = arith.constant 0.000000e+00 : f32
    %9 = vector.broadcast %cst_5 : f32 to vector<16x256xf32>
    %10 = arith.maximumf %5, %9 : vector<16x256xf32>
    %11 = arith.select %8, %10, %5 : vector<16x256xi1>, vector<16x256xf32>
    %12 = arith.truncf %11 : vector<16x256xf32> to vector<16x256xbf16>
    %c0_6 = arith.constant 0 : index
    %c0_7 = arith.constant 0 : index
    %13 = vector.load %arg4[%c0_6, %c0_7] : memref<16x256xbf16, #tpu.memory_space<vmem>>, vector<16x256xbf16>
    tpu.vector_store %arg4[%c0_6, %c0_7], %12 {strides = array<i32>} : memref<16x256xbf16, #tpu.memory_space<vmem>>, vector<16x256xbf16>,
    return
  }
  func.func @transform_0(%arg0: i32) -> (i32, i32) {
    %c0_i32 = arith.constant 0 : i32
    %c0_i32_0 = arith.constant 0 : i32
    return %arg0, %c0_i32 : i32, i32
  }
  func.func @transform_1(%arg0: i32) -> (i32, i32) {
    %c0_i32 = arith.constant 0 : i32
    %c0_i32_0 = arith.constant 0 : i32
    %c0_i32_1 = arith.constant 0 : i32
    return %c0_i32, %c0_i32_0 : i32, i32
  }
  func.func @transform_2(%arg0: i32) -> (i32, i32) {
    %c0_i32 = arith.constant 0 : i32
    %c0_i32_0 = arith.constant 0 : i32
    %c0_i32_1 = arith.constant 0 : i32
    return %c0_i32, %c0_i32_0 : i32, i32
  }
  func.func @transform_3(%arg0: i32) -> (i32, i32) {
    %c0_i32 = arith.constant 0 : i32
    %c0_i32_0 = arith.constant 0 : i32
    return %arg0, %c0_i32 : i32, i32
  }
}

module attributes {stable_mosaic.version = 11 : i64} {
  func.func @_conv3x3_s1_kernel(%arg0: i32, %arg1: memref<1x42x128xbf16, #tpu.memory_space<vmem>>, %arg2: memref<1152x128xbf16, #tpu.memory_space<vmem>>, %arg3: memref<1x128xf32, #tpu.memory_space<vmem>>, %arg4: memref<24x1xf32, #tpu.memory_space<vmem>>, %arg5: memref<1x42x128xbf16, #tpu.memory_space<vmem>>, %arg6: memref<1x42x128xbf16, #tpu.memory_space<vmem>>) attributes {dimension_semantics = [#tpu.dimension_semantics<parallel>], iteration_bounds = array<i64: 2>, scalar_prefetch = 0 : i64, scratch_operands = 0 : i64, tpu.core_type = #tpu.core_type<tc>, window_params = [{transform_indices = @transform_0, window_bounds = array<i64: 1, 42, 128>}, {pipeline_mode = #tpu.pipeline_mode<synchronous>, transform_indices = @transform_1, window_bounds = array<i64: 1152, 128>}, {pipeline_mode = #tpu.pipeline_mode<synchronous>, transform_indices = @transform_2, window_bounds = array<i64: 1, 128>}, {pipeline_mode = #tpu.pipeline_mode<synchronous>, transform_indices = @transform_3, window_bounds = array<i64: 24, 1>}, {transform_indices = @transform_4, window_bounds = array<i64: 1, 42, 128>}, {transform_indices = @transform_5, window_bounds = array<i64: 1, 42, 128>}]} {
    %cst = arith.constant 0.000000e+00 : f32
    %0 = vector.broadcast %cst : f32 to vector<24x128xf32>
    %c0 = arith.constant 0 : index
    %c0_0 = arith.constant 0 : index
    %c0_1 = arith.constant 0 : index
    %1 = vector.load %arg1[%c0, %c0_0, %c0_1] : memref<1x42x128xbf16, #tpu.memory_space<vmem>>, vector<1x24x128xbf16>
    %2 = vector.shape_cast %1 : vector<1x24x128xbf16> to vector<24x128xbf16>
    %c0_2 = arith.constant 0 : index
    %c0_3 = arith.constant 0 : index
    %3 = vector.load %arg2[%c0_2, %c0_3] : memref<1152x128xbf16, #tpu.memory_space<vmem>>, vector<128x128xbf16>
    %cst_4 = arith.constant dense<0.000000e+00> : vector<24x128xf32>
    %4 = tpu.matmul %2, %3, %cst_4 {dimension_numbers = #tpu.dot_dimension_numbers<[1], [0], [0], [1], [0, 0, 1, 1], [], []>} : vector<24x128xbf16>, vector<128x128xbf16>, vector<24x128xf32> -> vector<24x128xf32>
    %5 = arith.addf %0, %4 : vector<24x128xf32>
    %c0_5 = arith.constant 0 : index
    %c1 = arith.constant 1 : index
    %c0_6 = arith.constant 0 : index
    %6 = vector.load %arg1[%c0_5, %c1, %c0_6] : memref<1x42x128xbf16, #tpu.memory_space<vmem>>, vector<1x24x128xbf16>
    %7 = vector.shape_cast %6 : vector<1x24x128xbf16> to vector<24x128xbf16>
    %c128 = arith.constant 128 : index
    %c0_7 = arith.constant 0 : index
    %8 = vector.load %arg2[%c128, %c0_7] : memref<1152x128xbf16, #tpu.memory_space<vmem>>, vector<128x128xbf16>
    %cst_8 = arith.constant dense<0.000000e+00> : vector<24x128xf32>
    %9 = tpu.matmul %7, %8, %cst_8 {dimension_numbers = #tpu.dot_dimension_numbers<[1], [0], [0], [1], [0, 0, 1, 1], [], []>} : vector<24x128xbf16>, vector<128x128xbf16>, vector<24x128xf32> -> vector<24x128xf32>
    %10 = arith.addf %5, %9 : vector<24x128xf32>
    %c0_9 = arith.constant 0 : index
    %c2 = arith.constant 2 : index
    %c0_10 = arith.constant 0 : index
    %11 = vector.load %arg1[%c0_9, %c2, %c0_10] : memref<1x42x128xbf16, #tpu.memory_space<vmem>>, vector<1x24x128xbf16>
    %12 = vector.shape_cast %11 : vector<1x24x128xbf16> to vector<24x128xbf16>
    %c256 = arith.constant 256 : index
    %c0_11 = arith.constant 0 : index
    %13 = vector.load %arg2[%c256, %c0_11] : memref<1152x128xbf16, #tpu.memory_space<vmem>>, vector<128x128xbf16>
    %cst_12 = arith.constant dense<0.000000e+00> : vector<24x128xf32>
    %14 = tpu.matmul %12, %13, %cst_12 {dimension_numbers = #tpu.dot_dimension_numbers<[1], [0], [0], [1], [0, 0, 1, 1], [], []>} : vector<24x128xbf16>, vector<128x128xbf16>, vector<24x128xf32> -> vector<24x128xf32>
    %15 = arith.addf %10, %14 : vector<24x128xf32>
    %c0_13 = arith.constant 0 : index
    %c6 = arith.constant 6 : index
    %c0_14 = arith.constant 0 : index
    %16 = vector.load %arg1[%c0_13, %c6, %c0_14] : memref<1x42x128xbf16, #tpu.memory_space<vmem>>, vector<1x24x128xbf16>
    %17 = vector.shape_cast %16 : vector<1x24x128xbf16> to vector<24x128xbf16>
    %c384 = arith.constant 384 : index
    %c0_15 = arith.constant 0 : index
    %18 = vector.load %arg2[%c384, %c0_15] : memref<1152x128xbf16, #tpu.memory_space<vmem>>, vector<128x128xbf16>
    %cst_16 = arith.constant dense<0.000000e+00> : vector<24x128xf32>
    %19 = tpu.matmul %17, %18, %cst_16 {dimension_numbers = #tpu.dot_dimension_numbers<[1], [0], [0], [1], [0, 0, 1, 1], [], []>} : vector<24x128xbf16>, vector<128x128xbf16>, vector<24x128xf32> -> vector<24x128xf32>
    %20 = arith.addf %15, %19 : vector<24x128xf32>
    %c0_17 = arith.constant 0 : index
    %c7 = arith.constant 7 : index
    %c0_18 = arith.constant 0 : index
    %21 = vector.load %arg1[%c0_17, %c7, %c0_18] : memref<1x42x128xbf16, #tpu.memory_space<vmem>>, vector<1x24x128xbf16>
    %22 = vector.shape_cast %21 : vector<1x24x128xbf16> to vector<24x128xbf16>
    %c512 = arith.constant 512 : index
    %c0_19 = arith.constant 0 : index
    %23 = vector.load %arg2[%c512, %c0_19] : memref<1152x128xbf16, #tpu.memory_space<vmem>>, vector<128x128xbf16>
    %cst_20 = arith.constant dense<0.000000e+00> : vector<24x128xf32>
    %24 = tpu.matmul %22, %23, %cst_20 {dimension_numbers = #tpu.dot_dimension_numbers<[1], [0], [0], [1], [0, 0, 1, 1], [], []>} : vector<24x128xbf16>, vector<128x128xbf16>, vector<24x128xf32> -> vector<24x128xf32>
    %25 = arith.addf %20, %24 : vector<24x128xf32>
    %c0_21 = arith.constant 0 : index
    %c8 = arith.constant 8 : index
    %c0_22 = arith.constant 0 : index
    %26 = vector.load %arg1[%c0_21, %c8, %c0_22] : memref<1x42x128xbf16, #tpu.memory_space<vmem>>, vector<1x24x128xbf16>
    %27 = vector.shape_cast %26 : vector<1x24x128xbf16> to vector<24x128xbf16>
    %c640 = arith.constant 640 : index
    %c0_23 = arith.constant 0 : index
    %28 = vector.load %arg2[%c640, %c0_23] : memref<1152x128xbf16, #tpu.memory_space<vmem>>, vector<128x128xbf16>
    %cst_24 = arith.constant dense<0.000000e+00> : vector<24x128xf32>
    %29 = tpu.matmul %27, %28, %cst_24 {dimension_numbers = #tpu.dot_dimension_numbers<[1], [0], [0], [1], [0, 0, 1, 1], [], []>} : vector<24x128xbf16>, vector<128x128xbf16>, vector<24x128xf32> -> vector<24x128xf32>
    %30 = arith.addf %25, %29 : vector<24x128xf32>
    %c0_25 = arith.constant 0 : index
    %c12 = arith.constant 12 : index
    %c0_26 = arith.constant 0 : index
    %31 = vector.load %arg1[%c0_25, %c12, %c0_26] : memref<1x42x128xbf16, #tpu.memory_space<vmem>>, vector<1x24x128xbf16>
    %32 = vector.shape_cast %31 : vector<1x24x128xbf16> to vector<24x128xbf16>
    %c768 = arith.constant 768 : index
    %c0_27 = arith.constant 0 : index
    %33 = vector.load %arg2[%c768, %c0_27] : memref<1152x128xbf16, #tpu.memory_space<vmem>>, vector<128x128xbf16>
    %cst_28 = arith.constant dense<0.000000e+00> : vector<24x128xf32>
    %34 = tpu.matmul %32, %33, %cst_28 {dimension_numbers = #tpu.dot_dimension_numbers<[1], [0], [0], [1], [0, 0, 1, 1], [], []>} : vector<24x128xbf16>, vector<128x128xbf16>, vector<24x128xf32> -> vector<24x128xf32>
    %35 = arith.addf %30, %34 : vector<24x128xf32>
    %c0_29 = arith.constant 0 : index
    %c13 = arith.constant 13 : index
    %c0_30 = arith.constant 0 : index
    %36 = vector.load %arg1[%c0_29, %c13, %c0_30] : memref<1x42x128xbf16, #tpu.memory_space<vmem>>, vector<1x24x128xbf16>
    %37 = vector.shape_cast %36 : vector<1x24x128xbf16> to vector<24x128xbf16>
    %c896 = arith.constant 896 : index
    %c0_31 = arith.constant 0 : index
    %38 = vector.load %arg2[%c896, %c0_31] : memref<1152x128xbf16, #tpu.memory_space<vmem>>, vector<128x128xbf16>
    %cst_32 = arith.constant dense<0.000000e+00> : vector<24x128xf32>
    %39 = tpu.matmul %37, %38, %cst_32 {dimension_numbers = #tpu.dot_dimension_numbers<[1], [0], [0], [1], [0, 0, 1, 1], [], []>} : vector<24x128xbf16>, vector<128x128xbf16>, vector<24x128xf32> -> vector<24x128xf32>
    %40 = arith.addf %35, %39 : vector<24x128xf32>
    %c0_33 = arith.constant 0 : index
    %c14 = arith.constant 14 : index
    %c0_34 = arith.constant 0 : index
    %41 = vector.load %arg1[%c0_33, %c14, %c0_34] : memref<1x42x128xbf16, #tpu.memory_space<vmem>>, vector<1x24x128xbf16>
    %42 = vector.shape_cast %41 : vector<1x24x128xbf16> to vector<24x128xbf16>
    %c1024 = arith.constant 1024 : index
    %c0_35 = arith.constant 0 : index
    %43 = vector.load %arg2[%c1024, %c0_35] : memref<1152x128xbf16, #tpu.memory_space<vmem>>, vector<128x128xbf16>
    %cst_36 = arith.constant dense<0.000000e+00> : vector<24x128xf32>
    %44 = tpu.matmul %42, %43, %cst_36 {dimension_numbers = #tpu.dot_dimension_numbers<[1], [0], [0], [1], [0, 0, 1, 1], [], []>} : vector<24x128xbf16>, vector<128x128xbf16>, vector<24x128xf32> -> vector<24x128xf32>
    %45 = arith.addf %40, %44 : vector<24x128xf32>
    %c0_37 = arith.constant 0 : index
    %c0_38 = arith.constant 0 : index
    %46 = vector.load %arg3[%c0_37, %c0_38] : memref<1x128xf32, #tpu.memory_space<vmem>>, vector<1x128xf32>
    %47 = vector.broadcast %46 : vector<1x128xf32> to vector<24x128xf32>
    %48 = arith.addf %45, %47 : vector<24x128xf32>
    %c0_39 = arith.constant 0 : index
    %c7_40 = arith.constant 7 : index
    %c0_41 = arith.constant 0 : index
    %49 = vector.load %arg5[%c0_39, %c7_40, %c0_41] : memref<1x42x128xbf16, #tpu.memory_space<vmem>>, vector<1x24x128xbf16>
    %50 = vector.shape_cast %49 : vector<1x24x128xbf16> to vector<24x128xbf16>
    %51 = arith.extf %50 : vector<24x128xbf16> to vector<24x128xf32>
    %52 = arith.addf %48, %51 : vector<24x128xf32>
    %cst_42 = arith.constant 0.000000e+00 : f32
    %53 = vector.broadcast %cst_42 : f32 to vector<24x128xf32>
    %54 = arith.maximumf %52, %53 : vector<24x128xf32>
    %c0_43 = arith.constant 0 : index
    %c0_44 = arith.constant 0 : index
    %55 = vector.load %arg4[%c0_43, %c0_44] : memref<24x1xf32, #tpu.memory_space<vmem>>, vector<24x1xf32>
    %56 = vector.broadcast %55 : vector<24x1xf32> to vector<24x128xf32>
    %57 = arith.mulf %54, %56 : vector<24x128xf32>
    %cst_45 = arith.constant 0.000000e+00 : bf16
    %58 = vector.broadcast %cst_45 : bf16 to vector<7x128xbf16>
    %c0_46 = arith.constant 0 : index
    %c0_47 = arith.constant 0 : index
    %c0_48 = arith.constant 0 : index
    %59 = vector.load %arg6[%c0_46, %c0_47, %c0_48] : memref<1x42x128xbf16, #tpu.memory_space<vmem>>, vector<1x7x128xbf16>
    %60 = vector.shape_cast %59 : vector<1x7x128xbf16> to vector<7x128xbf16>
    %61 = vector.shape_cast %58 : vector<7x128xbf16> to vector<1x7x128xbf16>
    tpu.vector_store %arg6[%c0_46, %c0_47, %c0_48], %61 {strides = array<i32>} : memref<1x42x128xbf16, #tpu.memory_space<vmem>>, vector<1x7x128xbf16>,
    %62 = arith.truncf %57 : vector<24x128xf32> to vector<24x128xbf16>
    %c0_49 = arith.constant 0 : index
    %c7_50 = arith.constant 7 : index
    %c0_51 = arith.constant 0 : index
    %63 = vector.load %arg6[%c0_49, %c7_50, %c0_51] : memref<1x42x128xbf16, #tpu.memory_space<vmem>>, vector<1x24x128xbf16>
    %64 = vector.shape_cast %63 : vector<1x24x128xbf16> to vector<24x128xbf16>
    %65 = vector.shape_cast %62 : vector<24x128xbf16> to vector<1x24x128xbf16>
    tpu.vector_store %arg6[%c0_49, %c7_50, %c0_51], %65 {strides = array<i32>} : memref<1x42x128xbf16, #tpu.memory_space<vmem>>, vector<1x24x128xbf16>,
    %cst_52 = arith.constant 0.000000e+00 : bf16
    %66 = vector.broadcast %cst_52 : bf16 to vector<11x128xbf16>
    %c0_53 = arith.constant 0 : index
    %c31 = arith.constant 31 : index
    %c0_54 = arith.constant 0 : index
    %67 = vector.load %arg6[%c0_53, %c31, %c0_54] : memref<1x42x128xbf16, #tpu.memory_space<vmem>>, vector<1x11x128xbf16>
    %68 = vector.shape_cast %67 : vector<1x11x128xbf16> to vector<11x128xbf16>
    %69 = vector.shape_cast %66 : vector<11x128xbf16> to vector<1x11x128xbf16>
    tpu.vector_store %arg6[%c0_53, %c31, %c0_54], %69 {strides = array<i32>} : memref<1x42x128xbf16, #tpu.memory_space<vmem>>, vector<1x11x128xbf16>,
    return
  }
  func.func @transform_0(%arg0: i32) -> (i32, i32, i32) {
    %c0_i32 = arith.constant 0 : i32
    %c0_i32_0 = arith.constant 0 : i32
    %c0_i32_1 = arith.constant 0 : i32
    return %arg0, %c0_i32, %c0_i32_0 : i32, i32, i32
  }
  func.func @transform_1(%arg0: i32) -> (i32, i32) {
    %c0_i32 = arith.constant 0 : i32
    %c0_i32_0 = arith.constant 0 : i32
    %c0_i32_1 = arith.constant 0 : i32
    return %c0_i32, %c0_i32_0 : i32, i32
  }
  func.func @transform_2(%arg0: i32) -> (i32, i32) {
    %c0_i32 = arith.constant 0 : i32
    %c0_i32_0 = arith.constant 0 : i32
    %c0_i32_1 = arith.constant 0 : i32
    return %c0_i32, %c0_i32_0 : i32, i32
  }
  func.func @transform_3(%arg0: i32) -> (i32, i32) {
    %c0_i32 = arith.constant 0 : i32
    %c0_i32_0 = arith.constant 0 : i32
    %c0_i32_1 = arith.constant 0 : i32
    return %c0_i32, %c0_i32_0 : i32, i32
  }
  func.func @transform_4(%arg0: i32) -> (i32, i32, i32) {
    %c0_i32 = arith.constant 0 : i32
    %c0_i32_0 = arith.constant 0 : i32
    %c0_i32_1 = arith.constant 0 : i32
    return %arg0, %c0_i32, %c0_i32_0 : i32, i32, i32
  }
  func.func @transform_5(%arg0: i32) -> (i32, i32, i32) {
    %c0_i32 = arith.constant 0 : i32
    %c0_i32_0 = arith.constant 0 : i32
    %c0_i32_1 = arith.constant 0 : i32
    return %arg0, %c0_i32, %c0_i32_0 : i32, i32, i32
  }
}

module attributes {stable_mosaic.version = 11 : i64} {
  func.func @_conv3x3_s1_kernel(%arg0: i32, %arg1: memref<1x42x128xbf16, #tpu.memory_space<vmem>>, %arg2: memref<1152x128xbf16, #tpu.memory_space<vmem>>, %arg3: memref<1x128xf32, #tpu.memory_space<vmem>>, %arg4: memref<24x1xf32, #tpu.memory_space<vmem>>, %arg5: memref<1x42x128xbf16, #tpu.memory_space<vmem>>) attributes {dimension_semantics = [#tpu.dimension_semantics<parallel>], iteration_bounds = array<i64: 2>, scalar_prefetch = 0 : i64, scratch_operands = 0 : i64, tpu.core_type = #tpu.core_type<tc>, window_params = [{transform_indices = @transform_0, window_bounds = array<i64: 1, 42, 128>}, {pipeline_mode = #tpu.pipeline_mode<synchronous>, transform_indices = @transform_1, window_bounds = array<i64: 1152, 128>}, {pipeline_mode = #tpu.pipeline_mode<synchronous>, transform_indices = @transform_2, window_bounds = array<i64: 1, 128>}, {pipeline_mode = #tpu.pipeline_mode<synchronous>, transform_indices = @transform_3, window_bounds = array<i64: 24, 1>}, {transform_indices = @transform_4, window_bounds = array<i64: 1, 42, 128>}]} {
    %cst = arith.constant 0.000000e+00 : f32
    %0 = vector.broadcast %cst : f32 to vector<24x128xf32>
    %c0 = arith.constant 0 : index
    %c0_0 = arith.constant 0 : index
    %c0_1 = arith.constant 0 : index
    %1 = vector.load %arg1[%c0, %c0_0, %c0_1] : memref<1x42x128xbf16, #tpu.memory_space<vmem>>, vector<1x24x128xbf16>
    %2 = vector.shape_cast %1 : vector<1x24x128xbf16> to vector<24x128xbf16>
    %c0_2 = arith.constant 0 : index
    %c0_3 = arith.constant 0 : index
    %3 = vector.load %arg2[%c0_2, %c0_3] : memref<1152x128xbf16, #tpu.memory_space<vmem>>, vector<128x128xbf16>
    %cst_4 = arith.constant dense<0.000000e+00> : vector<24x128xf32>
    %4 = tpu.matmul %2, %3, %cst_4 {dimension_numbers = #tpu.dot_dimension_numbers<[1], [0], [0], [1], [0, 0, 1, 1], [], []>} : vector<24x128xbf16>, vector<128x128xbf16>, vector<24x128xf32> -> vector<24x128xf32>
    %5 = arith.addf %0, %4 : vector<24x128xf32>
    %c0_5 = arith.constant 0 : index
    %c1 = arith.constant 1 : index
    %c0_6 = arith.constant 0 : index
    %6 = vector.load %arg1[%c0_5, %c1, %c0_6] : memref<1x42x128xbf16, #tpu.memory_space<vmem>>, vector<1x24x128xbf16>
    %7 = vector.shape_cast %6 : vector<1x24x128xbf16> to vector<24x128xbf16>
    %c128 = arith.constant 128 : index
    %c0_7 = arith.constant 0 : index
    %8 = vector.load %arg2[%c128, %c0_7] : memref<1152x128xbf16, #tpu.memory_space<vmem>>, vector<128x128xbf16>
    %cst_8 = arith.constant dense<0.000000e+00> : vector<24x128xf32>
    %9 = tpu.matmul %7, %8, %cst_8 {dimension_numbers = #tpu.dot_dimension_numbers<[1], [0], [0], [1], [0, 0, 1, 1], [], []>} : vector<24x128xbf16>, vector<128x128xbf16>, vector<24x128xf32> -> vector<24x128xf32>
    %10 = arith.addf %5, %9 : vector<24x128xf32>
    %c0_9 = arith.constant 0 : index
    %c2 = arith.constant 2 : index
    %c0_10 = arith.constant 0 : index
    %11 = vector.load %arg1[%c0_9, %c2, %c0_10] : memref<1x42x128xbf16, #tpu.memory_space<vmem>>, vector<1x24x128xbf16>
    %12 = vector.shape_cast %11 : vector<1x24x128xbf16> to vector<24x128xbf16>
    %c256 = arith.constant 256 : index
    %c0_11 = arith.constant 0 : index
    %13 = vector.load %arg2[%c256, %c0_11] : memref<1152x128xbf16, #tpu.memory_space<vmem>>, vector<128x128xbf16>
    %cst_12 = arith.constant dense<0.000000e+00> : vector<24x128xf32>
    %14 = tpu.matmul %12, %13, %cst_12 {dimension_numbers = #tpu.dot_dimension_numbers<[1], [0], [0], [1], [0, 0, 1, 1], [], []>} : vector<24x128xbf16>, vector<128x128xbf16>, vector<24x128xf32> -> vector<24x128xf32>
    %15 = arith.addf %10, %14 : vector<24x128xf32>
    %c0_13 = arith.constant 0 : index
    %c6 = arith.constant 6 : index
    %c0_14 = arith.constant 0 : index
    %16 = vector.load %arg1[%c0_13, %c6, %c0_14] : memref<1x42x128xbf16, #tpu.memory_space<vmem>>, vector<1x24x128xbf16>
    %17 = vector.shape_cast %16 : vector<1x24x128xbf16> to vector<24x128xbf16>
    %c384 = arith.constant 384 : index
    %c0_15 = arith.constant 0 : index
    %18 = vector.load %arg2[%c384, %c0_15] : memref<1152x128xbf16, #tpu.memory_space<vmem>>, vector<128x128xbf16>
    %cst_16 = arith.constant dense<0.000000e+00> : vector<24x128xf32>
    %19 = tpu.matmul %17, %18, %cst_16 {dimension_numbers = #tpu.dot_dimension_numbers<[1], [0], [0], [1], [0, 0, 1, 1], [], []>} : vector<24x128xbf16>, vector<128x128xbf16>, vector<24x128xf32> -> vector<24x128xf32>
    %20 = arith.addf %15, %19 : vector<24x128xf32>
    %c0_17 = arith.constant 0 : index
    %c7 = arith.constant 7 : index
    %c0_18 = arith.constant 0 : index
    %21 = vector.load %arg1[%c0_17, %c7, %c0_18] : memref<1x42x128xbf16, #tpu.memory_space<vmem>>, vector<1x24x128xbf16>
    %22 = vector.shape_cast %21 : vector<1x24x128xbf16> to vector<24x128xbf16>
    %c512 = arith.constant 512 : index
    %c0_19 = arith.constant 0 : index
    %23 = vector.load %arg2[%c512, %c0_19] : memref<1152x128xbf16, #tpu.memory_space<vmem>>, vector<128x128xbf16>
    %cst_20 = arith.constant dense<0.000000e+00> : vector<24x128xf32>
    %24 = tpu.matmul %22, %23, %cst_20 {dimension_numbers = #tpu.dot_dimension_numbers<[1], [0], [0], [1], [0, 0, 1, 1], [], []>} : vector<24x128xbf16>, vector<128x128xbf16>, vector<24x128xf32> -> vector<24x128xf32>
    %25 = arith.addf %20, %24 : vector<24x128xf32>
    %c0_21 = arith.constant 0 : index
    %c8 = arith.constant 8 : index
    %c0_22 = arith.constant 0 : index
    %26 = vector.load %arg1[%c0_21, %c8, %c0_22] : memref<1x42x128xbf16, #tpu.memory_space<vmem>>, vector<1x24x128xbf16>
    %27 = vector.shape_cast %26 : vector<1x24x128xbf16> to vector<24x128xbf16>
    %c640 = arith.constant 640 : index
    %c0_23 = arith.constant 0 : index
    %28 = vector.load %arg2[%c640, %c0_23] : memref<1152x128xbf16, #tpu.memory_space<vmem>>, vector<128x128xbf16>
    %cst_24 = arith.constant dense<0.000000e+00> : vector<24x128xf32>
    %29 = tpu.matmul %27, %28, %cst_24 {dimension_numbers = #tpu.dot_dimension_numbers<[1], [0], [0], [1], [0, 0, 1, 1], [], []>} : vector<24x128xbf16>, vector<128x128xbf16>, vector<24x128xf32> -> vector<24x128xf32>
    %30 = arith.addf %25, %29 : vector<24x128xf32>
    %c0_25 = arith.constant 0 : index
    %c12 = arith.constant 12 : index
    %c0_26 = arith.constant 0 : index
    %31 = vector.load %arg1[%c0_25, %c12, %c0_26] : memref<1x42x128xbf16, #tpu.memory_space<vmem>>, vector<1x24x128xbf16>
    %32 = vector.shape_cast %31 : vector<1x24x128xbf16> to vector<24x128xbf16>
    %c768 = arith.constant 768 : index
    %c0_27 = arith.constant 0 : index
    %33 = vector.load %arg2[%c768, %c0_27] : memref<1152x128xbf16, #tpu.memory_space<vmem>>, vector<128x128xbf16>
    %cst_28 = arith.constant dense<0.000000e+00> : vector<24x128xf32>
    %34 = tpu.matmul %32, %33, %cst_28 {dimension_numbers = #tpu.dot_dimension_numbers<[1], [0], [0], [1], [0, 0, 1, 1], [], []>} : vector<24x128xbf16>, vector<128x128xbf16>, vector<24x128xf32> -> vector<24x128xf32>
    %35 = arith.addf %30, %34 : vector<24x128xf32>
    %c0_29 = arith.constant 0 : index
    %c13 = arith.constant 13 : index
    %c0_30 = arith.constant 0 : index
    %36 = vector.load %arg1[%c0_29, %c13, %c0_30] : memref<1x42x128xbf16, #tpu.memory_space<vmem>>, vector<1x24x128xbf16>
    %37 = vector.shape_cast %36 : vector<1x24x128xbf16> to vector<24x128xbf16>
    %c896 = arith.constant 896 : index
    %c0_31 = arith.constant 0 : index
    %38 = vector.load %arg2[%c896, %c0_31] : memref<1152x128xbf16, #tpu.memory_space<vmem>>, vector<128x128xbf16>
    %cst_32 = arith.constant dense<0.000000e+00> : vector<24x128xf32>
    %39 = tpu.matmul %37, %38, %cst_32 {dimension_numbers = #tpu.dot_dimension_numbers<[1], [0], [0], [1], [0, 0, 1, 1], [], []>} : vector<24x128xbf16>, vector<128x128xbf16>, vector<24x128xf32> -> vector<24x128xf32>
    %40 = arith.addf %35, %39 : vector<24x128xf32>
    %c0_33 = arith.constant 0 : index
    %c14 = arith.constant 14 : index
    %c0_34 = arith.constant 0 : index
    %41 = vector.load %arg1[%c0_33, %c14, %c0_34] : memref<1x42x128xbf16, #tpu.memory_space<vmem>>, vector<1x24x128xbf16>
    %42 = vector.shape_cast %41 : vector<1x24x128xbf16> to vector<24x128xbf16>
    %c1024 = arith.constant 1024 : index
    %c0_35 = arith.constant 0 : index
    %43 = vector.load %arg2[%c1024, %c0_35] : memref<1152x128xbf16, #tpu.memory_space<vmem>>, vector<128x128xbf16>
    %cst_36 = arith.constant dense<0.000000e+00> : vector<24x128xf32>
    %44 = tpu.matmul %42, %43, %cst_36 {dimension_numbers = #tpu.dot_dimension_numbers<[1], [0], [0], [1], [0, 0, 1, 1], [], []>} : vector<24x128xbf16>, vector<128x128xbf16>, vector<24x128xf32> -> vector<24x128xf32>
    %45 = arith.addf %40, %44 : vector<24x128xf32>
    %c0_37 = arith.constant 0 : index
    %c0_38 = arith.constant 0 : index
    %46 = vector.load %arg3[%c0_37, %c0_38] : memref<1x128xf32, #tpu.memory_space<vmem>>, vector<1x128xf32>
    %47 = vector.broadcast %46 : vector<1x128xf32> to vector<24x128xf32>
    %48 = arith.addf %45, %47 : vector<24x128xf32>
    %cst_39 = arith.constant 0.000000e+00 : f32
    %49 = vector.broadcast %cst_39 : f32 to vector<24x128xf32>
    %50 = arith.maximumf %48, %49 : vector<24x128xf32>
    %c0_40 = arith.constant 0 : index
    %c0_41 = arith.constant 0 : index
    %51 = vector.load %arg4[%c0_40, %c0_41] : memref<24x1xf32, #tpu.memory_space<vmem>>, vector<24x1xf32>
    %52 = vector.broadcast %51 : vector<24x1xf32> to vector<24x128xf32>
    %53 = arith.mulf %50, %52 : vector<24x128xf32>
    %cst_42 = arith.constant 0.000000e+00 : bf16
    %54 = vector.broadcast %cst_42 : bf16 to vector<7x128xbf16>
    %c0_43 = arith.constant 0 : index
    %c0_44 = arith.constant 0 : index
    %c0_45 = arith.constant 0 : index
    %55 = vector.load %arg5[%c0_43, %c0_44, %c0_45] : memref<1x42x128xbf16, #tpu.memory_space<vmem>>, vector<1x7x128xbf16>
    %56 = vector.shape_cast %55 : vector<1x7x128xbf16> to vector<7x128xbf16>
    %57 = vector.shape_cast %54 : vector<7x128xbf16> to vector<1x7x128xbf16>
    tpu.vector_store %arg5[%c0_43, %c0_44, %c0_45], %57 {strides = array<i32>} : memref<1x42x128xbf16, #tpu.memory_space<vmem>>, vector<1x7x128xbf16>,
    %58 = arith.truncf %53 : vector<24x128xf32> to vector<24x128xbf16>
    %c0_46 = arith.constant 0 : index
    %c7_47 = arith.constant 7 : index
    %c0_48 = arith.constant 0 : index
    %59 = vector.load %arg5[%c0_46, %c7_47, %c0_48] : memref<1x42x128xbf16, #tpu.memory_space<vmem>>, vector<1x24x128xbf16>
    %60 = vector.shape_cast %59 : vector<1x24x128xbf16> to vector<24x128xbf16>
    %61 = vector.shape_cast %58 : vector<24x128xbf16> to vector<1x24x128xbf16>
    tpu.vector_store %arg5[%c0_46, %c7_47, %c0_48], %61 {strides = array<i32>} : memref<1x42x128xbf16, #tpu.memory_space<vmem>>, vector<1x24x128xbf16>,
    %cst_49 = arith.constant 0.000000e+00 : bf16
    %62 = vector.broadcast %cst_49 : bf16 to vector<11x128xbf16>
    %c0_50 = arith.constant 0 : index
    %c31 = arith.constant 31 : index
    %c0_51 = arith.constant 0 : index
    %63 = vector.load %arg5[%c0_50, %c31, %c0_51] : memref<1x42x128xbf16, #tpu.memory_space<vmem>>, vector<1x11x128xbf16>
    %64 = vector.shape_cast %63 : vector<1x11x128xbf16> to vector<11x128xbf16>
    %65 = vector.shape_cast %62 : vector<11x128xbf16> to vector<1x11x128xbf16>
    tpu.vector_store %arg5[%c0_50, %c31, %c0_51], %65 {strides = array<i32>} : memref<1x42x128xbf16, #tpu.memory_space<vmem>>, vector<1x11x128xbf16>,
    return
  }
  func.func @transform_0(%arg0: i32) -> (i32, i32, i32) {
    %c0_i32 = arith.constant 0 : i32
    %c0_i32_0 = arith.constant 0 : i32
    %c0_i32_1 = arith.constant 0 : i32
    return %arg0, %c0_i32, %c0_i32_0 : i32, i32, i32
  }
  func.func @transform_1(%arg0: i32) -> (i32, i32) {
    %c0_i32 = arith.constant 0 : i32
    %c0_i32_0 = arith.constant 0 : i32
    %c0_i32_1 = arith.constant 0 : i32
    return %c0_i32, %c0_i32_0 : i32, i32
  }
  func.func @transform_2(%arg0: i32) -> (i32, i32) {
    %c0_i32 = arith.constant 0 : i32
    %c0_i32_0 = arith.constant 0 : i32
    %c0_i32_1 = arith.constant 0 : i32
    return %c0_i32, %c0_i32_0 : i32, i32
  }
  func.func @transform_3(%arg0: i32) -> (i32, i32) {
    %c0_i32 = arith.constant 0 : i32
    %c0_i32_0 = arith.constant 0 : i32
    %c0_i32_1 = arith.constant 0 : i32
    return %c0_i32, %c0_i32_0 : i32, i32
  }
  func.func @transform_4(%arg0: i32) -> (i32, i32, i32) {
    %c0_i32 = arith.constant 0 : i32
    %c0_i32_0 = arith.constant 0 : i32
    %c0_i32_1 = arith.constant 0 : i32
    return %arg0, %c0_i32, %c0_i32_0 : i32, i32, i32
  }
}

</mosaic_0001>

<llo_original>
// kernel: colornet_forward.10
$region0: #{colornet_forward.10}
  #allocation0 [shape = 'u32[]', space=smem, size = 0x4, offset = 0x4, fixed_abs, tag = 'smem constant byte address 0x4 - core index']
  #allocation1 [shape = 'u32[144,128]{1,0:T(1,128)}', space=vmem, size = 0x12000, scoped, tag = 'internal scratch']
  %s0 = inlined_call_operand.vmem [shape: bf16[512,56], index: 0, kind: input, shape index: {}]
  %s1 = inlined_call_operand.vmem [shape: bf16[56,64], index: 1, kind: input, shape index: {}]
  %s2 = inlined_call_operand.vmem [shape: f32[1,64], index: 2, kind: input, shape index: {}]
  %s3 = inlined_call_operand.vmem [shape: bf16[512,64], index: 3, kind: output, shape index: {}]
  %s4 = sld [smem:[#allocation0]]
  $region45: #{colornet_forward.10} parent=0
    _
  %s6 = ssub.s32 1, %s4
  %s7 = scalar_select 0, %s6, %s4
  loop: start=0, step=1, limit=4
  $region2: #{colornet_forward.10} parent=0 // loop_pre_header
    _
  $region3: #{colornet_forward.10} parent=0 // loop_header
    %s9 = sphi 0, %s13
    %p10 = scmp.ge.s32.totalorder %s9, 4
    %s19 = sphi 0, %s21
    %s22 = sphi 0, %s19
    %s23 = sphi 0, %s22
    %s39 = sphi 0, %s23
    %s43 = sphi 0, %s43
    %s45 = sphi 0, %s43
    %s46 = sphi 0, %s45
    %s60 = sphi 0, %s46
    %s64 = sphi 0, %s64
    %s66 = sphi 0, %s64
    %s67 = sphi 0, %s66
    %s81 = sphi 0, %s67
    %s87 = sphi 0, %s89
    %s90 = sphi 0, %s87
    %s91 = sphi 0, %s90
    %s107 = sphi 0, %s91
  $region4: #{colornet_forward.10} parent=0 // loop_header_branch
    %12 = sbr.rel (%p10) target = $region8
  $region5: #{colornet_forward.10} parent=0 // loop_body
    %s14 = ssub.s32 %s9, 1
    %s15 = ssub.s32 %s9, 2
    %s16 = sadd.s32 %s9, 1
    %s17 = ssub.s32 %s9, %s16
    %p18 = scmp.eq.s32.totalorder %s17, 0
    %s20 = sadd.s32 %s19, 1
    %s21 = scalar_select %p18, %s19, %s20
    %p24 = pneg %p18
    %p25 = scmp.eq.s32.totalorder %s9, 1
    %p26 = por %p24, %p25
    %p27 = scmp.ne.s32.totalorder %s19, %s22
    %p28 = scmp.eq.s32.totalorder %s9, 0
    %p29 = por %p27, %p28
    %p30 = scmp.ne.s32.totalorder %s19, %s22
    %p31 = scmp.eq.s32.totalorder %s14, 1
    %p32 = por %p30, %p31
    %p33 = scmp.ne.s32.totalorder %s22, %s23
    %p34 = scmp.eq.s32.totalorder %s14, 0
    %p35 = por %p33, %p34
    %p36 = scmp.ne.s32.totalorder %s22, %s23
    %p37 = scmp.eq.s32.totalorder %s15, 1
    %p38 = por %p36, %p37
    %p40 = scmp.ne.s32.totalorder %s23, %s39
    %p41 = scmp.eq.s32.totalorder %s15, 0
    %p42 = por %p40, %p41
    %s44 = sadd.s32 %s43, 1
    %p47 = scmp.eq.s32.totalorder %s9, 1
    %p48 = scmp.ne.s32.totalorder %s43, %s45
    %p49 = scmp.eq.s32.totalorder %s9, 0
    %p50 = por %p48, %p49
    %p51 = scmp.ne.s32.totalorder %s43, %s45
    %p52 = scmp.eq.s32.totalorder %s14, 1
    %p53 = por %p51, %p52
    %p54 = scmp.ne.s32.totalorder %s45, %s46
    %p55 = scmp.eq.s32.totalorder %s14, 0
    %p56 = por %p54, %p55
    %p57 = scmp.ne.s32.totalorder %s45, %s46
    %p58 = scmp.eq.s32.totalorder %s15, 1
    %p59 = por %p57, %p58
    %p61 = scmp.ne.s32.totalorder %s46, %s60
    %p62 = scmp.eq.s32.totalorder %s15, 0
    %p63 = por %p61, %p62
    %s65 = sadd.s32 %s64, 1
    %p68 = scmp.eq.s32.totalorder %s9, 1
    %p69 = scmp.ne.s32.totalorder %s64, %s66
    %p70 = scmp.eq.s32.totalorder %s9, 0
    %p71 = por %p69, %p70
    %p72 = scmp.ne.s32.totalorder %s64, %s66
    %p73 = scmp.eq.s32.totalorder %s14, 1
    %p74 = por %p72, %p73
    %p75 = scmp.ne.s32.totalorder %s66, %s67
    %p76 = scmp.eq.s32.totalorder %s14, 0
    %p77 = por %p75, %p76
    %p78 = scmp.ne.s32.totalorder %s66, %s67
    %p79 = scmp.eq.s32.totalorder %s15, 1
    %p80 = por %p78, %p79
    %p82 = scmp.ne.s32.totalorder %s67, %s81
    %p83 = scmp.eq.s32.totalorder %s15, 0
    %p84 = por %p82, %p83
    %s85 = ssub.s32 %s9, %s16
    %p86 = scmp.eq.s32.totalorder %s85, 0
    %s88 = sadd.s32 %s87, 1
    %s89 = scalar_select %p86, %s87, %s88
    %p92 = pneg %p86
    %p93 = scmp.eq.s32.totalorder %s9, 1
    %p94 = por %p92, %p93
    %p95 = scmp.ne.s32.totalorder %s87, %s90
    %p96 = scmp.eq.s32.totalorder %s9, 0
    %p97 = por %p95, %p96
    %p98 = scmp.ne.s32.totalorder %s87, %s90
    %p99 = scmp.eq.s32.totalorder %s14, 1
    %p100 = por %p98, %p99
    %p101 = scmp.ne.s32.totalorder %s90, %s91
    %p102 = scmp.eq.s32.totalorder %s14, 0
    %p103 = por %p101, %p102
    %p104 = scmp.ne.s32.totalorder %s90, %s91
    %p105 = scmp.eq.s32.totalorder %s15, 1
    %p106 = por %p104, %p105
    %p108 = scmp.ne.s32.totalorder %s91, %s107
    %p109 = scmp.eq.s32.totalorder %s15, 0
    %p110 = por %p108, %p109
    %p111 = scmp.le.s32.totalorder 1, %s9
    %p112 = scmp.lt.s32.totalorder %s9, 3
    %p113 = pnand %p111, %p112
    %p114 = pneg %p113
    // Predicated region
    $region9: #{colornet_forward.10} parent=5 // pred_check
      _
    $region10: #{colornet_forward.10} parent=5 // pred_check_branch
      %116 = sbr.rel (%p113) target = $region12
    $region11: #{colornet_forward.10} parent=5 // pred_region
      %s117 = ssub.s32 %s9, 1
      // Predicated region
      $region13: #{colornet_forward.10} parent=11 // pred_check
        %p118 = pneg %p56
      $region14: #{colornet_forward.10} parent=11 // pred_check_branch
        %120 = sbr.rel (%p118) target = $region16
      $region15: #{colornet_forward.10} parent=11 // pred_region
        _
      $region16: #{colornet_forward.10} parent=11 // pred_fallthru
        _
      // Predicated region
      $region17: #{colornet_forward.10} parent=11 // pred_check
        %p121 = pneg %p77
      $region18: #{colornet_forward.10} parent=11 // pred_check_branch
        %123 = sbr.rel (%p121) target = $region20
      $region19: #{colornet_forward.10} parent=11 // pred_region
        _
      $region20: #{colornet_forward.10} parent=11 // pred_fallthru
        _
    $region12: #{colornet_forward.10} parent=5 // pred_fallthru
      _
    %p124 = scmp.lt.s32.totalorder %s9, 2
    // Predicated region
    $region21: #{colornet_forward.10} parent=5 // pred_check
      %p125 = pneg %p124
    $region22: #{colornet_forward.10} parent=5 // pred_check_branch
      %127 = sbr.rel (%p125) target = $region24
    $region23: #{colornet_forward.10} parent=5 // pred_region
      // Predicated region
      $region25: #{colornet_forward.10} parent=23 // pred_check
        %p128 = pneg %p29
      $region26: #{colornet_forward.10} parent=23 // pred_check_branch
        %130 = sbr.rel (%p128) target = $region28
      $region27: #{colornet_forward.10} parent=23 // pred_region
        %s131 = smul.u32 32, %s9
        %p132 = scmp.lt.s32.totalorder %s131, 63
        %s133 = scalar_select %p132, %s131, 63
        %s134 = smul.addr %s133, 4
        %s135 = scalar_lea.vmem %s0, %s134
        %s136 = smul.u32 32, %s9
      $region28: #{colornet_forward.10} parent=23 // pred_fallthru
        _
    $region24: #{colornet_forward.10} parent=5 // pred_fallthru
      _
    %p137 = scmp.le.s32.totalorder 1, %s9
    %p138 = scmp.lt.s32.totalorder %s9, 3
    %p139 = pnand %p137, %p138
    %p140 = pneg %p139
    // Predicated region
    $region29: #{colornet_forward.10} parent=5 // pred_check
      _
    $region30: #{colornet_forward.10} parent=5 // pred_check_branch
      %142 = sbr.rel (%p139) target = $region32
    $region31: #{colornet_forward.10} parent=5 // pred_region
      %s143 = ssub.s32 %s9, 1
      %s144 = smul.u32 32, %s14
      %p145 = scmp.lt.s32.totalorder %s144, 63
      %s146 = scalar_select %p145, %s144, 63
      %s147 = smul.addr %s146, 4
      %s148 = scalar_lea.vmem %s0, %s147
      %p149 = pneg %p35
      %p150 = pneg %p32
      %p151 = pneg %p56
      %p152 = pneg %p53
      %p153 = pneg %p77
      %p154 = pneg %p74
      %p155 = pneg %p103
      %p156 = pneg %p100
      %s157 = smul.u32 32, %s14
      %p158 = scmp.lt.s32.totalorder %s157, 63
      %s159 = scalar_select %p158, %s157, 63
      %s160 = smul.addr %s159, 4
      %s161 = scalar_lea.vmem %s3, %s160
      %s162 = smul.u32 32, %s14
      %p163 = scmp.lt.s32.totalorder %s162, 63
      %s164 = scalar_select %p163, %s162, 63
      %s165 = smul.addr %s164, 4
      %s166 = scalar_lea.vmem %s0, %s165
      %s167 = smul.u32 32, %s14
      %s168 = smul.u32 32, %s14
      %p169 = scmp.lt.s32.totalorder %s168, 63
      %s170 = scalar_select %p169, %s168, 63
      %s171 = smul.addr %s170, 4
      %s172 = scalar_lea.vmem %s3, %s171
      %s173 = smul.u32 32, %s14
      %v175 = vld [vmem:[%s166] sm:$0xf]
      %v176 = vld [vmem:[%s166 + $0x4] sm:$0xf]
      %v177 = vld [vmem:[%s166 + $0x8] sm:$0xf]
      %v178 = vld [vmem:[%s166 + $0xc] sm:$0xf]
      %v179 = vld [vmem:[%s166 + $0x10] sm:$0xf]
      %v180 = vld [vmem:[%s166 + $0x14] sm:$0xf]
      %v181 = vld [vmem:[%s166 + $0x18] sm:$0xf]
      %v182 = vld [vmem:[%s166 + $0x1c] sm:$0xf]
      %v183 = vld [vmem:[%s166 + $0x20] sm:$0xf]
      %v184 = vld [vmem:[%s166 + $0x24] sm:$0xf]
      %v185 = vld [vmem:[%s166 + $0x28] sm:$0xf]
      %v186 = vld [vmem:[%s166 + $0x2c] sm:$0xf]
      %v187 = vld [vmem:[%s166 + $0x30] sm:$0xf]
      %v188 = vld [vmem:[%s166 + $0x34] sm:$0xf]
      %v189 = vld [vmem:[%s166 + $0x38] sm:$0xf]
      %v190 = vld [vmem:[%s166 + $0x3c] sm:$0xf]
      %v191 = vld [vmem:[%s166 + $0x40] sm:$0xf]
      %v192 = vld [vmem:[%s166 + $0x44] sm:$0xf]
      %v193 = vld [vmem:[%s166 + $0x48] sm:$0xf]
      %v194 = vld [vmem:[%s166 + $0x4c] sm:$0xf]
      %v195 = vld [vmem:[%s166 + $0x50] sm:$0xf]
      %v196 = vld [vmem:[%s166 + $0x54] sm:$0xf]
      %v197 = vld [vmem:[%s166 + $0x58] sm:$0xf]
      %v198 = vld [vmem:[%s166 + $0x5c] sm:$0xf]
      %v199 = vld [vmem:[%s166 + $0x60] sm:$0xf]
      %v200 = vld [vmem:[%s166 + $0x64] sm:$0xf]
      %v201 = vld [vmem:[%s166 + $0x68] sm:$0xf]
      %v202 = vld [vmem:[%s166 + $0x6c] sm:$0xf]
      %v203 = vld [vmem:[%s166 + $0x70] sm:$0xf]
      %v204 = vld [vmem:[%s166 + $0x74] sm:$0xf]
      %v205 = vld [vmem:[%s166 + $0x78] sm:$0xf]
      %v206 = vld [vmem:[%s166 + $0x7c] sm:$0xf]
      %v207 = vld [vmem:[%s1] sm:$0xf]
      %v208 = vld [vmem:[%s1 + $0x4] sm:$0xf]
      %v209 = vld [vmem:[%s1 + $0x8] sm:$0xf]
      %v210 = vld [vmem:[%s1 + $0xc] sm:$0xf]
      %v211 = vld [vmem:[%s1 + $0x10] sm:$0xf]
      %v212 = vld [vmem:[%s1 + $0x14] sm:$0xf]
      %v213 = vld [vmem:[%s1 + $0x18] sm:$0xf]
      %v214 = vld [vmem:[%s2] sm:$0x1]
      %v216 = vlaneseq
      %v217 = vshrl.u32 %v216, 7
      %v218 = vsub.s32 0, %v217
      %v219 = vrot.slane %v214, %v218
      %v253 = vunpack.c.l.b16 %v175
      %v254 = vunpack.c.l.b16 %v176
      %v255 = vunpack.c.l.b16 %v177
      %v256 = vunpack.c.l.b16 %v178
      %v257 = vunpack.c.l.b16 %v179
      %v258 = vunpack.c.l.b16 %v180
      %v259 = vunpack.c.l.b16 %v181
      %v260 = vunpack.c.l.b16 %v182
      %v261 = vunpack.c.l.b16 %v183
      %v262 = vunpack.c.l.b16 %v184
      %v263 = vunpack.c.l.b16 %v185
      %v264 = vunpack.c.l.b16 %v186
      %v265 = vunpack.c.l.b16 %v187
      %v266 = vunpack.c.l.b16 %v188
      %v267 = vunpack.c.l.b16 %v189
      %v268 = vunpack.c.l.b16 %v190
      %v269 = vunpack.c.l.b16 %v191
      %v270 = vunpack.c.l.b16 %v192
      %v271 = vunpack.c.l.b16 %v193
      %v272 = vunpack.c.l.b16 %v194
      %v273 = vunpack.c.l.b16 %v195
      %v274 = vunpack.c.l.b16 %v196
      %v275 = vunpack.c.l.b16 %v197
      %v276 = vunpack.c.l.b16 %v198
      %v277 = vunpack.c.l.b16 %v199
      %v278 = vunpack.c.l.b16 %v200
      %v279 = vunpack.c.l.b16 %v201
      %v280 = vunpack.c.l.b16 %v202
      %v281 = vunpack.c.l.b16 %v203
      %v282 = vunpack.c.l.b16 %v204
      %v283 = vunpack.c.l.b16 %v205
      %v284 = vunpack.c.l.b16 %v206
      %v285 = vpack.c.b16 %v254, %v253
      %v286 = vpack.c.b16 %v256, %v255
      %v287 = vpack.c.b16 %v258, %v257
      %v288 = vpack.c.b16 %v260, %v259
      %v289 = vpack.c.b16 %v262, %v261
      %v290 = vpack.c.b16 %v264, %v263
      %v291 = vpack.c.b16 %v266, %v265
      %v292 = vpack.c.b16 %v268, %v267
      %v293 = vpack.c.b16 %v270, %v269
      %v294 = vpack.c.b16 %v272, %v271
      %v295 = vpack.c.b16 %v274, %v273
      %v296 = vpack.c.b16 %v276, %v275
      %v297 = vpack.c.b16 %v278, %v277
      %v298 = vpack.c.b16 %v280, %v279
      %v299 = vpack.c.b16 %v282, %v281
      %v300 = vpack.c.b16 %v284, %v283
      %v308 = vunpack.c.l.b16 %v207
      %v309 = vunpack.c.l.b16 %v208
      %v310 = vunpack.c.l.b16 %v209
      %v311 = vunpack.c.l.b16 %v210
      %v312 = vunpack.c.l.b16 %v211
      %v313 = vunpack.c.l.b16 %v212
      %v314 = vunpack.c.l.b16 %v213
      %v315 = vpack.c.b16 %v309, %v308
      %v316 = vpack.c.b16 %v311, %v310
      %v317 = vpack.c.b16 %v313, %v312
      %v318 = vpack.c.b16 %v314, %v314
      %vm322 = vcmask 457728
      %v324 = vsel %vm322, %v285, 0
      %v327 = vsel %vm322, %v286, 0
      %v330 = vsel %vm322, %v287, 0
      %v333 = vsel %vm322, %v288, 0
      %v336 = vsel %vm322, %v289, 0
      %v339 = vsel %vm322, %v290, 0
      %v342 = vsel %vm322, %v291, 0
      %v345 = vsel %vm322, %v292, 0
      %v348 = vsel %vm322, %v293, 0
      %v351 = vsel %vm322, %v294, 0
      %v354 = vsel %vm322, %v295, 0
      %v357 = vsel %vm322, %v296, 0
      %v360 = vsel %vm322, %v297, 0
      %v363 = vsel %vm322, %v298, 0
      %v366 = vsel %vm322, %v299, 0
      %v369 = vsel %vm322, %v300, 0
      %vm371 = vcmask 1043456
      %v373 = vsel %vm371, %v318, 0
      %375 = vmatprep.subr.bf16.mxu0 0
      %376 = vmatpush1.bf16.msra.mxu0 0
      %377 = vmatprep.subr.bf16.mxu0 0
      %378 = vmatpush1.bf16.msra.mxu0 0
      %379 = vmatprep.subr.bf16.mxu0 0
      %380 = vmatpush1.bf16.msra.mxu0 0
      %381 = vmatprep.subr.bf16.mxu0 0
      %382 = vmatpush1.bf16.msra.mxu0 0
      %383 = vmatprep.subr.bf16.mxu0 0
      %384 = vmatpush1.bf16.msra.mxu0 %v373
      %385 = vmatprep.subr.bf16.mxu0 0
      %386 = vmatpush1.bf16.msra.mxu0 %v317
      %387 = vmatprep.subr.bf16.mxu0 0
      %388 = vmatpush1.bf16.msra.mxu0 %v316
      %389 = vmatprep.subr.bf16.mxu0 0
      %390 = vmatpush1.bf16.msra.mxu0 %v315
      %391 = vmatprep.subr.bf16.mxu0 0
      %392 = vmatpush2.bf16.msra.mxu0 0
      %393 = vmatprep.subr.bf16.mxu0 0
      %394 = vmatpush2.bf16.msra.mxu0 0
      %395 = vmatprep.subr.bf16.mxu0 0
      %396 = vmatpush2.bf16.msra.mxu0 0
      %397 = vmatprep.subr.bf16.mxu0 0
      %398 = vmatpush2.bf16.msra.mxu0 0
      %399 = vmatprep.subr.bf16.mxu0 0
      %400 = vmatpush2.bf16.msra.mxu0 0
      %401 = vmatprep.subr.bf16.mxu0 0
      %402 = vmatpush2.bf16.msra.mxu0 0
      %403 = vmatprep.subr.bf16.mxu0 0
      %404 = vmatpush2.bf16.msra.mxu0 0
      %405 = vmatprep.subr.bf16.mxu0 0
      %406 = vmatpush2.bf16.msra.mxu0 0
      %407 = vmatprep.mubr.bf16.mxu0 0
      %408 = vmatmul.mubr.bf16.gmra.mxu0 %v324
      %v409 = vpop.f32.mrf.mxu0
      %v410 = vadd.f32 %v219, %v409
      %v411 = vpop.f32.mrf.mxu0
      %v412 = vpop.f32.mrf.mxu0
      %v413 = vadd.f32 %v219, %v412
      %v414 = vpop.f32.mrf.mxu0
      %415 = vmatprep.mubr.bf16.mxu0 0
      %416 = vmatmul.mubr.bf16.gmra.mxu0 %v327
      %v417 = vpop.f32.mrf.mxu0
      %v418 = vadd.f32 %v219, %v417
      %v419 = vpop.f32.mrf.mxu0
      %v420 = vpop.f32.mrf.mxu0
      %v421 = vadd.f32 %v219, %v420
      %v422 = vpop.f32.mrf.mxu0
      %423 = vmatprep.mubr.bf16.mxu0 0
      %424 = vmatmul.mubr.bf16.gmra.mxu0 %v330
      %v425 = vpop.f32.mrf.mxu0
      %v426 = vadd.f32 %v219, %v425
      %v427 = vpop.f32.mrf.mxu0
      %v428 = vpop.f32.mrf.mxu0
      %v429 = vadd.f32 %v219, %v428
      %v430 = vpop.f32.mrf.mxu0
      %431 = vmatprep.mubr.bf16.mxu0 0
      %432 = vmatmul.mubr.bf16.gmra.mxu0 %v333
      %v433 = vpop.f32.mrf.mxu0
      %v434 = vadd.f32 %v219, %v433
      %v435 = vpop.f32.mrf.mxu0
      %v436 = vpop.f32.mrf.mxu0
      %v437 = vadd.f32 %v219, %v436
      %v438 = vpop.f32.mrf.mxu0
      %439 = vmatprep.mubr.bf16.mxu0 0
      %440 = vmatmul.mubr.bf16.gmra.mxu0 %v336
      %v441 = vpop.f32.mrf.mxu0
      %v442 = vadd.f32 %v219, %v441
      %v443 = vpop.f32.mrf.mxu0
      %v444 = vpop.f32.mrf.mxu0
      %v445 = vadd.f32 %v219, %v444
      %v446 = vpop.f32.mrf.mxu0
      %447 = vmatprep.mubr.bf16.mxu0 0
      %448 = vmatmul.mubr.bf16.gmra.mxu0 %v339
      %v449 = vpop.f32.mrf.mxu0
      %v450 = vadd.f32 %v219, %v449
      %v451 = vpop.f32.mrf.mxu0
      %v452 = vpop.f32.mrf.mxu0
      %v453 = vadd.f32 %v219, %v452
      %v454 = vpop.f32.mrf.mxu0
      %455 = vmatprep.mubr.bf16.mxu0 0
      %456 = vmatmul.mubr.bf16.gmra.mxu0 %v342
      %v457 = vpop.f32.mrf.mxu0
      %v458 = vadd.f32 %v219, %v457
      %v459 = vpop.f32.mrf.mxu0
      %v460 = vpop.f32.mrf.mxu0
      %v461 = vadd.f32 %v219, %v460
      %v462 = vpop.f32.mrf.mxu0
      %463 = vmatprep.mubr.bf16.mxu0 0
      %464 = vmatmul.mubr.bf16.gmra.mxu0 %v345
      %v465 = vpop.f32.mrf.mxu0
      %v466 = vadd.f32 %v219, %v465
      %v467 = vpop.f32.mrf.mxu0
      %v468 = vpop.f32.mrf.mxu0
      %v469 = vadd.f32 %v219, %v468
      %v470 = vpop.f32.mrf.mxu0
      %471 = vmatprep.mubr.bf16.mxu0 0
      %472 = vmatmul.mubr.bf16.gmra.mxu0 %v348
      %v473 = vpop.f32.mrf.mxu0
      %v474 = vadd.f32 %v219, %v473
      %v475 = vpop.f32.mrf.mxu0
      %v476 = vpop.f32.mrf.mxu0
      %v477 = vadd.f32 %v219, %v476
      %v478 = vpop.f32.mrf.mxu0
      %479 = vmatprep.mubr.bf16.mxu0 0
      %480 = vmatmul.mubr.bf16.gmra.mxu0 %v351
      %v481 = vpop.f32.mrf.mxu0
      %v482 = vadd.f32 %v219, %v481
      %v483 = vpop.f32.mrf.mxu0
      %v484 = vpop.f32.mrf.mxu0
      %v485 = vadd.f32 %v219, %v484
      %v486 = vpop.f32.mrf.mxu0
      %487 = vmatprep.mubr.bf16.mxu0 0
      %488 = vmatmul.mubr.bf16.gmra.mxu0 %v354
      %v489 = vpop.f32.mrf.mxu0
      %v490 = vadd.f32 %v219, %v489
      %v491 = vpop.f32.mrf.mxu0
      %v492 = vpop.f32.mrf.mxu0
      %v493 = vadd.f32 %v219, %v492
      %v494 = vpop.f32.mrf.mxu0
      %495 = vmatprep.mubr.bf16.mxu0 0
      %496 = vmatmul.mubr.bf16.gmra.mxu0 %v357
      %v497 = vpop.f32.mrf.mxu0
      %v498 = vadd.f32 %v219, %v497
      %v499 = vpop.f32.mrf.mxu0
      %v500 = vpop.f32.mrf.mxu0
      %v501 = vadd.f32 %v219, %v500
      %v502 = vpop.f32.mrf.mxu0
      %503 = vmatprep.mubr.bf16.mxu0 0
      %504 = vmatmul.mubr.bf16.gmra.mxu0 %v360
      %v505 = vpop.f32.mrf.mxu0
      %v506 = vadd.f32 %v219, %v505
      %v507 = vpop.f32.mrf.mxu0
      %v508 = vpop.f32.mrf.mxu0
      %v509 = vadd.f32 %v219, %v508
      %v510 = vpop.f32.mrf.mxu0
      %511 = vmatprep.mubr.bf16.mxu0 0
      %512 = vmatmul.mubr.bf16.gmra.mxu0 %v363
      %v513 = vpop.f32.mrf.mxu0
      %v514 = vadd.f32 %v219, %v513
      %v515 = vpop.f32.mrf.mxu0
      %v516 = vpop.f32.mrf.mxu0
      %v517 = vadd.f32 %v219, %v516
      %v518 = vpop.f32.mrf.mxu0
      %519 = vmatprep.mubr.bf16.mxu0 0
      %520 = vmatmul.mubr.bf16.gmra.mxu0 %v366
      %v521 = vpop.f32.mrf.mxu0
      %v522 = vadd.f32 %v219, %v521
      %v523 = vpop.f32.mrf.mxu0
      %v524 = vpop.f32.mrf.mxu0
      %v525 = vadd.f32 %v219, %v524
      %v526 = vpop.f32.mrf.mxu0
      %527 = vmatprep.mubr.bf16.mxu0 0
      %528 = vmatmul.mubr.bf16.gmra.mxu0 %v369
      %v529 = vpop.f32.mrf.mxu0
      %v530 = vadd.f32 %v219, %v529
      %v531 = vpop.f32.mrf.mxu0
      %v532 = vpop.f32.mrf.mxu0
      %v533 = vadd.f32 %v219, %v532
      %v534 = vpop.f32.mrf.mxu0
      %535 = vdwg.mxu0
      %v536 = vmax.f32 %v410, 0.0
      %v537 = vmax.f32 %v413, 0.0
      %v538 = vmax.f32 %v418, 0.0
      %v539 = vmax.f32 %v421, 0.0
      %v540 = vmax.f32 %v426, 0.0
      %v541 = vmax.f32 %v429, 0.0
      %v542 = vmax.f32 %v434, 0.0
      %v543 = vmax.f32 %v437, 0.0
      %v544 = vmax.f32 %v442, 0.0
      %v545 = vmax.f32 %v445, 0.0
      %v546 = vmax.f32 %v450, 0.0
      %v547 = vmax.f32 %v453, 0.0
      %v548 = vmax.f32 %v458, 0.0
      %v549 = vmax.f32 %v461, 0.0
      %v550 = vmax.f32 %v466, 0.0
      %v551 = vmax.f32 %v469, 0.0
      %v552 = vmax.f32 %v474, 0.0
      %v553 = vmax.f32 %v477, 0.0
      %v554 = vmax.f32 %v482, 0.0
      %v555 = vmax.f32 %v485, 0.0
      %v556 = vmax.f32 %v490, 0.0
      %v557 = vmax.f32 %v493, 0.0
      %v558 = vmax.f32 %v498, 0.0
      %v559 = vmax.f32 %v501, 0.0
      %v560 = vmax.f32 %v506, 0.0
      %v561 = vmax.f32 %v509, 0.0
      %v562 = vmax.f32 %v514, 0.0
      %v563 = vmax.f32 %v517, 0.0
      %v564 = vmax.f32 %v522, 0.0
      %v565 = vmax.f32 %v525, 0.0
      %v566 = vmax.f32 %v530, 0.0
      %v567 = vmax.f32 %v533, 0.0
      %v568 = vpack.c.bf16 %v537, %v536
      %v569 = vpack.c.bf16 %v539, %v538
      %v570 = vpack.c.bf16 %v541, %v540
      %v571 = vpack.c.bf16 %v543, %v542
      %v572 = vpack.c.bf16 %v545, %v544
      %v573 = vpack.c.bf16 %v547, %v546
      %v574 = vpack.c.bf16 %v549, %v548
      %v575 = vpack.c.bf16 %v551, %v550
      %v576 = vpack.c.bf16 %v553, %v552
      %v577 = vpack.c.bf16 %v555, %v554
      %v578 = vpack.c.bf16 %v557, %v556
      %v579 = vpack.c.bf16 %v559, %v558
      %v580 = vpack.c.bf16 %v561, %v560
      %v581 = vpack.c.bf16 %v563, %v562
      %v582 = vpack.c.bf16 %v565, %v564
      %v583 = vpack.c.bf16 %v567, %v566
      %v600 = vunpack.c.l.b16 %v568
      %v601 = vunpack.c.h.b16 %v568
      %v602 = vunpack.c.l.b16 %v569
      %v603 = vunpack.c.h.b16 %v569
      %v604 = vunpack.c.l.b16 %v570
      %v605 = vunpack.c.h.b16 %v570
      %v606 = vunpack.c.l.b16 %v571
      %v607 = vunpack.c.h.b16 %v571
      %v608 = vunpack.c.l.b16 %v572
      %v609 = vunpack.c.h.b16 %v572
      %v610 = vunpack.c.l.b16 %v573
      %v611 = vunpack.c.h.b16 %v573
      %v612 = vunpack.c.l.b16 %v574
      %v613 = vunpack.c.h.b16 %v574
      %v614 = vunpack.c.l.b16 %v575
      %v615 = vunpack.c.h.b16 %v575
      %v616 = vunpack.c.l.b16 %v576
      %v617 = vunpack.c.h.b16 %v576
      %v618 = vunpack.c.l.b16 %v577
      %v619 = vunpack.c.h.b16 %v577
      %v620 = vunpack.c.l.b16 %v578
      %v621 = vunpack.c.h.b16 %v578
      %v622 = vunpack.c.l.b16 %v579
      %v623 = vunpack.c.h.b16 %v579
      %v624 = vunpack.c.l.b16 %v580
      %v625 = vunpack.c.h.b16 %v580
      %v626 = vunpack.c.l.b16 %v581
      %v627 = vunpack.c.h.b16 %v581
      %v628 = vunpack.c.l.b16 %v582
      %v629 = vunpack.c.h.b16 %v582
      %v630 = vunpack.c.l.b16 %v583
      %v631 = vunpack.c.h.b16 %v583
      %v632 = vpack.c.b16 %v600, %v600
      %v633 = vpack.c.b16 %v601, %v601
      %v634 = vpack.c.b16 %v602, %v602
      %v635 = vpack.c.b16 %v603, %v603
      %v636 = vpack.c.b16 %v604, %v604
      %v637 = vpack.c.b16 %v605, %v605
      %v638 = vpack.c.b16 %v606, %v606
      %v639 = vpack.c.b16 %v607, %v607
      %v640 = vpack.c.b16 %v608, %v608
      %v641 = vpack.c.b16 %v609, %v609
      %v642 = vpack.c.b16 %v610, %v610
      %v643 = vpack.c.b16 %v611, %v611
      %v644 = vpack.c.b16 %v612, %v612
      %v645 = vpack.c.b16 %v613, %v613
      %v646 = vpack.c.b16 %v614, %v614
      %v647 = vpack.c.b16 %v615, %v615
      %v648 = vpack.c.b16 %v616, %v616
      %v649 = vpack.c.b16 %v617, %v617
      %v650 = vpack.c.b16 %v618, %v618
      %v651 = vpack.c.b16 %v619, %v619
      %v652 = vpack.c.b16 %v620, %v620
      %v653 = vpack.c.b16 %v621, %v621
      %v654 = vpack.c.b16 %v622, %v622
      %v655 = vpack.c.b16 %v623, %v623
      %v656 = vpack.c.b16 %v624, %v624
      %v657 = vpack.c.b16 %v625, %v625
      %v658 = vpack.c.b16 %v626, %v626
      %v659 = vpack.c.b16 %v627, %v627
      %v660 = vpack.c.b16 %v628, %v628
      %v661 = vpack.c.b16 %v629, %v629
      %v662 = vpack.c.b16 %v630, %v630
      %v663 = vpack.c.b16 %v631, %v631
      %vm696 = vcmask 519168
      %697 = vst.msk [vmem:[%s172] sm:$0xf] %vm696, %v632
      %698 = vst.msk [vmem:[%s172 + $0x4] sm:$0xf] %vm696, %v633
      %699 = vst.msk [vmem:[%s172 + $0x8] sm:$0xf] %vm696, %v634
      %700 = vst.msk [vmem:[%s172 + $0xc] sm:$0xf] %vm696, %v635
      %701 = vst.msk [vmem:[%s172 + $0x10] sm:$0xf] %vm696, %v636
      %702 = vst.msk [vmem:[%s172 + $0x14] sm:$0xf] %vm696, %v637
      %703 = vst.msk [vmem:[%s172 + $0x18] sm:$0xf] %vm696, %v638
      %704 = vst.msk [vmem:[%s172 + $0x1c] sm:$0xf] %vm696, %v639
      %705 = vst.msk [vmem:[%s172 + $0x20] sm:$0xf] %vm696, %v640
      %706 = vst.msk [vmem:[%s172 + $0x24] sm:$0xf] %vm696, %v641
      %707 = vst.msk [vmem:[%s172 + $0x28] sm:$0xf] %vm696, %v642
      %708 = vst.msk [vmem:[%s172 + $0x2c] sm:$0xf] %vm696, %v643
      %709 = vst.msk [vmem:[%s172 + $0x30] sm:$0xf] %vm696, %v644
      %710 = vst.msk [vmem:[%s172 + $0x34] sm:$0xf] %vm696, %v645
      %711 = vst.msk [vmem:[%s172 + $0x38] sm:$0xf] %vm696, %v646
      %712 = vst.msk [vmem:[%s172 + $0x3c] sm:$0xf] %vm696, %v647
      %713 = vst.msk [vmem:[%s172 + $0x40] sm:$0xf] %vm696, %v648
      %714 = vst.msk [vmem:[%s172 + $0x44] sm:$0xf] %vm696, %v649
      %715 = vst.msk [vmem:[%s172 + $0x48] sm:$0xf] %vm696, %v650
      %716 = vst.msk [vmem:[%s172 + $0x4c] sm:$0xf] %vm696, %v651
      %717 = vst.msk [vmem:[%s172 + $0x50] sm:$0xf] %vm696, %v652
      %718 = vst.msk [vmem:[%s172 + $0x54] sm:$0xf] %vm696, %v653
      %719 = vst.msk [vmem:[%s172 + $0x58] sm:$0xf] %vm696, %v654
      %720 = vst.msk [vmem:[%s172 + $0x5c] sm:$0xf] %vm696, %v655
      %721 = vst.msk [vmem:[%s172 + $0x60] sm:$0xf] %vm696, %v656
      %722 = vst.msk [vmem:[%s172 + $0x64] sm:$0xf] %vm696, %v657
      %723 = vst.msk [vmem:[%s172 + $0x68] sm:$0xf] %vm696, %v658
      %724 = vst.msk [vmem:[%s172 + $0x6c] sm:$0xf] %vm696, %v659
      %725 = vst.msk [vmem:[%s172 + $0x70] sm:$0xf] %vm696, %v660
      %726 = vst.msk [vmem:[%s172 + $0x74] sm:$0xf] %vm696, %v661
      %727 = vst.msk [vmem:[%s172 + $0x78] sm:$0xf] %vm696, %v662
      %728 = vst.msk [vmem:[%s172 + $0x7c] sm:$0xf] %vm696, %v663
      %s729 = smul.u32 32, %s14
      %p730 = scmp.lt.s32.totalorder %s729, 63
      %s731 = scalar_select %p730, %s729, 63
      %s732 = smul.addr %s731, 4
      %s733 = scalar_lea.vmem %s3, %s732
      // Predicated region
      $region33: #{colornet_forward.10} parent=31 // pred_check
        %p734 = pneg %p100
      $region34: #{colornet_forward.10} parent=31 // pred_check_branch
        %736 = sbr.rel (%p734) target = $region36
      $region35: #{colornet_forward.10} parent=31 // pred_region
        %s737 = smul.u32 32, %s14
      $region36: #{colornet_forward.10} parent=31 // pred_fallthru
        _
    $region32: #{colornet_forward.10} parent=5 // pred_fallthru
      _
    %p738 = scmp.le.s32.totalorder 2, %s9
    // Predicated region
    $region37: #{colornet_forward.10} parent=5 // pred_check
      %p739 = pneg %p738
    $region38: #{colornet_forward.10} parent=5 // pred_check_branch
      %741 = sbr.rel (%p739) target = $region40
    $region39: #{colornet_forward.10} parent=5 // pred_region
      %s742 = ssub.s32 %s9, 2
      // Predicated region
      $region41: #{colornet_forward.10} parent=39 // pred_check
        %p743 = pneg %p106
      $region42: #{colornet_forward.10} parent=39 // pred_check_branch
        %745 = sbr.rel (%p743) target = $region44
      $region43: #{colornet_forward.10} parent=39 // pred_region
        %s746 = smul.u32 32, %s15
        %p747 = scmp.lt.s32.totalorder %s746, 63
        %s748 = scalar_select %p747, %s746, 63
        %s749 = smul.addr %s748, 4
        %s750 = scalar_lea.vmem %s3, %s749
      $region44: #{colornet_forward.10} parent=39 // pred_fallthru
        _
    $region40: #{colornet_forward.10} parent=5 // pred_fallthru
      _
  $region6: #{colornet_forward.10} parent=0 // loop_footer
    %s13 = sadd.s32 1, %s9
  $region7: #{colornet_forward.10} parent=0 // loop_footer_branch
    %8 = sbr.rel target = $region3
  $region8: #{colornet_forward.10} parent=0 // loop_exit
    _

// kernel: colornet_forward.11
$region0: #{colornet_forward.11}
  #allocation0 [shape = 'u32[]', space=smem, size = 0x4, offset = 0x4, fixed_abs, tag = 'smem constant byte address 0x4 - core index']
  #allocation1 [shape = 'u32[144,128]{1,0:T(1,128)}', space=vmem, size = 0x12000, scoped, tag = 'internal scratch']
  %s0 = inlined_call_operand.vmem [shape: bf16[8,9,9,64], index: 0, kind: input, shape index: {}]
  %s1 = inlined_call_operand.vmem [shape: bf16[2,11,10,64], index: 1, kind: output, shape index: {}]
  %s2 = sld [smem:[#allocation0]]
  $region37: #{colornet_forward.11} parent=0
    _
  %s4 = ssub.s32 1, %s2
  %s5 = scalar_select 0, %s4, %s2
  loop: start=0, step=1, limit=4
  $region2: #{colornet_forward.11} parent=0 // loop_pre_header
    _
  $region3: #{colornet_forward.11} parent=0 // loop_header
    %s7 = sphi 0, %s11
    %p8 = scmp.ge.s32.totalorder %s7, 4
    %s17 = sphi 0, %s19
    %s20 = sphi 0, %s17
    %s21 = sphi 0, %s20
    %s37 = sphi 0, %s21
    %s43 = sphi 0, %s45
    %s46 = sphi 0, %s43
    %s47 = sphi 0, %s46
    %s63 = sphi 0, %s47
  $region4: #{colornet_forward.11} parent=0 // loop_header_branch
    %10 = sbr.rel (%p8) target = $region8
  $region5: #{colornet_forward.11} parent=0 // loop_body
    %s12 = ssub.s32 %s7, 1
    %s13 = ssub.s32 %s7, 2
    %s14 = sadd.s32 %s7, 1
    %s15 = ssub.s32 %s7, %s14
    %p16 = scmp.eq.s32.totalorder %s15, 0
    %s18 = sadd.s32 %s17, 1
    %s19 = scalar_select %p16, %s17, %s18
    %p22 = pneg %p16
    %p23 = scmp.eq.s32.totalorder %s7, 1
    %p24 = por %p22, %p23
    %p25 = scmp.ne.s32.totalorder %s17, %s20
    %p26 = scmp.eq.s32.totalorder %s7, 0
    %p27 = por %p25, %p26
    %p28 = scmp.ne.s32.totalorder %s17, %s20
    %p29 = scmp.eq.s32.totalorder %s12, 1
    %p30 = por %p28, %p29
    %p31 = scmp.ne.s32.totalorder %s20, %s21
    %p32 = scmp.eq.s32.totalorder %s12, 0
    %p33 = por %p31, %p32
    %p34 = scmp.ne.s32.totalorder %s20, %s21
    %p35 = scmp.eq.s32.totalorder %s13, 1
    %p36 = por %p34, %p35
    %p38 = scmp.ne.s32.totalorder %s21, %s37
    %p39 = scmp.eq.s32.totalorder %s13, 0
    %p40 = por %p38, %p39
    %s41 = ssub.s32 %s7, %s14
    %p42 = scmp.eq.s32.totalorder %s41, 0
    %s44 = sadd.s32 %s43, 1
    %s45 = scalar_select %p42, %s43, %s44
    %p48 = pneg %p42
    %p49 = scmp.eq.s32.totalorder %s7, 1
    %p50 = por %p48, %p49
    %p51 = scmp.ne.s32.totalorder %s43, %s46
    %p52 = scmp.eq.s32.totalorder %s7, 0
    %p53 = por %p51, %p52
    %p54 = scmp.ne.s32.totalorder %s43, %s46
    %p55 = scmp.eq.s32.totalorder %s12, 1
    %p56 = por %p54, %p55
    %p57 = scmp.ne.s32.totalorder %s46, %s47
    %p58 = scmp.eq.s32.totalorder %s12, 0
    %p59 = por %p57, %p58
    %p60 = scmp.ne.s32.totalorder %s46, %s47
    %p61 = scmp.eq.s32.totalorder %s13, 1
    %p62 = por %p60, %p61
    %p64 = scmp.ne.s32.totalorder %s47, %s63
    %p65 = scmp.eq.s32.totalorder %s13, 0
    %p66 = por %p64, %p65
    %p67 = scmp.le.s32.totalorder 1, %s7
    %p68 = scmp.lt.s32.totalorder %s7, 3
    %p69 = pnand %p67, %p68
    %p70 = pneg %p69
    // Predicated region
    $region9: #{colornet_forward.11} parent=5 // pred_check
      _
    $region10: #{colornet_forward.11} parent=5 // pred_check_branch
      %72 = sbr.rel (%p69) target = $region12
    $region11: #{colornet_forward.11} parent=5 // pred_region
      %s73 = ssub.s32 %s7, 1
    $region12: #{colornet_forward.11} parent=5 // pred_fallthru
      _
    %p74 = scmp.lt.s32.totalorder %s7, 2
    // Predicated region
    $region13: #{colornet_forward.11} parent=5 // pred_check
      %p75 = pneg %p74
    $region14: #{colornet_forward.11} parent=5 // pred_check_branch
      %77 = sbr.rel (%p75) target = $region16
    $region15: #{colornet_forward.11} parent=5 // pred_region
      // Predicated region
      $region17: #{colornet_forward.11} parent=15 // pred_check
        %p78 = pneg %p27
      $region18: #{colornet_forward.11} parent=15 // pred_check_branch
        %80 = sbr.rel (%p78) target = $region20
      $region19: #{colornet_forward.11} parent=15 // pred_region
        %s81 = smul.u32 4, %s7
        %p82 = scmp.lt.s32.totalorder %s81, 7
        %s83 = scalar_select %p82, %s81, 7
        %s84 = smul.addr %s83, 18
        %s85 = smul.addr %s84, 4
        %s86 = scalar_lea.vmem %s0, %s85
        %s87 = smul.u32 4, %s7
      $region20: #{colornet_forward.11} parent=15 // pred_fallthru
        _
    $region16: #{colornet_forward.11} parent=5 // pred_fallthru
      _
    %p88 = scmp.le.s32.totalorder 1, %s7
    %p89 = scmp.lt.s32.totalorder %s7, 3
    %p90 = pnand %p88, %p89
    %p91 = pneg %p90
    // Predicated region
    $region21: #{colornet_forward.11} parent=5 // pred_check
      _
    $region22: #{colornet_forward.11} parent=5 // pred_check_branch
      %93 = sbr.rel (%p90) target = $region24
    $region23: #{colornet_forward.11} parent=5 // pred_region
      %s94 = ssub.s32 %s7, 1
      %s95 = smul.u32 4, %s12
      %p96 = scmp.lt.s32.totalorder %s95, 7
      %s97 = scalar_select %p96, %s95, 7
      %s98 = smul.addr %s97, 18
      %s99 = smul.addr %s98, 4
      %s100 = scalar_lea.vmem %s0, %s99
      %p101 = pneg %p33
      %p102 = pneg %p30
      %p103 = pneg %p59
      %p104 = pneg %p56
      %p105 = scmp.lt.s32.totalorder %s12, 1
      %s106 = scalar_select %p105, %s12, 1
      %s107 = smul.addr %s106, 22
      %s108 = smul.addr %s107, 4
      %s109 = scalar_lea.vmem %s1, %s108
      %s110 = smul.u32 4, %s12
      %p111 = scmp.lt.s32.totalorder %s110, 7
      %s112 = scalar_select %p111, %s110, 7
      %s113 = smul.addr %s112, 18
      %s114 = smul.addr %s113, 4
      %s115 = scalar_lea.vmem %s0, %s114
      %s116 = smul.u32 4, %s12
      %p117 = scmp.lt.s32.totalorder %s12, 1
      %s118 = scalar_select %p117, %s12, 1
      %s119 = smul.addr %s118, 22
      %s120 = smul.addr %s119, 4
      %s121 = scalar_lea.vmem %s1, %s120
      %v123 = vld [vmem:[%s115] sm:$0xf]
      %v124 = vld [vmem:[%s115 + $0x8] sm:$0xf]
      %v125 = vld [vmem:[%s115 + $0x10] sm:$0xf]
      %v126 = vld [vmem:[%s115 + $0x18] sm:$0xf]
      %v127 = vld [vmem:[%s115 + $0x20] sm:$0xf]
      %v128 = vld [vmem:[%s115 + $0x28] sm:$0xf]
      %v129 = vld [vmem:[%s115 + $0x30] sm:$0xf]
      %v130 = vld [vmem:[%s115 + $0x38] sm:$0xf]
      %v131 = vunpack.c.l.bf16 %v123
      %v132 = vunpack.c.l.bf16 %v124
      %v133 = vunpack.c.l.bf16 %v125
      %v134 = vunpack.c.l.bf16 %v126
      %v135 = vunpack.c.l.bf16 %v127
      %v136 = vunpack.c.l.bf16 %v128
      %v137 = vunpack.c.l.bf16 %v129
      %v138 = vunpack.c.l.bf16 %v130
      %s139 = scalar_lea.vmem %s115, 72
      %v140 = vld [vmem:[%s139] sm:$0xf]
      %v141 = vld [vmem:[%s139 + $0x8] sm:$0xf]
      %v142 = vld [vmem:[%s139 + $0x10] sm:$0xf]
      %v143 = vld [vmem:[%s139 + $0x18] sm:$0xf]
      %v144 = vld [vmem:[%s139 + $0x20] sm:$0xf]
      %v145 = vld [vmem:[%s139 + $0x28] sm:$0xf]
      %v146 = vld [vmem:[%s139 + $0x30] sm:$0xf]
      %v147 = vld [vmem:[%s139 + $0x38] sm:$0xf]
      %v148 = vunpack.c.l.bf16 %v140
      %v149 = vunpack.c.l.bf16 %v141
      %v150 = vunpack.c.l.bf16 %v142
      %v151 = vunpack.c.l.bf16 %v143
      %v152 = vunpack.c.l.bf16 %v144
      %v153 = vunpack.c.l.bf16 %v145
      %v154 = vunpack.c.l.bf16 %v146
      %v155 = vunpack.c.l.bf16 %v147
      %v156 = vmax.f32 %v131, %v148
      %v157 = vmax.f32 %v132, %v149
      %v158 = vmax.f32 %v133, %v150
      %v159 = vmax.f32 %v134, %v151
      %v160 = vmax.f32 %v135, %v152
      %v161 = vmax.f32 %v136, %v153
      %v162 = vmax.f32 %v137, %v154
      %v163 = vmax.f32 %v138, %v155
      %v164 = vld [vmem:[%s115 + $0x4] sm:$0x1]
      %v165 = vld [vmem:[%s115 + $0xc] sm:$0x1]
      %v166 = vld [vmem:[%s115 + $0x14] sm:$0x1]
      %v167 = vld [vmem:[%s115 + $0x1c] sm:$0x1]
      %v168 = vld [vmem:[%s115 + $0x24] sm:$0x1]
      %v169 = vld [vmem:[%s115 + $0x2c] sm:$0x1]
      %v170 = vld [vmem:[%s115 + $0x34] sm:$0x1]
      %v171 = vld [vmem:[%s115 + $0x3c] sm:$0x1]
      %v172 = vunpack.c.l.bf16 %v164
      %v173 = vunpack.c.l.bf16 %v165
      %v174 = vunpack.c.l.bf16 %v166
      %v175 = vunpack.c.l.bf16 %v167
      %v176 = vunpack.c.l.bf16 %v168
      %v177 = vunpack.c.l.bf16 %v169
      %v178 = vunpack.c.l.bf16 %v170
      %v179 = vunpack.c.l.bf16 %v171
      %vm196 = vcmask 1046528
      %v197 = vrot.slane %v131, 1
      %v198 = vrot.slane %v172, 1
      %v199 = vsel %vm196, %v197, %v198
      %v200 = vrot.slane %v132, 1
      %v201 = vrot.slane %v173, 1
      %v202 = vsel %vm196, %v200, %v201
      %v203 = vrot.slane %v133, 1
      %v204 = vrot.slane %v174, 1
      %v205 = vsel %vm196, %v203, %v204
      %v206 = vrot.slane %v134, 1
      %v207 = vrot.slane %v175, 1
      %v208 = vsel %vm196, %v206, %v207
      %v209 = vrot.slane %v135, 1
      %v210 = vrot.slane %v176, 1
      %v211 = vsel %vm196, %v209, %v210
      %v212 = vrot.slane %v136, 1
      %v213 = vrot.slane %v177, 1
      %v214 = vsel %vm196, %v212, %v213
      %v215 = vrot.slane %v137, 1
      %v216 = vrot.slane %v178, 1
      %v217 = vsel %vm196, %v215, %v216
      %v218 = vrot.slane %v138, 1
      %v219 = vrot.slane %v179, 1
      %v220 = vsel %vm196, %v218, %v219
      %v229 = vmax.f32 %v156, %v199
      %v230 = vmax.f32 %v157, %v202
      %v231 = vmax.f32 %v158, %v205
      %v232 = vmax.f32 %v159, %v208
      %v233 = vmax.f32 %v160, %v211
      %v234 = vmax.f32 %v161, %v214
      %v235 = vmax.f32 %v162, %v217
      %v236 = vmax.f32 %v163, %v220
      %s237 = scalar_lea.vmem %s115, 144
      %v238 = vld [vmem:[%s237] sm:$0xf]
      %v239 = vld [vmem:[%s237 + $0x8] sm:$0xf]
      %v240 = vld [vmem:[%s237 + $0x10] sm:$0xf]
      %v241 = vld [vmem:[%s237 + $0x18] sm:$0xf]
      %v242 = vld [vmem:[%s237 + $0x20] sm:$0xf]
      %v243 = vld [vmem:[%s237 + $0x28] sm:$0xf]
      %v244 = vld [vmem:[%s237 + $0x30] sm:$0xf]
      %v245 = vld [vmem:[%s237 + $0x38] sm:$0xf]
      %v246 = vunpack.c.l.bf16 %v238
      %v247 = vunpack.c.l.bf16 %v239
      %v248 = vunpack.c.l.bf16 %v240
      %v249 = vunpack.c.l.bf16 %v241
      %v250 = vunpack.c.l.bf16 %v242
      %v251 = vunpack.c.l.bf16 %v243
      %v252 = vunpack.c.l.bf16 %v244
      %v253 = vunpack.c.l.bf16 %v245
      %v254 = vmax.f32 %v229, %v246
      %v255 = vmax.f32 %v230, %v247
      %v256 = vmax.f32 %v231, %v248
      %v257 = vmax.f32 %v232, %v249
      %v258 = vmax.f32 %v233, %v250
      %v259 = vmax.f32 %v234, %v251
      %v260 = vmax.f32 %v235, %v252
      %v261 = vmax.f32 %v236, %v253
      %s262 = scalar_lea.vmem %s115, 216
      %v263 = vld [vmem:[%s262] sm:$0xf]
      %v264 = vld [vmem:[%s262 + $0x8] sm:$0xf]
      %v265 = vld [vmem:[%s262 + $0x10] sm:$0xf]
      %v266 = vld [vmem:[%s262 + $0x18] sm:$0xf]
      %v267 = vld [vmem:[%s262 + $0x20] sm:$0xf]
      %v268 = vld [vmem:[%s262 + $0x28] sm:$0xf]
      %v269 = vld [vmem:[%s262 + $0x30] sm:$0xf]
      %v270 = vld [vmem:[%s262 + $0x38] sm:$0xf]
      %v271 = vunpack.c.l.bf16 %v263
      %v272 = vunpack.c.l.bf16 %v264
      %v273 = vunpack.c.l.bf16 %v265
      %v274 = vunpack.c.l.bf16 %v266
      %v275 = vunpack.c.l.bf16 %v267
      %v276 = vunpack.c.l.bf16 %v268
      %v277 = vunpack.c.l.bf16 %v269
      %v278 = vunpack.c.l.bf16 %v270
      %v279 = vmax.f32 %v254, %v271
      %v280 = vmax.f32 %v255, %v272
      %v281 = vmax.f32 %v256, %v273
      %v282 = vmax.f32 %v257, %v274
      %v283 = vmax.f32 %v258, %v275
      %v284 = vmax.f32 %v259, %v276
      %v285 = vmax.f32 %v260, %v277
      %v286 = vmax.f32 %v261, %v278
      %v287 = vld [vmem:[%s237 + $0x4] sm:$0x1]
      %v288 = vld [vmem:[%s237 + $0xc] sm:$0x1]
      %v289 = vld [vmem:[%s237 + $0x14] sm:$0x1]
      %v290 = vld [vmem:[%s237 + $0x1c] sm:$0x1]
      %v291 = vld [vmem:[%s237 + $0x24] sm:$0x1]
      %v292 = vld [vmem:[%s237 + $0x2c] sm:$0x1]
      %v293 = vld [vmem:[%s237 + $0x34] sm:$0x1]
      %v294 = vld [vmem:[%s237 + $0x3c] sm:$0x1]
      %v295 = vunpack.c.l.bf16 %v287
      %v296 = vunpack.c.l.bf16 %v288
      %v297 = vunpack.c.l.bf16 %v289
      %v298 = vunpack.c.l.bf16 %v290
      %v299 = vunpack.c.l.bf16 %v291
      %v300 = vunpack.c.l.bf16 %v292
      %v301 = vunpack.c.l.bf16 %v293
      %v302 = vunpack.c.l.bf16 %v294
      %v319 = vrot.slane %v246, 1
      %v320 = vrot.slane %v295, 1
      %v321 = vsel %vm196, %v319, %v320
      %v322 = vrot.slane %v247, 1
      %v323 = vrot.slane %v296, 1
      %v324 = vsel %vm196, %v322, %v323
      %v325 = vrot.slane %v248, 1
      %v326 = vrot.slane %v297, 1
      %v327 = vsel %vm196, %v325, %v326
      %v328 = vrot.slane %v249, 1
      %v329 = vrot.slane %v298, 1
      %v330 = vsel %vm196, %v328, %v329
      %v331 = vrot.slane %v250, 1
      %v332 = vrot.slane %v299, 1
      %v333 = vsel %vm196, %v331, %v332
      %v334 = vrot.slane %v251, 1
      %v335 = vrot.slane %v300, 1
      %v336 = vsel %vm196, %v334, %v335
      %v337 = vrot.slane %v252, 1
      %v338 = vrot.slane %v301, 1
      %v339 = vsel %vm196, %v337, %v338
      %v340 = vrot.slane %v253, 1
      %v341 = vrot.slane %v302, 1
      %v342 = vsel %vm196, %v340, %v341
      %v351 = vmax.f32 %v279, %v321
      %v352 = vmax.f32 %v280, %v324
      %v353 = vmax.f32 %v281, %v327
      %v354 = vmax.f32 %v282, %v330
      %v355 = vmax.f32 %v283, %v333
      %v356 = vmax.f32 %v284, %v336
      %v357 = vmax.f32 %v285, %v339
      %v358 = vmax.f32 %v286, %v342
      %s359 = scalar_lea.vmem %s115, 8
      %v360 = vld [vmem:[%s359] sm:$0xf]
      %v361 = vld [vmem:[%s359 + $0x8] sm:$0xf]
      %v362 = vld [vmem:[%s359 + $0x10] sm:$0xf]
      %v363 = vld [vmem:[%s359 + $0x18] sm:$0xf]
      %v364 = vld [vmem:[%s359 + $0x20] sm:$0xf]
      %v365 = vld [vmem:[%s359 + $0x28] sm:$0xf]
      %v366 = vld [vmem:[%s359 + $0x30] sm:$0xf]
      %v367 = vld [vmem:[%s359 + $0x38] sm:$0xf]
      %v368 = vunpack.c.l.bf16 %v360
      %v369 = vunpack.c.l.bf16 %v361
      %v370 = vunpack.c.l.bf16 %v362
      %v371 = vunpack.c.l.bf16 %v363
      %v372 = vunpack.c.l.bf16 %v364
      %v373 = vunpack.c.l.bf16 %v365
      %v374 = vunpack.c.l.bf16 %v366
      %v375 = vunpack.c.l.bf16 %v367
      %v376 = vmax.f32 %v351, %v368
      %v377 = vmax.f32 %v352, %v369
      %v378 = vmax.f32 %v353, %v370
      %v379 = vmax.f32 %v354, %v371
      %v380 = vmax.f32 %v355, %v372
      %v381 = vmax.f32 %v356, %v373
      %v382 = vmax.f32 %v357, %v374
      %v383 = vmax.f32 %v358, %v375
      %s384 = scalar_lea.vmem %s115, 80
      %v385 = vld [vmem:[%s384] sm:$0xf]
      %v386 = vld [vmem:[%s384 + $0x8] sm:$0xf]
      %v387 = vld [vmem:[%s384 + $0x10] sm:$0xf]
      %v388 = vld [vmem:[%s384 + $0x18] sm:$0xf]
      %v389 = vld [vmem:[%s384 + $0x20] sm:$0xf]
      %v390 = vld [vmem:[%s384 + $0x28] sm:$0xf]
      %v391 = vld [vmem:[%s384 + $0x30] sm:$0xf]
      %v392 = vld [vmem:[%s384 + $0x38] sm:$0xf]
      %v393 = vunpack.c.l.bf16 %v385
      %v394 = vunpack.c.l.bf16 %v386
      %v395 = vunpack.c.l.bf16 %v387
      %v396 = vunpack.c.l.bf16 %v388
      %v397 = vunpack.c.l.bf16 %v389
      %v398 = vunpack.c.l.bf16 %v390
      %v399 = vunpack.c.l.bf16 %v391
      %v400 = vunpack.c.l.bf16 %v392
      %v401 = vmax.f32 %v376, %v393
      %v402 = vmax.f32 %v377, %v394
      %v403 = vmax.f32 %v378, %v395
      %v404 = vmax.f32 %v379, %v396
      %v405 = vmax.f32 %v380, %v397
      %v406 = vmax.f32 %v381, %v398
      %v407 = vmax.f32 %v382, %v399
      %v408 = vmax.f32 %v383, %v400
      %v409 = vld [vmem:[%s359 + $0x4] sm:$0x1]
      %v410 = vld [vmem:[%s359 + $0xc] sm:$0x1]
      %v411 = vld [vmem:[%s359 + $0x14] sm:$0x1]
      %v412 = vld [vmem:[%s359 + $0x1c] sm:$0x1]
      %v413 = vld [vmem:[%s359 + $0x24] sm:$0x1]
      %v414 = vld [vmem:[%s359 + $0x2c] sm:$0x1]
      %v415 = vld [vmem:[%s359 + $0x34] sm:$0x1]
      %v416 = vld [vmem:[%s359 + $0x3c] sm:$0x1]
      %v417 = vunpack.c.l.bf16 %v409
      %v418 = vunpack.c.l.bf16 %v410
      %v419 = vunpack.c.l.bf16 %v411
      %v420 = vunpack.c.l.bf16 %v412
      %v421 = vunpack.c.l.bf16 %v413
      %v422 = vunpack.c.l.bf16 %v414
      %v423 = vunpack.c.l.bf16 %v415
      %v424 = vunpack.c.l.bf16 %v416
      %v441 = vrot.slane %v368, 1
      %v442 = vrot.slane %v417, 1
      %v443 = vsel %vm196, %v441, %v442
      %v444 = vrot.slane %v369, 1
      %v445 = vrot.slane %v418, 1
      %v446 = vsel %vm196, %v444, %v445
      %v447 = vrot.slane %v370, 1
      %v448 = vrot.slane %v419, 1
      %v449 = vsel %vm196, %v447, %v448
      %v450 = vrot.slane %v371, 1
      %v451 = vrot.slane %v420, 1
      %v452 = vsel %vm196, %v450, %v451
      %v453 = vrot.slane %v372, 1
      %v454 = vrot.slane %v421, 1
      %v455 = vsel %vm196, %v453, %v454
      %v456 = vrot.slane %v373, 1
      %v457 = vrot.slane %v422, 1
      %v458 = vsel %vm196, %v456, %v457
      %v459 = vrot.slane %v374, 1
      %v460 = vrot.slane %v423, 1
      %v461 = vsel %vm196, %v459, %v460
      %v462 = vrot.slane %v375, 1
      %v463 = vrot.slane %v424, 1
      %v464 = vsel %vm196, %v462, %v463
      %v473 = vmax.f32 %v401, %v443
      %v474 = vmax.f32 %v402, %v446
      %v475 = vmax.f32 %v403, %v449
      %v476 = vmax.f32 %v404, %v452
      %v477 = vmax.f32 %v405, %v455
      %v478 = vmax.f32 %v406, %v458
      %v479 = vmax.f32 %v407, %v461
      %v480 = vmax.f32 %v408, %v464
      %vm481 = vcmask 519168
      %482 = vst.msk [vmem:[%s121] sm:$0xf] %vm481, 0
      %vm483 = vcmask 516096
      %484 = vst.msk [vmem:[%s121 + $0x4] sm:$0x1] %vm483, 0
      %485 = vst.msk [vmem:[%s121 + $0x8] sm:$0xf] %vm481, 0
      %486 = vst.msk [vmem:[%s121 + $0xc] sm:$0x1] %vm483, 0
      %487 = vst.msk [vmem:[%s121 + $0x10] sm:$0xf] %vm481, 0
      %488 = vst.msk [vmem:[%s121 + $0x14] sm:$0x1] %vm483, 0
      %489 = vst.msk [vmem:[%s121 + $0x18] sm:$0xf] %vm481, 0
      %490 = vst.msk [vmem:[%s121 + $0x1c] sm:$0x1] %vm483, 0
      %491 = vst.msk [vmem:[%s121 + $0x20] sm:$0xf] %vm481, 0
      %492 = vst.msk [vmem:[%s121 + $0x24] sm:$0x1] %vm483, 0
      %493 = vst.msk [vmem:[%s121 + $0x28] sm:$0xf] %vm481, 0
      %494 = vst.msk [vmem:[%s121 + $0x2c] sm:$0x1] %vm483, 0
      %495 = vst.msk [vmem:[%s121 + $0x30] sm:$0xf] %vm481, 0
      %496 = vst.msk [vmem:[%s121 + $0x34] sm:$0x1] %vm483, 0
      %497 = vst.msk [vmem:[%s121 + $0x38] sm:$0xf] %vm481, 0
      %498 = vst.msk [vmem:[%s121 + $0x3c] sm:$0x1] %vm483, 0
      %499 = vst.msk [vmem:[%s121 + $0x40] sm:$0xf] %vm481, 0
      %500 = vst.msk [vmem:[%s121 + $0x44] sm:$0x1] %vm483, 0
      %501 = vst.msk [vmem:[%s121 + $0x48] sm:$0xf] %vm481, 0
      %502 = vst.msk [vmem:[%s121 + $0x4c] sm:$0x1] %vm483, 0
      %503 = vst.msk [vmem:[%s121 + $0x50] sm:$0xf] %vm481, 0
      %504 = vst.msk [vmem:[%s121 + $0x54] sm:$0x1] %vm483, 0
      %v505 = vpack.c.bf16 %v473, %v473
      %v506 = vpack.c.bf16 %v474, %v474
      %v507 = vpack.c.bf16 %v475, %v475
      %v508 = vpack.c.bf16 %v476, %v476
      %v509 = vpack.c.bf16 %v477, %v477
      %v510 = vpack.c.bf16 %v478, %v478
      %v511 = vpack.c.bf16 %v479, %v479
      %v512 = vpack.c.bf16 %v480, %v480
      %v521 = vunpack.c.l.b16 %v505
      %v522 = vunpack.c.l.b16 %v506
      %v523 = vunpack.c.l.b16 %v507
      %v524 = vunpack.c.l.b16 %v508
      %v525 = vunpack.c.l.b16 %v509
      %v526 = vunpack.c.l.b16 %v510
      %v527 = vunpack.c.l.b16 %v511
      %v528 = vunpack.c.l.b16 %v512
      %v529 = vpack.c.b16 %v521, %v521
      %v530 = vpack.c.b16 %v522, %v522
      %v531 = vpack.c.b16 %v523, %v523
      %v532 = vpack.c.b16 %v524, %v524
      %v533 = vpack.c.b16 %v525, %v525
      %v534 = vpack.c.b16 %v526, %v526
      %v535 = vpack.c.b16 %v527, %v527
      %v536 = vpack.c.b16 %v528, %v528
      %v538 = vshrl.u32 %v529, 16
      %v540 = vrot.slane %v538, 7
      %v541 = vshll.u32 %v529, 16
      %v543 = vor.u32 %v540, %v541
      %v544 = vrot.slane %v540, 4
      %v546 = vshrl.u32 %v530, 16
      %v548 = vrot.slane %v546, 7
      %v549 = vshll.u32 %v530, 16
      %v551 = vor.u32 %v548, %v549
      %v552 = vrot.slane %v548, 4
      %v554 = vshrl.u32 %v531, 16
      %v556 = vrot.slane %v554, 7
      %v557 = vshll.u32 %v531, 16
      %v559 = vor.u32 %v556, %v557
      %v560 = vrot.slane %v556, 4
      %v562 = vshrl.u32 %v532, 16
      %v564 = vrot.slane %v562, 7
      %v565 = vshll.u32 %v532, 16
      %v567 = vor.u32 %v564, %v565
      %v568 = vrot.slane %v564, 4
      %v570 = vshrl.u32 %v533, 16
      %v572 = vrot.slane %v570, 7
      %v573 = vshll.u32 %v533, 16
      %v575 = vor.u32 %v572, %v573
      %v576 = vrot.slane %v572, 4
      %v578 = vshrl.u32 %v534, 16
      %v580 = vrot.slane %v578, 7
      %v581 = vshll.u32 %v534, 16
      %v583 = vor.u32 %v580, %v581
      %v584 = vrot.slane %v580, 4
      %v586 = vshrl.u32 %v535, 16
      %v588 = vrot.slane %v586, 7
      %v589 = vshll.u32 %v535, 16
      %v591 = vor.u32 %v588, %v589
      %v592 = vrot.slane %v588, 4
      %v594 = vshrl.u32 %v536, 16
      %v596 = vrot.slane %v594, 7
      %v597 = vshll.u32 %v536, 16
      %v599 = vor.u32 %v596, %v597
      %v600 = vrot.slane %v596, 4
      %s617 = scalar_lea.vmem %s121, 8
      %vm618 = vcmask 519168
      %vm619 = vsmask.f32 7938
      %vm620 = vmand %vm618, %vm619
      %v621 = vld [vmem:[%s617] sm:$0xf]
      %v622 = vsel %vm620, %v543, %v621
      %623 = vst [vmem:[%s617] sm:$0xf] %v622
      %vm624 = vcmask 516096
      %vm625 = vsmask.f32 256
      %vm626 = vmand %vm624, %vm625
      %v627 = vld [vmem:[%s617 + $0x4] sm:$0x1]
      %v628 = vsel %vm626, %v544, %v627
      %629 = vst [vmem:[%s617 + $0x4] sm:$0x1] %v628
      %v630 = vld [vmem:[%s617 + $0x8] sm:$0xf]
      %v631 = vsel %vm620, %v551, %v630
      %632 = vst [vmem:[%s617 + $0x8] sm:$0xf] %v631
      %v633 = vld [vmem:[%s617 + $0xc] sm:$0x1]
      %v634 = vsel %vm626, %v552, %v633
      %635 = vst [vmem:[%s617 + $0xc] sm:$0x1] %v634
      %v636 = vld [vmem:[%s617 + $0x10] sm:$0xf]
      %v637 = vsel %vm620, %v559, %v636
      %638 = vst [vmem:[%s617 + $0x10] sm:$0xf] %v637
      %v639 = vld [vmem:[%s617 + $0x14] sm:$0x1]
      %v640 = vsel %vm626, %v560, %v639
      %641 = vst [vmem:[%s617 + $0x14] sm:$0x1] %v640
      %v642 = vld [vmem:[%s617 + $0x18] sm:$0xf]
      %v643 = vsel %vm620, %v567, %v642
      %644 = vst [vmem:[%s617 + $0x18] sm:$0xf] %v643
      %v645 = vld [vmem:[%s617 + $0x1c] sm:$0x1]
      %v646 = vsel %vm626, %v568, %v645
      %647 = vst [vmem:[%s617 + $0x1c] sm:$0x1] %v646
      %v648 = vld [vmem:[%s617 + $0x20] sm:$0xf]
      %v649 = vsel %vm620, %v575, %v648
      %650 = vst [vmem:[%s617 + $0x20] sm:$0xf] %v649
      %v651 = vld [vmem:[%s617 + $0x24] sm:$0x1]
      %v652 = vsel %vm626, %v576, %v651
      %653 = vst [vmem:[%s617 + $0x24] sm:$0x1] %v652
      %v654 = vld [vmem:[%s617 + $0x28] sm:$0xf]
      %v655 = vsel %vm620, %v583, %v654
      %656 = vst [vmem:[%s617 + $0x28] sm:$0xf] %v655
      %v657 = vld [vmem:[%s617 + $0x2c] sm:$0x1]
      %v658 = vsel %vm626, %v584, %v657
      %659 = vst [vmem:[%s617 + $0x2c] sm:$0x1] %v658
      %v660 = vld [vmem:[%s617 + $0x30] sm:$0xf]
      %v661 = vsel %vm620, %v591, %v660
      %662 = vst [vmem:[%s617 + $0x30] sm:$0xf] %v661
      %v663 = vld [vmem:[%s617 + $0x34] sm:$0x1]
      %v664 = vsel %vm626, %v592, %v663
      %665 = vst [vmem:[%s617 + $0x34] sm:$0x1] %v664
      %v666 = vld [vmem:[%s617 + $0x38] sm:$0xf]
      %v667 = vsel %vm620, %v599, %v666
      %668 = vst [vmem:[%s617 + $0x38] sm:$0xf] %v667
      %v669 = vld [vmem:[%s617 + $0x3c] sm:$0x1]
      %v670 = vsel %vm626, %v600, %v669
      %671 = vst [vmem:[%s617 + $0x3c] sm:$0x1] %v670
      %p672 = scmp.lt.s32.totalorder %s12, 1
      %s673 = scalar_select %p672, %s12, 1
      %s674 = smul.addr %s673, 22
      %s675 = smul.addr %s674, 4
      %s676 = scalar_lea.vmem %s1, %s675
      // Predicated region
      $region25: #{colornet_forward.11} parent=23 // pred_check
        %p677 = pneg %p56
      $region26: #{colornet_forward.11} parent=23 // pred_check_branch
        %679 = sbr.rel (%p677) target = $region28
      $region27: #{colornet_forward.11} parent=23 // pred_region
        _
      $region28: #{colornet_forward.11} parent=23 // pred_fallthru
        _
    $region24: #{colornet_forward.11} parent=5 // pred_fallthru
      _
    %p680 = scmp.le.s32.totalorder 2, %s7
    // Predicated region
    $region29: #{colornet_forward.11} parent=5 // pred_check
      %p681 = pneg %p680
    $region30: #{colornet_forward.11} parent=5 // pred_check_branch
      %683 = sbr.rel (%p681) target = $region32
    $region31: #{colornet_forward.11} parent=5 // pred_region
      %s684 = ssub.s32 %s7, 2
      // Predicated region
      $region33: #{colornet_forward.11} parent=31 // pred_check
        %p685 = pneg %p62
      $region34: #{colornet_forward.11} parent=31 // pred_check_branch
        %687 = sbr.rel (%p685) target = $region36
      $region35: #{colornet_forward.11} parent=31 // pred_region
        %p688 = scmp.lt.s32.totalorder %s13, 1
        %s689 = scalar_select %p688, %s13, 1
        %s690 = smul.addr %s689, 22
        %s691 = smul.addr %s690, 4
        %s692 = scalar_lea.vmem %s1, %s691
      $region36: #{colornet_forward.11} parent=31 // pred_fallthru
        _
    $region32: #{colornet_forward.11} parent=5 // pred_fallthru
      _
  $region6: #{colornet_forward.11} parent=0 // loop_footer
    %s11 = sadd.s32 1, %s7
  $region7: #{colornet_forward.11} parent=0 // loop_footer_branch
    %6 = sbr.rel target = $region3
  $region8: #{colornet_forward.11} parent=0 // loop_exit
    _

// kernel: colornet_forward.12
$region0: #{colornet_forward.12}
  #allocation0 [shape = 'u32[]', space=smem, size = 0x4, offset = 0x4, fixed_abs, tag = 'smem constant byte address 0x4 - core index']
  #allocation1 [shape = 'u32[144,128]{1,0:T(1,128)}', space=vmem, size = 0x12000, scoped, tag = 'internal scratch']
  %s0 = inlined_call_operand.vmem [shape: bf16[2,110,64], index: 0, kind: input, shape index: {}]
  %s1 = inlined_call_operand.vmem [shape: bf16[576,64], index: 1, kind: input, shape index: {}]
  %s2 = inlined_call_operand.vmem [shape: f32[1,64], index: 2, kind: input, shape index: {}]
  %s3 = inlined_call_operand.vmem [shape: f32[80,1], index: 3, kind: input, shape index: {}]
  %s4 = inlined_call_operand.vmem [shape: bf16[2,110,64], index: 4, kind: output, shape index: {}]
  %s5 = sld [smem:[#allocation0]]
  $region49: #{colornet_forward.12} parent=0
    _
  %s7 = ssub.s32 1, %s5
  %s8 = scalar_select 0, %s7, %s5
  loop: start=0, step=1, limit=4
  $region2: #{colornet_forward.12} parent=0 // loop_pre_header
    _
  $region3: #{colornet_forward.12} parent=0 // loop_header
    %s10 = sphi 0, %s14
    %p11 = scmp.ge.s32.totalorder %s10, 4
    %s20 = sphi 0, %s22
    %s23 = sphi 0, %s20
    %s24 = sphi 0, %s23
    %s40 = sphi 0, %s24
    %s44 = sphi 0, %s44
    %s46 = sphi 0, %s44
    %s47 = sphi 0, %s46
    %s61 = sphi 0, %s47
    %s65 = sphi 0, %s65
    %s67 = sphi 0, %s65
    %s68 = sphi 0, %s67
    %s82 = sphi 0, %s68
    %s86 = sphi 0, %s86
    %s88 = sphi 0, %s86
    %s89 = sphi 0, %s88
    %s103 = sphi 0, %s89
    %s109 = sphi 0, %s111
    %s112 = sphi 0, %s109
    %s113 = sphi 0, %s112
    %s129 = sphi 0, %s113
  $region4: #{colornet_forward.12} parent=0 // loop_header_branch
    %13 = sbr.rel (%p11) target = $region8
  $region5: #{colornet_forward.12} parent=0 // loop_body
    %s15 = ssub.s32 %s10, 1
    %s16 = ssub.s32 %s10, 2
    %s17 = sadd.s32 %s10, 1
    %s18 = ssub.s32 %s10, %s17
    %p19 = scmp.eq.s32.totalorder %s18, 0
    %s21 = sadd.s32 %s20, 1
    %s22 = scalar_select %p19, %s20, %s21
    %p25 = pneg %p19
    %p26 = scmp.eq.s32.totalorder %s10, 1
    %p27 = por %p25, %p26
    %p28 = scmp.ne.s32.totalorder %s20, %s23
    %p29 = scmp.eq.s32.totalorder %s10, 0
    %p30 = por %p28, %p29
    %p31 = scmp.ne.s32.totalorder %s20, %s23
    %p32 = scmp.eq.s32.totalorder %s15, 1
    %p33 = por %p31, %p32
    %p34 = scmp.ne.s32.totalorder %s23, %s24
    %p35 = scmp.eq.s32.totalorder %s15, 0
    %p36 = por %p34, %p35
    %p37 = scmp.ne.s32.totalorder %s23, %s24
    %p38 = scmp.eq.s32.totalorder %s16, 1
    %p39 = por %p37, %p38
    %p41 = scmp.ne.s32.totalorder %s24, %s40
    %p42 = scmp.eq.s32.totalorder %s16, 0
    %p43 = por %p41, %p42
    %s45 = sadd.s32 %s44, 1
    %p48 = scmp.eq.s32.totalorder %s10, 1
    %p49 = scmp.ne.s32.totalorder %s44, %s46
    %p50 = scmp.eq.s32.totalorder %s10, 0
    %p51 = por %p49, %p50
    %p52 = scmp.ne.s32.totalorder %s44, %s46
    %p53 = scmp.eq.s32.totalorder %s15, 1
    %p54 = por %p52, %p53
    %p55 = scmp.ne.s32.totalorder %s46, %s47
    %p56 = scmp.eq.s32.totalorder %s15, 0
    %p57 = por %p55, %p56
    %p58 = scmp.ne.s32.totalorder %s46, %s47
    %p59 = scmp.eq.s32.totalorder %s16, 1
    %p60 = por %p58, %p59
    %p62 = scmp.ne.s32.totalorder %s47, %s61
    %p63 = scmp.eq.s32.totalorder %s16, 0
    %p64 = por %p62, %p63
    %s66 = sadd.s32 %s65, 1
    %p69 = scmp.eq.s32.totalorder %s10, 1
    %p70 = scmp.ne.s32.totalorder %s65, %s67
    %p71 = scmp.eq.s32.totalorder %s10, 0
    %p72 = por %p70, %p71
    %p73 = scmp.ne.s32.totalorder %s65, %s67
    %p74 = scmp.eq.s32.totalorder %s15, 1
    %p75 = por %p73, %p74
    %p76 = scmp.ne.s32.totalorder %s67, %s68
    %p77 = scmp.eq.s32.totalorder %s15, 0
    %p78 = por %p76, %p77
    %p79 = scmp.ne.s32.totalorder %s67, %s68
    %p80 = scmp.eq.s32.totalorder %s16, 1
    %p81 = por %p79, %p80
    %p83 = scmp.ne.s32.totalorder %s68, %s82
    %p84 = scmp.eq.s32.totalorder %s16, 0
    %p85 = por %p83, %p84
    %s87 = sadd.s32 %s86, 1
    %p90 = scmp.eq.s32.totalorder %s10, 1
    %p91 = scmp.ne.s32.totalorder %s86, %s88
    %p92 = scmp.eq.s32.totalorder %s10, 0
    %p93 = por %p91, %p92
    %p94 = scmp.ne.s32.totalorder %s86, %s88
    %p95 = scmp.eq.s32.totalorder %s15, 1
    %p96 = por %p94, %p95
    %p97 = scmp.ne.s32.totalorder %s88, %s89
    %p98 = scmp.eq.s32.totalorder %s15, 0
    %p99 = por %p97, %p98
    %p100 = scmp.ne.s32.totalorder %s88, %s89
    %p101 = scmp.eq.s32.totalorder %s16, 1
    %p102 = por %p100, %p101
    %p104 = scmp.ne.s32.totalorder %s89, %s103
    %p105 = scmp.eq.s32.totalorder %s16, 0
    %p106 = por %p104, %p105
    %s107 = ssub.s32 %s10, %s17
    %p108 = scmp.eq.s32.totalorder %s107, 0
    %s110 = sadd.s32 %s109, 1
    %s111 = scalar_select %p108, %s109, %s110
    %p114 = pneg %p108
    %p115 = scmp.eq.s32.totalorder %s10, 1
    %p116 = por %p114, %p115
    %p117 = scmp.ne.s32.totalorder %s109, %s112
    %p118 = scmp.eq.s32.totalorder %s10, 0
    %p119 = por %p117, %p118
    %p120 = scmp.ne.s32.totalorder %s109, %s112
    %p121 = scmp.eq.s32.totalorder %s15, 1
    %p122 = por %p120, %p121
    %p123 = scmp.ne.s32.totalorder %s112, %s113
    %p124 = scmp.eq.s32.totalorder %s15, 0
    %p125 = por %p123, %p124
    %p126 = scmp.ne.s32.totalorder %s112, %s113
    %p127 = scmp.eq.s32.totalorder %s16, 1
    %p128 = por %p126, %p127
    %p130 = scmp.ne.s32.totalorder %s113, %s129
    %p131 = scmp.eq.s32.totalorder %s16, 0
    %p132 = por %p130, %p131
    %p133 = scmp.le.s32.totalorder 1, %s10
    %p134 = scmp.lt.s32.totalorder %s10, 3
    %p135 = pnand %p133, %p134
    %p136 = pneg %p135
    // Predicated region
    $region9: #{colornet_forward.12} parent=5 // pred_check
      _
    $region10: #{colornet_forward.12} parent=5 // pred_check_branch
      %138 = sbr.rel (%p135) target = $region12
    $region11: #{colornet_forward.12} parent=5 // pred_region
      %s139 = ssub.s32 %s10, 1
      // Predicated region
      $region13: #{colornet_forward.12} parent=11 // pred_check
        %p140 = pneg %p57
      $region14: #{colornet_forward.12} parent=11 // pred_check_branch
        %142 = sbr.rel (%p140) target = $region16
      $region15: #{colornet_forward.12} parent=11 // pred_region
        _
      $region16: #{colornet_forward.12} parent=11 // pred_fallthru
        _
      // Predicated region
      $region17: #{colornet_forward.12} parent=11 // pred_check
        %p143 = pneg %p78
      $region18: #{colornet_forward.12} parent=11 // pred_check_branch
        %145 = sbr.rel (%p143) target = $region20
      $region19: #{colornet_forward.12} parent=11 // pred_region
        _
      $region20: #{colornet_forward.12} parent=11 // pred_fallthru
        _
      // Predicated region
      $region21: #{colornet_forward.12} parent=11 // pred_check
        %p146 = pneg %p99
      $region22: #{colornet_forward.12} parent=11 // pred_check_branch
        %148 = sbr.rel (%p146) target = $region24
      $region23: #{colornet_forward.12} parent=11 // pred_region
        _
      $region24: #{colornet_forward.12} parent=11 // pred_fallthru
        _
    $region12: #{colornet_forward.12} parent=5 // pred_fallthru
      _
    %p149 = scmp.lt.s32.totalorder %s10, 2
    // Predicated region
    $region25: #{colornet_forward.12} parent=5 // pred_check
      %p150 = pneg %p149
    $region26: #{colornet_forward.12} parent=5 // pred_check_branch
      %152 = sbr.rel (%p150) target = $region28
    $region27: #{colornet_forward.12} parent=5 // pred_region
      // Predicated region
      $region29: #{colornet_forward.12} parent=27 // pred_check
        %p153 = pneg %p30
      $region30: #{colornet_forward.12} parent=27 // pred_check_branch
        %155 = sbr.rel (%p153) target = $region32
      $region31: #{colornet_forward.12} parent=27 // pred_region
        %p156 = scmp.lt.s32.totalorder %s10, 1
        %s157 = scalar_select %p156, %s10, 1
        %s158 = smul.addr %s157, 14
        %s159 = smul.addr %s158, 4
        %s160 = scalar_lea.vmem %s0, %s159
      $region32: #{colornet_forward.12} parent=27 // pred_fallthru
        _
    $region28: #{colornet_forward.12} parent=5 // pred_fallthru
      _
    %p161 = scmp.le.s32.totalorder 1, %s10
    %p162 = scmp.lt.s32.totalorder %s10, 3
    %p163 = pnand %p161, %p162
    %p164 = pneg %p163
    // Predicated region
    $region33: #{colornet_forward.12} parent=5 // pred_check
      _
    $region34: #{colornet_forward.12} parent=5 // pred_check_branch
      %166 = sbr.rel (%p163) target = $region36
    $region35: #{colornet_forward.12} parent=5 // pred_region
      %s167 = ssub.s32 %s10, 1
      %p168 = scmp.lt.s32.totalorder %s15, 1
      %s169 = scalar_select %p168, %s15, 1
      %s170 = smul.addr %s169, 14
      %s171 = smul.addr %s170, 4
      %s172 = scalar_lea.vmem %s0, %s171
      %p173 = pneg %p36
      %p174 = pneg %p33
      %p175 = pneg %p57
      %p176 = pneg %p54
      %p177 = pneg %p78
      %p178 = pneg %p75
      %p179 = pneg %p99
      %p180 = pneg %p96
      %p181 = pneg %p125
      %p182 = pneg %p122
      %p183 = scmp.lt.s32.totalorder %s15, 1
      %s184 = scalar_select %p183, %s15, 1
      %s185 = smul.addr %s184, 14
      %s186 = smul.addr %s185, 4
      %s187 = scalar_lea.vmem %s4, %s186
      %p188 = scmp.lt.s32.totalorder %s15, 1
      %s189 = scalar_select %p188, %s15, 1
      %s190 = smul.addr %s189, 14
      %s191 = smul.addr %s190, 4
      %s192 = scalar_lea.vmem %s0, %s191
      %p193 = scmp.lt.s32.totalorder %s15, 1
      %s194 = scalar_select %p193, %s15, 1
      %s195 = smul.addr %s194, 14
      %s196 = smul.addr %s195, 4
      %s197 = scalar_lea.vmem %s4, %s196
      %v199 = vld [vmem:[%s192] sm:$0xf]
      %v200 = vld [vmem:[%s192 + $0x4] sm:$0xf]
      %v201 = vld [vmem:[%s192 + $0x8] sm:$0xf]
      %v202 = vld [vmem:[%s192 + $0xc] sm:$0xf]
      %v203 = vld [vmem:[%s192 + $0x10] sm:$0xf]
      %v204 = vld [vmem:[%s192 + $0x14] sm:$0xf]
      %v205 = vld [vmem:[%s192 + $0x18] sm:$0xf]
      %v206 = vld [vmem:[%s192 + $0x1c] sm:$0xf]
      %v207 = vld [vmem:[%s192 + $0x20] sm:$0xf]
      %v208 = vld [vmem:[%s192 + $0x24] sm:$0xf]
      %v209 = vld [vmem:[%s1] sm:$0xf]
      %v210 = vld [vmem:[%s1 + $0x4] sm:$0xf]
      %v211 = vld [vmem:[%s1 + $0x8] sm:$0xf]
      %v212 = vld [vmem:[%s1 + $0xc] sm:$0xf]
      %v213 = vld [vmem:[%s1 + $0x10] sm:$0xf]
      %v214 = vld [vmem:[%s1 + $0x14] sm:$0xf]
      %v215 = vld [vmem:[%s1 + $0x18] sm:$0xf]
      %v216 = vld [vmem:[%s1 + $0x1c] sm:$0xf]
      %v217 = vld [vmem:[%s192 + $0x28] sm:$0x1]
      %v218 = vld [vmem:[%s1 + $0x20] sm:$0xf]
      %v219 = vld [vmem:[%s1 + $0x24] sm:$0xf]
      %v220 = vld [vmem:[%s1 + $0x28] sm:$0xf]
      %v221 = vld [vmem:[%s1 + $0x2c] sm:$0xf]
      %v222 = vld [vmem:[%s1 + $0x30] sm:$0xf]
      %v223 = vld [vmem:[%s1 + $0x34] sm:$0xf]
      %v224 = vld [vmem:[%s1 + $0x38] sm:$0xf]
      %v225 = vld [vmem:[%s1 + $0x3c] sm:$0xf]
      %v237 = vunpack.c.l.b16 %v199
      %v238 = vunpack.c.l.b16 %v200
      %v239 = vunpack.c.l.b16 %v201
      %v240 = vunpack.c.l.b16 %v202
      %v241 = vunpack.c.l.b16 %v203
      %v242 = vunpack.c.l.b16 %v204
      %v243 = vunpack.c.l.b16 %v205
      %v244 = vunpack.c.l.b16 %v206
      %v245 = vunpack.c.l.b16 %v207
      %v246 = vunpack.c.l.b16 %v208
      %v247 = vunpack.c.l.b16 %v217
      %v248 = vpack.c.b16 %v238, %v237
      %v249 = vpack.c.b16 %v240, %v239
      %v250 = vpack.c.b16 %v242, %v241
      %v251 = vpack.c.b16 %v244, %v243
      %v252 = vpack.c.b16 %v246, %v245
      %v253 = vpack.c.b16 %v247, %v247
      %vm254 = vsmask.f32 7424
      %v256 = vshrl.u32 %v248, 16
      %v258 = vshll.u32 %v248, 16
      %v260 = vrot.slane %v258, 1
      %v261 = vor.u32 %v256, %v260
      %v263 = vshll.u32 %v249, 16
      %v265 = vrot.slane %v263, 1
      %v266 = vsel %vm254, %v261, %v265
      %v267 = vshrl.u32 %v249, 16
      %v269 = vor.u32 %v267, %v265
      %v271 = vshll.u32 %v250, 16
      %v273 = vrot.slane %v271, 1
      %v274 = vsel %vm254, %v269, %v273
      %v275 = vshrl.u32 %v250, 16
      %v277 = vor.u32 %v275, %v273
      %v279 = vshll.u32 %v251, 16
      %v281 = vrot.slane %v279, 1
      %v282 = vsel %vm254, %v277, %v281
      %v283 = vshrl.u32 %v251, 16
      %v285 = vor.u32 %v283, %v281
      %v287 = vshll.u32 %v252, 16
      %v289 = vrot.slane %v287, 1
      %v290 = vsel %vm254, %v285, %v289
      %v291 = vshrl.u32 %v252, 16
      %v293 = vor.u32 %v291, %v289
      %v295 = vshll.u32 %v253, 16
      %v297 = vrot.slane %v295, 1
      %v298 = vsel %vm254, %v293, %v297
      %v307 = vunpack.c.l.b16 %v218
      %v308 = vunpack.c.l.b16 %v219
      %v309 = vunpack.c.l.b16 %v220
      %v310 = vunpack.c.l.b16 %v221
      %v311 = vunpack.c.l.b16 %v222
      %v312 = vunpack.c.l.b16 %v223
      %v313 = vunpack.c.l.b16 %v224
      %v314 = vunpack.c.l.b16 %v225
      %v315 = vpack.c.b16 %v308, %v307
      %v316 = vpack.c.b16 %v310, %v309
      %v317 = vpack.c.b16 %v312, %v311
      %v318 = vpack.c.b16 %v314, %v313
      %vm323 = vcmask 523264
      %v325 = vsel %vm323, %v266, 0
      %v328 = vsel %vm323, %v274, 0
      %v331 = vsel %vm323, %v282, 0
      %v334 = vsel %vm323, %v290, 0
      %v337 = vsel %vm323, %v298, 0
      %339 = vmatprep.subr.bf16.mxu0 0
      %340 = vmatpush1.bf16.msra.mxu0 0
      %341 = vmatprep.subr.bf16.mxu0 0
      %342 = vmatpush1.bf16.msra.mxu0 0
      %343 = vmatprep.subr.bf16.mxu0 0
      %344 = vmatpush1.bf16.msra.mxu0 0
      %345 = vmatprep.subr.bf16.mxu0 0
      %346 = vmatpush1.bf16.msra.mxu0 0
      %347 = vmatprep.subr.bf16.mxu0 0
      %348 = vmatpush1.bf16.msra.mxu0 %v318
      %349 = vmatprep.subr.bf16.mxu0 0
      %350 = vmatpush1.bf16.msra.mxu0 %v317
      %351 = vmatprep.subr.bf16.mxu0 0
      %352 = vmatpush1.bf16.msra.mxu0 %v316
      %353 = vmatprep.subr.bf16.mxu0 0
      %354 = vmatpush1.bf16.msra.mxu0 %v315
      %355 = vmatprep.subr.bf16.mxu0 0
      %356 = vmatpush2.bf16.msra.mxu0 0
      %357 = vmatprep.subr.bf16.mxu0 0
      %358 = vmatpush2.bf16.msra.mxu0 0
      %359 = vmatprep.subr.bf16.mxu0 0
      %360 = vmatpush2.bf16.msra.mxu0 0
      %361 = vmatprep.subr.bf16.mxu0 0
      %362 = vmatpush2.bf16.msra.mxu0 0
      %363 = vmatprep.subr.bf16.mxu0 0
      %364 = vmatpush2.bf16.msra.mxu0 0
      %365 = vmatprep.subr.bf16.mxu0 0
      %366 = vmatpush2.bf16.msra.mxu0 0
      %367 = vmatprep.subr.bf16.mxu0 0
      %368 = vmatpush2.bf16.msra.mxu0 0
      %369 = vmatprep.subr.bf16.mxu0 0
      %370 = vmatpush2.bf16.msra.mxu0 0
      %371 = vmatprep.mubr.bf16.mxu0 0
      %372 = vmatmul.mubr.bf16.gmra.mxu0 %v325
      %v373 = vpop.f32.mrf.mxu0
      %v374 = vadd.f32 0.0, %v373
      %v375 = vpop.f32.mrf.mxu0
      %v376 = vpop.f32.mrf.mxu0
      %v377 = vadd.f32 0.0, %v376
      %v378 = vpop.f32.mrf.mxu0
      %379 = vmatprep.mubr.bf16.mxu0 0
      %380 = vmatmul.mubr.bf16.gmra.mxu0 %v328
      %v381 = vpop.f32.mrf.mxu0
      %v382 = vadd.f32 0.0, %v381
      %v383 = vpop.f32.mrf.mxu0
      %v384 = vpop.f32.mrf.mxu0
      %v385 = vadd.f32 0.0, %v384
      %v386 = vpop.f32.mrf.mxu0
      %387 = vmatprep.mubr.bf16.mxu0 0
      %388 = vmatmul.mubr.bf16.gmra.mxu0 %v331
      %v389 = vpop.f32.mrf.mxu0
      %v390 = vadd.f32 0.0, %v389
      %v391 = vpop.f32.mrf.mxu0
      %v392 = vpop.f32.mrf.mxu0
      %v393 = vadd.f32 0.0, %v392
      %v394 = vpop.f32.mrf.mxu0
      %395 = vmatprep.mubr.bf16.mxu0 0
      %396 = vmatmul.mubr.bf16.gmra.mxu0 %v334
      %v397 = vpop.f32.mrf.mxu0
      %v398 = vadd.f32 0.0, %v397
      %v399 = vpop.f32.mrf.mxu0
      %v400 = vpop.f32.mrf.mxu0
      %v401 = vadd.f32 0.0, %v400
      %v402 = vpop.f32.mrf.mxu0
      %403 = vmatprep.mubr.bf16.mxu0 0
      %404 = vmatmul.mubr.bf16.gmra.mxu0 %v337
      %v405 = vpop.f32.mrf.mxu0
      %v406 = vadd.f32 0.0, %v405
      %v407 = vpop.f32.mrf.mxu0
      %v408 = vpop.f32.mrf.mxu0
      %v409 = vadd.f32 0.0, %v408
      %v410 = vpop.f32.mrf.mxu0
      %411 = vdwg.mxu0
      %v420 = vunpack.c.l.b16 %v209
      %v421 = vunpack.c.l.b16 %v210
      %v422 = vunpack.c.l.b16 %v211
      %v423 = vunpack.c.l.b16 %v212
      %v424 = vunpack.c.l.b16 %v213
      %v425 = vunpack.c.l.b16 %v214
      %v426 = vunpack.c.l.b16 %v215
      %v427 = vunpack.c.l.b16 %v216
      %v428 = vpack.c.b16 %v421, %v420
      %v429 = vpack.c.b16 %v423, %v422
      %v430 = vpack.c.b16 %v425, %v424
      %v431 = vpack.c.b16 %v427, %v426
      %v436 = vsel %vm323, %v248, 0
      %v438 = vsel %vm323, %v249, 0
      %v440 = vsel %vm323, %v250, 0
      %v442 = vsel %vm323, %v251, 0
      %v444 = vsel %vm323, %v252, 0
      %446 = vmatprep.subr.bf16.mxu0 0
      %447 = vmatpush1.bf16.msra.mxu0 0
      %448 = vmatprep.subr.bf16.mxu0 0
      %449 = vmatpush1.bf16.msra.mxu0 0
      %450 = vmatprep.subr.bf16.mxu0 0
      %451 = vmatpush1.bf16.msra.mxu0 0
      %452 = vmatprep.subr.bf16.mxu0 0
      %453 = vmatpush1.bf16.msra.mxu0 0
      %454 = vmatprep.subr.bf16.mxu0 0
      %455 = vmatpush1.bf16.msra.mxu0 %v431
      %456 = vmatprep.subr.bf16.mxu0 0
      %457 = vmatpush1.bf16.msra.mxu0 %v430
      %458 = vmatprep.subr.bf16.mxu0 0
      %459 = vmatpush1.bf16.msra.mxu0 %v429
      %460 = vmatprep.subr.bf16.mxu0 0
      %461 = vmatpush1.bf16.msra.mxu0 %v428
      %462 = vmatprep.subr.bf16.mxu0 0
      %463 = vmatpush2.bf16.msra.mxu0 0
      %464 = vmatprep.subr.bf16.mxu0 0
      %465 = vmatpush2.bf16.msra.mxu0 0
      %466 = vmatprep.subr.bf16.mxu0 0
      %467 = vmatpush2.bf16.msra.mxu0 0
      %468 = vmatprep.subr.bf16.mxu0 0
      %469 = vmatpush2.bf16.msra.mxu0 0
      %470 = vmatprep.subr.bf16.mxu0 0
      %471 = vmatpush2.bf16.msra.mxu0 0
      %472 = vmatprep.subr.bf16.mxu0 0
      %473 = vmatpush2.bf16.msra.mxu0 0
      %474 = vmatprep.subr.bf16.mxu0 0
      %475 = vmatpush2.bf16.msra.mxu0 0
      %476 = vmatprep.subr.bf16.mxu0 0
      %477 = vmatpush2.bf16.msra.mxu0 0
      %478 = vmatprep.mubr.bf16.mxu0 0
      %479 = vmatmul.mubr.bf16.gmra.mxu0 %v436
      %v480 = vpop.f32.mrf.mxu0
      %v481 = vadd.f32 %v374, %v480
      %v482 = vpop.f32.mrf.mxu0
      %v483 = vpop.f32.mrf.mxu0
      %v484 = vadd.f32 %v377, %v483
      %v485 = vpop.f32.mrf.mxu0
      %486 = vmatprep.mubr.bf16.mxu0 0
      %487 = vmatmul.mubr.bf16.gmra.mxu0 %v438
      %v488 = vpop.f32.mrf.mxu0
      %v489 = vadd.f32 %v382, %v488
      %v490 = vpop.f32.mrf.mxu0
      %v491 = vpop.f32.mrf.mxu0
      %v492 = vadd.f32 %v385, %v491
      %v493 = vpop.f32.mrf.mxu0
      %494 = vmatprep.mubr.bf16.mxu0 0
      %495 = vmatmul.mubr.bf16.gmra.mxu0 %v440
      %v496 = vpop.f32.mrf.mxu0
      %v497 = vadd.f32 %v390, %v496
      %v498 = vpop.f32.mrf.mxu0
      %v499 = vpop.f32.mrf.mxu0
      %v500 = vadd.f32 %v393, %v499
      %v501 = vpop.f32.mrf.mxu0
      %502 = vmatprep.mubr.bf16.mxu0 0
      %503 = vmatmul.mubr.bf16.gmra.mxu0 %v442
      %v504 = vpop.f32.mrf.mxu0
      %v505 = vadd.f32 %v398, %v504
      %v506 = vpop.f32.mrf.mxu0
      %v507 = vpop.f32.mrf.mxu0
      %v508 = vadd.f32 %v401, %v507
      %v509 = vpop.f32.mrf.mxu0
      %510 = vmatprep.mubr.bf16.mxu0 0
      %511 = vmatmul.mubr.bf16.gmra.mxu0 %v444
      %v512 = vpop.f32.mrf.mxu0
      %v513 = vadd.f32 %v406, %v512
      %v514 = vpop.f32.mrf.mxu0
      %v515 = vpop.f32.mrf.mxu0
      %v516 = vadd.f32 %v409, %v515
      %v517 = vpop.f32.mrf.mxu0
      %518 = vdwg.mxu0
      %v519 = vld [vmem:[%s192] sm:$0xe]
      %v520 = vld [vmem:[%s1 + $0x40] sm:$0xf]
      %v521 = vld [vmem:[%s1 + $0x44] sm:$0xf]
      %v522 = vld [vmem:[%s1 + $0x48] sm:$0xf]
      %v523 = vld [vmem:[%s1 + $0x4c] sm:$0xf]
      %v524 = vld [vmem:[%s1 + $0x50] sm:$0xf]
      %v525 = vld [vmem:[%s1 + $0x54] sm:$0xf]
      %v526 = vld [vmem:[%s1 + $0x58] sm:$0xf]
      %v527 = vld [vmem:[%s1 + $0x5c] sm:$0xf]
      %v529 = vunpack.c.l.b16 %v519
      %v530 = vpack.c.b16 %v238, %v529
      %vm531 = vcmask 1046528
      %v532 = vrot.slane %v530, 1
      %v533 = vrot.slane %v249, 1
      %v534 = vsel %vm531, %v532, %v533
      %v535 = vrot.slane %v250, 1
      %v536 = vsel %vm531, %v533, %v535
      %v537 = vrot.slane %v251, 1
      %v538 = vsel %vm531, %v535, %v537
      %v539 = vrot.slane %v252, 1
      %v540 = vsel %vm531, %v537, %v539
      %v541 = vrot.slane %v253, 1
      %v542 = vsel %vm531, %v539, %v541
      %v551 = vunpack.c.l.b16 %v520
      %v552 = vunpack.c.l.b16 %v521
      %v553 = vunpack.c.l.b16 %v522
      %v554 = vunpack.c.l.b16 %v523
      %v555 = vunpack.c.l.b16 %v524
      %v556 = vunpack.c.l.b16 %v525
      %v557 = vunpack.c.l.b16 %v526
      %v558 = vunpack.c.l.b16 %v527
      %v559 = vpack.c.b16 %v552, %v551
      %v560 = vpack.c.b16 %v554, %v553
      %v561 = vpack.c.b16 %v556, %v555
      %v562 = vpack.c.b16 %v558, %v557
      %v568 = vsel %vm323, %v534, 0
      %v571 = vsel %vm323, %v536, 0
      %v574 = vsel %vm323, %v538, 0
      %v577 = vsel %vm323, %v540, 0
      %v580 = vsel %vm323, %v542, 0
      %582 = vmatprep.subr.bf16.mxu0 0
      %583 = vmatpush1.bf16.msra.mxu0 0
      %584 = vmatprep.subr.bf16.mxu0 0
      %585 = vmatpush1.bf16.msra.mxu0 0
      %586 = vmatprep.subr.bf16.mxu0 0
      %587 = vmatpush1.bf16.msra.mxu0 0
      %588 = vmatprep.subr.bf16.mxu0 0
      %589 = vmatpush1.bf16.msra.mxu0 0
      %590 = vmatprep.subr.bf16.mxu0 0
      %591 = vmatpush1.bf16.msra.mxu0 %v562
      %592 = vmatprep.subr.bf16.mxu0 0
      %593 = vmatpush1.bf16.msra.mxu0 %v561
      %594 = vmatprep.subr.bf16.mxu0 0
      %595 = vmatpush1.bf16.msra.mxu0 %v560
      %596 = vmatprep.subr.bf16.mxu0 0
      %597 = vmatpush1.bf16.msra.mxu0 %v559
      %598 = vmatprep.subr.bf16.mxu0 0
      %599 = vmatpush2.bf16.msra.mxu0 0
      %600 = vmatprep.subr.bf16.mxu0 0
      %601 = vmatpush2.bf16.msra.mxu0 0
      %602 = vmatprep.subr.bf16.mxu0 0
      %603 = vmatpush2.bf16.msra.mxu0 0
      %604 = vmatprep.subr.bf16.mxu0 0
      %605 = vmatpush2.bf16.msra.mxu0 0
      %606 = vmatprep.subr.bf16.mxu0 0
      %607 = vmatpush2.bf16.msra.mxu0 0
      %608 = vmatprep.subr.bf16.mxu0 0
      %609 = vmatpush2.bf16.msra.mxu0 0
      %610 = vmatprep.subr.bf16.mxu0 0
      %611 = vmatpush2.bf16.msra.mxu0 0
      %612 = vmatprep.subr.bf16.mxu0 0
      %613 = vmatpush2.bf16.msra.mxu0 0
      %614 = vmatprep.mubr.bf16.mxu0 0
      %615 = vmatmul.mubr.bf16.gmra.mxu0 %v568
      %v616 = vpop.f32.mrf.mxu0
      %v617 = vadd.f32 0.0, %v616
      %v618 = vpop.f32.mrf.mxu0
      %v619 = vpop.f32.mrf.mxu0
      %v620 = vadd.f32 0.0, %v619
      %v621 = vpop.f32.mrf.mxu0
      %622 = vmatprep.mubr.bf16.mxu0 0
      %623 = vmatmul.mubr.bf16.gmra.mxu0 %v571
      %v624 = vpop.f32.mrf.mxu0
      %v625 = vadd.f32 0.0, %v624
      %v626 = vpop.f32.mrf.mxu0
      %v627 = vpop.f32.mrf.mxu0
      %v628 = vadd.f32 0.0, %v627
      %v629 = vpop.f32.mrf.mxu0
      %630 = vmatprep.mubr.bf16.mxu0 0
      %631 = vmatmul.mubr.bf16.gmra.mxu0 %v574
      %v632 = vpop.f32.mrf.mxu0
      %v633 = vadd.f32 0.0, %v632
      %v634 = vpop.f32.mrf.mxu0
      %v635 = vpop.f32.mrf.mxu0
      %v636 = vadd.f32 0.0, %v635
      %v637 = vpop.f32.mrf.mxu0
      %638 = vmatprep.mubr.bf16.mxu0 0
      %639 = vmatmul.mubr.bf16.gmra.mxu0 %v577
      %v640 = vpop.f32.mrf.mxu0
      %v641 = vadd.f32 0.0, %v640
      %v642 = vpop.f32.mrf.mxu0
      %v643 = vpop.f32.mrf.mxu0
      %v644 = vadd.f32 0.0, %v643
      %v645 = vpop.f32.mrf.mxu0
      %646 = vmatprep.mubr.bf16.mxu0 0
      %647 = vmatmul.mubr.bf16.gmra.mxu0 %v580
      %v648 = vpop.f32.mrf.mxu0
      %v649 = vadd.f32 0.0, %v648
      %v650 = vpop.f32.mrf.mxu0
      %v651 = vpop.f32.mrf.mxu0
      %v652 = vadd.f32 0.0, %v651
      %v653 = vpop.f32.mrf.mxu0
      %654 = vdwg.mxu0
      %v655 = vadd.f32 %v481, %v617
      %v656 = vadd.f32 %v484, %v620
      %v657 = vadd.f32 %v489, %v625
      %v658 = vadd.f32 %v492, %v628
      %v659 = vadd.f32 %v497, %v633
      %v660 = vadd.f32 %v500, %v636
      %v661 = vadd.f32 %v505, %v641
      %v662 = vadd.f32 %v508, %v644
      %v663 = vadd.f32 %v513, %v649
      %v664 = vadd.f32 %v516, %v652
      %v665 = vld [vmem:[%s192 + $0x4] sm:$0xe]
      %v666 = vld [vmem:[%s192 + $0x8] sm:$0xf]
      %v667 = vld [vmem:[%s192 + $0xc] sm:$0xf]
      %v668 = vld [vmem:[%s192 + $0x10] sm:$0xf]
      %v669 = vld [vmem:[%s192 + $0x14] sm:$0xf]
      %v670 = vld [vmem:[%s192 + $0x18] sm:$0xf]
      %v671 = vld [vmem:[%s192 + $0x1c] sm:$0xf]
      %v672 = vld [vmem:[%s192 + $0x20] sm:$0xf]
      %v673 = vld [vmem:[%s192 + $0x24] sm:$0xf]
      %v674 = vld [vmem:[%s192 + $0x28] sm:$0xf]
      %v675 = vld [vmem:[%s192 + $0x2c] sm:$0x1]
      %v676 = vld [vmem:[%s1 + $0x60] sm:$0xf]
      %v677 = vld [vmem:[%s1 + $0x64] sm:$0xf]
      %v678 = vld [vmem:[%s1 + $0x68] sm:$0xf]
      %v679 = vld [vmem:[%s1 + $0x6c] sm:$0xf]
      %v680 = vld [vmem:[%s1 + $0x70] sm:$0xf]
      %v681 = vld [vmem:[%s1 + $0x74] sm:$0xf]
      %v682 = vld [vmem:[%s1 + $0x78] sm:$0xf]
      %v683 = vld [vmem:[%s1 + $0x7c] sm:$0xf]
      %v695 = vunpack.c.l.b16 %v665
      %v696 = vunpack.c.l.b16 %v666
      %v697 = vunpack.c.l.b16 %v667
      %v698 = vunpack.c.l.b16 %v668
      %v699 = vunpack.c.l.b16 %v669
      %v700 = vunpack.c.l.b16 %v670
      %v701 = vunpack.c.l.b16 %v671
      %v702 = vunpack.c.l.b16 %v672
      %v703 = vunpack.c.l.b16 %v673
      %v704 = vunpack.c.l.b16 %v674
      %v705 = vunpack.c.l.b16 %v675
      %v706 = vpack.c.b16 %v696, %v695
      %v707 = vpack.c.b16 %v698, %v697
      %v708 = vpack.c.b16 %v700, %v699
      %v709 = vpack.c.b16 %v702, %v701
      %v710 = vpack.c.b16 %v704, %v703
      %v711 = vpack.c.b16 %v705, %v705
      %v712 = vrot.slane %v706, 1
      %v713 = vrot.slane %v707, 1
      %v714 = vsel %vm531, %v712, %v713
      %v715 = vrot.slane %v708, 1
      %v716 = vsel %vm531, %v713, %v715
      %v717 = vrot.slane %v709, 1
      %v718 = vsel %vm531, %v715, %v717
      %v719 = vrot.slane %v710, 1
      %v720 = vsel %vm531, %v717, %v719
      %v721 = vrot.slane %v711, 1
      %v722 = vsel %vm531, %v719, %v721
      %v731 = vunpack.c.l.b16 %v676
      %v732 = vunpack.c.l.b16 %v677
      %v733 = vunpack.c.l.b16 %v678
      %v734 = vunpack.c.l.b16 %v679
      %v735 = vunpack.c.l.b16 %v680
      %v736 = vunpack.c.l.b16 %v681
      %v737 = vunpack.c.l.b16 %v682
      %v738 = vunpack.c.l.b16 %v683
      %v739 = vpack.c.b16 %v732, %v731
      %v740 = vpack.c.b16 %v734, %v733
      %v741 = vpack.c.b16 %v736, %v735
      %v742 = vpack.c.b16 %v738, %v737
      %v748 = vsel %vm323, %v714, 0
      %v751 = vsel %vm323, %v716, 0
      %v754 = vsel %vm323, %v718, 0
      %v757 = vsel %vm323, %v720, 0
      %v760 = vsel %vm323, %v722, 0
      %762 = vmatprep.subr.bf16.mxu0 0
      %763 = vmatpush1.bf16.msra.mxu0 0
      %764 = vmatprep.subr.bf16.mxu0 0
      %765 = vmatpush1.bf16.msra.mxu0 0
      %766 = vmatprep.subr.bf16.mxu0 0
      %767 = vmatpush1.bf16.msra.mxu0 0
      %768 = vmatprep.subr.bf16.mxu0 0
      %769 = vmatpush1.bf16.msra.mxu0 0
      %770 = vmatprep.subr.bf16.mxu0 0
      %771 = vmatpush1.bf16.msra.mxu0 %v742
      %772 = vmatprep.subr.bf16.mxu0 0
      %773 = vmatpush1.bf16.msra.mxu0 %v741
      %774 = vmatprep.subr.bf16.mxu0 0
      %775 = vmatpush1.bf16.msra.mxu0 %v740
      %776 = vmatprep.subr.bf16.mxu0 0
      %777 = vmatpush1.bf16.msra.mxu0 %v739
      %778 = vmatprep.subr.bf16.mxu0 0
      %779 = vmatpush2.bf16.msra.mxu0 0
      %780 = vmatprep.subr.bf16.mxu0 0
      %781 = vmatpush2.bf16.msra.mxu0 0
      %782 = vmatprep.subr.bf16.mxu0 0
      %783 = vmatpush2.bf16.msra.mxu0 0
      %784 = vmatprep.subr.bf16.mxu0 0
      %785 = vmatpush2.bf16.msra.mxu0 0
      %786 = vmatprep.subr.bf16.mxu0 0
      %787 = vmatpush2.bf16.msra.mxu0 0
      %788 = vmatprep.subr.bf16.mxu0 0
      %789 = vmatpush2.bf16.msra.mxu0 0
      %790 = vmatprep.subr.bf16.mxu0 0
      %791 = vmatpush2.bf16.msra.mxu0 0
      %792 = vmatprep.subr.bf16.mxu0 0
      %793 = vmatpush2.bf16.msra.mxu0 0
      %794 = vmatprep.mubr.bf16.mxu0 0
      %795 = vmatmul.mubr.bf16.gmra.mxu0 %v748
      %v796 = vpop.f32.mrf.mxu0
      %v797 = vadd.f32 0.0, %v796
      %v798 = vpop.f32.mrf.mxu0
      %v799 = vpop.f32.mrf.mxu0
      %v800 = vadd.f32 0.0, %v799
      %v801 = vpop.f32.mrf.mxu0
      %802 = vmatprep.mubr.bf16.mxu0 0
      %803 = vmatmul.mubr.bf16.gmra.mxu0 %v751
      %v804 = vpop.f32.mrf.mxu0
      %v805 = vadd.f32 0.0, %v804
      %v806 = vpop.f32.mrf.mxu0
      %v807 = vpop.f32.mrf.mxu0
      %v808 = vadd.f32 0.0, %v807
      %v809 = vpop.f32.mrf.mxu0
      %810 = vmatprep.mubr.bf16.mxu0 0
      %811 = vmatmul.mubr.bf16.gmra.mxu0 %v754
      %v812 = vpop.f32.mrf.mxu0
      %v813 = vadd.f32 0.0, %v812
      %v814 = vpop.f32.mrf.mxu0
      %v815 = vpop.f32.mrf.mxu0
      %v816 = vadd.f32 0.0, %v815
      %v817 = vpop.f32.mrf.mxu0
      %818 = vmatprep.mubr.bf16.mxu0 0
      %819 = vmatmul.mubr.bf16.gmra.mxu0 %v757
      %v820 = vpop.f32.mrf.mxu0
      %v821 = vadd.f32 0.0, %v820
      %v822 = vpop.f32.mrf.mxu0
      %v823 = vpop.f32.mrf.mxu0
      %v824 = vadd.f32 0.0, %v823
      %v825 = vpop.f32.mrf.mxu0
      %826 = vmatprep.mubr.bf16.mxu0 0
      %827 = vmatmul.mubr.bf16.gmra.mxu0 %v760
      %v828 = vpop.f32.mrf.mxu0
      %v829 = vadd.f32 0.0, %v828
      %v830 = vpop.f32.mrf.mxu0
      %v831 = vpop.f32.mrf.mxu0
      %v832 = vadd.f32 0.0, %v831
      %v833 = vpop.f32.mrf.mxu0
      %834 = vdwg.mxu0
      %v835 = vadd.f32 %v655, %v797
      %v836 = vadd.f32 %v656, %v800
      %v837 = vadd.f32 %v657, %v805
      %v838 = vadd.f32 %v658, %v808
      %v839 = vadd.f32 %v659, %v813
      %v840 = vadd.f32 %v660, %v816
      %v841 = vadd.f32 %v661, %v821
      %v842 = vadd.f32 %v662, %v824
      %v843 = vadd.f32 %v663, %v829
      %v844 = vadd.f32 %v664, %v832
      %v845 = vld [vmem:[%s192 + $0x2c] sm:$0x3]
      %v846 = vld [vmem:[%s1 + $0x80] sm:$0xf]
      %v847 = vld [vmem:[%s1 + $0x84] sm:$0xf]
      %v848 = vld [vmem:[%s1 + $0x88] sm:$0xf]
      %v849 = vld [vmem:[%s1 + $0x8c] sm:$0xf]
      %v850 = vld [vmem:[%s1 + $0x90] sm:$0xf]
      %v851 = vld [vmem:[%s1 + $0x94] sm:$0xf]
      %v852 = vld [vmem:[%s1 + $0x98] sm:$0xf]
      %v853 = vld [vmem:[%s1 + $0x9c] sm:$0xf]
      %v855 = vunpack.c.l.b16 %v845
      %v856 = vpack.c.b16 %v855, %v855
      %vm857 = vsmask.f32 6400
      %v859 = vshrl.u32 %v706, 16
      %v861 = vrot.slane %v859, 1
      %v862 = vshll.u32 %v706, 16
      %v864 = vrot.slane %v862, 2
      %v865 = vor.u32 %v861, %v864
      %v867 = vshrl.u32 %v707, 16
      %v869 = vrot.slane %v867, 1
      %v870 = vshll.u32 %v707, 16
      %v872 = vrot.slane %v870, 2
      %v873 = vor.u32 %v869, %v872
      %v874 = vsel %vm857, %v865, %v873
      %v876 = vshrl.u32 %v708, 16
      %v878 = vrot.slane %v876, 1
      %v879 = vshll.u32 %v708, 16
      %v881 = vrot.slane %v879, 2
      %v882 = vor.u32 %v878, %v881
      %v883 = vsel %vm857, %v873, %v882
      %v885 = vshrl.u32 %v709, 16
      %v887 = vrot.slane %v885, 1
      %v888 = vshll.u32 %v709, 16
      %v890 = vrot.slane %v888, 2
      %v891 = vor.u32 %v887, %v890
      %v892 = vsel %vm857, %v882, %v891
      %v894 = vshrl.u32 %v710, 16
      %v896 = vrot.slane %v894, 1
      %v897 = vshll.u32 %v710, 16
      %v899 = vrot.slane %v897, 2
      %v900 = vor.u32 %v896, %v899
      %v901 = vsel %vm857, %v891, %v900
      %v903 = vshrl.u32 %v856, 16
      %v905 = vrot.slane %v903, 1
      %v906 = vshll.u32 %v856, 16
      %v908 = vrot.slane %v906, 2
      %v909 = vor.u32 %v905, %v908
      %v910 = vsel %vm857, %v900, %v909
      %v919 = vunpack.c.l.b16 %v846
      %v920 = vunpack.c.l.b16 %v847
      %v921 = vunpack.c.l.b16 %v848
      %v922 = vunpack.c.l.b16 %v849
      %v923 = vunpack.c.l.b16 %v850
      %v924 = vunpack.c.l.b16 %v851
      %v925 = vunpack.c.l.b16 %v852
      %v926 = vunpack.c.l.b16 %v853
      %v927 = vpack.c.b16 %v920, %v919
      %v928 = vpack.c.b16 %v922, %v921
      %v929 = vpack.c.b16 %v924, %v923
      %v930 = vpack.c.b16 %v926, %v925
      %v936 = vsel %vm323, %v874, 0
      %v939 = vsel %vm323, %v883, 0
      %v942 = vsel %vm323, %v892, 0
      %v945 = vsel %vm323, %v901, 0
      %v948 = vsel %vm323, %v910, 0
      %950 = vmatprep.subr.bf16.mxu0 0
      %951 = vmatpush1.bf16.msra.mxu0 0
      %952 = vmatprep.subr.bf16.mxu0 0
      %953 = vmatpush1.bf16.msra.mxu0 0
      %954 = vmatprep.subr.bf16.mxu0 0
      %955 = vmatpush1.bf16.msra.mxu0 0
      %956 = vmatprep.subr.bf16.mxu0 0
      %957 = vmatpush1.bf16.msra.mxu0 0
      %958 = vmatprep.subr.bf16.mxu0 0
      %959 = vmatpush1.bf16.msra.mxu0 %v930
      %960 = vmatprep.subr.bf16.mxu0 0
      %961 = vmatpush1.bf16.msra.mxu0 %v929
      %962 = vmatprep.subr.bf16.mxu0 0
      %963 = vmatpush1.bf16.msra.mxu0 %v928
      %964 = vmatprep.subr.bf16.mxu0 0
      %965 = vmatpush1.bf16.msra.mxu0 %v927
      %966 = vmatprep.subr.bf16.mxu0 0
      %967 = vmatpush2.bf16.msra.mxu0 0
      %968 = vmatprep.subr.bf16.mxu0 0
      %969 = vmatpush2.bf16.msra.mxu0 0
      %970 = vmatprep.subr.bf16.mxu0 0
      %971 = vmatpush2.bf16.msra.mxu0 0
      %972 = vmatprep.subr.bf16.mxu0 0
      %973 = vmatpush2.bf16.msra.mxu0 0
      %974 = vmatprep.subr.bf16.mxu0 0
      %975 = vmatpush2.bf16.msra.mxu0 0
      %976 = vmatprep.subr.bf16.mxu0 0
      %977 = vmatpush2.bf16.msra.mxu0 0
      %978 = vmatprep.subr.bf16.mxu0 0
      %979 = vmatpush2.bf16.msra.mxu0 0
      %980 = vmatprep.subr.bf16.mxu0 0
      %981 = vmatpush2.bf16.msra.mxu0 0
      %982 = vmatprep.mubr.bf16.mxu0 0
      %983 = vmatmul.mubr.bf16.gmra.mxu0 %v936
      %v984 = vpop.f32.mrf.mxu0
      %v985 = vadd.f32 0.0, %v984
      %v986 = vpop.f32.mrf.mxu0
      %v987 = vpop.f32.mrf.mxu0
      %v988 = vadd.f32 0.0, %v987
      %v989 = vpop.f32.mrf.mxu0
      %990 = vmatprep.mubr.bf16.mxu0 0
      %991 = vmatmul.mubr.bf16.gmra.mxu0 %v939
      %v992 = vpop.f32.mrf.mxu0
      %v993 = vadd.f32 0.0, %v992
      %v994 = vpop.f32.mrf.mxu0
      %v995 = vpop.f32.mrf.mxu0
      %v996 = vadd.f32 0.0, %v995
      %v997 = vpop.f32.mrf.mxu0
      %998 = vmatprep.mubr.bf16.mxu0 0
      %999 = vmatmul.mubr.bf16.gmra.mxu0 %v942
      %v1000 = vpop.f32.mrf.mxu0
      %v1001 = vadd.f32 0.0, %v1000
      %v1002 = vpop.f32.mrf.mxu0
      %v1003 = vpop.f32.mrf.mxu0
      %v1004 = vadd.f32 0.0, %v1003
      %v1005 = vpop.f32.mrf.mxu0
      %1006 = vmatprep.mubr.bf16.mxu0 0
      %1007 = vmatmul.mubr.bf16.gmra.mxu0 %v945
      %v1008 = vpop.f32.mrf.mxu0
      %v1009 = vadd.f32 0.0, %v1008
      %v1010 = vpop.f32.mrf.mxu0
      %v1011 = vpop.f32.mrf.mxu0
      %v1012 = vadd.f32 0.0, %v1011
      %v1013 = vpop.f32.mrf.mxu0
      %1014 = vmatprep.mubr.bf16.mxu0 0
      %1015 = vmatmul.mubr.bf16.gmra.mxu0 %v948
      %v1016 = vpop.f32.mrf.mxu0
      %v1017 = vadd.f32 0.0, %v1016
      %v1018 = vpop.f32.mrf.mxu0
      %v1019 = vpop.f32.mrf.mxu0
      %v1020 = vadd.f32 0.0, %v1019
      %v1021 = vpop.f32.mrf.mxu0
      %1022 = vdwg.mxu0
      %v1023 = vadd.f32 %v835, %v985
      %v1024 = vadd.f32 %v836, %v988
      %v1025 = vadd.f32 %v837, %v993
      %v1026 = vadd.f32 %v838, %v996
      %v1027 = vadd.f32 %v839, %v1001
      %v1028 = vadd.f32 %v840, %v1004
      %v1029 = vadd.f32 %v841, %v1009
      %v1030 = vadd.f32 %v842, %v1012
      %v1031 = vadd.f32 %v843, %v1017
      %v1032 = vadd.f32 %v844, %v1020
      %v1033 = vld [vmem:[%s192 + $0x4] sm:$0xc]
      %v1034 = vld [vmem:[%s1 + $0xa0] sm:$0xf]
      %v1035 = vld [vmem:[%s1 + $0xa4] sm:$0xf]
      %v1036 = vld [vmem:[%s1 + $0xa8] sm:$0xf]
      %v1037 = vld [vmem:[%s1 + $0xac] sm:$0xf]
      %v1038 = vld [vmem:[%s1 + $0xb0] sm:$0xf]
      %v1039 = vld [vmem:[%s1 + $0xb4] sm:$0xf]
      %v1040 = vld [vmem:[%s1 + $0xb8] sm:$0xf]
      %v1041 = vld [vmem:[%s1 + $0xbc] sm:$0xf]
      %v1043 = vunpack.c.l.b16 %v1033
      %v1044 = vpack.c.b16 %v696, %v1043
      %vm1045 = vcmask 1045504
      %v1046 = vrot.slane %v1044, 2
      %v1047 = vrot.slane %v707, 2
      %v1048 = vsel %vm1045, %v1046, %v1047
      %v1049 = vrot.slane %v708, 2
      %v1050 = vsel %vm1045, %v1047, %v1049
      %v1051 = vrot.slane %v709, 2
      %v1052 = vsel %vm1045, %v1049, %v1051
      %v1053 = vrot.slane %v710, 2
      %v1054 = vsel %vm1045, %v1051, %v1053
      %v1055 = vrot.slane %v856, 2
      %v1056 = vsel %vm1045, %v1053, %v1055
      %v1065 = vunpack.c.l.b16 %v1034
      %v1066 = vunpack.c.l.b16 %v1035
      %v1067 = vunpack.c.l.b16 %v1036
      %v1068 = vunpack.c.l.b16 %v1037
      %v1069 = vunpack.c.l.b16 %v1038
      %v1070 = vunpack.c.l.b16 %v1039
      %v1071 = vunpack.c.l.b16 %v1040
      %v1072 = vunpack.c.l.b16 %v1041
      %v1073 = vpack.c.b16 %v1066, %v1065
      %v1074 = vpack.c.b16 %v1068, %v1067
      %v1075 = vpack.c.b16 %v1070, %v1069
      %v1076 = vpack.c.b16 %v1072, %v1071
      %v1082 = vsel %vm323, %v1048, 0
      %v1085 = vsel %vm323, %v1050, 0
      %v1088 = vsel %vm323, %v1052, 0
      %v1091 = vsel %vm323, %v1054, 0
      %v1094 = vsel %vm323, %v1056, 0
      %1096 = vmatprep.subr.bf16.mxu0 0
      %1097 = vmatpush1.bf16.msra.mxu0 0
      %1098 = vmatprep.subr.bf16.mxu0 0
      %1099 = vmatpush1.bf16.msra.mxu0 0
      %1100 = vmatprep.subr.bf16.mxu0 0
      %1101 = vmatpush1.bf16.msra.mxu0 0
      %1102 = vmatprep.subr.bf16.mxu0 0
      %1103 = vmatpush1.bf16.msra.mxu0 0
      %1104 = vmatprep.subr.bf16.mxu0 0
      %1105 = vmatpush1.bf16.msra.mxu0 %v1076
      %1106 = vmatprep.subr.bf16.mxu0 0
      %1107 = vmatpush1.bf16.msra.mxu0 %v1075
      %1108 = vmatprep.subr.bf16.mxu0 0
      %1109 = vmatpush1.bf16.msra.mxu0 %v1074
      %1110 = vmatprep.subr.bf16.mxu0 0
      %1111 = vmatpush1.bf16.msra.mxu0 %v1073
      %1112 = vmatprep.subr.bf16.mxu0 0
      %1113 = vmatpush2.bf16.msra.mxu0 0
      %1114 = vmatprep.subr.bf16.mxu0 0
      %1115 = vmatpush2.bf16.msra.mxu0 0
      %1116 = vmatprep.subr.bf16.mxu0 0
      %1117 = vmatpush2.bf16.msra.mxu0 0
      %1118 = vmatprep.subr.bf16.mxu0 0
      %1119 = vmatpush2.bf16.msra.mxu0 0
      %1120 = vmatprep.subr.bf16.mxu0 0
      %1121 = vmatpush2.bf16.msra.mxu0 0
      %1122 = vmatprep.subr.bf16.mxu0 0
      %1123 = vmatpush2.bf16.msra.mxu0 0
      %1124 = vmatprep.subr.bf16.mxu0 0
      %1125 = vmatpush2.bf16.msra.mxu0 0
      %1126 = vmatprep.subr.bf16.mxu0 0
      %1127 = vmatpush2.bf16.msra.mxu0 0
      %1128 = vmatprep.mubr.bf16.mxu0 0
      %1129 = vmatmul.mubr.bf16.gmra.mxu0 %v1082
      %v1130 = vpop.f32.mrf.mxu0
      %v1131 = vadd.f32 0.0, %v1130
      %v1132 = vpop.f32.mrf.mxu0
      %v1133 = vpop.f32.mrf.mxu0
      %v1134 = vadd.f32 0.0, %v1133
      %v1135 = vpop.f32.mrf.mxu0
      %1136 = vmatprep.mubr.bf16.mxu0 0
      %1137 = vmatmul.mubr.bf16.gmra.mxu0 %v1085
      %v1138 = vpop.f32.mrf.mxu0
      %v1139 = vadd.f32 0.0, %v1138
      %v1140 = vpop.f32.mrf.mxu0
      %v1141 = vpop.f32.mrf.mxu0
      %v1142 = vadd.f32 0.0, %v1141
      %v1143 = vpop.f32.mrf.mxu0
      %1144 = vmatprep.mubr.bf16.mxu0 0
      %1145 = vmatmul.mubr.bf16.gmra.mxu0 %v1088
      %v1146 = vpop.f32.mrf.mxu0
      %v1147 = vadd.f32 0.0, %v1146
      %v1148 = vpop.f32.mrf.mxu0
      %v1149 = vpop.f32.mrf.mxu0
      %v1150 = vadd.f32 0.0, %v1149
      %v1151 = vpop.f32.mrf.mxu0
      %1152 = vmatprep.mubr.bf16.mxu0 0
      %1153 = vmatmul.mubr.bf16.gmra.mxu0 %v1091
      %v1154 = vpop.f32.mrf.mxu0
      %v1155 = vadd.f32 0.0, %v1154
      %v1156 = vpop.f32.mrf.mxu0
      %v1157 = vpop.f32.mrf.mxu0
      %v1158 = vadd.f32 0.0, %v1157
      %v1159 = vpop.f32.mrf.mxu0
      %1160 = vmatprep.mubr.bf16.mxu0 0
      %1161 = vmatmul.mubr.bf16.gmra.mxu0 %v1094
      %v1162 = vpop.f32.mrf.mxu0
      %v1163 = vadd.f32 0.0, %v1162
      %v1164 = vpop.f32.mrf.mxu0
      %v1165 = vpop.f32.mrf.mxu0
      %v1166 = vadd.f32 0.0, %v1165
      %v1167 = vpop.f32.mrf.mxu0
      %1168 = vdwg.mxu0
      %v1169 = vadd.f32 %v1023, %v1131
      %v1170 = vadd.f32 %v1024, %v1134
      %v1171 = vadd.f32 %v1025, %v1139
      %v1172 = vadd.f32 %v1026, %v1142
      %v1173 = vadd.f32 %v1027, %v1147
      %v1174 = vadd.f32 %v1028, %v1150
      %v1175 = vadd.f32 %v1029, %v1155
      %v1176 = vadd.f32 %v1030, %v1158
      %v1177 = vadd.f32 %v1031, %v1163
      %v1178 = vadd.f32 %v1032, %v1166
      %v1179 = vld [vmem:[%s192 + $0x8] sm:$0xc]
      %v1180 = vld [vmem:[%s192 + $0xc] sm:$0xf]
      %v1181 = vld [vmem:[%s192 + $0x10] sm:$0xf]
      %v1182 = vld [vmem:[%s192 + $0x14] sm:$0xf]
      %v1183 = vld [vmem:[%s192 + $0x18] sm:$0xf]
      %v1184 = vld [vmem:[%s192 + $0x1c] sm:$0xf]
      %v1185 = vld [vmem:[%s192 + $0x20] sm:$0xf]
      %v1186 = vld [vmem:[%s192 + $0x24] sm:$0xf]
      %v1187 = vld [vmem:[%s192 + $0x28] sm:$0xf]
      %v1188 = vld [vmem:[%s192 + $0x2c] sm:$0xf]
      %v1189 = vld [vmem:[%s192 + $0x30] sm:$0x3]
      %v1190 = vld [vmem:[%s1 + $0xc0] sm:$0xf]
      %v1191 = vld [vmem:[%s1 + $0xc4] sm:$0xf]
      %v1192 = vld [vmem:[%s1 + $0xc8] sm:$0xf]
      %v1193 = vld [vmem:[%s1 + $0xcc] sm:$0xf]
      %v1194 = vld [vmem:[%s1 + $0xd0] sm:$0xf]
      %v1195 = vld [vmem:[%s1 + $0xd4] sm:$0xf]
      %v1196 = vld [vmem:[%s1 + $0xd8] sm:$0xf]
      %v1197 = vld [vmem:[%s1 + $0xdc] sm:$0xf]
      %v1209 = vunpack.c.l.b16 %v1179
      %v1210 = vunpack.c.l.b16 %v1180
      %v1211 = vunpack.c.l.b16 %v1181
      %v1212 = vunpack.c.l.b16 %v1182
      %v1213 = vunpack.c.l.b16 %v1183
      %v1214 = vunpack.c.l.b16 %v1184
      %v1215 = vunpack.c.l.b16 %v1185
      %v1216 = vunpack.c.l.b16 %v1186
      %v1217 = vunpack.c.l.b16 %v1187
      %v1218 = vunpack.c.l.b16 %v1188
      %v1219 = vunpack.c.l.b16 %v1189
      %v1220 = vpack.c.b16 %v1210, %v1209
      %v1221 = vpack.c.b16 %v1212, %v1211
      %v1222 = vpack.c.b16 %v1214, %v1213
      %v1223 = vpack.c.b16 %v1216, %v1215
      %v1224 = vpack.c.b16 %v1218, %v1217
      %v1225 = vpack.c.b16 %v1219, %v1219
      %v1226 = vrot.slane %v1220, 2
      %v1227 = vrot.slane %v1221, 2
      %v1228 = vsel %vm1045, %v1226, %v1227
      %v1229 = vrot.slane %v1222, 2
      %v1230 = vsel %vm1045, %v1227, %v1229
      %v1231 = vrot.slane %v1223, 2
      %v1232 = vsel %vm1045, %v1229, %v1231
      %v1233 = vrot.slane %v1224, 2
      %v1234 = vsel %vm1045, %v1231, %v1233
      %v1235 = vrot.slane %v1225, 2
      %v1236 = vsel %vm1045, %v1233, %v1235
      %v1245 = vunpack.c.l.b16 %v1190
      %v1246 = vunpack.c.l.b16 %v1191
      %v1247 = vunpack.c.l.b16 %v1192
      %v1248 = vunpack.c.l.b16 %v1193
      %v1249 = vunpack.c.l.b16 %v1194
      %v1250 = vunpack.c.l.b16 %v1195
      %v1251 = vunpack.c.l.b16 %v1196
      %v1252 = vunpack.c.l.b16 %v1197
      %v1253 = vpack.c.b16 %v1246, %v1245
      %v1254 = vpack.c.b16 %v1248, %v1247
      %v1255 = vpack.c.b16 %v1250, %v1249
      %v1256 = vpack.c.b16 %v1252, %v1251
      %v1262 = vsel %vm323, %v1228, 0
      %v1265 = vsel %vm323, %v1230, 0
      %v1268 = vsel %vm323, %v1232, 0
      %v1271 = vsel %vm323, %v1234, 0
      %v1274 = vsel %vm323, %v1236, 0
      %1276 = vmatprep.subr.bf16.mxu0 0
      %1277 = vmatpush1.bf16.msra.mxu0 0
      %1278 = vmatprep.subr.bf16.mxu0 0
      %1279 = vmatpush1.bf16.msra.mxu0 0
      %1280 = vmatprep.subr.bf16.mxu0 0
      %1281 = vmatpush1.bf16.msra.mxu0 0
      %1282 = vmatprep.subr.bf16.mxu0 0
      %1283 = vmatpush1.bf16.msra.mxu0 0
      %1284 = vmatprep.subr.bf16.mxu0 0
      %1285 = vmatpush1.bf16.msra.mxu0 %v1256
      %1286 = vmatprep.subr.bf16.mxu0 0
      %1287 = vmatpush1.bf16.msra.mxu0 %v1255
      %1288 = vmatprep.subr.bf16.mxu0 0
      %1289 = vmatpush1.bf16.msra.mxu0 %v1254
      %1290 = vmatprep.subr.bf16.mxu0 0
      %1291 = vmatpush1.bf16.msra.mxu0 %v1253
      %1292 = vmatprep.subr.bf16.mxu0 0
      %1293 = vmatpush2.bf16.msra.mxu0 0
      %1294 = vmatprep.subr.bf16.mxu0 0
      %1295 = vmatpush2.bf16.msra.mxu0 0
      %1296 = vmatprep.subr.bf16.mxu0 0
      %1297 = vmatpush2.bf16.msra.mxu0 0
      %1298 = vmatprep.subr.bf16.mxu0 0
      %1299 = vmatpush2.bf16.msra.mxu0 0
      %1300 = vmatprep.subr.bf16.mxu0 0
      %1301 = vmatpush2.bf16.msra.mxu0 0
      %1302 = vmatprep.subr.bf16.mxu0 0
      %1303 = vmatpush2.bf16.msra.mxu0 0
      %1304 = vmatprep.subr.bf16.mxu0 0
      %1305 = vmatpush2.bf16.msra.mxu0 0
      %1306 = vmatprep.subr.bf16.mxu0 0
      %1307 = vmatpush2.bf16.msra.mxu0 0
      %1308 = vmatprep.mubr.bf16.mxu0 0
      %1309 = vmatmul.mubr.bf16.gmra.mxu0 %v1262
      %v1310 = vpop.f32.mrf.mxu0
      %v1311 = vadd.f32 0.0, %v1310
      %v1312 = vpop.f32.mrf.mxu0
      %v1313 = vpop.f32.mrf.mxu0
      %v1314 = vadd.f32 0.0, %v1313
      %v1315 = vpop.f32.mrf.mxu0
      %1316 = vmatprep.mubr.bf16.mxu0 0
      %1317 = vmatmul.mubr.bf16.gmra.mxu0 %v1265
      %v1318 = vpop.f32.mrf.mxu0
      %v1319 = vadd.f32 0.0, %v1318
      %v1320 = vpop.f32.mrf.mxu0
      %v1321 = vpop.f32.mrf.mxu0
      %v1322 = vadd.f32 0.0, %v1321
      %v1323 = vpop.f32.mrf.mxu0
      %1324 = vmatprep.mubr.bf16.mxu0 0
      %1325 = vmatmul.mubr.bf16.gmra.mxu0 %v1268
      %v1326 = vpop.f32.mrf.mxu0
      %v1327 = vadd.f32 0.0, %v1326
      %v1328 = vpop.f32.mrf.mxu0
      %v1329 = vpop.f32.mrf.mxu0
      %v1330 = vadd.f32 0.0, %v1329
      %v1331 = vpop.f32.mrf.mxu0
      %1332 = vmatprep.mubr.bf16.mxu0 0
      %1333 = vmatmul.mubr.bf16.gmra.mxu0 %v1271
      %v1334 = vpop.f32.mrf.mxu0
      %v1335 = vadd.f32 0.0, %v1334
      %v1336 = vpop.f32.mrf.mxu0
      %v1337 = vpop.f32.mrf.mxu0
      %v1338 = vadd.f32 0.0, %v1337
      %v1339 = vpop.f32.mrf.mxu0
      %1340 = vmatprep.mubr.bf16.mxu0 0
      %1341 = vmatmul.mubr.bf16.gmra.mxu0 %v1274
      %v1342 = vpop.f32.mrf.mxu0
      %v1343 = vadd.f32 0.0, %v1342
      %v1344 = vpop.f32.mrf.mxu0
      %v1345 = vpop.f32.mrf.mxu0
      %v1346 = vadd.f32 0.0, %v1345
      %v1347 = vpop.f32.mrf.mxu0
      %1348 = vdwg.mxu0
      %v1349 = vadd.f32 %v1169, %v1311
      %v1350 = vadd.f32 %v1170, %v1314
      %v1351 = vadd.f32 %v1171, %v1319
      %v1352 = vadd.f32 %v1172, %v1322
      %v1353 = vadd.f32 %v1173, %v1327
      %v1354 = vadd.f32 %v1174, %v1330
      %v1355 = vadd.f32 %v1175, %v1335
      %v1356 = vadd.f32 %v1176, %v1338
      %v1357 = vadd.f32 %v1177, %v1343
      %v1358 = vadd.f32 %v1178, %v1346
      %v1359 = vld [vmem:[%s192 + $0x30] sm:$0x7]
      %v1360 = vld [vmem:[%s1 + $0xe0] sm:$0xf]
      %v1361 = vld [vmem:[%s1 + $0xe4] sm:$0xf]
      %v1362 = vld [vmem:[%s1 + $0xe8] sm:$0xf]
      %v1363 = vld [vmem:[%s1 + $0xec] sm:$0xf]
      %v1364 = vld [vmem:[%s1 + $0xf0] sm:$0xf]
      %v1365 = vld [vmem:[%s1 + $0xf4] sm:$0xf]
      %v1366 = vld [vmem:[%s1 + $0xf8] sm:$0xf]
      %v1367 = vld [vmem:[%s1 + $0xfc] sm:$0xf]
      %v1369 = vunpack.c.l.b16 %v1359
      %v1370 = vpack.c.b16 %v1369, %v1369
      %vm1371 = vsmask.f32 5376
      %v1373 = vshrl.u32 %v1220, 16
      %v1375 = vrot.slane %v1373, 2
      %v1376 = vshll.u32 %v1220, 16
      %v1378 = vrot.slane %v1376, 3
      %v1379 = vor.u32 %v1375, %v1378
      %v1381 = vshrl.u32 %v1221, 16
      %v1383 = vrot.slane %v1381, 2
      %v1384 = vshll.u32 %v1221, 16
      %v1386 = vrot.slane %v1384, 3
      %v1387 = vor.u32 %v1383, %v1386
      %v1388 = vsel %vm1371, %v1379, %v1387
      %v1390 = vshrl.u32 %v1222, 16
      %v1392 = vrot.slane %v1390, 2
      %v1393 = vshll.u32 %v1222, 16
      %v1395 = vrot.slane %v1393, 3
      %v1396 = vor.u32 %v1392, %v1395
      %v1397 = vsel %vm1371, %v1387, %v1396
      %v1399 = vshrl.u32 %v1223, 16
      %v1401 = vrot.slane %v1399, 2
      %v1402 = vshll.u32 %v1223, 16
      %v1404 = vrot.slane %v1402, 3
      %v1405 = vor.u32 %v1401, %v1404
      %v1406 = vsel %vm1371, %v1396, %v1405
      %v1408 = vshrl.u32 %v1224, 16
      %v1410 = vrot.slane %v1408, 2
      %v1411 = vshll.u32 %v1224, 16
      %v1413 = vrot.slane %v1411, 3
      %v1414 = vor.u32 %v1410, %v1413
      %v1415 = vsel %vm1371, %v1405, %v1414
      %v1417 = vshrl.u32 %v1370, 16
      %v1419 = vrot.slane %v1417, 2
      %v1420 = vshll.u32 %v1370, 16
      %v1422 = vrot.slane %v1420, 3
      %v1423 = vor.u32 %v1419, %v1422
      %v1424 = vsel %vm1371, %v1414, %v1423
      %v1433 = vunpack.c.l.b16 %v1360
      %v1434 = vunpack.c.l.b16 %v1361
      %v1435 = vunpack.c.l.b16 %v1362
      %v1436 = vunpack.c.l.b16 %v1363
      %v1437 = vunpack.c.l.b16 %v1364
      %v1438 = vunpack.c.l.b16 %v1365
      %v1439 = vunpack.c.l.b16 %v1366
      %v1440 = vunpack.c.l.b16 %v1367
      %v1441 = vpack.c.b16 %v1434, %v1433
      %v1442 = vpack.c.b16 %v1436, %v1435
      %v1443 = vpack.c.b16 %v1438, %v1437
      %v1444 = vpack.c.b16 %v1440, %v1439
      %v1450 = vsel %vm323, %v1388, 0
      %v1453 = vsel %vm323, %v1397, 0
      %v1456 = vsel %vm323, %v1406, 0
      %v1459 = vsel %vm323, %v1415, 0
      %v1462 = vsel %vm323, %v1424, 0
      %1464 = vmatprep.subr.bf16.mxu0 0
      %1465 = vmatpush1.bf16.msra.mxu0 0
      %1466 = vmatprep.subr.bf16.mxu0 0
      %1467 = vmatpush1.bf16.msra.mxu0 0
      %1468 = vmatprep.subr.bf16.mxu0 0
      %1469 = vmatpush1.bf16.msra.mxu0 0
      %1470 = vmatprep.subr.bf16.mxu0 0
      %1471 = vmatpush1.bf16.msra.mxu0 0
      %1472 = vmatprep.subr.bf16.mxu0 0
      %1473 = vmatpush1.bf16.msra.mxu0 %v1444
      %1474 = vmatprep.subr.bf16.mxu0 0
      %1475 = vmatpush1.bf16.msra.mxu0 %v1443
      %1476 = vmatprep.subr.bf16.mxu0 0
      %1477 = vmatpush1.bf16.msra.mxu0 %v1442
      %1478 = vmatprep.subr.bf16.mxu0 0
      %1479 = vmatpush1.bf16.msra.mxu0 %v1441
      %1480 = vmatprep.subr.bf16.mxu0 0
      %1481 = vmatpush2.bf16.msra.mxu0 0
      %1482 = vmatprep.subr.bf16.mxu0 0
      %1483 = vmatpush2.bf16.msra.mxu0 0
      %1484 = vmatprep.subr.bf16.mxu0 0
      %1485 = vmatpush2.bf16.msra.mxu0 0
      %1486 = vmatprep.subr.bf16.mxu0 0
      %1487 = vmatpush2.bf16.msra.mxu0 0
      %1488 = vmatprep.subr.bf16.mxu0 0
      %1489 = vmatpush2.bf16.msra.mxu0 0
      %1490 = vmatprep.subr.bf16.mxu0 0
      %1491 = vmatpush2.bf16.msra.mxu0 0
      %1492 = vmatprep.subr.bf16.mxu0 0
      %1493 = vmatpush2.bf16.msra.mxu0 0
      %1494 = vmatprep.subr.bf16.mxu0 0
      %1495 = vmatpush2.bf16.msra.mxu0 0
      %1496 = vmatprep.mubr.bf16.mxu0 0
      %1497 = vmatmul.mubr.bf16.gmra.mxu0 %v1450
      %v1498 = vpop.f32.mrf.mxu0
      %v1499 = vadd.f32 0.0, %v1498
      %v1500 = vpop.f32.mrf.mxu0
      %v1501 = vpop.f32.mrf.mxu0
      %v1502 = vadd.f32 0.0, %v1501
      %v1503 = vpop.f32.mrf.mxu0
      %1504 = vmatprep.mubr.bf16.mxu0 0
      %1505 = vmatmul.mubr.bf16.gmra.mxu0 %v1453
      %v1506 = vpop.f32.mrf.mxu0
      %v1507 = vadd.f32 0.0, %v1506
      %v1508 = vpop.f32.mrf.mxu0
      %v1509 = vpop.f32.mrf.mxu0
      %v1510 = vadd.f32 0.0, %v1509
      %v1511 = vpop.f32.mrf.mxu0
      %1512 = vmatprep.mubr.bf16.mxu0 0
      %1513 = vmatmul.mubr.bf16.gmra.mxu0 %v1456
      %v1514 = vpop.f32.mrf.mxu0
      %v1515 = vadd.f32 0.0, %v1514
      %v1516 = vpop.f32.mrf.mxu0
      %v1517 = vpop.f32.mrf.mxu0
      %v1518 = vadd.f32 0.0, %v1517
      %v1519 = vpop.f32.mrf.mxu0
      %1520 = vmatprep.mubr.bf16.mxu0 0
      %1521 = vmatmul.mubr.bf16.gmra.mxu0 %v1459
      %v1522 = vpop.f32.mrf.mxu0
      %v1523 = vadd.f32 0.0, %v1522
      %v1524 = vpop.f32.mrf.mxu0
      %v1525 = vpop.f32.mrf.mxu0
      %v1526 = vadd.f32 0.0, %v1525
      %v1527 = vpop.f32.mrf.mxu0
      %1528 = vmatprep.mubr.bf16.mxu0 0
      %1529 = vmatmul.mubr.bf16.gmra.mxu0 %v1462
      %v1530 = vpop.f32.mrf.mxu0
      %v1531 = vadd.f32 0.0, %v1530
      %v1532 = vpop.f32.mrf.mxu0
      %v1533 = vpop.f32.mrf.mxu0
      %v1534 = vadd.f32 0.0, %v1533
      %v1535 = vpop.f32.mrf.mxu0
      %1536 = vdwg.mxu0
      %v1537 = vadd.f32 %v1349, %v1499
      %v1538 = vadd.f32 %v1350, %v1502
      %v1539 = vadd.f32 %v1351, %v1507
      %v1540 = vadd.f32 %v1352, %v1510
      %v1541 = vadd.f32 %v1353, %v1515
      %v1542 = vadd.f32 %v1354, %v1518
      %v1543 = vadd.f32 %v1355, %v1523
      %v1544 = vadd.f32 %v1356, %v1526
      %v1545 = vadd.f32 %v1357, %v1531
      %v1546 = vadd.f32 %v1358, %v1534
      %v1547 = vld [vmem:[%s192 + $0x8] sm:$0x8]
      %v1548 = vld [vmem:[%s1 + $0x100] sm:$0xf]
      %v1549 = vld [vmem:[%s1 + $0x104] sm:$0xf]
      %v1550 = vld [vmem:[%s1 + $0x108] sm:$0xf]
      %v1551 = vld [vmem:[%s1 + $0x10c] sm:$0xf]
      %v1552 = vld [vmem:[%s1 + $0x110] sm:$0xf]
      %v1553 = vld [vmem:[%s1 + $0x114] sm:$0xf]
      %v1554 = vld [vmem:[%s1 + $0x118] sm:$0xf]
      %v1555 = vld [vmem:[%s1 + $0x11c] sm:$0xf]
      %v1557 = vunpack.c.l.b16 %v1547
      %v1558 = vpack.c.b16 %v1210, %v1557
      %vm1559 = vcmask 1044480
      %v1560 = vrot.slane %v1558, 3
      %v1561 = vrot.slane %v1221, 3
      %v1562 = vsel %vm1559, %v1560, %v1561
      %v1563 = vrot.slane %v1222, 3
      %v1564 = vsel %vm1559, %v1561, %v1563
      %v1565 = vrot.slane %v1223, 3
      %v1566 = vsel %vm1559, %v1563, %v1565
      %v1567 = vrot.slane %v1224, 3
      %v1568 = vsel %vm1559, %v1565, %v1567
      %v1569 = vrot.slane %v1370, 3
      %v1570 = vsel %vm1559, %v1567, %v1569
      %v1579 = vunpack.c.l.b16 %v1548
      %v1580 = vunpack.c.l.b16 %v1549
      %v1581 = vunpack.c.l.b16 %v1550
      %v1582 = vunpack.c.l.b16 %v1551
      %v1583 = vunpack.c.l.b16 %v1552
      %v1584 = vunpack.c.l.b16 %v1553
      %v1585 = vunpack.c.l.b16 %v1554
      %v1586 = vunpack.c.l.b16 %v1555
      %v1587 = vpack.c.b16 %v1580, %v1579
      %v1588 = vpack.c.b16 %v1582, %v1581
      %v1589 = vpack.c.b16 %v1584, %v1583
      %v1590 = vpack.c.b16 %v1586, %v1585
      %v1596 = vsel %vm323, %v1562, 0
      %v1599 = vsel %vm323, %v1564, 0
      %v1602 = vsel %vm323, %v1566, 0
      %v1605 = vsel %vm323, %v1568, 0
      %v1608 = vsel %vm323, %v1570, 0
      %1610 = vmatprep.subr.bf16.mxu0 0
      %1611 = vmatpush1.bf16.msra.mxu0 0
      %1612 = vmatprep.subr.bf16.mxu0 0
      %1613 = vmatpush1.bf16.msra.mxu0 0
      %1614 = vmatprep.subr.bf16.mxu0 0
      %1615 = vmatpush1.bf16.msra.mxu0 0
      %1616 = vmatprep.subr.bf16.mxu0 0
      %1617 = vmatpush1.bf16.msra.mxu0 0
      %1618 = vmatprep.subr.bf16.mxu0 0
      %1619 = vmatpush1.bf16.msra.mxu0 %v1590
      %1620 = vmatprep.subr.bf16.mxu0 0
      %1621 = vmatpush1.bf16.msra.mxu0 %v1589
      %1622 = vmatprep.subr.bf16.mxu0 0
      %1623 = vmatpush1.bf16.msra.mxu0 %v1588
      %1624 = vmatprep.subr.bf16.mxu0 0
      %1625 = vmatpush1.bf16.msra.mxu0 %v1587
      %1626 = vmatprep.subr.bf16.mxu0 0
      %1627 = vmatpush2.bf16.msra.mxu0 0
      %1628 = vmatprep.subr.bf16.mxu0 0
      %1629 = vmatpush2.bf16.msra.mxu0 0
      %1630 = vmatprep.subr.bf16.mxu0 0
      %1631 = vmatpush2.bf16.msra.mxu0 0
      %1632 = vmatprep.subr.bf16.mxu0 0
      %1633 = vmatpush2.bf16.msra.mxu0 0
      %1634 = vmatprep.subr.bf16.mxu0 0
      %1635 = vmatpush2.bf16.msra.mxu0 0
      %1636 = vmatprep.subr.bf16.mxu0 0
      %1637 = vmatpush2.bf16.msra.mxu0 0
      %1638 = vmatprep.subr.bf16.mxu0 0
      %1639 = vmatpush2.bf16.msra.mxu0 0
      %1640 = vmatprep.subr.bf16.mxu0 0
      %1641 = vmatpush2.bf16.msra.mxu0 0
      %1642 = vmatprep.mubr.bf16.mxu0 0
      %1643 = vmatmul.mubr.bf16.gmra.mxu0 %v1596
      %v1644 = vpop.f32.mrf.mxu0
      %v1645 = vadd.f32 0.0, %v1644
      %v1646 = vpop.f32.mrf.mxu0
      %v1647 = vpop.f32.mrf.mxu0
      %v1648 = vadd.f32 0.0, %v1647
      %v1649 = vpop.f32.mrf.mxu0
      %1650 = vmatprep.mubr.bf16.mxu0 0
      %1651 = vmatmul.mubr.bf16.gmra.mxu0 %v1599
      %v1652 = vpop.f32.mrf.mxu0
      %v1653 = vadd.f32 0.0, %v1652
      %v1654 = vpop.f32.mrf.mxu0
      %v1655 = vpop.f32.mrf.mxu0
      %v1656 = vadd.f32 0.0, %v1655
      %v1657 = vpop.f32.mrf.mxu0
      %1658 = vmatprep.mubr.bf16.mxu0 0
      %1659 = vmatmul.mubr.bf16.gmra.mxu0 %v1602
      %v1660 = vpop.f32.mrf.mxu0
      %v1661 = vadd.f32 0.0, %v1660
      %v1662 = vpop.f32.mrf.mxu0
      %v1663 = vpop.f32.mrf.mxu0
      %v1664 = vadd.f32 0.0, %v1663
      %v1665 = vpop.f32.mrf.mxu0
      %1666 = vmatprep.mubr.bf16.mxu0 0
      %1667 = vmatmul.mubr.bf16.gmra.mxu0 %v1605
      %v1668 = vpop.f32.mrf.mxu0
      %v1669 = vadd.f32 0.0, %v1668
      %v1670 = vpop.f32.mrf.mxu0
      %v1671 = vpop.f32.mrf.mxu0
      %v1672 = vadd.f32 0.0, %v1671
      %v1673 = vpop.f32.mrf.mxu0
      %1674 = vmatprep.mubr.bf16.mxu0 0
      %1675 = vmatmul.mubr.bf16.gmra.mxu0 %v1608
      %v1676 = vpop.f32.mrf.mxu0
      %v1677 = vadd.f32 0.0, %v1676
      %v1678 = vpop.f32.mrf.mxu0
      %v1679 = vpop.f32.mrf.mxu0
      %v1680 = vadd.f32 0.0, %v1679
      %v1681 = vpop.f32.mrf.mxu0
      %1682 = vdwg.mxu0
      %v1683 = vadd.f32 %v1537, %v1645
      %v1684 = vadd.f32 %v1538, %v1648
      %v1685 = vadd.f32 %v1539, %v1653
      %v1686 = vadd.f32 %v1540, %v1656
      %v1687 = vadd.f32 %v1541, %v1661
      %v1688 = vadd.f32 %v1542, %v1664
      %v1689 = vadd.f32 %v1543, %v1669
      %v1690 = vadd.f32 %v1544, %v1672
      %v1691 = vadd.f32 %v1545, %v1677
      %v1692 = vadd.f32 %v1546, %v1680
      %v1693 = vld [vmem:[%s2] sm:$0x1]
      %v1695 = vlaneseq
      %v1696 = vshrl.u32 %v1695, 7
      %v1697 = vsub.s32 0, %v1696
      %v1698 = vrot.slane %v1693, %v1697
      %v1700 = vadd.f32 %v1683, %v1698
      %v1701 = vadd.f32 %v1684, %v1698
      %v1702 = vadd.f32 %v1685, %v1698
      %v1703 = vadd.f32 %v1686, %v1698
      %v1704 = vadd.f32 %v1687, %v1698
      %v1705 = vadd.f32 %v1688, %v1698
      %v1706 = vadd.f32 %v1689, %v1698
      %v1707 = vadd.f32 %v1690, %v1698
      %v1708 = vadd.f32 %v1691, %v1698
      %v1709 = vadd.f32 %v1692, %v1698
      %v1710 = vmax.f32 %v1700, 0.0
      %v1711 = vmax.f32 %v1701, 0.0
      %v1712 = vmax.f32 %v1702, 0.0
      %v1713 = vmax.f32 %v1703, 0.0
      %v1714 = vmax.f32 %v1704, 0.0
      %v1715 = vmax.f32 %v1705, 0.0
      %v1716 = vmax.f32 %v1706, 0.0
      %v1717 = vmax.f32 %v1707, 0.0
      %v1718 = vmax.f32 %v1708, 0.0
      %v1719 = vmax.f32 %v1709, 0.0
      %v1720 = vld [vmem:[%s3] sm:$0xff]
      %v1721 = vld [vmem:[%s3 + $0x8] sm:$0xff]
      %v1722 = vld [vmem:[%s3 + $0x10] sm:$0xff]
      %v1723 = vld [vmem:[%s3 + $0x18] sm:$0xff]
      %v1724 = vld [vmem:[%s3 + $0x20] sm:$0xff]
      %v1725 = vld [vmem:[%s3 + $0x28] sm:$0xff]
      %v1726 = vld [vmem:[%s3 + $0x30] sm:$0xff]
      %v1727 = vld [vmem:[%s3 + $0x38] sm:$0xff]
      %v1728 = vld [vmem:[%s3 + $0x40] sm:$0xff]
      %v1729 = vld [vmem:[%s3 + $0x48] sm:$0xff]
      %1731 = vset.pattern.permute.xlu0 0
      %1732 = vperm.xlu0 %1731, %v1720
      %v1733 = vpop.permute.xlu0 %1732
      %1736 = vset.pattern.permute.xlu0 0
      %1737 = vperm.xlu0 %1736, %v1721
      %v1738 = vpop.permute.xlu0 %1737
      %1741 = vset.pattern.permute.xlu0 0
      %1742 = vperm.xlu0 %1741, %v1722
      %v1743 = vpop.permute.xlu0 %1742
      %1746 = vset.pattern.permute.xlu0 0
      %1747 = vperm.xlu0 %1746, %v1723
      %v1748 = vpop.permute.xlu0 %1747
      %1751 = vset.pattern.permute.xlu0 0
      %1752 = vperm.xlu0 %1751, %v1724
      %v1753 = vpop.permute.xlu0 %1752
      %1756 = vset.pattern.permute.xlu0 0
      %1757 = vperm.xlu0 %1756, %v1725
      %v1758 = vpop.permute.xlu0 %1757
      %1761 = vset.pattern.permute.xlu0 0
      %1762 = vperm.xlu0 %1761, %v1726
      %v1763 = vpop.permute.xlu0 %1762
      %1766 = vset.pattern.permute.xlu0 0
      %1767 = vperm.xlu0 %1766, %v1727
      %v1768 = vpop.permute.xlu0 %1767
      %1771 = vset.pattern.permute.xlu0 0
      %1772 = vperm.xlu0 %1771, %v1728
      %v1773 = vpop.permute.xlu0 %1772
      %1776 = vset.pattern.permute.xlu0 0
      %1777 = vperm.xlu0 %1776, %v1729
      %v1778 = vpop.permute.xlu0 %1777
      %v1780 = vmul.f32 %v1710, %v1733
      %v1781 = vmul.f32 %v1711, %v1738
      %v1782 = vmul.f32 %v1712, %v1743
      %v1783 = vmul.f32 %v1713, %v1748
      %v1784 = vmul.f32 %v1714, %v1753
      %v1785 = vmul.f32 %v1715, %v1758
      %v1786 = vmul.f32 %v1716, %v1763
      %v1787 = vmul.f32 %v1717, %v1768
      %v1788 = vmul.f32 %v1718, %v1773
      %v1789 = vmul.f32 %v1719, %v1778
      %vm1790 = vcmask 519168
      %1791 = vst.msk [vmem:[%s197] sm:$0xf] %vm1790, 0
      %vm1792 = vcmask 517120
      %vm1793 = vsmask.f32 1280
      %vm1794 = vmand %vm1792, %vm1793
      %v1795 = vld [vmem:[%s197 + $0x4] sm:$0x3]
      %v1796 = vsel %vm1794, 0, %v1795
      %1797 = vst [vmem:[%s197 + $0x4] sm:$0x3] %v1796
      %v1798 = vpack.c.bf16 %v1781, %v1780
      %v1799 = vpack.c.bf16 %v1783, %v1782
      %v1800 = vpack.c.bf16 %v1785, %v1784
      %v1801 = vpack.c.bf16 %v1787, %v1786
      %v1802 = vpack.c.bf16 %v1789, %v1788
      %v1808 = vunpack.c.l.b16 %v1798
      %v1809 = vunpack.c.h.b16 %v1798
      %v1810 = vunpack.c.l.b16 %v1799
      %v1811 = vunpack.c.h.b16 %v1799
      %v1812 = vunpack.c.l.b16 %v1800
      %v1813 = vunpack.c.h.b16 %v1800
      %v1814 = vunpack.c.l.b16 %v1801
      %v1815 = vunpack.c.h.b16 %v1801
      %v1816 = vunpack.c.l.b16 %v1802
      %v1817 = vunpack.c.h.b16 %v1802
      %v1818 = vpack.c.b16 %v1808, %v1808
      %v1819 = vpack.c.b16 %v1809, %v1809
      %v1820 = vpack.c.b16 %v1810, %v1810
      %v1821 = vpack.c.b16 %v1811, %v1811
      %v1822 = vpack.c.b16 %v1812, %v1812
      %v1823 = vpack.c.b16 %v1813, %v1813
      %v1824 = vpack.c.b16 %v1814, %v1814
      %v1825 = vpack.c.b16 %v1815, %v1815
      %v1826 = vpack.c.b16 %v1816, %v1816
      %v1827 = vpack.c.b16 %v1817, %v1817
      %vm1828 = vsmask.f32 5392
      %vm1829 = vmor %vm1793, %vm1828
      %v1831 = vshrl.u32 %v1818, 16
      %v1833 = vrot.slane %v1831, 6
      %v1834 = vshll.u32 %v1818, 16
      %v1836 = vrot.slane %v1834, 7
      %v1837 = vor.u32 %v1833, %v1836
      %v1838 = vrot.slane %v1837, 4
      %v1840 = vshrl.u32 %v1819, 16
      %v1842 = vrot.slane %v1840, 6
      %v1843 = vshll.u32 %v1819, 16
      %v1845 = vrot.slane %v1843, 7
      %v1846 = vor.u32 %v1842, %v1845
      %v1847 = vsel %vm1829, %v1838, %v1846
      %v1848 = vrot.slane %v1846, 4
      %v1850 = vshrl.u32 %v1820, 16
      %v1852 = vrot.slane %v1850, 6
      %v1853 = vshll.u32 %v1820, 16
      %v1855 = vrot.slane %v1853, 7
      %v1856 = vor.u32 %v1852, %v1855
      %v1857 = vsel %vm1829, %v1848, %v1856
      %v1858 = vrot.slane %v1856, 4
      %v1860 = vshrl.u32 %v1821, 16
      %v1862 = vrot.slane %v1860, 6
      %v1863 = vshll.u32 %v1821, 16
      %v1865 = vrot.slane %v1863, 7
      %v1866 = vor.u32 %v1862, %v1865
      %v1867 = vsel %vm1829, %v1858, %v1866
      %v1868 = vrot.slane %v1866, 4
      %v1870 = vshrl.u32 %v1822, 16
      %v1872 = vrot.slane %v1870, 6
      %v1873 = vshll.u32 %v1822, 16
      %v1875 = vrot.slane %v1873, 7
      %v1876 = vor.u32 %v1872, %v1875
      %v1877 = vsel %vm1829, %v1868, %v1876
      %v1878 = vrot.slane %v1876, 4
      %v1880 = vshrl.u32 %v1823, 16
      %v1882 = vrot.slane %v1880, 6
      %v1883 = vshll.u32 %v1823, 16
      %v1885 = vrot.slane %v1883, 7
      %v1886 = vor.u32 %v1882, %v1885
      %v1887 = vsel %vm1829, %v1878, %v1886
      %v1888 = vrot.slane %v1886, 4
      %v1890 = vshrl.u32 %v1824, 16
      %v1892 = vrot.slane %v1890, 6
      %v1893 = vshll.u32 %v1824, 16
      %v1895 = vrot.slane %v1893, 7
      %v1896 = vor.u32 %v1892, %v1895
      %v1897 = vsel %vm1829, %v1888, %v1896
      %v1898 = vrot.slane %v1896, 4
      %v1900 = vshrl.u32 %v1825, 16
      %v1902 = vrot.slane %v1900, 6
      %v1903 = vshll.u32 %v1825, 16
      %v1905 = vrot.slane %v1903, 7
      %v1906 = vor.u32 %v1902, %v1905
      %v1907 = vsel %vm1829, %v1898, %v1906
      %v1908 = vrot.slane %v1906, 4
      %v1910 = vshrl.u32 %v1826, 16
      %v1912 = vrot.slane %v1910, 6
      %v1913 = vshll.u32 %v1826, 16
      %v1915 = vrot.slane %v1913, 7
      %v1916 = vor.u32 %v1912, %v1915
      %v1917 = vsel %vm1829, %v1908, %v1916
      %v1918 = vrot.slane %v1916, 4
      %v1920 = vshrl.u32 %v1827, 16
      %v1922 = vrot.slane %v1920, 6
      %v1923 = vshll.u32 %v1827, 16
      %v1925 = vrot.slane %v1923, 7
      %v1926 = vor.u32 %v1922, %v1925
      %v1927 = vsel %vm1829, %v1918, %v1926
      %v1928 = vrot.slane %v1926, 4
      %vm1940 = vcmask 519169
      %vm1941 = vsmask.f32 7942
      %vm1942 = vmand %vm1940, %vm1941
      %v1943 = vld [vmem:[%s197 + $0x4] sm:$0xe]
      %v1944 = vsel %vm1942, %v1837, %v1943
      %1945 = vst [vmem:[%s197 + $0x4] sm:$0xe] %v1944
      %1946 = vst.msk [vmem:[%s197 + $0x8] sm:$0xf] %vm1790, %v1847
      %1947 = vst.msk [vmem:[%s197 + $0xc] sm:$0xf] %vm1790, %v1857
      %1948 = vst.msk [vmem:[%s197 + $0x10] sm:$0xf] %vm1790, %v1867
      %1949 = vst.msk [vmem:[%s197 + $0x14] sm:$0xf] %vm1790, %v1877
      %1950 = vst.msk [vmem:[%s197 + $0x18] sm:$0xf] %vm1790, %v1887
      %1951 = vst.msk [vmem:[%s197 + $0x1c] sm:$0xf] %vm1790, %v1897
      %1952 = vst.msk [vmem:[%s197 + $0x20] sm:$0xf] %vm1790, %v1907
      %1953 = vst.msk [vmem:[%s197 + $0x24] sm:$0xf] %vm1790, %v1917
      %1954 = vst.msk [vmem:[%s197 + $0x28] sm:$0xf] %vm1790, %v1927
      %v1955 = vld [vmem:[%s197 + $0x2c] sm:$0x3]
      %v1956 = vsel %vm1794, %v1928, %v1955
      %1957 = vst [vmem:[%s197 + $0x2c] sm:$0x3] %v1956
      %v1958 = vld [vmem:[%s197 + $0x2c] sm:$0xe]
      %v1959 = vsel %vm1942, 0, %v1958
      %1960 = vst [vmem:[%s197 + $0x2c] sm:$0xe] %v1959
      %1961 = vst.msk [vmem:[%s197 + $0x30] sm:$0xf] %vm1790, 0
      %vm1962 = vcmask 518144
      %1963 = vst.msk [vmem:[%s197 + $0x34] sm:$0x7] %vm1962, 0
      %p1964 = scmp.lt.s32.totalorder %s15, 1
      %s1965 = scalar_select %p1964, %s15, 1
      %s1966 = smul.addr %s1965, 14
      %s1967 = smul.addr %s1966, 4
      %s1968 = scalar_lea.vmem %s4, %s1967
      // Predicated region
      $region37: #{colornet_forward.12} parent=35 // pred_check
        %p1969 = pneg %p122
      $region38: #{colornet_forward.12} parent=35 // pred_check_branch
        %1971 = sbr.rel (%p1969) target = $region40
      $region39: #{colornet_forward.12} parent=35 // pred_region
        _
      $region40: #{colornet_forward.12} parent=35 // pred_fallthru
        _
    $region36: #{colornet_forward.12} parent=5 // pred_fallthru
      _
    %p1972 = scmp.le.s32.totalorder 2, %s10
    // Predicated region
    $region41: #{colornet_forward.12} parent=5 // pred_check
      %p1973 = pneg %p1972
    $region42: #{colornet_forward.12} parent=5 // pred_check_branch
      %1975 = sbr.rel (%p1973) target = $region44
    $region43: #{colornet_forward.12} parent=5 // pred_region
      %s1976 = ssub.s32 %s10, 2
      // Predicated region
      $region45: #{colornet_forward.12} parent=43 // pred_check
        %p1977 = pneg %p128
      $region46: #{colornet_forward.12} parent=43 // pred_check_branch
        %1979 = sbr.rel (%p1977) target = $region48
      $region47: #{colornet_forward.12} parent=43 // pred_region
        %p1980 = scmp.lt.s32.totalorder %s16, 1
        %s1981 = scalar_select %p1980, %s16, 1
        %s1982 = smul.addr %s1981, 14
        %s1983 = smul.addr %s1982, 4
        %s1984 = scalar_lea.vmem %s4, %s1983
      $region48: #{colornet_forward.12} parent=43 // pred_fallthru
        _
    $region44: #{colornet_forward.12} parent=5 // pred_fallthru
      _
  $region6: #{colornet_forward.12} parent=0 // loop_footer
    %s14 = sadd.s32 1, %s10
  $region7: #{colornet_forward.12} parent=0 // loop_footer_branch
    %9 = sbr.rel target = $region3
  $region8: #{colornet_forward.12} parent=0 // loop_exit
    _

// kernel: colornet_forward.13
$region0: #{colornet_forward.13}
  #allocation0 [shape = 'u32[]', space=smem, size = 0x4, offset = 0x4, fixed_abs, tag = 'smem constant byte address 0x4 - core index']
  #allocation1 [shape = 'u32[144,128]{1,0:T(1,128)}', space=vmem, size = 0x12000, scoped, tag = 'internal scratch']
  %s0 = inlined_call_operand.vmem [shape: bf16[2,110,64], index: 0, kind: input, shape index: {}]
  %s1 = inlined_call_operand.vmem [shape: bf16[576,64], index: 1, kind: input, shape index: {}]
  %s2 = inlined_call_operand.vmem [shape: f32[1,64], index: 2, kind: input, shape index: {}]
  %s3 = inlined_call_operand.vmem [shape: f32[80,1], index: 3, kind: input, shape index: {}]
  %s4 = inlined_call_operand.vmem [shape: bf16[2,110,64], index: 4, kind: input, shape index: {}]
  %s5 = inlined_call_operand.vmem [shape: bf16[2,110,64], index: 5, kind: output, shape index: {}]
  %s6 = sld [smem:[#allocation0]]
  $region53: #{colornet_forward.13} parent=0
    _
  %s8 = ssub.s32 1, %s6
  %s9 = scalar_select 0, %s8, %s6
  loop: start=0, step=1, limit=4
  $region2: #{colornet_forward.13} parent=0 // loop_pre_header
    _
  $region3: #{colornet_forward.13} parent=0 // loop_header
    %s11 = sphi 0, %s15
    %p12 = scmp.ge.s32.totalorder %s11, 4
    %s21 = sphi 0, %s23
    %s24 = sphi 0, %s21
    %s25 = sphi 0, %s24
    %s41 = sphi 0, %s25
    %s45 = sphi 0, %s45
    %s47 = sphi 0, %s45
    %s48 = sphi 0, %s47
    %s62 = sphi 0, %s48
    %s66 = sphi 0, %s66
    %s68 = sphi 0, %s66
    %s69 = sphi 0, %s68
    %s83 = sphi 0, %s69
    %s87 = sphi 0, %s87
    %s89 = sphi 0, %s87
    %s90 = sphi 0, %s89
    %s104 = sphi 0, %s90
    %s110 = sphi 0, %s112
    %s113 = sphi 0, %s110
    %s114 = sphi 0, %s113
    %s130 = sphi 0, %s114
    %s136 = sphi 0, %s138
    %s139 = sphi 0, %s136
    %s140 = sphi 0, %s139
    %s156 = sphi 0, %s140
  $region4: #{colornet_forward.13} parent=0 // loop_header_branch
    %14 = sbr.rel (%p12) target = $region8
  $region5: #{colornet_forward.13} parent=0 // loop_body
    %s16 = ssub.s32 %s11, 1
    %s17 = ssub.s32 %s11, 2
    %s18 = sadd.s32 %s11, 1
    %s19 = ssub.s32 %s11, %s18
    %p20 = scmp.eq.s32.totalorder %s19, 0
    %s22 = sadd.s32 %s21, 1
    %s23 = scalar_select %p20, %s21, %s22
    %p26 = pneg %p20
    %p27 = scmp.eq.s32.totalorder %s11, 1
    %p28 = por %p26, %p27
    %p29 = scmp.ne.s32.totalorder %s21, %s24
    %p30 = scmp.eq.s32.totalorder %s11, 0
    %p31 = por %p29, %p30
    %p32 = scmp.ne.s32.totalorder %s21, %s24
    %p33 = scmp.eq.s32.totalorder %s16, 1
    %p34 = por %p32, %p33
    %p35 = scmp.ne.s32.totalorder %s24, %s25
    %p36 = scmp.eq.s32.totalorder %s16, 0
    %p37 = por %p35, %p36
    %p38 = scmp.ne.s32.totalorder %s24, %s25
    %p39 = scmp.eq.s32.totalorder %s17, 1
    %p40 = por %p38, %p39
    %p42 = scmp.ne.s32.totalorder %s25, %s41
    %p43 = scmp.eq.s32.totalorder %s17, 0
    %p44 = por %p42, %p43
    %s46 = sadd.s32 %s45, 1
    %p49 = scmp.eq.s32.totalorder %s11, 1
    %p50 = scmp.ne.s32.totalorder %s45, %s47
    %p51 = scmp.eq.s32.totalorder %s11, 0
    %p52 = por %p50, %p51
    %p53 = scmp.ne.s32.totalorder %s45, %s47
    %p54 = scmp.eq.s32.totalorder %s16, 1
    %p55 = por %p53, %p54
    %p56 = scmp.ne.s32.totalorder %s47, %s48
    %p57 = scmp.eq.s32.totalorder %s16, 0
    %p58 = por %p56, %p57
    %p59 = scmp.ne.s32.totalorder %s47, %s48
    %p60 = scmp.eq.s32.totalorder %s17, 1
    %p61 = por %p59, %p60
    %p63 = scmp.ne.s32.totalorder %s48, %s62
    %p64 = scmp.eq.s32.totalorder %s17, 0
    %p65 = por %p63, %p64
    %s67 = sadd.s32 %s66, 1
    %p70 = scmp.eq.s32.totalorder %s11, 1
    %p71 = scmp.ne.s32.totalorder %s66, %s68
    %p72 = scmp.eq.s32.totalorder %s11, 0
    %p73 = por %p71, %p72
    %p74 = scmp.ne.s32.totalorder %s66, %s68
    %p75 = scmp.eq.s32.totalorder %s16, 1
    %p76 = por %p74, %p75
    %p77 = scmp.ne.s32.totalorder %s68, %s69
    %p78 = scmp.eq.s32.totalorder %s16, 0
    %p79 = por %p77, %p78
    %p80 = scmp.ne.s32.totalorder %s68, %s69
    %p81 = scmp.eq.s32.totalorder %s17, 1
    %p82 = por %p80, %p81
    %p84 = scmp.ne.s32.totalorder %s69, %s83
    %p85 = scmp.eq.s32.totalorder %s17, 0
    %p86 = por %p84, %p85
    %s88 = sadd.s32 %s87, 1
    %p91 = scmp.eq.s32.totalorder %s11, 1
    %p92 = scmp.ne.s32.totalorder %s87, %s89
    %p93 = scmp.eq.s32.totalorder %s11, 0
    %p94 = por %p92, %p93
    %p95 = scmp.ne.s32.totalorder %s87, %s89
    %p96 = scmp.eq.s32.totalorder %s16, 1
    %p97 = por %p95, %p96
    %p98 = scmp.ne.s32.totalorder %s89, %s90
    %p99 = scmp.eq.s32.totalorder %s16, 0
    %p100 = por %p98, %p99
    %p101 = scmp.ne.s32.totalorder %s89, %s90
    %p102 = scmp.eq.s32.totalorder %s17, 1
    %p103 = por %p101, %p102
    %p105 = scmp.ne.s32.totalorder %s90, %s104
    %p106 = scmp.eq.s32.totalorder %s17, 0
    %p107 = por %p105, %p106
    %s108 = ssub.s32 %s11, %s18
    %p109 = scmp.eq.s32.totalorder %s108, 0
    %s111 = sadd.s32 %s110, 1
    %s112 = scalar_select %p109, %s110, %s111
    %p115 = pneg %p109
    %p116 = scmp.eq.s32.totalorder %s11, 1
    %p117 = por %p115, %p116
    %p118 = scmp.ne.s32.totalorder %s110, %s113
    %p119 = scmp.eq.s32.totalorder %s11, 0
    %p120 = por %p118, %p119
    %p121 = scmp.ne.s32.totalorder %s110, %s113
    %p122 = scmp.eq.s32.totalorder %s16, 1
    %p123 = por %p121, %p122
    %p124 = scmp.ne.s32.totalorder %s113, %s114
    %p125 = scmp.eq.s32.totalorder %s16, 0
    %p126 = por %p124, %p125
    %p127 = scmp.ne.s32.totalorder %s113, %s114
    %p128 = scmp.eq.s32.totalorder %s17, 1
    %p129 = por %p127, %p128
    %p131 = scmp.ne.s32.totalorder %s114, %s130
    %p132 = scmp.eq.s32.totalorder %s17, 0
    %p133 = por %p131, %p132
    %s134 = ssub.s32 %s11, %s18
    %p135 = scmp.eq.s32.totalorder %s134, 0
    %s137 = sadd.s32 %s136, 1
    %s138 = scalar_select %p135, %s136, %s137
    %p141 = pneg %p135
    %p142 = scmp.eq.s32.totalorder %s11, 1
    %p143 = por %p141, %p142
    %p144 = scmp.ne.s32.totalorder %s136, %s139
    %p145 = scmp.eq.s32.totalorder %s11, 0
    %p146 = por %p144, %p145
    %p147 = scmp.ne.s32.totalorder %s136, %s139
    %p148 = scmp.eq.s32.totalorder %s16, 1
    %p149 = por %p147, %p148
    %p150 = scmp.ne.s32.totalorder %s139, %s140
    %p151 = scmp.eq.s32.totalorder %s16, 0
    %p152 = por %p150, %p151
    %p153 = scmp.ne.s32.totalorder %s139, %s140
    %p154 = scmp.eq.s32.totalorder %s17, 1
    %p155 = por %p153, %p154
    %p157 = scmp.ne.s32.totalorder %s140, %s156
    %p158 = scmp.eq.s32.totalorder %s17, 0
    %p159 = por %p157, %p158
    %p160 = scmp.le.s32.totalorder 1, %s11
    %p161 = scmp.lt.s32.totalorder %s11, 3
    %p162 = pnand %p160, %p161
    %p163 = pneg %p162
    // Predicated region
    $region9: #{colornet_forward.13} parent=5 // pred_check
      _
    $region10: #{colornet_forward.13} parent=5 // pred_check_branch
      %165 = sbr.rel (%p162) target = $region12
    $region11: #{colornet_forward.13} parent=5 // pred_region
      %s166 = ssub.s32 %s11, 1
      // Predicated region
      $region13: #{colornet_forward.13} parent=11 // pred_check
        %p167 = pneg %p58
      $region14: #{colornet_forward.13} parent=11 // pred_check_branch
        %169 = sbr.rel (%p167) target = $region16
      $region15: #{colornet_forward.13} parent=11 // pred_region
        _
      $region16: #{colornet_forward.13} parent=11 // pred_fallthru
        _
      // Predicated region
      $region17: #{colornet_forward.13} parent=11 // pred_check
        %p170 = pneg %p79
      $region18: #{colornet_forward.13} parent=11 // pred_check_branch
        %172 = sbr.rel (%p170) target = $region20
      $region19: #{colornet_forward.13} parent=11 // pred_region
        _
      $region20: #{colornet_forward.13} parent=11 // pred_fallthru
        _
      // Predicated region
      $region21: #{colornet_forward.13} parent=11 // pred_check
        %p173 = pneg %p100
      $region22: #{colornet_forward.13} parent=11 // pred_check_branch
        %175 = sbr.rel (%p173) target = $region24
      $region23: #{colornet_forward.13} parent=11 // pred_region
        _
      $region24: #{colornet_forward.13} parent=11 // pred_fallthru
        _
    $region12: #{colornet_forward.13} parent=5 // pred_fallthru
      _
    %p176 = scmp.lt.s32.totalorder %s11, 2
    // Predicated region
    $region25: #{colornet_forward.13} parent=5 // pred_check
      %p177 = pneg %p176
    $region26: #{colornet_forward.13} parent=5 // pred_check_branch
      %179 = sbr.rel (%p177) target = $region28
    $region27: #{colornet_forward.13} parent=5 // pred_region
      // Predicated region
      $region29: #{colornet_forward.13} parent=27 // pred_check
        %p180 = pneg %p31
      $region30: #{colornet_forward.13} parent=27 // pred_check_branch
        %182 = sbr.rel (%p180) target = $region32
      $region31: #{colornet_forward.13} parent=27 // pred_region
        %p183 = scmp.lt.s32.totalorder %s11, 1
        %s184 = scalar_select %p183, %s11, 1
        %s185 = smul.addr %s184, 14
        %s186 = smul.addr %s185, 4
        %s187 = scalar_lea.vmem %s0, %s186
      $region32: #{colornet_forward.13} parent=27 // pred_fallthru
        _
      // Predicated region
      $region33: #{colornet_forward.13} parent=27 // pred_check
        %p188 = pneg %p120
      $region34: #{colornet_forward.13} parent=27 // pred_check_branch
        %190 = sbr.rel (%p188) target = $region36
      $region35: #{colornet_forward.13} parent=27 // pred_region
        %p191 = scmp.lt.s32.totalorder %s11, 1
        %s192 = scalar_select %p191, %s11, 1
        %s193 = smul.addr %s192, 14
        %s194 = smul.addr %s193, 4
        %s195 = scalar_lea.vmem %s4, %s194
      $region36: #{colornet_forward.13} parent=27 // pred_fallthru
        _
    $region28: #{colornet_forward.13} parent=5 // pred_fallthru
      _
    %p196 = scmp.le.s32.totalorder 1, %s11
    %p197 = scmp.lt.s32.totalorder %s11, 3
    %p198 = pnand %p196, %p197
    %p199 = pneg %p198
    // Predicated region
    $region37: #{colornet_forward.13} parent=5 // pred_check
      _
    $region38: #{colornet_forward.13} parent=5 // pred_check_branch
      %201 = sbr.rel (%p198) target = $region40
    $region39: #{colornet_forward.13} parent=5 // pred_region
      %s202 = ssub.s32 %s11, 1
      %p203 = scmp.lt.s32.totalorder %s16, 1
      %s204 = scalar_select %p203, %s16, 1
      %s205 = smul.addr %s204, 14
      %s206 = smul.addr %s205, 4
      %s207 = scalar_lea.vmem %s0, %s206
      %p208 = pneg %p37
      %p209 = pneg %p34
      %p210 = pneg %p58
      %p211 = pneg %p55
      %p212 = pneg %p79
      %p213 = pneg %p76
      %p214 = pneg %p100
      %p215 = pneg %p97
      %p216 = scmp.lt.s32.totalorder %s16, 1
      %s217 = scalar_select %p216, %s16, 1
      %s218 = smul.addr %s217, 14
      %s219 = smul.addr %s218, 4
      %s220 = scalar_lea.vmem %s4, %s219
      %p221 = pneg %p126
      %p222 = pneg %p123
      %p223 = pneg %p152
      %p224 = pneg %p149
      %p225 = scmp.lt.s32.totalorder %s16, 1
      %s226 = scalar_select %p225, %s16, 1
      %s227 = smul.addr %s226, 14
      %s228 = smul.addr %s227, 4
      %s229 = scalar_lea.vmem %s5, %s228
      %p230 = scmp.lt.s32.totalorder %s16, 1
      %s231 = scalar_select %p230, %s16, 1
      %s232 = smul.addr %s231, 14
      %s233 = smul.addr %s232, 4
      %s234 = scalar_lea.vmem %s0, %s233
      %p235 = scmp.lt.s32.totalorder %s16, 1
      %s236 = scalar_select %p235, %s16, 1
      %s237 = smul.addr %s236, 14
      %s238 = smul.addr %s237, 4
      %s239 = scalar_lea.vmem %s4, %s238
      %p240 = scmp.lt.s32.totalorder %s16, 1
      %s241 = scalar_select %p240, %s16, 1
      %s242 = smul.addr %s241, 14
      %s243 = smul.addr %s242, 4
      %s244 = scalar_lea.vmem %s5, %s243
      %v246 = vld [vmem:[%s234] sm:$0xf]
      %v247 = vld [vmem:[%s234 + $0x4] sm:$0xf]
      %v248 = vld [vmem:[%s234 + $0x8] sm:$0xf]
      %v249 = vld [vmem:[%s234 + $0xc] sm:$0xf]
      %v250 = vld [vmem:[%s234 + $0x10] sm:$0xf]
      %v251 = vld [vmem:[%s234 + $0x14] sm:$0xf]
      %v252 = vld [vmem:[%s234 + $0x18] sm:$0xf]
      %v253 = vld [vmem:[%s234 + $0x1c] sm:$0xf]
      %v254 = vld [vmem:[%s234 + $0x20] sm:$0xf]
      %v255 = vld [vmem:[%s234 + $0x24] sm:$0xf]
      %v256 = vld [vmem:[%s1] sm:$0xf]
      %v257 = vld [vmem:[%s1 + $0x4] sm:$0xf]
      %v258 = vld [vmem:[%s1 + $0x8] sm:$0xf]
      %v259 = vld [vmem:[%s1 + $0xc] sm:$0xf]
      %v260 = vld [vmem:[%s1 + $0x10] sm:$0xf]
      %v261 = vld [vmem:[%s1 + $0x14] sm:$0xf]
      %v262 = vld [vmem:[%s1 + $0x18] sm:$0xf]
      %v263 = vld [vmem:[%s1 + $0x1c] sm:$0xf]
      %v264 = vld [vmem:[%s234 + $0x28] sm:$0x1]
      %v265 = vld [vmem:[%s1 + $0x20] sm:$0xf]
      %v266 = vld [vmem:[%s1 + $0x24] sm:$0xf]
      %v267 = vld [vmem:[%s1 + $0x28] sm:$0xf]
      %v268 = vld [vmem:[%s1 + $0x2c] sm:$0xf]
      %v269 = vld [vmem:[%s1 + $0x30] sm:$0xf]
      %v270 = vld [vmem:[%s1 + $0x34] sm:$0xf]
      %v271 = vld [vmem:[%s1 + $0x38] sm:$0xf]
      %v272 = vld [vmem:[%s1 + $0x3c] sm:$0xf]
      %v284 = vunpack.c.l.b16 %v246
      %v285 = vunpack.c.l.b16 %v247
      %v286 = vunpack.c.l.b16 %v248
      %v287 = vunpack.c.l.b16 %v249
      %v288 = vunpack.c.l.b16 %v250
      %v289 = vunpack.c.l.b16 %v251
      %v290 = vunpack.c.l.b16 %v252
      %v291 = vunpack.c.l.b16 %v253
      %v292 = vunpack.c.l.b16 %v254
      %v293 = vunpack.c.l.b16 %v255
      %v294 = vunpack.c.l.b16 %v264
      %v295 = vpack.c.b16 %v285, %v284
      %v296 = vpack.c.b16 %v287, %v286
      %v297 = vpack.c.b16 %v289, %v288
      %v298 = vpack.c.b16 %v291, %v290
      %v299 = vpack.c.b16 %v293, %v292
      %v300 = vpack.c.b16 %v294, %v294
      %vm301 = vsmask.f32 7424
      %v303 = vshrl.u32 %v295, 16
      %v305 = vshll.u32 %v295, 16
      %v307 = vrot.slane %v305, 1
      %v308 = vor.u32 %v303, %v307
      %v310 = vshll.u32 %v296, 16
      %v312 = vrot.slane %v310, 1
      %v313 = vsel %vm301, %v308, %v312
      %v314 = vshrl.u32 %v296, 16
      %v316 = vor.u32 %v314, %v312
      %v318 = vshll.u32 %v297, 16
      %v320 = vrot.slane %v318, 1
      %v321 = vsel %vm301, %v316, %v320
      %v322 = vshrl.u32 %v297, 16
      %v324 = vor.u32 %v322, %v320
      %v326 = vshll.u32 %v298, 16
      %v328 = vrot.slane %v326, 1
      %v329 = vsel %vm301, %v324, %v328
      %v330 = vshrl.u32 %v298, 16
      %v332 = vor.u32 %v330, %v328
      %v334 = vshll.u32 %v299, 16
      %v336 = vrot.slane %v334, 1
      %v337 = vsel %vm301, %v332, %v336
      %v338 = vshrl.u32 %v299, 16
      %v340 = vor.u32 %v338, %v336
      %v342 = vshll.u32 %v300, 16
      %v344 = vrot.slane %v342, 1
      %v345 = vsel %vm301, %v340, %v344
      %v354 = vunpack.c.l.b16 %v265
      %v355 = vunpack.c.l.b16 %v266
      %v356 = vunpack.c.l.b16 %v267
      %v357 = vunpack.c.l.b16 %v268
      %v358 = vunpack.c.l.b16 %v269
      %v359 = vunpack.c.l.b16 %v270
      %v360 = vunpack.c.l.b16 %v271
      %v361 = vunpack.c.l.b16 %v272
      %v362 = vpack.c.b16 %v355, %v354
      %v363 = vpack.c.b16 %v357, %v356
      %v364 = vpack.c.b16 %v359, %v358
      %v365 = vpack.c.b16 %v361, %v360
      %vm370 = vcmask 523264
      %v372 = vsel %vm370, %v313, 0
      %v375 = vsel %vm370, %v321, 0
      %v378 = vsel %vm370, %v329, 0
      %v381 = vsel %vm370, %v337, 0
      %v384 = vsel %vm370, %v345, 0
      %386 = vmatprep.subr.bf16.mxu0 0
      %387 = vmatpush1.bf16.msra.mxu0 0
      %388 = vmatprep.subr.bf16.mxu0 0
      %389 = vmatpush1.bf16.msra.mxu0 0
      %390 = vmatprep.subr.bf16.mxu0 0
      %391 = vmatpush1.bf16.msra.mxu0 0
      %392 = vmatprep.subr.bf16.mxu0 0
      %393 = vmatpush1.bf16.msra.mxu0 0
      %394 = vmatprep.subr.bf16.mxu0 0
      %395 = vmatpush1.bf16.msra.mxu0 %v365
      %396 = vmatprep.subr.bf16.mxu0 0
      %397 = vmatpush1.bf16.msra.mxu0 %v364
      %398 = vmatprep.subr.bf16.mxu0 0
      %399 = vmatpush1.bf16.msra.mxu0 %v363
      %400 = vmatprep.subr.bf16.mxu0 0
      %401 = vmatpush1.bf16.msra.mxu0 %v362
      %402 = vmatprep.subr.bf16.mxu0 0
      %403 = vmatpush2.bf16.msra.mxu0 0
      %404 = vmatprep.subr.bf16.mxu0 0
      %405 = vmatpush2.bf16.msra.mxu0 0
      %406 = vmatprep.subr.bf16.mxu0 0
      %407 = vmatpush2.bf16.msra.mxu0 0
      %408 = vmatprep.subr.bf16.mxu0 0
      %409 = vmatpush2.bf16.msra.mxu0 0
      %410 = vmatprep.subr.bf16.mxu0 0
      %411 = vmatpush2.bf16.msra.mxu0 0
      %412 = vmatprep.subr.bf16.mxu0 0
      %413 = vmatpush2.bf16.msra.mxu0 0
      %414 = vmatprep.subr.bf16.mxu0 0
      %415 = vmatpush2.bf16.msra.mxu0 0
      %416 = vmatprep.subr.bf16.mxu0 0
      %417 = vmatpush2.bf16.msra.mxu0 0
      %418 = vmatprep.mubr.bf16.mxu0 0
      %419 = vmatmul.mubr.bf16.gmra.mxu0 %v372
      %v420 = vpop.f32.mrf.mxu0
      %v421 = vadd.f32 0.0, %v420
      %v422 = vpop.f32.mrf.mxu0
      %v423 = vpop.f32.mrf.mxu0
      %v424 = vadd.f32 0.0, %v423
      %v425 = vpop.f32.mrf.mxu0
      %426 = vmatprep.mubr.bf16.mxu0 0
      %427 = vmatmul.mubr.bf16.gmra.mxu0 %v375
      %v428 = vpop.f32.mrf.mxu0
      %v429 = vadd.f32 0.0, %v428
      %v430 = vpop.f32.mrf.mxu0
      %v431 = vpop.f32.mrf.mxu0
      %v432 = vadd.f32 0.0, %v431
      %v433 = vpop.f32.mrf.mxu0
      %434 = vmatprep.mubr.bf16.mxu0 0
      %435 = vmatmul.mubr.bf16.gmra.mxu0 %v378
      %v436 = vpop.f32.mrf.mxu0
      %v437 = vadd.f32 0.0, %v436
      %v438 = vpop.f32.mrf.mxu0
      %v439 = vpop.f32.mrf.mxu0
      %v440 = vadd.f32 0.0, %v439
      %v441 = vpop.f32.mrf.mxu0
      %442 = vmatprep.mubr.bf16.mxu0 0
      %443 = vmatmul.mubr.bf16.gmra.mxu0 %v381
      %v444 = vpop.f32.mrf.mxu0
      %v445 = vadd.f32 0.0, %v444
      %v446 = vpop.f32.mrf.mxu0
      %v447 = vpop.f32.mrf.mxu0
      %v448 = vadd.f32 0.0, %v447
      %v449 = vpop.f32.mrf.mxu0
      %450 = vmatprep.mubr.bf16.mxu0 0
      %451 = vmatmul.mubr.bf16.gmra.mxu0 %v384
      %v452 = vpop.f32.mrf.mxu0
      %v453 = vadd.f32 0.0, %v452
      %v454 = vpop.f32.mrf.mxu0
      %v455 = vpop.f32.mrf.mxu0
      %v456 = vadd.f32 0.0, %v455
      %v457 = vpop.f32.mrf.mxu0
      %458 = vdwg.mxu0
      %v467 = vunpack.c.l.b16 %v256
      %v468 = vunpack.c.l.b16 %v257
      %v469 = vunpack.c.l.b16 %v258
      %v470 = vunpack.c.l.b16 %v259
      %v471 = vunpack.c.l.b16 %v260
      %v472 = vunpack.c.l.b16 %v261
      %v473 = vunpack.c.l.b16 %v262
      %v474 = vunpack.c.l.b16 %v263
      %v475 = vpack.c.b16 %v468, %v467
      %v476 = vpack.c.b16 %v470, %v469
      %v477 = vpack.c.b16 %v472, %v471
      %v478 = vpack.c.b16 %v474, %v473
      %v483 = vsel %vm370, %v295, 0
      %v485 = vsel %vm370, %v296, 0
      %v487 = vsel %vm370, %v297, 0
      %v489 = vsel %vm370, %v298, 0
      %v491 = vsel %vm370, %v299, 0
      %493 = vmatprep.subr.bf16.mxu0 0
      %494 = vmatpush1.bf16.msra.mxu0 0
      %495 = vmatprep.subr.bf16.mxu0 0
      %496 = vmatpush1.bf16.msra.mxu0 0
      %497 = vmatprep.subr.bf16.mxu0 0
      %498 = vmatpush1.bf16.msra.mxu0 0
      %499 = vmatprep.subr.bf16.mxu0 0
      %500 = vmatpush1.bf16.msra.mxu0 0
      %501 = vmatprep.subr.bf16.mxu0 0
      %502 = vmatpush1.bf16.msra.mxu0 %v478
      %503 = vmatprep.subr.bf16.mxu0 0
      %504 = vmatpush1.bf16.msra.mxu0 %v477
      %505 = vmatprep.subr.bf16.mxu0 0
      %506 = vmatpush1.bf16.msra.mxu0 %v476
      %507 = vmatprep.subr.bf16.mxu0 0
      %508 = vmatpush1.bf16.msra.mxu0 %v475
      %509 = vmatprep.subr.bf16.mxu0 0
      %510 = vmatpush2.bf16.msra.mxu0 0
      %511 = vmatprep.subr.bf16.mxu0 0
      %512 = vmatpush2.bf16.msra.mxu0 0
      %513 = vmatprep.subr.bf16.mxu0 0
      %514 = vmatpush2.bf16.msra.mxu0 0
      %515 = vmatprep.subr.bf16.mxu0 0
      %516 = vmatpush2.bf16.msra.mxu0 0
      %517 = vmatprep.subr.bf16.mxu0 0
      %518 = vmatpush2.bf16.msra.mxu0 0
      %519 = vmatprep.subr.bf16.mxu0 0
      %520 = vmatpush2.bf16.msra.mxu0 0
      %521 = vmatprep.subr.bf16.mxu0 0
      %522 = vmatpush2.bf16.msra.mxu0 0
      %523 = vmatprep.subr.bf16.mxu0 0
      %524 = vmatpush2.bf16.msra.mxu0 0
      %525 = vmatprep.mubr.bf16.mxu0 0
      %526 = vmatmul.mubr.bf16.gmra.mxu0 %v483
      %v527 = vpop.f32.mrf.mxu0
      %v528 = vadd.f32 %v421, %v527
      %v529 = vpop.f32.mrf.mxu0
      %v530 = vpop.f32.mrf.mxu0
      %v531 = vadd.f32 %v424, %v530
      %v532 = vpop.f32.mrf.mxu0
      %533 = vmatprep.mubr.bf16.mxu0 0
      %534 = vmatmul.mubr.bf16.gmra.mxu0 %v485
      %v535 = vpop.f32.mrf.mxu0
      %v536 = vadd.f32 %v429, %v535
      %v537 = vpop.f32.mrf.mxu0
      %v538 = vpop.f32.mrf.mxu0
      %v539 = vadd.f32 %v432, %v538
      %v540 = vpop.f32.mrf.mxu0
      %541 = vmatprep.mubr.bf16.mxu0 0
      %542 = vmatmul.mubr.bf16.gmra.mxu0 %v487
      %v543 = vpop.f32.mrf.mxu0
      %v544 = vadd.f32 %v437, %v543
      %v545 = vpop.f32.mrf.mxu0
      %v546 = vpop.f32.mrf.mxu0
      %v547 = vadd.f32 %v440, %v546
      %v548 = vpop.f32.mrf.mxu0
      %549 = vmatprep.mubr.bf16.mxu0 0
      %550 = vmatmul.mubr.bf16.gmra.mxu0 %v489
      %v551 = vpop.f32.mrf.mxu0
      %v552 = vadd.f32 %v445, %v551
      %v553 = vpop.f32.mrf.mxu0
      %v554 = vpop.f32.mrf.mxu0
      %v555 = vadd.f32 %v448, %v554
      %v556 = vpop.f32.mrf.mxu0
      %557 = vmatprep.mubr.bf16.mxu0 0
      %558 = vmatmul.mubr.bf16.gmra.mxu0 %v491
      %v559 = vpop.f32.mrf.mxu0
      %v560 = vadd.f32 %v453, %v559
      %v561 = vpop.f32.mrf.mxu0
      %v562 = vpop.f32.mrf.mxu0
      %v563 = vadd.f32 %v456, %v562
      %v564 = vpop.f32.mrf.mxu0
      %565 = vdwg.mxu0
      %v566 = vld [vmem:[%s234] sm:$0xe]
      %v567 = vld [vmem:[%s1 + $0x40] sm:$0xf]
      %v568 = vld [vmem:[%s1 + $0x44] sm:$0xf]
      %v569 = vld [vmem:[%s1 + $0x48] sm:$0xf]
      %v570 = vld [vmem:[%s1 + $0x4c] sm:$0xf]
      %v571 = vld [vmem:[%s1 + $0x50] sm:$0xf]
      %v572 = vld [vmem:[%s1 + $0x54] sm:$0xf]
      %v573 = vld [vmem:[%s1 + $0x58] sm:$0xf]
      %v574 = vld [vmem:[%s1 + $0x5c] sm:$0xf]
      %v576 = vunpack.c.l.b16 %v566
      %v577 = vpack.c.b16 %v285, %v576
      %vm578 = vcmask 1046528
      %v579 = vrot.slane %v577, 1
      %v580 = vrot.slane %v296, 1
      %v581 = vsel %vm578, %v579, %v580
      %v582 = vrot.slane %v297, 1
      %v583 = vsel %vm578, %v580, %v582
      %v584 = vrot.slane %v298, 1
      %v585 = vsel %vm578, %v582, %v584
      %v586 = vrot.slane %v299, 1
      %v587 = vsel %vm578, %v584, %v586
      %v588 = vrot.slane %v300, 1
      %v589 = vsel %vm578, %v586, %v588
      %v598 = vunpack.c.l.b16 %v567
      %v599 = vunpack.c.l.b16 %v568
      %v600 = vunpack.c.l.b16 %v569
      %v601 = vunpack.c.l.b16 %v570
      %v602 = vunpack.c.l.b16 %v571
      %v603 = vunpack.c.l.b16 %v572
      %v604 = vunpack.c.l.b16 %v573
      %v605 = vunpack.c.l.b16 %v574
      %v606 = vpack.c.b16 %v599, %v598
      %v607 = vpack.c.b16 %v601, %v600
      %v608 = vpack.c.b16 %v603, %v602
      %v609 = vpack.c.b16 %v605, %v604
      %v615 = vsel %vm370, %v581, 0
      %v618 = vsel %vm370, %v583, 0
      %v621 = vsel %vm370, %v585, 0
      %v624 = vsel %vm370, %v587, 0
      %v627 = vsel %vm370, %v589, 0
      %629 = vmatprep.subr.bf16.mxu0 0
      %630 = vmatpush1.bf16.msra.mxu0 0
      %631 = vmatprep.subr.bf16.mxu0 0
      %632 = vmatpush1.bf16.msra.mxu0 0
      %633 = vmatprep.subr.bf16.mxu0 0
      %634 = vmatpush1.bf16.msra.mxu0 0
      %635 = vmatprep.subr.bf16.mxu0 0
      %636 = vmatpush1.bf16.msra.mxu0 0
      %637 = vmatprep.subr.bf16.mxu0 0
      %638 = vmatpush1.bf16.msra.mxu0 %v609
      %639 = vmatprep.subr.bf16.mxu0 0
      %640 = vmatpush1.bf16.msra.mxu0 %v608
      %641 = vmatprep.subr.bf16.mxu0 0
      %642 = vmatpush1.bf16.msra.mxu0 %v607
      %643 = vmatprep.subr.bf16.mxu0 0
      %644 = vmatpush1.bf16.msra.mxu0 %v606
      %645 = vmatprep.subr.bf16.mxu0 0
      %646 = vmatpush2.bf16.msra.mxu0 0
      %647 = vmatprep.subr.bf16.mxu0 0
      %648 = vmatpush2.bf16.msra.mxu0 0
      %649 = vmatprep.subr.bf16.mxu0 0
      %650 = vmatpush2.bf16.msra.mxu0 0
      %651 = vmatprep.subr.bf16.mxu0 0
      %652 = vmatpush2.bf16.msra.mxu0 0
      %653 = vmatprep.subr.bf16.mxu0 0
      %654 = vmatpush2.bf16.msra.mxu0 0
      %655 = vmatprep.subr.bf16.mxu0 0
      %656 = vmatpush2.bf16.msra.mxu0 0
      %657 = vmatprep.subr.bf16.mxu0 0
      %658 = vmatpush2.bf16.msra.mxu0 0
      %659 = vmatprep.subr.bf16.mxu0 0
      %660 = vmatpush2.bf16.msra.mxu0 0
      %661 = vmatprep.mubr.bf16.mxu0 0
      %662 = vmatmul.mubr.bf16.gmra.mxu0 %v615
      %v663 = vpop.f32.mrf.mxu0
      %v664 = vadd.f32 0.0, %v663
      %v665 = vpop.f32.mrf.mxu0
      %v666 = vpop.f32.mrf.mxu0
      %v667 = vadd.f32 0.0, %v666
      %v668 = vpop.f32.mrf.mxu0
      %669 = vmatprep.mubr.bf16.mxu0 0
      %670 = vmatmul.mubr.bf16.gmra.mxu0 %v618
      %v671 = vpop.f32.mrf.mxu0
      %v672 = vadd.f32 0.0, %v671
      %v673 = vpop.f32.mrf.mxu0
      %v674 = vpop.f32.mrf.mxu0
      %v675 = vadd.f32 0.0, %v674
      %v676 = vpop.f32.mrf.mxu0
      %677 = vmatprep.mubr.bf16.mxu0 0
      %678 = vmatmul.mubr.bf16.gmra.mxu0 %v621
      %v679 = vpop.f32.mrf.mxu0
      %v680 = vadd.f32 0.0, %v679
      %v681 = vpop.f32.mrf.mxu0
      %v682 = vpop.f32.mrf.mxu0
      %v683 = vadd.f32 0.0, %v682
      %v684 = vpop.f32.mrf.mxu0
      %685 = vmatprep.mubr.bf16.mxu0 0
      %686 = vmatmul.mubr.bf16.gmra.mxu0 %v624
      %v687 = vpop.f32.mrf.mxu0
      %v688 = vadd.f32 0.0, %v687
      %v689 = vpop.f32.mrf.mxu0
      %v690 = vpop.f32.mrf.mxu0
      %v691 = vadd.f32 0.0, %v690
      %v692 = vpop.f32.mrf.mxu0
      %693 = vmatprep.mubr.bf16.mxu0 0
      %694 = vmatmul.mubr.bf16.gmra.mxu0 %v627
      %v695 = vpop.f32.mrf.mxu0
      %v696 = vadd.f32 0.0, %v695
      %v697 = vpop.f32.mrf.mxu0
      %v698 = vpop.f32.mrf.mxu0
      %v699 = vadd.f32 0.0, %v698
      %v700 = vpop.f32.mrf.mxu0
      %701 = vdwg.mxu0
      %v702 = vadd.f32 %v528, %v664
      %v703 = vadd.f32 %v531, %v667
      %v704 = vadd.f32 %v536, %v672
      %v705 = vadd.f32 %v539, %v675
      %v706 = vadd.f32 %v544, %v680
      %v707 = vadd.f32 %v547, %v683
      %v708 = vadd.f32 %v552, %v688
      %v709 = vadd.f32 %v555, %v691
      %v710 = vadd.f32 %v560, %v696
      %v711 = vadd.f32 %v563, %v699
      %v712 = vld [vmem:[%s234 + $0x4] sm:$0xe]
      %v713 = vld [vmem:[%s234 + $0x8] sm:$0xf]
      %v714 = vld [vmem:[%s234 + $0xc] sm:$0xf]
      %v715 = vld [vmem:[%s234 + $0x10] sm:$0xf]
      %v716 = vld [vmem:[%s234 + $0x14] sm:$0xf]
      %v717 = vld [vmem:[%s234 + $0x18] sm:$0xf]
      %v718 = vld [vmem:[%s234 + $0x1c] sm:$0xf]
      %v719 = vld [vmem:[%s234 + $0x20] sm:$0xf]
      %v720 = vld [vmem:[%s234 + $0x24] sm:$0xf]
      %v721 = vld [vmem:[%s234 + $0x28] sm:$0xf]
      %v722 = vld [vmem:[%s234 + $0x2c] sm:$0x1]
      %v723 = vld [vmem:[%s1 + $0x60] sm:$0xf]
      %v724 = vld [vmem:[%s1 + $0x64] sm:$0xf]
      %v725 = vld [vmem:[%s1 + $0x68] sm:$0xf]
      %v726 = vld [vmem:[%s1 + $0x6c] sm:$0xf]
      %v727 = vld [vmem:[%s1 + $0x70] sm:$0xf]
      %v728 = vld [vmem:[%s1 + $0x74] sm:$0xf]
      %v729 = vld [vmem:[%s1 + $0x78] sm:$0xf]
      %v730 = vld [vmem:[%s1 + $0x7c] sm:$0xf]
      %v742 = vunpack.c.l.b16 %v712
      %v743 = vunpack.c.l.b16 %v713
      %v744 = vunpack.c.l.b16 %v714
      %v745 = vunpack.c.l.b16 %v715
      %v746 = vunpack.c.l.b16 %v716
      %v747 = vunpack.c.l.b16 %v717
      %v748 = vunpack.c.l.b16 %v718
      %v749 = vunpack.c.l.b16 %v719
      %v750 = vunpack.c.l.b16 %v720
      %v751 = vunpack.c.l.b16 %v721
      %v752 = vunpack.c.l.b16 %v722
      %v753 = vpack.c.b16 %v743, %v742
      %v754 = vpack.c.b16 %v745, %v744
      %v755 = vpack.c.b16 %v747, %v746
      %v756 = vpack.c.b16 %v749, %v748
      %v757 = vpack.c.b16 %v751, %v750
      %v758 = vpack.c.b16 %v752, %v752
      %v759 = vrot.slane %v753, 1
      %v760 = vrot.slane %v754, 1
      %v761 = vsel %vm578, %v759, %v760
      %v762 = vrot.slane %v755, 1
      %v763 = vsel %vm578, %v760, %v762
      %v764 = vrot.slane %v756, 1
      %v765 = vsel %vm578, %v762, %v764
      %v766 = vrot.slane %v757, 1
      %v767 = vsel %vm578, %v764, %v766
      %v768 = vrot.slane %v758, 1
      %v769 = vsel %vm578, %v766, %v768
      %v778 = vunpack.c.l.b16 %v723
      %v779 = vunpack.c.l.b16 %v724
      %v780 = vunpack.c.l.b16 %v725
      %v781 = vunpack.c.l.b16 %v726
      %v782 = vunpack.c.l.b16 %v727
      %v783 = vunpack.c.l.b16 %v728
      %v784 = vunpack.c.l.b16 %v729
      %v785 = vunpack.c.l.b16 %v730
      %v786 = vpack.c.b16 %v779, %v778
      %v787 = vpack.c.b16 %v781, %v780
      %v788 = vpack.c.b16 %v783, %v782
      %v789 = vpack.c.b16 %v785, %v784
      %v795 = vsel %vm370, %v761, 0
      %v798 = vsel %vm370, %v763, 0
      %v801 = vsel %vm370, %v765, 0
      %v804 = vsel %vm370, %v767, 0
      %v807 = vsel %vm370, %v769, 0
      %809 = vmatprep.subr.bf16.mxu0 0
      %810 = vmatpush1.bf16.msra.mxu0 0
      %811 = vmatprep.subr.bf16.mxu0 0
      %812 = vmatpush1.bf16.msra.mxu0 0
      %813 = vmatprep.subr.bf16.mxu0 0
      %814 = vmatpush1.bf16.msra.mxu0 0
      %815 = vmatprep.subr.bf16.mxu0 0
      %816 = vmatpush1.bf16.msra.mxu0 0
      %817 = vmatprep.subr.bf16.mxu0 0
      %818 = vmatpush1.bf16.msra.mxu0 %v789
      %819 = vmatprep.subr.bf16.mxu0 0
      %820 = vmatpush1.bf16.msra.mxu0 %v788
      %821 = vmatprep.subr.bf16.mxu0 0
      %822 = vmatpush1.bf16.msra.mxu0 %v787
      %823 = vmatprep.subr.bf16.mxu0 0
      %824 = vmatpush1.bf16.msra.mxu0 %v786
      %825 = vmatprep.subr.bf16.mxu0 0
      %826 = vmatpush2.bf16.msra.mxu0 0
      %827 = vmatprep.subr.bf16.mxu0 0
      %828 = vmatpush2.bf16.msra.mxu0 0
      %829 = vmatprep.subr.bf16.mxu0 0
      %830 = vmatpush2.bf16.msra.mxu0 0
      %831 = vmatprep.subr.bf16.mxu0 0
      %832 = vmatpush2.bf16.msra.mxu0 0
      %833 = vmatprep.subr.bf16.mxu0 0
      %834 = vmatpush2.bf16.msra.mxu0 0
      %835 = vmatprep.subr.bf16.mxu0 0
      %836 = vmatpush2.bf16.msra.mxu0 0
      %837 = vmatprep.subr.bf16.mxu0 0
      %838 = vmatpush2.bf16.msra.mxu0 0
      %839 = vmatprep.subr.bf16.mxu0 0
      %840 = vmatpush2.bf16.msra.mxu0 0
      %841 = vmatprep.mubr.bf16.mxu0 0
      %842 = vmatmul.mubr.bf16.gmra.mxu0 %v795
      %v843 = vpop.f32.mrf.mxu0
      %v844 = vadd.f32 0.0, %v843
      %v845 = vpop.f32.mrf.mxu0
      %v846 = vpop.f32.mrf.mxu0
      %v847 = vadd.f32 0.0, %v846
      %v848 = vpop.f32.mrf.mxu0
      %849 = vmatprep.mubr.bf16.mxu0 0
      %850 = vmatmul.mubr.bf16.gmra.mxu0 %v798
      %v851 = vpop.f32.mrf.mxu0
      %v852 = vadd.f32 0.0, %v851
      %v853 = vpop.f32.mrf.mxu0
      %v854 = vpop.f32.mrf.mxu0
      %v855 = vadd.f32 0.0, %v854
      %v856 = vpop.f32.mrf.mxu0
      %857 = vmatprep.mubr.bf16.mxu0 0
      %858 = vmatmul.mubr.bf16.gmra.mxu0 %v801
      %v859 = vpop.f32.mrf.mxu0
      %v860 = vadd.f32 0.0, %v859
      %v861 = vpop.f32.mrf.mxu0
      %v862 = vpop.f32.mrf.mxu0
      %v863 = vadd.f32 0.0, %v862
      %v864 = vpop.f32.mrf.mxu0
      %865 = vmatprep.mubr.bf16.mxu0 0
      %866 = vmatmul.mubr.bf16.gmra.mxu0 %v804
      %v867 = vpop.f32.mrf.mxu0
      %v868 = vadd.f32 0.0, %v867
      %v869 = vpop.f32.mrf.mxu0
      %v870 = vpop.f32.mrf.mxu0
      %v871 = vadd.f32 0.0, %v870
      %v872 = vpop.f32.mrf.mxu0
      %873 = vmatprep.mubr.bf16.mxu0 0
      %874 = vmatmul.mubr.bf16.gmra.mxu0 %v807
      %v875 = vpop.f32.mrf.mxu0
      %v876 = vadd.f32 0.0, %v875
      %v877 = vpop.f32.mrf.mxu0
      %v878 = vpop.f32.mrf.mxu0
      %v879 = vadd.f32 0.0, %v878
      %v880 = vpop.f32.mrf.mxu0
      %881 = vdwg.mxu0
      %v882 = vadd.f32 %v702, %v844
      %v883 = vadd.f32 %v703, %v847
      %v884 = vadd.f32 %v704, %v852
      %v885 = vadd.f32 %v705, %v855
      %v886 = vadd.f32 %v706, %v860
      %v887 = vadd.f32 %v707, %v863
      %v888 = vadd.f32 %v708, %v868
      %v889 = vadd.f32 %v709, %v871
      %v890 = vadd.f32 %v710, %v876
      %v891 = vadd.f32 %v711, %v879
      %v892 = vld [vmem:[%s234 + $0x2c] sm:$0x3]
      %v893 = vld [vmem:[%s1 + $0x80] sm:$0xf]
      %v894 = vld [vmem:[%s1 + $0x84] sm:$0xf]
      %v895 = vld [vmem:[%s1 + $0x88] sm:$0xf]
      %v896 = vld [vmem:[%s1 + $0x8c] sm:$0xf]
      %v897 = vld [vmem:[%s1 + $0x90] sm:$0xf]
      %v898 = vld [vmem:[%s1 + $0x94] sm:$0xf]
      %v899 = vld [vmem:[%s1 + $0x98] sm:$0xf]
      %v900 = vld [vmem:[%s1 + $0x9c] sm:$0xf]
      %v902 = vunpack.c.l.b16 %v892
      %v903 = vpack.c.b16 %v902, %v902
      %vm904 = vsmask.f32 6400
      %v906 = vshrl.u32 %v753, 16
      %v908 = vrot.slane %v906, 1
      %v909 = vshll.u32 %v753, 16
      %v911 = vrot.slane %v909, 2
      %v912 = vor.u32 %v908, %v911
      %v914 = vshrl.u32 %v754, 16
      %v916 = vrot.slane %v914, 1
      %v917 = vshll.u32 %v754, 16
      %v919 = vrot.slane %v917, 2
      %v920 = vor.u32 %v916, %v919
      %v921 = vsel %vm904, %v912, %v920
      %v923 = vshrl.u32 %v755, 16
      %v925 = vrot.slane %v923, 1
      %v926 = vshll.u32 %v755, 16
      %v928 = vrot.slane %v926, 2
      %v929 = vor.u32 %v925, %v928
      %v930 = vsel %vm904, %v920, %v929
      %v932 = vshrl.u32 %v756, 16
      %v934 = vrot.slane %v932, 1
      %v935 = vshll.u32 %v756, 16
      %v937 = vrot.slane %v935, 2
      %v938 = vor.u32 %v934, %v937
      %v939 = vsel %vm904, %v929, %v938
      %v941 = vshrl.u32 %v757, 16
      %v943 = vrot.slane %v941, 1
      %v944 = vshll.u32 %v757, 16
      %v946 = vrot.slane %v944, 2
      %v947 = vor.u32 %v943, %v946
      %v948 = vsel %vm904, %v938, %v947
      %v950 = vshrl.u32 %v903, 16
      %v952 = vrot.slane %v950, 1
      %v953 = vshll.u32 %v903, 16
      %v955 = vrot.slane %v953, 2
      %v956 = vor.u32 %v952, %v955
      %v957 = vsel %vm904, %v947, %v956
      %v966 = vunpack.c.l.b16 %v893
      %v967 = vunpack.c.l.b16 %v894
      %v968 = vunpack.c.l.b16 %v895
      %v969 = vunpack.c.l.b16 %v896
      %v970 = vunpack.c.l.b16 %v897
      %v971 = vunpack.c.l.b16 %v898
      %v972 = vunpack.c.l.b16 %v899
      %v973 = vunpack.c.l.b16 %v900
      %v974 = vpack.c.b16 %v967, %v966
      %v975 = vpack.c.b16 %v969, %v968
      %v976 = vpack.c.b16 %v971, %v970
      %v977 = vpack.c.b16 %v973, %v972
      %v983 = vsel %vm370, %v921, 0
      %v986 = vsel %vm370, %v930, 0
      %v989 = vsel %vm370, %v939, 0
      %v992 = vsel %vm370, %v948, 0
      %v995 = vsel %vm370, %v957, 0
      %997 = vmatprep.subr.bf16.mxu0 0
      %998 = vmatpush1.bf16.msra.mxu0 0
      %999 = vmatprep.subr.bf16.mxu0 0
      %1000 = vmatpush1.bf16.msra.mxu0 0
      %1001 = vmatprep.subr.bf16.mxu0 0
      %1002 = vmatpush1.bf16.msra.mxu0 0
      %1003 = vmatprep.subr.bf16.mxu0 0
      %1004 = vmatpush1.bf16.msra.mxu0 0
      %1005 = vmatprep.subr.bf16.mxu0 0
      %1006 = vmatpush1.bf16.msra.mxu0 %v977
      %1007 = vmatprep.subr.bf16.mxu0 0
      %1008 = vmatpush1.bf16.msra.mxu0 %v976
      %1009 = vmatprep.subr.bf16.mxu0 0
      %1010 = vmatpush1.bf16.msra.mxu0 %v975
      %1011 = vmatprep.subr.bf16.mxu0 0
      %1012 = vmatpush1.bf16.msra.mxu0 %v974
      %1013 = vmatprep.subr.bf16.mxu0 0
      %1014 = vmatpush2.bf16.msra.mxu0 0
      %1015 = vmatprep.subr.bf16.mxu0 0
      %1016 = vmatpush2.bf16.msra.mxu0 0
      %1017 = vmatprep.subr.bf16.mxu0 0
      %1018 = vmatpush2.bf16.msra.mxu0 0
      %1019 = vmatprep.subr.bf16.mxu0 0
      %1020 = vmatpush2.bf16.msra.mxu0 0
      %1021 = vmatprep.subr.bf16.mxu0 0
      %1022 = vmatpush2.bf16.msra.mxu0 0
      %1023 = vmatprep.subr.bf16.mxu0 0
      %1024 = vmatpush2.bf16.msra.mxu0 0
      %1025 = vmatprep.subr.bf16.mxu0 0
      %1026 = vmatpush2.bf16.msra.mxu0 0
      %1027 = vmatprep.subr.bf16.mxu0 0
      %1028 = vmatpush2.bf16.msra.mxu0 0
      %1029 = vmatprep.mubr.bf16.mxu0 0
      %1030 = vmatmul.mubr.bf16.gmra.mxu0 %v983
      %v1031 = vpop.f32.mrf.mxu0
      %v1032 = vadd.f32 0.0, %v1031
      %v1033 = vpop.f32.mrf.mxu0
      %v1034 = vpop.f32.mrf.mxu0
      %v1035 = vadd.f32 0.0, %v1034
      %v1036 = vpop.f32.mrf.mxu0
      %1037 = vmatprep.mubr.bf16.mxu0 0
      %1038 = vmatmul.mubr.bf16.gmra.mxu0 %v986
      %v1039 = vpop.f32.mrf.mxu0
      %v1040 = vadd.f32 0.0, %v1039
      %v1041 = vpop.f32.mrf.mxu0
      %v1042 = vpop.f32.mrf.mxu0
      %v1043 = vadd.f32 0.0, %v1042
      %v1044 = vpop.f32.mrf.mxu0
      %1045 = vmatprep.mubr.bf16.mxu0 0
      %1046 = vmatmul.mubr.bf16.gmra.mxu0 %v989
      %v1047 = vpop.f32.mrf.mxu0
      %v1048 = vadd.f32 0.0, %v1047
      %v1049 = vpop.f32.mrf.mxu0
      %v1050 = vpop.f32.mrf.mxu0
      %v1051 = vadd.f32 0.0, %v1050
      %v1052 = vpop.f32.mrf.mxu0
      %1053 = vmatprep.mubr.bf16.mxu0 0
      %1054 = vmatmul.mubr.bf16.gmra.mxu0 %v992
      %v1055 = vpop.f32.mrf.mxu0
      %v1056 = vadd.f32 0.0, %v1055
      %v1057 = vpop.f32.mrf.mxu0
      %v1058 = vpop.f32.mrf.mxu0
      %v1059 = vadd.f32 0.0, %v1058
      %v1060 = vpop.f32.mrf.mxu0
      %1061 = vmatprep.mubr.bf16.mxu0 0
      %1062 = vmatmul.mubr.bf16.gmra.mxu0 %v995
      %v1063 = vpop.f32.mrf.mxu0
      %v1064 = vadd.f32 0.0, %v1063
      %v1065 = vpop.f32.mrf.mxu0
      %v1066 = vpop.f32.mrf.mxu0
      %v1067 = vadd.f32 0.0, %v1066
      %v1068 = vpop.f32.mrf.mxu0
      %1069 = vdwg.mxu0
      %v1070 = vadd.f32 %v882, %v1032
      %v1071 = vadd.f32 %v883, %v1035
      %v1072 = vadd.f32 %v884, %v1040
      %v1073 = vadd.f32 %v885, %v1043
      %v1074 = vadd.f32 %v886, %v1048
      %v1075 = vadd.f32 %v887, %v1051
      %v1076 = vadd.f32 %v888, %v1056
      %v1077 = vadd.f32 %v889, %v1059
      %v1078 = vadd.f32 %v890, %v1064
      %v1079 = vadd.f32 %v891, %v1067
      %v1080 = vld [vmem:[%s234 + $0x4] sm:$0xc]
      %v1081 = vld [vmem:[%s1 + $0xa0] sm:$0xf]
      %v1082 = vld [vmem:[%s1 + $0xa4] sm:$0xf]
      %v1083 = vld [vmem:[%s1 + $0xa8] sm:$0xf]
      %v1084 = vld [vmem:[%s1 + $0xac] sm:$0xf]
      %v1085 = vld [vmem:[%s1 + $0xb0] sm:$0xf]
      %v1086 = vld [vmem:[%s1 + $0xb4] sm:$0xf]
      %v1087 = vld [vmem:[%s1 + $0xb8] sm:$0xf]
      %v1088 = vld [vmem:[%s1 + $0xbc] sm:$0xf]
      %v1090 = vunpack.c.l.b16 %v1080
      %v1091 = vpack.c.b16 %v743, %v1090
      %vm1092 = vcmask 1045504
      %v1093 = vrot.slane %v1091, 2
      %v1094 = vrot.slane %v754, 2
      %v1095 = vsel %vm1092, %v1093, %v1094
      %v1096 = vrot.slane %v755, 2
      %v1097 = vsel %vm1092, %v1094, %v1096
      %v1098 = vrot.slane %v756, 2
      %v1099 = vsel %vm1092, %v1096, %v1098
      %v1100 = vrot.slane %v757, 2
      %v1101 = vsel %vm1092, %v1098, %v1100
      %v1102 = vrot.slane %v903, 2
      %v1103 = vsel %vm1092, %v1100, %v1102
      %v1112 = vunpack.c.l.b16 %v1081
      %v1113 = vunpack.c.l.b16 %v1082
      %v1114 = vunpack.c.l.b16 %v1083
      %v1115 = vunpack.c.l.b16 %v1084
      %v1116 = vunpack.c.l.b16 %v1085
      %v1117 = vunpack.c.l.b16 %v1086
      %v1118 = vunpack.c.l.b16 %v1087
      %v1119 = vunpack.c.l.b16 %v1088
      %v1120 = vpack.c.b16 %v1113, %v1112
      %v1121 = vpack.c.b16 %v1115, %v1114
      %v1122 = vpack.c.b16 %v1117, %v1116
      %v1123 = vpack.c.b16 %v1119, %v1118
      %v1129 = vsel %vm370, %v1095, 0
      %v1132 = vsel %vm370, %v1097, 0
      %v1135 = vsel %vm370, %v1099, 0
      %v1138 = vsel %vm370, %v1101, 0
      %v1141 = vsel %vm370, %v1103, 0
      %1143 = vmatprep.subr.bf16.mxu0 0
      %1144 = vmatpush1.bf16.msra.mxu0 0
      %1145 = vmatprep.subr.bf16.mxu0 0
      %1146 = vmatpush1.bf16.msra.mxu0 0
      %1147 = vmatprep.subr.bf16.mxu0 0
      %1148 = vmatpush1.bf16.msra.mxu0 0
      %1149 = vmatprep.subr.bf16.mxu0 0
      %1150 = vmatpush1.bf16.msra.mxu0 0
      %1151 = vmatprep.subr.bf16.mxu0 0
      %1152 = vmatpush1.bf16.msra.mxu0 %v1123
      %1153 = vmatprep.subr.bf16.mxu0 0
      %1154 = vmatpush1.bf16.msra.mxu0 %v1122
      %1155 = vmatprep.subr.bf16.mxu0 0
      %1156 = vmatpush1.bf16.msra.mxu0 %v1121
      %1157 = vmatprep.subr.bf16.mxu0 0
      %1158 = vmatpush1.bf16.msra.mxu0 %v1120
      %1159 = vmatprep.subr.bf16.mxu0 0
      %1160 = vmatpush2.bf16.msra.mxu0 0
      %1161 = vmatprep.subr.bf16.mxu0 0
      %1162 = vmatpush2.bf16.msra.mxu0 0
      %1163 = vmatprep.subr.bf16.mxu0 0
      %1164 = vmatpush2.bf16.msra.mxu0 0
      %1165 = vmatprep.subr.bf16.mxu0 0
      %1166 = vmatpush2.bf16.msra.mxu0 0
      %1167 = vmatprep.subr.bf16.mxu0 0
      %1168 = vmatpush2.bf16.msra.mxu0 0
      %1169 = vmatprep.subr.bf16.mxu0 0
      %1170 = vmatpush2.bf16.msra.mxu0 0
      %1171 = vmatprep.subr.bf16.mxu0 0
      %1172 = vmatpush2.bf16.msra.mxu0 0
      %1173 = vmatprep.subr.bf16.mxu0 0
      %1174 = vmatpush2.bf16.msra.mxu0 0
      %1175 = vmatprep.mubr.bf16.mxu0 0
      %1176 = vmatmul.mubr.bf16.gmra.mxu0 %v1129
      %v1177 = vpop.f32.mrf.mxu0
      %v1178 = vadd.f32 0.0, %v1177
      %v1179 = vpop.f32.mrf.mxu0
      %v1180 = vpop.f32.mrf.mxu0
      %v1181 = vadd.f32 0.0, %v1180
      %v1182 = vpop.f32.mrf.mxu0
      %1183 = vmatprep.mubr.bf16.mxu0 0
      %1184 = vmatmul.mubr.bf16.gmra.mxu0 %v1132
      %v1185 = vpop.f32.mrf.mxu0
      %v1186 = vadd.f32 0.0, %v1185
      %v1187 = vpop.f32.mrf.mxu0
      %v1188 = vpop.f32.mrf.mxu0
      %v1189 = vadd.f32 0.0, %v1188
      %v1190 = vpop.f32.mrf.mxu0
      %1191 = vmatprep.mubr.bf16.mxu0 0
      %1192 = vmatmul.mubr.bf16.gmra.mxu0 %v1135
      %v1193 = vpop.f32.mrf.mxu0
      %v1194 = vadd.f32 0.0, %v1193
      %v1195 = vpop.f32.mrf.mxu0
      %v1196 = vpop.f32.mrf.mxu0
      %v1197 = vadd.f32 0.0, %v1196
      %v1198 = vpop.f32.mrf.mxu0
      %1199 = vmatprep.mubr.bf16.mxu0 0
      %1200 = vmatmul.mubr.bf16.gmra.mxu0 %v1138
      %v1201 = vpop.f32.mrf.mxu0
      %v1202 = vadd.f32 0.0, %v1201
      %v1203 = vpop.f32.mrf.mxu0
      %v1204 = vpop.f32.mrf.mxu0
      %v1205 = vadd.f32 0.0, %v1204
      %v1206 = vpop.f32.mrf.mxu0
      %1207 = vmatprep.mubr.bf16.mxu0 0
      %1208 = vmatmul.mubr.bf16.gmra.mxu0 %v1141
      %v1209 = vpop.f32.mrf.mxu0
      %v1210 = vadd.f32 0.0, %v1209
      %v1211 = vpop.f32.mrf.mxu0
      %v1212 = vpop.f32.mrf.mxu0
      %v1213 = vadd.f32 0.0, %v1212
      %v1214 = vpop.f32.mrf.mxu0
      %1215 = vdwg.mxu0
      %v1216 = vadd.f32 %v1070, %v1178
      %v1217 = vadd.f32 %v1071, %v1181
      %v1218 = vadd.f32 %v1072, %v1186
      %v1219 = vadd.f32 %v1073, %v1189
      %v1220 = vadd.f32 %v1074, %v1194
      %v1221 = vadd.f32 %v1075, %v1197
      %v1222 = vadd.f32 %v1076, %v1202
      %v1223 = vadd.f32 %v1077, %v1205
      %v1224 = vadd.f32 %v1078, %v1210
      %v1225 = vadd.f32 %v1079, %v1213
      %v1226 = vld [vmem:[%s234 + $0x8] sm:$0xc]
      %v1227 = vld [vmem:[%s234 + $0xc] sm:$0xf]
      %v1228 = vld [vmem:[%s234 + $0x10] sm:$0xf]
      %v1229 = vld [vmem:[%s234 + $0x14] sm:$0xf]
      %v1230 = vld [vmem:[%s234 + $0x18] sm:$0xf]
      %v1231 = vld [vmem:[%s234 + $0x1c] sm:$0xf]
      %v1232 = vld [vmem:[%s234 + $0x20] sm:$0xf]
      %v1233 = vld [vmem:[%s234 + $0x24] sm:$0xf]
      %v1234 = vld [vmem:[%s234 + $0x28] sm:$0xf]
      %v1235 = vld [vmem:[%s234 + $0x2c] sm:$0xf]
      %v1236 = vld [vmem:[%s234 + $0x30] sm:$0x3]
      %v1237 = vld [vmem:[%s1 + $0xc0] sm:$0xf]
      %v1238 = vld [vmem:[%s1 + $0xc4] sm:$0xf]
      %v1239 = vld [vmem:[%s1 + $0xc8] sm:$0xf]
      %v1240 = vld [vmem:[%s1 + $0xcc] sm:$0xf]
      %v1241 = vld [vmem:[%s1 + $0xd0] sm:$0xf]
      %v1242 = vld [vmem:[%s1 + $0xd4] sm:$0xf]
      %v1243 = vld [vmem:[%s1 + $0xd8] sm:$0xf]
      %v1244 = vld [vmem:[%s1 + $0xdc] sm:$0xf]
      %v1256 = vunpack.c.l.b16 %v1226
      %v1257 = vunpack.c.l.b16 %v1227
      %v1258 = vunpack.c.l.b16 %v1228
      %v1259 = vunpack.c.l.b16 %v1229
      %v1260 = vunpack.c.l.b16 %v1230
      %v1261 = vunpack.c.l.b16 %v1231
      %v1262 = vunpack.c.l.b16 %v1232
      %v1263 = vunpack.c.l.b16 %v1233
      %v1264 = vunpack.c.l.b16 %v1234
      %v1265 = vunpack.c.l.b16 %v1235
      %v1266 = vunpack.c.l.b16 %v1236
      %v1267 = vpack.c.b16 %v1257, %v1256
      %v1268 = vpack.c.b16 %v1259, %v1258
      %v1269 = vpack.c.b16 %v1261, %v1260
      %v1270 = vpack.c.b16 %v1263, %v1262
      %v1271 = vpack.c.b16 %v1265, %v1264
      %v1272 = vpack.c.b16 %v1266, %v1266
      %v1273 = vrot.slane %v1267, 2
      %v1274 = vrot.slane %v1268, 2
      %v1275 = vsel %vm1092, %v1273, %v1274
      %v1276 = vrot.slane %v1269, 2
      %v1277 = vsel %vm1092, %v1274, %v1276
      %v1278 = vrot.slane %v1270, 2
      %v1279 = vsel %vm1092, %v1276, %v1278
      %v1280 = vrot.slane %v1271, 2
      %v1281 = vsel %vm1092, %v1278, %v1280
      %v1282 = vrot.slane %v1272, 2
      %v1283 = vsel %vm1092, %v1280, %v1282
      %v1292 = vunpack.c.l.b16 %v1237
      %v1293 = vunpack.c.l.b16 %v1238
      %v1294 = vunpack.c.l.b16 %v1239
      %v1295 = vunpack.c.l.b16 %v1240
      %v1296 = vunpack.c.l.b16 %v1241
      %v1297 = vunpack.c.l.b16 %v1242
      %v1298 = vunpack.c.l.b16 %v1243
      %v1299 = vunpack.c.l.b16 %v1244
      %v1300 = vpack.c.b16 %v1293, %v1292
      %v1301 = vpack.c.b16 %v1295, %v1294
      %v1302 = vpack.c.b16 %v1297, %v1296
      %v1303 = vpack.c.b16 %v1299, %v1298
      %v1309 = vsel %vm370, %v1275, 0
      %v1312 = vsel %vm370, %v1277, 0
      %v1315 = vsel %vm370, %v1279, 0
      %v1318 = vsel %vm370, %v1281, 0
      %v1321 = vsel %vm370, %v1283, 0
      %1323 = vmatprep.subr.bf16.mxu0 0
      %1324 = vmatpush1.bf16.msra.mxu0 0
      %1325 = vmatprep.subr.bf16.mxu0 0
      %1326 = vmatpush1.bf16.msra.mxu0 0
      %1327 = vmatprep.subr.bf16.mxu0 0
      %1328 = vmatpush1.bf16.msra.mxu0 0
      %1329 = vmatprep.subr.bf16.mxu0 0
      %1330 = vmatpush1.bf16.msra.mxu0 0
      %1331 = vmatprep.subr.bf16.mxu0 0
      %1332 = vmatpush1.bf16.msra.mxu0 %v1303
      %1333 = vmatprep.subr.bf16.mxu0 0
      %1334 = vmatpush1.bf16.msra.mxu0 %v1302
      %1335 = vmatprep.subr.bf16.mxu0 0
      %1336 = vmatpush1.bf16.msra.mxu0 %v1301
      %1337 = vmatprep.subr.bf16.mxu0 0
      %1338 = vmatpush1.bf16.msra.mxu0 %v1300
      %1339 = vmatprep.subr.bf16.mxu0 0
      %1340 = vmatpush2.bf16.msra.mxu0 0
      %1341 = vmatprep.subr.bf16.mxu0 0
      %1342 = vmatpush2.bf16.msra.mxu0 0
      %1343 = vmatprep.subr.bf16.mxu0 0
      %1344 = vmatpush2.bf16.msra.mxu0 0
      %1345 = vmatprep.subr.bf16.mxu0 0
      %1346 = vmatpush2.bf16.msra.mxu0 0
      %1347 = vmatprep.subr.bf16.mxu0 0
      %1348 = vmatpush2.bf16.msra.mxu0 0
      %1349 = vmatprep.subr.bf16.mxu0 0
      %1350 = vmatpush2.bf16.msra.mxu0 0
      %1351 = vmatprep.subr.bf16.mxu0 0
      %1352 = vmatpush2.bf16.msra.mxu0 0
      %1353 = vmatprep.subr.bf16.mxu0 0
      %1354 = vmatpush2.bf16.msra.mxu0 0
      %1355 = vmatprep.mubr.bf16.mxu0 0
      %1356 = vmatmul.mubr.bf16.gmra.mxu0 %v1309
      %v1357 = vpop.f32.mrf.mxu0
      %v1358 = vadd.f32 0.0, %v1357
      %v1359 = vpop.f32.mrf.mxu0
      %v1360 = vpop.f32.mrf.mxu0
      %v1361 = vadd.f32 0.0, %v1360
      %v1362 = vpop.f32.mrf.mxu0
      %1363 = vmatprep.mubr.bf16.mxu0 0
      %1364 = vmatmul.mubr.bf16.gmra.mxu0 %v1312
      %v1365 = vpop.f32.mrf.mxu0
      %v1366 = vadd.f32 0.0, %v1365
      %v1367 = vpop.f32.mrf.mxu0
      %v1368 = vpop.f32.mrf.mxu0
      %v1369 = vadd.f32 0.0, %v1368
      %v1370 = vpop.f32.mrf.mxu0
      %1371 = vmatprep.mubr.bf16.mxu0 0
      %1372 = vmatmul.mubr.bf16.gmra.mxu0 %v1315
      %v1373 = vpop.f32.mrf.mxu0
      %v1374 = vadd.f32 0.0, %v1373
      %v1375 = vpop.f32.mrf.mxu0
      %v1376 = vpop.f32.mrf.mxu0
      %v1377 = vadd.f32 0.0, %v1376
      %v1378 = vpop.f32.mrf.mxu0
      %1379 = vmatprep.mubr.bf16.mxu0 0
      %1380 = vmatmul.mubr.bf16.gmra.mxu0 %v1318
      %v1381 = vpop.f32.mrf.mxu0
      %v1382 = vadd.f32 0.0, %v1381
      %v1383 = vpop.f32.mrf.mxu0
      %v1384 = vpop.f32.mrf.mxu0
      %v1385 = vadd.f32 0.0, %v1384
      %v1386 = vpop.f32.mrf.mxu0
      %1387 = vmatprep.mubr.bf16.mxu0 0
      %1388 = vmatmul.mubr.bf16.gmra.mxu0 %v1321
      %v1389 = vpop.f32.mrf.mxu0
      %v1390 = vadd.f32 0.0, %v1389
      %v1391 = vpop.f32.mrf.mxu0
      %v1392 = vpop.f32.mrf.mxu0
      %v1393 = vadd.f32 0.0, %v1392
      %v1394 = vpop.f32.mrf.mxu0
      %1395 = vdwg.mxu0
      %v1396 = vadd.f32 %v1216, %v1358
      %v1397 = vadd.f32 %v1217, %v1361
      %v1398 = vadd.f32 %v1218, %v1366
      %v1399 = vadd.f32 %v1219, %v1369
      %v1400 = vadd.f32 %v1220, %v1374
      %v1401 = vadd.f32 %v1221, %v1377
      %v1402 = vadd.f32 %v1222, %v1382
      %v1403 = vadd.f32 %v1223, %v1385
      %v1404 = vadd.f32 %v1224, %v1390
      %v1405 = vadd.f32 %v1225, %v1393
      %v1406 = vld [vmem:[%s234 + $0x30] sm:$0x7]
      %v1407 = vld [vmem:[%s1 + $0xe0] sm:$0xf]
      %v1408 = vld [vmem:[%s1 + $0xe4] sm:$0xf]
      %v1409 = vld [vmem:[%s1 + $0xe8] sm:$0xf]
      %v1410 = vld [vmem:[%s1 + $0xec] sm:$0xf]
      %v1411 = vld [vmem:[%s1 + $0xf0] sm:$0xf]
      %v1412 = vld [vmem:[%s1 + $0xf4] sm:$0xf]
      %v1413 = vld [vmem:[%s1 + $0xf8] sm:$0xf]
      %v1414 = vld [vmem:[%s1 + $0xfc] sm:$0xf]
      %v1416 = vunpack.c.l.b16 %v1406
      %v1417 = vpack.c.b16 %v1416, %v1416
      %vm1418 = vsmask.f32 5376
      %v1420 = vshrl.u32 %v1267, 16
      %v1422 = vrot.slane %v1420, 2
      %v1423 = vshll.u32 %v1267, 16
      %v1425 = vrot.slane %v1423, 3
      %v1426 = vor.u32 %v1422, %v1425
      %v1428 = vshrl.u32 %v1268, 16
      %v1430 = vrot.slane %v1428, 2
      %v1431 = vshll.u32 %v1268, 16
      %v1433 = vrot.slane %v1431, 3
      %v1434 = vor.u32 %v1430, %v1433
      %v1435 = vsel %vm1418, %v1426, %v1434
      %v1437 = vshrl.u32 %v1269, 16
      %v1439 = vrot.slane %v1437, 2
      %v1440 = vshll.u32 %v1269, 16
      %v1442 = vrot.slane %v1440, 3
      %v1443 = vor.u32 %v1439, %v1442
      %v1444 = vsel %vm1418, %v1434, %v1443
      %v1446 = vshrl.u32 %v1270, 16
      %v1448 = vrot.slane %v1446, 2
      %v1449 = vshll.u32 %v1270, 16
      %v1451 = vrot.slane %v1449, 3
      %v1452 = vor.u32 %v1448, %v1451
      %v1453 = vsel %vm1418, %v1443, %v1452
      %v1455 = vshrl.u32 %v1271, 16
      %v1457 = vrot.slane %v1455, 2
      %v1458 = vshll.u32 %v1271, 16
      %v1460 = vrot.slane %v1458, 3
      %v1461 = vor.u32 %v1457, %v1460
      %v1462 = vsel %vm1418, %v1452, %v1461
      %v1464 = vshrl.u32 %v1417, 16
      %v1466 = vrot.slane %v1464, 2
      %v1467 = vshll.u32 %v1417, 16
      %v1469 = vrot.slane %v1467, 3
      %v1470 = vor.u32 %v1466, %v1469
      %v1471 = vsel %vm1418, %v1461, %v1470
      %v1480 = vunpack.c.l.b16 %v1407
      %v1481 = vunpack.c.l.b16 %v1408
      %v1482 = vunpack.c.l.b16 %v1409
      %v1483 = vunpack.c.l.b16 %v1410
      %v1484 = vunpack.c.l.b16 %v1411
      %v1485 = vunpack.c.l.b16 %v1412
      %v1486 = vunpack.c.l.b16 %v1413
      %v1487 = vunpack.c.l.b16 %v1414
      %v1488 = vpack.c.b16 %v1481, %v1480
      %v1489 = vpack.c.b16 %v1483, %v1482
      %v1490 = vpack.c.b16 %v1485, %v1484
      %v1491 = vpack.c.b16 %v1487, %v1486
      %v1497 = vsel %vm370, %v1435, 0
      %v1500 = vsel %vm370, %v1444, 0
      %v1503 = vsel %vm370, %v1453, 0
      %v1506 = vsel %vm370, %v1462, 0
      %v1509 = vsel %vm370, %v1471, 0
      %1511 = vmatprep.subr.bf16.mxu0 0
      %1512 = vmatpush1.bf16.msra.mxu0 0
      %1513 = vmatprep.subr.bf16.mxu0 0
      %1514 = vmatpush1.bf16.msra.mxu0 0
      %1515 = vmatprep.subr.bf16.mxu0 0
      %1516 = vmatpush1.bf16.msra.mxu0 0
      %1517 = vmatprep.subr.bf16.mxu0 0
      %1518 = vmatpush1.bf16.msra.mxu0 0
      %1519 = vmatprep.subr.bf16.mxu0 0
      %1520 = vmatpush1.bf16.msra.mxu0 %v1491
      %1521 = vmatprep.subr.bf16.mxu0 0
      %1522 = vmatpush1.bf16.msra.mxu0 %v1490
      %1523 = vmatprep.subr.bf16.mxu0 0
      %1524 = vmatpush1.bf16.msra.mxu0 %v1489
      %1525 = vmatprep.subr.bf16.mxu0 0
      %1526 = vmatpush1.bf16.msra.mxu0 %v1488
      %1527 = vmatprep.subr.bf16.mxu0 0
      %1528 = vmatpush2.bf16.msra.mxu0 0
      %1529 = vmatprep.subr.bf16.mxu0 0
      %1530 = vmatpush2.bf16.msra.mxu0 0
      %1531 = vmatprep.subr.bf16.mxu0 0
      %1532 = vmatpush2.bf16.msra.mxu0 0
      %1533 = vmatprep.subr.bf16.mxu0 0
      %1534 = vmatpush2.bf16.msra.mxu0 0
      %1535 = vmatprep.subr.bf16.mxu0 0
      %1536 = vmatpush2.bf16.msra.mxu0 0
      %1537 = vmatprep.subr.bf16.mxu0 0
      %1538 = vmatpush2.bf16.msra.mxu0 0
      %1539 = vmatprep.subr.bf16.mxu0 0
      %1540 = vmatpush2.bf16.msra.mxu0 0
      %1541 = vmatprep.subr.bf16.mxu0 0
      %1542 = vmatpush2.bf16.msra.mxu0 0
      %1543 = vmatprep.mubr.bf16.mxu0 0
      %1544 = vmatmul.mubr.bf16.gmra.mxu0 %v1497
      %v1545 = vpop.f32.mrf.mxu0
      %v1546 = vadd.f32 0.0, %v1545
      %v1547 = vpop.f32.mrf.mxu0
      %v1548 = vpop.f32.mrf.mxu0
      %v1549 = vadd.f32 0.0, %v1548
      %v1550 = vpop.f32.mrf.mxu0
      %1551 = vmatprep.mubr.bf16.mxu0 0
      %1552 = vmatmul.mubr.bf16.gmra.mxu0 %v1500
      %v1553 = vpop.f32.mrf.mxu0
      %v1554 = vadd.f32 0.0, %v1553
      %v1555 = vpop.f32.mrf.mxu0
      %v1556 = vpop.f32.mrf.mxu0
      %v1557 = vadd.f32 0.0, %v1556
      %v1558 = vpop.f32.mrf.mxu0
      %1559 = vmatprep.mubr.bf16.mxu0 0
      %1560 = vmatmul.mubr.bf16.gmra.mxu0 %v1503
      %v1561 = vpop.f32.mrf.mxu0
      %v1562 = vadd.f32 0.0, %v1561
      %v1563 = vpop.f32.mrf.mxu0
      %v1564 = vpop.f32.mrf.mxu0
      %v1565 = vadd.f32 0.0, %v1564
      %v1566 = vpop.f32.mrf.mxu0
      %1567 = vmatprep.mubr.bf16.mxu0 0
      %1568 = vmatmul.mubr.bf16.gmra.mxu0 %v1506
      %v1569 = vpop.f32.mrf.mxu0
      %v1570 = vadd.f32 0.0, %v1569
      %v1571 = vpop.f32.mrf.mxu0
      %v1572 = vpop.f32.mrf.mxu0
      %v1573 = vadd.f32 0.0, %v1572
      %v1574 = vpop.f32.mrf.mxu0
      %1575 = vmatprep.mubr.bf16.mxu0 0
      %1576 = vmatmul.mubr.bf16.gmra.mxu0 %v1509
      %v1577 = vpop.f32.mrf.mxu0
      %v1578 = vadd.f32 0.0, %v1577
      %v1579 = vpop.f32.mrf.mxu0
      %v1580 = vpop.f32.mrf.mxu0
      %v1581 = vadd.f32 0.0, %v1580
      %v1582 = vpop.f32.mrf.mxu0
      %1583 = vdwg.mxu0
      %v1584 = vadd.f32 %v1396, %v1546
      %v1585 = vadd.f32 %v1397, %v1549
      %v1586 = vadd.f32 %v1398, %v1554
      %v1587 = vadd.f32 %v1399, %v1557
      %v1588 = vadd.f32 %v1400, %v1562
      %v1589 = vadd.f32 %v1401, %v1565
      %v1590 = vadd.f32 %v1402, %v1570
      %v1591 = vadd.f32 %v1403, %v1573
      %v1592 = vadd.f32 %v1404, %v1578
      %v1593 = vadd.f32 %v1405, %v1581
      %v1594 = vld [vmem:[%s234 + $0x8] sm:$0x8]
      %v1595 = vld [vmem:[%s1 + $0x100] sm:$0xf]
      %v1596 = vld [vmem:[%s1 + $0x104] sm:$0xf]
      %v1597 = vld [vmem:[%s1 + $0x108] sm:$0xf]
      %v1598 = vld [vmem:[%s1 + $0x10c] sm:$0xf]
      %v1599 = vld [vmem:[%s1 + $0x110] sm:$0xf]
      %v1600 = vld [vmem:[%s1 + $0x114] sm:$0xf]
      %v1601 = vld [vmem:[%s1 + $0x118] sm:$0xf]
      %v1602 = vld [vmem:[%s1 + $0x11c] sm:$0xf]
      %v1604 = vunpack.c.l.b16 %v1594
      %v1605 = vpack.c.b16 %v1257, %v1604
      %vm1606 = vcmask 1044480
      %v1607 = vrot.slane %v1605, 3
      %v1608 = vrot.slane %v1268, 3
      %v1609 = vsel %vm1606, %v1607, %v1608
      %v1610 = vrot.slane %v1269, 3
      %v1611 = vsel %vm1606, %v1608, %v1610
      %v1612 = vrot.slane %v1270, 3
      %v1613 = vsel %vm1606, %v1610, %v1612
      %v1614 = vrot.slane %v1271, 3
      %v1615 = vsel %vm1606, %v1612, %v1614
      %v1616 = vrot.slane %v1417, 3
      %v1617 = vsel %vm1606, %v1614, %v1616
      %v1626 = vunpack.c.l.b16 %v1595
      %v1627 = vunpack.c.l.b16 %v1596
      %v1628 = vunpack.c.l.b16 %v1597
      %v1629 = vunpack.c.l.b16 %v1598
      %v1630 = vunpack.c.l.b16 %v1599
      %v1631 = vunpack.c.l.b16 %v1600
      %v1632 = vunpack.c.l.b16 %v1601
      %v1633 = vunpack.c.l.b16 %v1602
      %v1634 = vpack.c.b16 %v1627, %v1626
      %v1635 = vpack.c.b16 %v1629, %v1628
      %v1636 = vpack.c.b16 %v1631, %v1630
      %v1637 = vpack.c.b16 %v1633, %v1632
      %v1643 = vsel %vm370, %v1609, 0
      %v1646 = vsel %vm370, %v1611, 0
      %v1649 = vsel %vm370, %v1613, 0
      %v1652 = vsel %vm370, %v1615, 0
      %v1655 = vsel %vm370, %v1617, 0
      %1657 = vmatprep.subr.bf16.mxu0 0
      %1658 = vmatpush1.bf16.msra.mxu0 0
      %1659 = vmatprep.subr.bf16.mxu0 0
      %1660 = vmatpush1.bf16.msra.mxu0 0
      %1661 = vmatprep.subr.bf16.mxu0 0
      %1662 = vmatpush1.bf16.msra.mxu0 0
      %1663 = vmatprep.subr.bf16.mxu0 0
      %1664 = vmatpush1.bf16.msra.mxu0 0
      %1665 = vmatprep.subr.bf16.mxu0 0
      %1666 = vmatpush1.bf16.msra.mxu0 %v1637
      %1667 = vmatprep.subr.bf16.mxu0 0
      %1668 = vmatpush1.bf16.msra.mxu0 %v1636
      %1669 = vmatprep.subr.bf16.mxu0 0
      %1670 = vmatpush1.bf16.msra.mxu0 %v1635
      %1671 = vmatprep.subr.bf16.mxu0 0
      %1672 = vmatpush1.bf16.msra.mxu0 %v1634
      %1673 = vmatprep.subr.bf16.mxu0 0
      %1674 = vmatpush2.bf16.msra.mxu0 0
      %1675 = vmatprep.subr.bf16.mxu0 0
      %1676 = vmatpush2.bf16.msra.mxu0 0
      %1677 = vmatprep.subr.bf16.mxu0 0
      %1678 = vmatpush2.bf16.msra.mxu0 0
      %1679 = vmatprep.subr.bf16.mxu0 0
      %1680 = vmatpush2.bf16.msra.mxu0 0
      %1681 = vmatprep.subr.bf16.mxu0 0
      %1682 = vmatpush2.bf16.msra.mxu0 0
      %1683 = vmatprep.subr.bf16.mxu0 0
      %1684 = vmatpush2.bf16.msra.mxu0 0
      %1685 = vmatprep.subr.bf16.mxu0 0
      %1686 = vmatpush2.bf16.msra.mxu0 0
      %1687 = vmatprep.subr.bf16.mxu0 0
      %1688 = vmatpush2.bf16.msra.mxu0 0
      %1689 = vmatprep.mubr.bf16.mxu0 0
      %1690 = vmatmul.mubr.bf16.gmra.mxu0 %v1643
      %v1691 = vpop.f32.mrf.mxu0
      %v1692 = vadd.f32 0.0, %v1691
      %v1693 = vpop.f32.mrf.mxu0
      %v1694 = vpop.f32.mrf.mxu0
      %v1695 = vadd.f32 0.0, %v1694
      %v1696 = vpop.f32.mrf.mxu0
      %1697 = vmatprep.mubr.bf16.mxu0 0
      %1698 = vmatmul.mubr.bf16.gmra.mxu0 %v1646
      %v1699 = vpop.f32.mrf.mxu0
      %v1700 = vadd.f32 0.0, %v1699
      %v1701 = vpop.f32.mrf.mxu0
      %v1702 = vpop.f32.mrf.mxu0
      %v1703 = vadd.f32 0.0, %v1702
      %v1704 = vpop.f32.mrf.mxu0
      %1705 = vmatprep.mubr.bf16.mxu0 0
      %1706 = vmatmul.mubr.bf16.gmra.mxu0 %v1649
      %v1707 = vpop.f32.mrf.mxu0
      %v1708 = vadd.f32 0.0, %v1707
      %v1709 = vpop.f32.mrf.mxu0
      %v1710 = vpop.f32.mrf.mxu0
      %v1711 = vadd.f32 0.0, %v1710
      %v1712 = vpop.f32.mrf.mxu0
      %1713 = vmatprep.mubr.bf16.mxu0 0
      %1714 = vmatmul.mubr.bf16.gmra.mxu0 %v1652
      %v1715 = vpop.f32.mrf.mxu0
      %v1716 = vadd.f32 0.0, %v1715
      %v1717 = vpop.f32.mrf.mxu0
      %v1718 = vpop.f32.mrf.mxu0
      %v1719 = vadd.f32 0.0, %v1718
      %v1720 = vpop.f32.mrf.mxu0
      %1721 = vmatprep.mubr.bf16.mxu0 0
      %1722 = vmatmul.mubr.bf16.gmra.mxu0 %v1655
      %v1723 = vpop.f32.mrf.mxu0
      %v1724 = vadd.f32 0.0, %v1723
      %v1725 = vpop.f32.mrf.mxu0
      %v1726 = vpop.f32.mrf.mxu0
      %v1727 = vadd.f32 0.0, %v1726
      %v1728 = vpop.f32.mrf.mxu0
      %1729 = vdwg.mxu0
      %v1730 = vadd.f32 %v1584, %v1692
      %v1731 = vadd.f32 %v1585, %v1695
      %v1732 = vadd.f32 %v1586, %v1700
      %v1733 = vadd.f32 %v1587, %v1703
      %v1734 = vadd.f32 %v1588, %v1708
      %v1735 = vadd.f32 %v1589, %v1711
      %v1736 = vadd.f32 %v1590, %v1716
      %v1737 = vadd.f32 %v1591, %v1719
      %v1738 = vadd.f32 %v1592, %v1724
      %v1739 = vadd.f32 %v1593, %v1727
      %v1740 = vld [vmem:[%s2] sm:$0x1]
      %v1742 = vlaneseq
      %v1743 = vshrl.u32 %v1742, 7
      %v1744 = vsub.s32 0, %v1743
      %v1745 = vrot.slane %v1740, %v1744
      %v1747 = vadd.f32 %v1730, %v1745
      %v1748 = vadd.f32 %v1731, %v1745
      %v1749 = vadd.f32 %v1732, %v1745
      %v1750 = vadd.f32 %v1733, %v1745
      %v1751 = vadd.f32 %v1734, %v1745
      %v1752 = vadd.f32 %v1735, %v1745
      %v1753 = vadd.f32 %v1736, %v1745
      %v1754 = vadd.f32 %v1737, %v1745
      %v1755 = vadd.f32 %v1738, %v1745
      %v1756 = vadd.f32 %v1739, %v1745
      %v1757 = vld [vmem:[%s239 + $0x4] sm:$0xe]
      %v1758 = vld [vmem:[%s239 + $0x8] sm:$0xf]
      %v1759 = vld [vmem:[%s239 + $0xc] sm:$0xf]
      %v1760 = vld [vmem:[%s239 + $0x10] sm:$0xf]
      %v1761 = vld [vmem:[%s239 + $0x14] sm:$0xf]
      %v1762 = vld [vmem:[%s239 + $0x18] sm:$0xf]
      %v1763 = vld [vmem:[%s239 + $0x1c] sm:$0xf]
      %v1764 = vld [vmem:[%s239 + $0x20] sm:$0xf]
      %v1765 = vld [vmem:[%s239 + $0x24] sm:$0xf]
      %v1766 = vld [vmem:[%s239 + $0x28] sm:$0xf]
      %v1767 = vld [vmem:[%s239 + $0x2c] sm:$0x3]
      %v1768 = vunpack.c.l.bf16 %v1757
      %v1769 = vunpack.c.l.bf16 %v1758
      %v1770 = vunpack.c.l.bf16 %v1759
      %v1771 = vunpack.c.l.bf16 %v1760
      %v1772 = vunpack.c.l.bf16 %v1761
      %v1773 = vunpack.c.l.bf16 %v1762
      %v1774 = vunpack.c.l.bf16 %v1763
      %v1775 = vunpack.c.l.bf16 %v1764
      %v1776 = vunpack.c.l.bf16 %v1765
      %v1777 = vunpack.c.l.bf16 %v1766
      %v1778 = vunpack.c.l.bf16 %v1767
      %vm1790 = vcmask 1044480
      %v1791 = vrot.slane %v1768, 3
      %v1792 = vrot.slane %v1769, 3
      %v1793 = vsel %vm1790, %v1791, %v1792
      %v1794 = vrot.slane %v1770, 3
      %v1795 = vsel %vm1790, %v1792, %v1794
      %v1796 = vrot.slane %v1771, 3
      %v1797 = vsel %vm1790, %v1794, %v1796
      %v1798 = vrot.slane %v1772, 3
      %v1799 = vsel %vm1790, %v1796, %v1798
      %v1800 = vrot.slane %v1773, 3
      %v1801 = vsel %vm1790, %v1798, %v1800
      %v1802 = vrot.slane %v1774, 3
      %v1803 = vsel %vm1790, %v1800, %v1802
      %v1804 = vrot.slane %v1775, 3
      %v1805 = vsel %vm1790, %v1802, %v1804
      %v1806 = vrot.slane %v1776, 3
      %v1807 = vsel %vm1790, %v1804, %v1806
      %v1808 = vrot.slane %v1777, 3
      %v1809 = vsel %vm1790, %v1806, %v1808
      %v1810 = vrot.slane %v1778, 3
      %v1811 = vsel %vm1790, %v1808, %v1810
      %v1822 = vadd.f32 %v1747, %v1793
      %v1823 = vadd.f32 %v1748, %v1795
      %v1824 = vadd.f32 %v1749, %v1797
      %v1825 = vadd.f32 %v1750, %v1799
      %v1826 = vadd.f32 %v1751, %v1801
      %v1827 = vadd.f32 %v1752, %v1803
      %v1828 = vadd.f32 %v1753, %v1805
      %v1829 = vadd.f32 %v1754, %v1807
      %v1830 = vadd.f32 %v1755, %v1809
      %v1831 = vadd.f32 %v1756, %v1811
      %v1832 = vmax.f32 %v1822, 0.0
      %v1833 = vmax.f32 %v1823, 0.0
      %v1834 = vmax.f32 %v1824, 0.0
      %v1835 = vmax.f32 %v1825, 0.0
      %v1836 = vmax.f32 %v1826, 0.0
      %v1837 = vmax.f32 %v1827, 0.0
      %v1838 = vmax.f32 %v1828, 0.0
      %v1839 = vmax.f32 %v1829, 0.0
      %v1840 = vmax.f32 %v1830, 0.0
      %v1841 = vmax.f32 %v1831, 0.0
      %v1842 = vld [vmem:[%s3] sm:$0xff]
      %v1843 = vld [vmem:[%s3 + $0x8] sm:$0xff]
      %v1844 = vld [vmem:[%s3 + $0x10] sm:$0xff]
      %v1845 = vld [vmem:[%s3 + $0x18] sm:$0xff]
      %v1846 = vld [vmem:[%s3 + $0x20] sm:$0xff]
      %v1847 = vld [vmem:[%s3 + $0x28] sm:$0xff]
      %v1848 = vld [vmem:[%s3 + $0x30] sm:$0xff]
      %v1849 = vld [vmem:[%s3 + $0x38] sm:$0xff]
      %v1850 = vld [vmem:[%s3 + $0x40] sm:$0xff]
      %v1851 = vld [vmem:[%s3 + $0x48] sm:$0xff]
      %1853 = vset.pattern.permute.xlu0 0
      %1854 = vperm.xlu0 %1853, %v1842
      %v1855 = vpop.permute.xlu0 %1854
      %1858 = vset.pattern.permute.xlu0 0
      %1859 = vperm.xlu0 %1858, %v1843
      %v1860 = vpop.permute.xlu0 %1859
      %1863 = vset.pattern.permute.xlu0 0
      %1864 = vperm.xlu0 %1863, %v1844
      %v1865 = vpop.permute.xlu0 %1864
      %1868 = vset.pattern.permute.xlu0 0
      %1869 = vperm.xlu0 %1868, %v1845
      %v1870 = vpop.permute.xlu0 %1869
      %1873 = vset.pattern.permute.xlu0 0
      %1874 = vperm.xlu0 %1873, %v1846
      %v1875 = vpop.permute.xlu0 %1874
      %1878 = vset.pattern.permute.xlu0 0
      %1879 = vperm.xlu0 %1878, %v1847
      %v1880 = vpop.permute.xlu0 %1879
      %1883 = vset.pattern.permute.xlu0 0
      %1884 = vperm.xlu0 %1883, %v1848
      %v1885 = vpop.permute.xlu0 %1884
      %1888 = vset.pattern.permute.xlu0 0
      %1889 = vperm.xlu0 %1888, %v1849
      %v1890 = vpop.permute.xlu0 %1889
      %1893 = vset.pattern.permute.xlu0 0
      %1894 = vperm.xlu0 %1893, %v1850
      %v1895 = vpop.permute.xlu0 %1894
      %1898 = vset.pattern.permute.xlu0 0
      %1899 = vperm.xlu0 %1898, %v1851
      %v1900 = vpop.permute.xlu0 %1899
      %v1902 = vmul.f32 %v1832, %v1855
      %v1903 = vmul.f32 %v1833, %v1860
      %v1904 = vmul.f32 %v1834, %v1865
      %v1905 = vmul.f32 %v1835, %v1870
      %v1906 = vmul.f32 %v1836, %v1875
      %v1907 = vmul.f32 %v1837, %v1880
      %v1908 = vmul.f32 %v1838, %v1885
      %v1909 = vmul.f32 %v1839, %v1890
      %v1910 = vmul.f32 %v1840, %v1895
      %v1911 = vmul.f32 %v1841, %v1900
      %vm1912 = vcmask 519168
      %1913 = vst.msk [vmem:[%s244] sm:$0xf] %vm1912, 0
      %vm1914 = vcmask 517120
      %vm1915 = vsmask.f32 1280
      %vm1916 = vmand %vm1914, %vm1915
      %v1917 = vld [vmem:[%s244 + $0x4] sm:$0x3]
      %v1918 = vsel %vm1916, 0, %v1917
      %1919 = vst [vmem:[%s244 + $0x4] sm:$0x3] %v1918
      %v1920 = vpack.c.bf16 %v1903, %v1902
      %v1921 = vpack.c.bf16 %v1905, %v1904
      %v1922 = vpack.c.bf16 %v1907, %v1906
      %v1923 = vpack.c.bf16 %v1909, %v1908
      %v1924 = vpack.c.bf16 %v1911, %v1910
      %v1930 = vunpack.c.l.b16 %v1920
      %v1931 = vunpack.c.h.b16 %v1920
      %v1932 = vunpack.c.l.b16 %v1921
      %v1933 = vunpack.c.h.b16 %v1921
      %v1934 = vunpack.c.l.b16 %v1922
      %v1935 = vunpack.c.h.b16 %v1922
      %v1936 = vunpack.c.l.b16 %v1923
      %v1937 = vunpack.c.h.b16 %v1923
      %v1938 = vunpack.c.l.b16 %v1924
      %v1939 = vunpack.c.h.b16 %v1924
      %v1940 = vpack.c.b16 %v1930, %v1930
      %v1941 = vpack.c.b16 %v1931, %v1931
      %v1942 = vpack.c.b16 %v1932, %v1932
      %v1943 = vpack.c.b16 %v1933, %v1933
      %v1944 = vpack.c.b16 %v1934, %v1934
      %v1945 = vpack.c.b16 %v1935, %v1935
      %v1946 = vpack.c.b16 %v1936, %v1936
      %v1947 = vpack.c.b16 %v1937, %v1937
      %v1948 = vpack.c.b16 %v1938, %v1938
      %v1949 = vpack.c.b16 %v1939, %v1939
      %vm1950 = vsmask.f32 5392
      %vm1951 = vmor %vm1915, %vm1950
      %v1953 = vshrl.u32 %v1940, 16
      %v1955 = vrot.slane %v1953, 6
      %v1956 = vshll.u32 %v1940, 16
      %v1958 = vrot.slane %v1956, 7
      %v1959 = vor.u32 %v1955, %v1958
      %v1960 = vrot.slane %v1959, 4
      %v1962 = vshrl.u32 %v1941, 16
      %v1964 = vrot.slane %v1962, 6
      %v1965 = vshll.u32 %v1941, 16
      %v1967 = vrot.slane %v1965, 7
      %v1968 = vor.u32 %v1964, %v1967
      %v1969 = vsel %vm1951, %v1960, %v1968
      %v1970 = vrot.slane %v1968, 4
      %v1972 = vshrl.u32 %v1942, 16
      %v1974 = vrot.slane %v1972, 6
      %v1975 = vshll.u32 %v1942, 16
      %v1977 = vrot.slane %v1975, 7
      %v1978 = vor.u32 %v1974, %v1977
      %v1979 = vsel %vm1951, %v1970, %v1978
      %v1980 = vrot.slane %v1978, 4
      %v1982 = vshrl.u32 %v1943, 16
      %v1984 = vrot.slane %v1982, 6
      %v1985 = vshll.u32 %v1943, 16
      %v1987 = vrot.slane %v1985, 7
      %v1988 = vor.u32 %v1984, %v1987
      %v1989 = vsel %vm1951, %v1980, %v1988
      %v1990 = vrot.slane %v1988, 4
      %v1992 = vshrl.u32 %v1944, 16
      %v1994 = vrot.slane %v1992, 6
      %v1995 = vshll.u32 %v1944, 16
      %v1997 = vrot.slane %v1995, 7
      %v1998 = vor.u32 %v1994, %v1997
      %v1999 = vsel %vm1951, %v1990, %v1998
      %v2000 = vrot.slane %v1998, 4
      %v2002 = vshrl.u32 %v1945, 16
      %v2004 = vrot.slane %v2002, 6
      %v2005 = vshll.u32 %v1945, 16
      %v2007 = vrot.slane %v2005, 7
      %v2008 = vor.u32 %v2004, %v2007
      %v2009 = vsel %vm1951, %v2000, %v2008
      %v2010 = vrot.slane %v2008, 4
      %v2012 = vshrl.u32 %v1946, 16
      %v2014 = vrot.slane %v2012, 6
      %v2015 = vshll.u32 %v1946, 16
      %v2017 = vrot.slane %v2015, 7
      %v2018 = vor.u32 %v2014, %v2017
      %v2019 = vsel %vm1951, %v2010, %v2018
      %v2020 = vrot.slane %v2018, 4
      %v2022 = vshrl.u32 %v1947, 16
      %v2024 = vrot.slane %v2022, 6
      %v2025 = vshll.u32 %v1947, 16
      %v2027 = vrot.slane %v2025, 7
      %v2028 = vor.u32 %v2024, %v2027
      %v2029 = vsel %vm1951, %v2020, %v2028
      %v2030 = vrot.slane %v2028, 4
      %v2032 = vshrl.u32 %v1948, 16
      %v2034 = vrot.slane %v2032, 6
      %v2035 = vshll.u32 %v1948, 16
      %v2037 = vrot.slane %v2035, 7
      %v2038 = vor.u32 %v2034, %v2037
      %v2039 = vsel %vm1951, %v2030, %v2038
      %v2040 = vrot.slane %v2038, 4
      %v2042 = vshrl.u32 %v1949, 16
      %v2044 = vrot.slane %v2042, 6
      %v2045 = vshll.u32 %v1949, 16
      %v2047 = vrot.slane %v2045, 7
      %v2048 = vor.u32 %v2044, %v2047
      %v2049 = vsel %vm1951, %v2040, %v2048
      %v2050 = vrot.slane %v2048, 4
      %vm2062 = vcmask 519169
      %vm2063 = vsmask.f32 7942
      %vm2064 = vmand %vm2062, %vm2063
      %v2065 = vld [vmem:[%s244 + $0x4] sm:$0xe]
      %v2066 = vsel %vm2064, %v1959, %v2065
      %2067 = vst [vmem:[%s244 + $0x4] sm:$0xe] %v2066
      %2068 = vst.msk [vmem:[%s244 + $0x8] sm:$0xf] %vm1912, %v1969
      %2069 = vst.msk [vmem:[%s244 + $0xc] sm:$0xf] %vm1912, %v1979
      %2070 = vst.msk [vmem:[%s244 + $0x10] sm:$0xf] %vm1912, %v1989
      %2071 = vst.msk [vmem:[%s244 + $0x14] sm:$0xf] %vm1912, %v1999
      %2072 = vst.msk [vmem:[%s244 + $0x18] sm:$0xf] %vm1912, %v2009
      %2073 = vst.msk [vmem:[%s244 + $0x1c] sm:$0xf] %vm1912, %v2019
      %2074 = vst.msk [vmem:[%s244 + $0x20] sm:$0xf] %vm1912, %v2029
      %2075 = vst.msk [vmem:[%s244 + $0x24] sm:$0xf] %vm1912, %v2039
      %2076 = vst.msk [vmem:[%s244 + $0x28] sm:$0xf] %vm1912, %v2049
      %v2077 = vld [vmem:[%s244 + $0x2c] sm:$0x3]
      %v2078 = vsel %vm1916, %v2050, %v2077
      %2079 = vst [vmem:[%s244 + $0x2c] sm:$0x3] %v2078
      %v2080 = vld [vmem:[%s244 + $0x2c] sm:$0xe]
      %v2081 = vsel %vm2064, 0, %v2080
      %2082 = vst [vmem:[%s244 + $0x2c] sm:$0xe] %v2081
      %2083 = vst.msk [vmem:[%s244 + $0x30] sm:$0xf] %vm1912, 0
      %vm2084 = vcmask 518144
      %2085 = vst.msk [vmem:[%s244 + $0x34] sm:$0x7] %vm2084, 0
      %p2086 = scmp.lt.s32.totalorder %s16, 1
      %s2087 = scalar_select %p2086, %s16, 1
      %s2088 = smul.addr %s2087, 14
      %s2089 = smul.addr %s2088, 4
      %s2090 = scalar_lea.vmem %s5, %s2089
      // Predicated region
      $region41: #{colornet_forward.13} parent=39 // pred_check
        %p2091 = pneg %p149
      $region42: #{colornet_forward.13} parent=39 // pred_check_branch
        %2093 = sbr.rel (%p2091) target = $region44
      $region43: #{colornet_forward.13} parent=39 // pred_region
        _
      $region44: #{colornet_forward.13} parent=39 // pred_fallthru
        _
    $region40: #{colornet_forward.13} parent=5 // pred_fallthru
      _
    %p2094 = scmp.le.s32.totalorder 2, %s11
    // Predicated region
    $region45: #{colornet_forward.13} parent=5 // pred_check
      %p2095 = pneg %p2094
    $region46: #{colornet_forward.13} parent=5 // pred_check_branch
      %2097 = sbr.rel (%p2095) target = $region48
    $region47: #{colornet_forward.13} parent=5 // pred_region
      %s2098 = ssub.s32 %s11, 2
      // Predicated region
      $region49: #{colornet_forward.13} parent=47 // pred_check
        %p2099 = pneg %p155
      $region50: #{colornet_forward.13} parent=47 // pred_check_branch
        %2101 = sbr.rel (%p2099) target = $region52
      $region51: #{colornet_forward.13} parent=47 // pred_region
        %p2102 = scmp.lt.s32.totalorder %s17, 1
        %s2103 = scalar_select %p2102, %s17, 1
        %s2104 = smul.addr %s2103, 14
        %s2105 = smul.addr %s2104, 4
        %s2106 = scalar_lea.vmem %s5, %s2105
      $region52: #{colornet_forward.13} parent=47 // pred_fallthru
        _
    $region48: #{colornet_forward.13} parent=5 // pred_fallthru
      _
  $region6: #{colornet_forward.13} parent=0 // loop_footer
    %s15 = sadd.s32 1, %s11
  $region7: #{colornet_forward.13} parent=0 // loop_footer_branch
    %10 = sbr.rel target = $region3
  $region8: #{colornet_forward.13} parent=0 // loop_exit
    _

// kernel: colornet_forward.16
$region0: #{colornet_forward.16}
  #allocation0 [shape = 'u32[]', space=smem, size = 0x4, offset = 0x4, fixed_abs, tag = 'smem constant byte address 0x4 - core index']
  #allocation1 [shape = 'u32[144,128]{1,0:T(1,128)}', space=vmem, size = 0x12000, scoped, tag = 'internal scratch']
  %s0 = inlined_call_operand.vmem [shape: bf16[32,576], index: 0, kind: input, shape index: {}]
  %s1 = inlined_call_operand.vmem [shape: bf16[576,256], index: 1, kind: input, shape index: {}]
  %s2 = inlined_call_operand.vmem [shape: f32[1,256], index: 2, kind: input, shape index: {}]
  %s3 = inlined_call_operand.vmem [shape: bf16[32,256], index: 3, kind: output, shape index: {}]
  %s4 = sld [smem:[#allocation0]]
  $region45: #{colornet_forward.16} parent=0
    _
  %s6 = ssub.s32 1, %s4
  %s7 = scalar_select 0, %s6, %s4
  loop: start=0, step=1, limit=4
  $region2: #{colornet_forward.16} parent=0 // loop_pre_header
    _
  $region3: #{colornet_forward.16} parent=0 // loop_header
    %s9 = sphi 0, %s13
    %p10 = scmp.ge.s32.totalorder %s9, 4
    %s19 = sphi 0, %s21
    %s22 = sphi 0, %s19
    %s23 = sphi 0, %s22
    %s39 = sphi 0, %s23
    %s43 = sphi 0, %s43
    %s45 = sphi 0, %s43
    %s46 = sphi 0, %s45
    %s60 = sphi 0, %s46
    %s64 = sphi 0, %s64
    %s66 = sphi 0, %s64
    %s67 = sphi 0, %s66
    %s81 = sphi 0, %s67
    %s87 = sphi 0, %s89
    %s90 = sphi 0, %s87
    %s91 = sphi 0, %s90
    %s107 = sphi 0, %s91
  $region4: #{colornet_forward.16} parent=0 // loop_header_branch
    %12 = sbr.rel (%p10) target = $region8
  $region5: #{colornet_forward.16} parent=0 // loop_body
    %s14 = ssub.s32 %s9, 1
    %s15 = ssub.s32 %s9, 2
    %s16 = sadd.s32 %s9, 1
    %s17 = ssub.s32 %s9, %s16
    %p18 = scmp.eq.s32.totalorder %s17, 0
    %s20 = sadd.s32 %s19, 1
    %s21 = scalar_select %p18, %s19, %s20
    %p24 = pneg %p18
    %p25 = scmp.eq.s32.totalorder %s9, 1
    %p26 = por %p24, %p25
    %p27 = scmp.ne.s32.totalorder %s19, %s22
    %p28 = scmp.eq.s32.totalorder %s9, 0
    %p29 = por %p27, %p28
    %p30 = scmp.ne.s32.totalorder %s19, %s22
    %p31 = scmp.eq.s32.totalorder %s14, 1
    %p32 = por %p30, %p31
    %p33 = scmp.ne.s32.totalorder %s22, %s23
    %p34 = scmp.eq.s32.totalorder %s14, 0
    %p35 = por %p33, %p34
    %p36 = scmp.ne.s32.totalorder %s22, %s23
    %p37 = scmp.eq.s32.totalorder %s15, 1
    %p38 = por %p36, %p37
    %p40 = scmp.ne.s32.totalorder %s23, %s39
    %p41 = scmp.eq.s32.totalorder %s15, 0
    %p42 = por %p40, %p41
    %s44 = sadd.s32 %s43, 1
    %p47 = scmp.eq.s32.totalorder %s9, 1
    %p48 = scmp.ne.s32.totalorder %s43, %s45
    %p49 = scmp.eq.s32.totalorder %s9, 0
    %p50 = por %p48, %p49
    %p51 = scmp.ne.s32.totalorder %s43, %s45
    %p52 = scmp.eq.s32.totalorder %s14, 1
    %p53 = por %p51, %p52
    %p54 = scmp.ne.s32.totalorder %s45, %s46
    %p55 = scmp.eq.s32.totalorder %s14, 0
    %p56 = por %p54, %p55
    %p57 = scmp.ne.s32.totalorder %s45, %s46
    %p58 = scmp.eq.s32.totalorder %s15, 1
    %p59 = por %p57, %p58
    %p61 = scmp.ne.s32.totalorder %s46, %s60
    %p62 = scmp.eq.s32.totalorder %s15, 0
    %p63 = por %p61, %p62
    %s65 = sadd.s32 %s64, 1
    %p68 = scmp.eq.s32.totalorder %s9, 1
    %p69 = scmp.ne.s32.totalorder %s64, %s66
    %p70 = scmp.eq.s32.totalorder %s9, 0
    %p71 = por %p69, %p70
    %p72 = scmp.ne.s32.totalorder %s64, %s66
    %p73 = scmp.eq.s32.totalorder %s14, 1
    %p74 = por %p72, %p73
    %p75 = scmp.ne.s32.totalorder %s66, %s67
    %p76 = scmp.eq.s32.totalorder %s14, 0
    %p77 = por %p75, %p76
    %p78 = scmp.ne.s32.totalorder %s66, %s67
    %p79 = scmp.eq.s32.totalorder %s15, 1
    %p80 = por %p78, %p79
    %p82 = scmp.ne.s32.totalorder %s67, %s81
    %p83 = scmp.eq.s32.totalorder %s15, 0
    %p84 = por %p82, %p83
    %s85 = ssub.s32 %s9, %s16
    %p86 = scmp.eq.s32.totalorder %s85, 0
    %s88 = sadd.s32 %s87, 1
    %s89 = scalar_select %p86, %s87, %s88
    %p92 = pneg %p86
    %p93 = scmp.eq.s32.totalorder %s9, 1
    %p94 = por %p92, %p93
    %p95 = scmp.ne.s32.totalorder %s87, %s90
    %p96 = scmp.eq.s32.totalorder %s9, 0
    %p97 = por %p95, %p96
    %p98 = scmp.ne.s32.totalorder %s87, %s90
    %p99 = scmp.eq.s32.totalorder %s14, 1
    %p100 = por %p98, %p99
    %p101 = scmp.ne.s32.totalorder %s90, %s91
    %p102 = scmp.eq.s32.totalorder %s14, 0
    %p103 = por %p101, %p102
    %p104 = scmp.ne.s32.totalorder %s90, %s91
    %p105 = scmp.eq.s32.totalorder %s15, 1
    %p106 = por %p104, %p105
    %p108 = scmp.ne.s32.totalorder %s91, %s107
    %p109 = scmp.eq.s32.totalorder %s15, 0
    %p110 = por %p108, %p109
    %p111 = scmp.le.s32.totalorder 1, %s9
    %p112 = scmp.lt.s32.totalorder %s9, 3
    %p113 = pnand %p111, %p112
    %p114 = pneg %p113
    // Predicated region
    $region9: #{colornet_forward.16} parent=5 // pred_check
      _
    $region10: #{colornet_forward.16} parent=5 // pred_check_branch
      %116 = sbr.rel (%p113) target = $region12
    $region11: #{colornet_forward.16} parent=5 // pred_region
      %s117 = ssub.s32 %s9, 1
      // Predicated region
      $region13: #{colornet_forward.16} parent=11 // pred_check
        %p118 = pneg %p56
      $region14: #{colornet_forward.16} parent=11 // pred_check_branch
        %120 = sbr.rel (%p118) target = $region16
      $region15: #{colornet_forward.16} parent=11 // pred_region
        _
      $region16: #{colornet_forward.16} parent=11 // pred_fallthru
        _
      // Predicated region
      $region17: #{colornet_forward.16} parent=11 // pred_check
        %p121 = pneg %p77
      $region18: #{colornet_forward.16} parent=11 // pred_check_branch
        %123 = sbr.rel (%p121) target = $region20
      $region19: #{colornet_forward.16} parent=11 // pred_region
        _
      $region20: #{colornet_forward.16} parent=11 // pred_fallthru
        _
    $region12: #{colornet_forward.16} parent=5 // pred_fallthru
      _
    %p124 = scmp.lt.s32.totalorder %s9, 2
    // Predicated region
    $region21: #{colornet_forward.16} parent=5 // pred_check
      %p125 = pneg %p124
    $region22: #{colornet_forward.16} parent=5 // pred_check_branch
      %127 = sbr.rel (%p125) target = $region24
    $region23: #{colornet_forward.16} parent=5 // pred_region
      // Predicated region
      $region25: #{colornet_forward.16} parent=23 // pred_check
        %p128 = pneg %p29
      $region26: #{colornet_forward.16} parent=23 // pred_check_branch
        %130 = sbr.rel (%p128) target = $region28
      $region27: #{colornet_forward.16} parent=23 // pred_region
        %s131 = smul.u32 2, %s9
        %p132 = scmp.lt.s32.totalorder %s131, 3
        %s133 = scalar_select %p132, %s131, 3
        %s134 = smul.addr %s133, 5
        %s135 = smul.addr %s134, 4
        %s136 = scalar_lea.vmem %s0, %s135
        %s137 = smul.u32 2, %s9
      $region28: #{colornet_forward.16} parent=23 // pred_fallthru
        _
    $region24: #{colornet_forward.16} parent=5 // pred_fallthru
      _
    %p138 = scmp.le.s32.totalorder 1, %s9
    %p139 = scmp.lt.s32.totalorder %s9, 3
    %p140 = pnand %p138, %p139
    %p141 = pneg %p140
    // Predicated region
    $region29: #{colornet_forward.16} parent=5 // pred_check
      _
    $region30: #{colornet_forward.16} parent=5 // pred_check_branch
      %143 = sbr.rel (%p140) target = $region32
    $region31: #{colornet_forward.16} parent=5 // pred_region
      %s144 = ssub.s32 %s9, 1
      %s145 = smul.u32 2, %s14
      %p146 = scmp.lt.s32.totalorder %s145, 3
      %s147 = scalar_select %p146, %s145, 3
      %s148 = smul.addr %s147, 5
      %s149 = smul.addr %s148, 4
      %s150 = scalar_lea.vmem %s0, %s149
      %p151 = pneg %p35
      %p152 = pneg %p32
      %p153 = pneg %p56
      %p154 = pneg %p53
      %p155 = pneg %p77
      %p156 = pneg %p74
      %p157 = pneg %p103
      %p158 = pneg %p100
      %s159 = smul.u32 2, %s14
      %p160 = scmp.lt.s32.totalorder %s159, 3
      %s161 = scalar_select %p160, %s159, 3
      %s162 = smul.addr %s161, 2
      %s163 = smul.addr %s162, 4
      %s164 = scalar_lea.vmem %s3, %s163
      %s165 = smul.u32 2, %s14
      %p166 = scmp.lt.s32.totalorder %s165, 3
      %s167 = scalar_select %p166, %s165, 3
      %s168 = smul.addr %s167, 5
      %s169 = smul.addr %s168, 4
      %s170 = scalar_lea.vmem %s0, %s169
      %s171 = smul.u32 2, %s14
      %s172 = smul.u32 2, %s14
      %p173 = scmp.lt.s32.totalorder %s172, 3
      %s174 = scalar_select %p173, %s172, 3
      %s175 = smul.addr %s174, 2
      %s176 = smul.addr %s175, 4
      %s177 = scalar_lea.vmem %s3, %s176
      %s178 = smul.u32 2, %s14
      %v180 = vld [vmem:[%s170] sm:$0xff]
      %v181 = vld [vmem:[%s170 + $0x8] sm:$0xff]
      %v182 = vld [vmem:[%s170 + $0x10] sm:$0xf]
      %v183 = vld [vmem:[%s170 + $0x14] sm:$0xff]
      %v184 = vld [vmem:[%s170 + $0x1c] sm:$0xff]
      %v185 = vld [vmem:[%s170 + $0x24] sm:$0xf]
      %v186 = vld [vmem:[%s1] sm:$0xff]
      %v187 = vld [vmem:[%s1 + $0x8] sm:$0xff]
      %v188 = vld [vmem:[%s1 + $0x10] sm:$0xff]
      %v189 = vld [vmem:[%s1 + $0x18] sm:$0xff]
      %v190 = vld [vmem:[%s1 + $0x20] sm:$0xff]
      %v191 = vld [vmem:[%s1 + $0x28] sm:$0xff]
      %v192 = vld [vmem:[%s1 + $0x30] sm:$0xff]
      %v193 = vld [vmem:[%s1 + $0x38] sm:$0xff]
      %v194 = vld [vmem:[%s1 + $0x40] sm:$0xff]
      %v195 = vld [vmem:[%s1 + $0x48] sm:$0xff]
      %v196 = vld [vmem:[%s1 + $0x50] sm:$0xff]
      %v197 = vld [vmem:[%s1 + $0x58] sm:$0xff]
      %v198 = vld [vmem:[%s1 + $0x60] sm:$0xff]
      %v199 = vld [vmem:[%s1 + $0x68] sm:$0xff]
      %v200 = vld [vmem:[%s1 + $0x70] sm:$0xff]
      %v201 = vld [vmem:[%s1 + $0x78] sm:$0xff]
      %v202 = vld [vmem:[%s1 + $0x80] sm:$0xff]
      %v203 = vld [vmem:[%s1 + $0x88] sm:$0xff]
      %v204 = vld [vmem:[%s1 + $0x90] sm:$0xff]
      %v205 = vld [vmem:[%s1 + $0x98] sm:$0xff]
      %v206 = vld [vmem:[%s1 + $0xa0] sm:$0xff]
      %v207 = vld [vmem:[%s1 + $0xa8] sm:$0xff]
      %v208 = vld [vmem:[%s1 + $0xb0] sm:$0xff]
      %v209 = vld [vmem:[%s1 + $0xb8] sm:$0xff]
      %v210 = vld [vmem:[%s1 + $0xc0] sm:$0xff]
      %v211 = vld [vmem:[%s1 + $0xc8] sm:$0xff]
      %v212 = vld [vmem:[%s1 + $0xd0] sm:$0xff]
      %v213 = vld [vmem:[%s1 + $0xd8] sm:$0xff]
      %v214 = vld [vmem:[%s1 + $0xe0] sm:$0xff]
      %v215 = vld [vmem:[%s1 + $0xe8] sm:$0xff]
      %v216 = vld [vmem:[%s1 + $0xf0] sm:$0xff]
      %v217 = vld [vmem:[%s1 + $0xf8] sm:$0xff]
      %v218 = vld [vmem:[%s1 + $0x100] sm:$0xff]
      %v219 = vld [vmem:[%s1 + $0x108] sm:$0xff]
      %v220 = vld [vmem:[%s1 + $0x110] sm:$0xff]
      %v221 = vld [vmem:[%s1 + $0x118] sm:$0xff]
      %v222 = vld [vmem:[%s1 + $0x120] sm:$0xff]
      %v223 = vld [vmem:[%s1 + $0x128] sm:$0xff]
      %v224 = vld [vmem:[%s1 + $0x130] sm:$0xff]
      %v225 = vld [vmem:[%s1 + $0x138] sm:$0xff]
      %v226 = vld [vmem:[%s1 + $0x140] sm:$0xff]
      %v227 = vld [vmem:[%s1 + $0x148] sm:$0xff]
      %v228 = vld [vmem:[%s1 + $0x150] sm:$0xff]
      %v229 = vld [vmem:[%s1 + $0x158] sm:$0xff]
      %v230 = vld [vmem:[%s1 + $0x160] sm:$0xff]
      %v231 = vld [vmem:[%s1 + $0x168] sm:$0xff]
      %v232 = vld [vmem:[%s1 + $0x170] sm:$0xff]
      %v233 = vld [vmem:[%s1 + $0x178] sm:$0xff]
      %v234 = vld [vmem:[%s1 + $0x180] sm:$0xff]
      %v235 = vld [vmem:[%s1 + $0x188] sm:$0xff]
      %v236 = vld [vmem:[%s1 + $0x190] sm:$0xff]
      %v237 = vld [vmem:[%s1 + $0x198] sm:$0xff]
      %v238 = vld [vmem:[%s1 + $0x1a0] sm:$0xff]
      %v239 = vld [vmem:[%s1 + $0x1a8] sm:$0xff]
      %v240 = vld [vmem:[%s1 + $0x1b0] sm:$0xff]
      %v241 = vld [vmem:[%s1 + $0x1b8] sm:$0xff]
      %v242 = vld [vmem:[%s1 + $0x1c0] sm:$0xff]
      %v243 = vld [vmem:[%s1 + $0x1c8] sm:$0xff]
      %v244 = vld [vmem:[%s1 + $0x1d0] sm:$0xff]
      %v245 = vld [vmem:[%s1 + $0x1d8] sm:$0xff]
      %v246 = vld [vmem:[%s1 + $0x1e0] sm:$0xff]
      %v247 = vld [vmem:[%s1 + $0x1e8] sm:$0xff]
      %v248 = vld [vmem:[%s1 + $0x1f0] sm:$0xff]
      %v249 = vld [vmem:[%s1 + $0x1f8] sm:$0xff]
      %v250 = vld [vmem:[%s1 + $0x200] sm:$0xff]
      %v251 = vld [vmem:[%s1 + $0x208] sm:$0xff]
      %v252 = vld [vmem:[%s1 + $0x210] sm:$0xff]
      %v253 = vld [vmem:[%s1 + $0x218] sm:$0xff]
      %v254 = vld [vmem:[%s1 + $0x220] sm:$0xff]
      %v255 = vld [vmem:[%s1 + $0x228] sm:$0xff]
      %v256 = vld [vmem:[%s1 + $0x230] sm:$0xff]
      %v257 = vld [vmem:[%s1 + $0x238] sm:$0xff]
      %v258 = vld [vmem:[%s2] sm:$0x3]
      %v260 = vlaneseq
      %v261 = vshrl.u32 %v260, 7
      %v262 = vsub.s32 0, %v261
      %v263 = vrot.slane %v258, %v262
      %v264 = vlaneseq
      %v265 = vshrl.u32 %v264, 7
      %v266 = vsub.s32 1, %v265
      %v267 = vrot.slane %v258, %v266
      %v276 = vunpack.c.l.b16 %v180
      %v277 = vunpack.c.h.b16 %v180
      %v278 = vunpack.c.l.b16 %v181
      %v279 = vunpack.c.h.b16 %v181
      %v280 = vunpack.c.l.b16 %v182
      %v281 = vunpack.c.l.b16 %v183
      %v282 = vunpack.c.h.b16 %v183
      %v283 = vunpack.c.l.b16 %v184
      %v284 = vunpack.c.h.b16 %v184
      %v285 = vunpack.c.l.b16 %v185
      %v286 = vpack.c.b16 %v281, %v276
      %v287 = vpack.c.b16 %v282, %v277
      %v288 = vpack.c.b16 %v283, %v278
      %v289 = vpack.c.b16 %v284, %v279
      %v290 = vpack.c.b16 %v285, %v280
      %v367 = vunpack.c.l.b16 %v186
      %v368 = vunpack.c.h.b16 %v186
      %v369 = vunpack.c.l.b16 %v187
      %v370 = vunpack.c.h.b16 %v187
      %v371 = vunpack.c.l.b16 %v188
      %v372 = vunpack.c.h.b16 %v188
      %v373 = vunpack.c.l.b16 %v189
      %v374 = vunpack.c.h.b16 %v189
      %v375 = vunpack.c.l.b16 %v190
      %v376 = vunpack.c.h.b16 %v190
      %v377 = vunpack.c.l.b16 %v191
      %v378 = vunpack.c.h.b16 %v191
      %v379 = vunpack.c.l.b16 %v192
      %v380 = vunpack.c.h.b16 %v192
      %v381 = vunpack.c.l.b16 %v193
      %v382 = vunpack.c.h.b16 %v193
      %v383 = vunpack.c.l.b16 %v194
      %v384 = vunpack.c.h.b16 %v194
      %v385 = vunpack.c.l.b16 %v195
      %v386 = vunpack.c.h.b16 %v195
      %v387 = vunpack.c.l.b16 %v196
      %v388 = vunpack.c.h.b16 %v196
      %v389 = vunpack.c.l.b16 %v197
      %v390 = vunpack.c.h.b16 %v197
      %v391 = vunpack.c.l.b16 %v198
      %v392 = vunpack.c.h.b16 %v198
      %v393 = vunpack.c.l.b16 %v199
      %v394 = vunpack.c.h.b16 %v199
      %v395 = vunpack.c.l.b16 %v200
      %v396 = vunpack.c.h.b16 %v200
      %v397 = vunpack.c.l.b16 %v201
      %v398 = vunpack.c.h.b16 %v201
      %v399 = vunpack.c.l.b16 %v202
      %v400 = vunpack.c.h.b16 %v202
      %v401 = vunpack.c.l.b16 %v203
      %v402 = vunpack.c.h.b16 %v203
      %v403 = vunpack.c.l.b16 %v204
      %v404 = vunpack.c.h.b16 %v204
      %v405 = vunpack.c.l.b16 %v205
      %v406 = vunpack.c.h.b16 %v205
      %v407 = vunpack.c.l.b16 %v206
      %v408 = vunpack.c.h.b16 %v206
      %v409 = vunpack.c.l.b16 %v207
      %v410 = vunpack.c.h.b16 %v207
      %v411 = vunpack.c.l.b16 %v208
      %v412 = vunpack.c.h.b16 %v208
      %v413 = vunpack.c.l.b16 %v209
      %v414 = vunpack.c.h.b16 %v209
      %v415 = vunpack.c.l.b16 %v210
      %v416 = vunpack.c.h.b16 %v210
      %v417 = vunpack.c.l.b16 %v211
      %v418 = vunpack.c.h.b16 %v211
      %v419 = vunpack.c.l.b16 %v212
      %v420 = vunpack.c.h.b16 %v212
      %v421 = vunpack.c.l.b16 %v213
      %v422 = vunpack.c.h.b16 %v213
      %v423 = vunpack.c.l.b16 %v214
      %v424 = vunpack.c.h.b16 %v214
      %v425 = vunpack.c.l.b16 %v215
      %v426 = vunpack.c.h.b16 %v215
      %v427 = vunpack.c.l.b16 %v216
      %v428 = vunpack.c.h.b16 %v216
      %v429 = vunpack.c.l.b16 %v217
      %v430 = vunpack.c.h.b16 %v217
      %v431 = vunpack.c.l.b16 %v218
      %v432 = vunpack.c.h.b16 %v218
      %v433 = vunpack.c.l.b16 %v219
      %v434 = vunpack.c.h.b16 %v219
      %v435 = vunpack.c.l.b16 %v220
      %v436 = vunpack.c.h.b16 %v220
      %v437 = vunpack.c.l.b16 %v221
      %v438 = vunpack.c.h.b16 %v221
      %v439 = vunpack.c.l.b16 %v222
      %v440 = vunpack.c.h.b16 %v222
      %v441 = vunpack.c.l.b16 %v223
      %v442 = vunpack.c.h.b16 %v223
      %v443 = vunpack.c.l.b16 %v224
      %v444 = vunpack.c.h.b16 %v224
      %v445 = vunpack.c.l.b16 %v225
      %v446 = vunpack.c.h.b16 %v225
      %v447 = vunpack.c.l.b16 %v226
      %v448 = vunpack.c.h.b16 %v226
      %v449 = vunpack.c.l.b16 %v227
      %v450 = vunpack.c.h.b16 %v227
      %v451 = vunpack.c.l.b16 %v228
      %v452 = vunpack.c.h.b16 %v228
      %v453 = vunpack.c.l.b16 %v229
      %v454 = vunpack.c.h.b16 %v229
      %v455 = vunpack.c.l.b16 %v230
      %v456 = vunpack.c.h.b16 %v230
      %v457 = vunpack.c.l.b16 %v231
      %v458 = vunpack.c.h.b16 %v231
      %v459 = vunpack.c.l.b16 %v232
      %v460 = vunpack.c.h.b16 %v232
      %v461 = vunpack.c.l.b16 %v233
      %v462 = vunpack.c.h.b16 %v233
      %v463 = vunpack.c.l.b16 %v234
      %v464 = vunpack.c.h.b16 %v234
      %v465 = vunpack.c.l.b16 %v235
      %v466 = vunpack.c.h.b16 %v235
      %v467 = vunpack.c.l.b16 %v236
      %v468 = vunpack.c.h.b16 %v236
      %v469 = vunpack.c.l.b16 %v237
      %v470 = vunpack.c.h.b16 %v237
      %v471 = vunpack.c.l.b16 %v238
      %v472 = vunpack.c.h.b16 %v238
      %v473 = vunpack.c.l.b16 %v239
      %v474 = vunpack.c.h.b16 %v239
      %v475 = vunpack.c.l.b16 %v240
      %v476 = vunpack.c.h.b16 %v240
      %v477 = vunpack.c.l.b16 %v241
      %v478 = vunpack.c.h.b16 %v241
      %v479 = vunpack.c.l.b16 %v242
      %v480 = vunpack.c.h.b16 %v242
      %v481 = vunpack.c.l.b16 %v243
      %v482 = vunpack.c.h.b16 %v243
      %v483 = vunpack.c.l.b16 %v244
      %v484 = vunpack.c.h.b16 %v244
      %v485 = vunpack.c.l.b16 %v245
      %v486 = vunpack.c.h.b16 %v245
      %v487 = vunpack.c.l.b16 %v246
      %v488 = vunpack.c.h.b16 %v246
      %v489 = vunpack.c.l.b16 %v247
      %v490 = vunpack.c.h.b16 %v247
      %v491 = vunpack.c.l.b16 %v248
      %v492 = vunpack.c.h.b16 %v248
      %v493 = vunpack.c.l.b16 %v249
      %v494 = vunpack.c.h.b16 %v249
      %v495 = vunpack.c.l.b16 %v250
      %v496 = vunpack.c.h.b16 %v250
      %v497 = vunpack.c.l.b16 %v251
      %v498 = vunpack.c.h.b16 %v251
      %v499 = vunpack.c.l.b16 %v252
      %v500 = vunpack.c.h.b16 %v252
      %v501 = vunpack.c.l.b16 %v253
      %v502 = vunpack.c.h.b16 %v253
      %v503 = vunpack.c.l.b16 %v254
      %v504 = vunpack.c.h.b16 %v254
      %v505 = vunpack.c.l.b16 %v255
      %v506 = vunpack.c.h.b16 %v255
      %v507 = vunpack.c.l.b16 %v256
      %v508 = vunpack.c.h.b16 %v256
      %v509 = vunpack.c.l.b16 %v257
      %v510 = vunpack.c.h.b16 %v257
      %v511 = vpack.c.b16 %v369, %v367
      %v512 = vpack.c.b16 %v370, %v368
      %v513 = vpack.c.b16 %v373, %v371
      %v514 = vpack.c.b16 %v374, %v372
      %v515 = vpack.c.b16 %v377, %v375
      %v516 = vpack.c.b16 %v378, %v376
      %v517 = vpack.c.b16 %v381, %v379
      %v518 = vpack.c.b16 %v382, %v380
      %v519 = vpack.c.b16 %v385, %v383
      %v520 = vpack.c.b16 %v386, %v384
      %v521 = vpack.c.b16 %v389, %v387
      %v522 = vpack.c.b16 %v390, %v388
      %v523 = vpack.c.b16 %v393, %v391
      %v524 = vpack.c.b16 %v394, %v392
      %v525 = vpack.c.b16 %v397, %v395
      %v526 = vpack.c.b16 %v398, %v396
      %v527 = vpack.c.b16 %v401, %v399
      %v528 = vpack.c.b16 %v402, %v400
      %v529 = vpack.c.b16 %v405, %v403
      %v530 = vpack.c.b16 %v406, %v404
      %v531 = vpack.c.b16 %v409, %v407
      %v532 = vpack.c.b16 %v410, %v408
      %v533 = vpack.c.b16 %v413, %v411
      %v534 = vpack.c.b16 %v414, %v412
      %v535 = vpack.c.b16 %v417, %v415
      %v536 = vpack.c.b16 %v418, %v416
      %v537 = vpack.c.b16 %v421, %v419
      %v538 = vpack.c.b16 %v422, %v420
      %v539 = vpack.c.b16 %v425, %v423
      %v540 = vpack.c.b16 %v426, %v424
      %v541 = vpack.c.b16 %v429, %v427
      %v542 = vpack.c.b16 %v430, %v428
      %v543 = vpack.c.b16 %v433, %v431
      %v544 = vpack.c.b16 %v434, %v432
      %v545 = vpack.c.b16 %v437, %v435
      %v546 = vpack.c.b16 %v438, %v436
      %v547 = vpack.c.b16 %v441, %v439
      %v548 = vpack.c.b16 %v442, %v440
      %v549 = vpack.c.b16 %v445, %v443
      %v550 = vpack.c.b16 %v446, %v444
      %v551 = vpack.c.b16 %v449, %v447
      %v552 = vpack.c.b16 %v450, %v448
      %v553 = vpack.c.b16 %v453, %v451
      %v554 = vpack.c.b16 %v454, %v452
      %v555 = vpack.c.b16 %v457, %v455
      %v556 = vpack.c.b16 %v458, %v456
      %v557 = vpack.c.b16 %v461, %v459
      %v558 = vpack.c.b16 %v462, %v460
      %v559 = vpack.c.b16 %v465, %v463
      %v560 = vpack.c.b16 %v466, %v464
      %v561 = vpack.c.b16 %v469, %v467
      %v562 = vpack.c.b16 %v470, %v468
      %v563 = vpack.c.b16 %v473, %v471
      %v564 = vpack.c.b16 %v474, %v472
      %v565 = vpack.c.b16 %v477, %v475
      %v566 = vpack.c.b16 %v478, %v476
      %v567 = vpack.c.b16 %v481, %v479
      %v568 = vpack.c.b16 %v482, %v480
      %v569 = vpack.c.b16 %v485, %v483
      %v570 = vpack.c.b16 %v486, %v484
      %v571 = vpack.c.b16 %v489, %v487
      %v572 = vpack.c.b16 %v490, %v488
      %v573 = vpack.c.b16 %v493, %v491
      %v574 = vpack.c.b16 %v494, %v492
      %v575 = vpack.c.b16 %v497, %v495
      %v576 = vpack.c.b16 %v498, %v496
      %v577 = vpack.c.b16 %v501, %v499
      %v578 = vpack.c.b16 %v502, %v500
      %v579 = vpack.c.b16 %v505, %v503
      %v580 = vpack.c.b16 %v506, %v504
      %v581 = vpack.c.b16 %v509, %v507
      %v582 = vpack.c.b16 %v510, %v508
      %vm655 = vcmask 523264
      %v657 = vsel %vm655, %v290, 0
      %659 = vmatprep.subr.bf16.mxu0 %v526
      %660 = vmatpush1.bf16.msra.mxu0 %v525
      %661 = vmatprep.subr.bf16.mxu0 %v524
      %662 = vmatpush1.bf16.msra.mxu0 %v523
      %663 = vmatprep.subr.bf16.mxu0 %v522
      %664 = vmatpush1.bf16.msra.mxu0 %v521
      %665 = vmatprep.subr.bf16.mxu0 %v520
      %666 = vmatpush1.bf16.msra.mxu0 %v519
      %667 = vmatprep.subr.bf16.mxu0 %v518
      %668 = vmatpush1.bf16.msra.mxu0 %v517
      %669 = vmatprep.subr.bf16.mxu0 %v516
      %670 = vmatpush1.bf16.msra.mxu0 %v515
      %671 = vmatprep.subr.bf16.mxu0 %v514
      %672 = vmatpush1.bf16.msra.mxu0 %v513
      %673 = vmatprep.subr.bf16.mxu0 %v512
      %674 = vmatpush1.bf16.msra.mxu0 %v511
      %675 = vmatprep.subr.bf16.mxu0 %v542
      %676 = vmatpush2.bf16.msra.mxu0 %v541
      %677 = vmatprep.subr.bf16.mxu0 %v540
      %678 = vmatpush2.bf16.msra.mxu0 %v539
      %679 = vmatprep.subr.bf16.mxu0 %v538
      %680 = vmatpush2.bf16.msra.mxu0 %v537
      %681 = vmatprep.subr.bf16.mxu0 %v536
      %682 = vmatpush2.bf16.msra.mxu0 %v535
      %683 = vmatprep.subr.bf16.mxu0 %v534
      %684 = vmatpush2.bf16.msra.mxu0 %v533
      %685 = vmatprep.subr.bf16.mxu0 %v532
      %686 = vmatpush2.bf16.msra.mxu0 %v531
      %687 = vmatprep.subr.bf16.mxu0 %v530
      %688 = vmatpush2.bf16.msra.mxu0 %v529
      %689 = vmatprep.subr.bf16.mxu0 %v528
      %690 = vmatpush2.bf16.msra.mxu0 %v527
      %691 = vmatprep.mubr.bf16.mxu0 %v287
      %692 = vmatmul.mubr.bf16.gmra.mxu0 %v286
      %v693 = vpop.f32.mrf.mxu0
      %v694 = vadd.f32 %v263, %v693
      %v695 = vpop.f32.mrf.mxu0
      %v696 = vadd.f32 %v267, %v695
      %v697 = vpop.f32.mrf.mxu0
      %v698 = vadd.f32 %v263, %v697
      %v699 = vpop.f32.mrf.mxu0
      %v700 = vadd.f32 %v267, %v699
      %701 = vdwg.mxu0
      %702 = vmatprep.subr.bf16.mxu0 %v558
      %703 = vmatpush1.bf16.msra.mxu0 %v557
      %704 = vmatprep.subr.bf16.mxu0 %v556
      %705 = vmatpush1.bf16.msra.mxu0 %v555
      %706 = vmatprep.subr.bf16.mxu0 %v554
      %707 = vmatpush1.bf16.msra.mxu0 %v553
      %708 = vmatprep.subr.bf16.mxu0 %v552
      %709 = vmatpush1.bf16.msra.mxu0 %v551
      %710 = vmatprep.subr.bf16.mxu0 %v550
      %711 = vmatpush1.bf16.msra.mxu0 %v549
      %712 = vmatprep.subr.bf16.mxu0 %v548
      %713 = vmatpush1.bf16.msra.mxu0 %v547
      %714 = vmatprep.subr.bf16.mxu0 %v546
      %715 = vmatpush1.bf16.msra.mxu0 %v545
      %716 = vmatprep.subr.bf16.mxu0 %v544
      %717 = vmatpush1.bf16.msra.mxu0 %v543
      %718 = vmatprep.subr.bf16.mxu0 %v574
      %719 = vmatpush2.bf16.msra.mxu0 %v573
      %720 = vmatprep.subr.bf16.mxu0 %v572
      %721 = vmatpush2.bf16.msra.mxu0 %v571
      %722 = vmatprep.subr.bf16.mxu0 %v570
      %723 = vmatpush2.bf16.msra.mxu0 %v569
      %724 = vmatprep.subr.bf16.mxu0 %v568
      %725 = vmatpush2.bf16.msra.mxu0 %v567
      %726 = vmatprep.subr.bf16.mxu0 %v566
      %727 = vmatpush2.bf16.msra.mxu0 %v565
      %728 = vmatprep.subr.bf16.mxu0 %v564
      %729 = vmatpush2.bf16.msra.mxu0 %v563
      %730 = vmatprep.subr.bf16.mxu0 %v562
      %731 = vmatpush2.bf16.msra.mxu0 %v561
      %732 = vmatprep.subr.bf16.mxu0 %v560
      %733 = vmatpush2.bf16.msra.mxu0 %v559
      %734 = vmatprep.mubr.bf16.mxu0 %v289
      %735 = vmatmul.mubr.bf16.gmra.mxu0 %v288
      %v736 = vpop.f32.mrf.mxu0
      %v737 = vadd.f32 %v694, %v736
      %v738 = vpop.f32.mrf.mxu0
      %v739 = vadd.f32 %v696, %v738
      %v740 = vpop.f32.mrf.mxu0
      %v741 = vadd.f32 %v698, %v740
      %v742 = vpop.f32.mrf.mxu0
      %v743 = vadd.f32 %v700, %v742
      %744 = vdwg.mxu0
      %745 = vmatprep.subr.bf16.mxu0 0
      %746 = vmatpush1.bf16.msra.mxu0 0
      %747 = vmatprep.subr.bf16.mxu0 0
      %748 = vmatpush1.bf16.msra.mxu0 0
      %749 = vmatprep.subr.bf16.mxu0 0
      %750 = vmatpush1.bf16.msra.mxu0 0
      %751 = vmatprep.subr.bf16.mxu0 0
      %752 = vmatpush1.bf16.msra.mxu0 0
      %753 = vmatprep.subr.bf16.mxu0 %v582
      %754 = vmatpush1.bf16.msra.mxu0 %v581
      %755 = vmatprep.subr.bf16.mxu0 %v580
      %756 = vmatpush1.bf16.msra.mxu0 %v579
      %757 = vmatprep.subr.bf16.mxu0 %v578
      %758 = vmatpush1.bf16.msra.mxu0 %v577
      %759 = vmatprep.subr.bf16.mxu0 %v576
      %760 = vmatpush1.bf16.msra.mxu0 %v575
      %761 = vmatprep.subr.bf16.mxu0 0
      %762 = vmatpush2.bf16.msra.mxu0 0
      %763 = vmatprep.subr.bf16.mxu0 0
      %764 = vmatpush2.bf16.msra.mxu0 0
      %765 = vmatprep.subr.bf16.mxu0 0
      %766 = vmatpush2.bf16.msra.mxu0 0
      %767 = vmatprep.subr.bf16.mxu0 0
      %768 = vmatpush2.bf16.msra.mxu0 0
      %769 = vmatprep.subr.bf16.mxu0 0
      %770 = vmatpush2.bf16.msra.mxu0 0
      %771 = vmatprep.subr.bf16.mxu0 0
      %772 = vmatpush2.bf16.msra.mxu0 0
      %773 = vmatprep.subr.bf16.mxu0 0
      %774 = vmatpush2.bf16.msra.mxu0 0
      %775 = vmatprep.subr.bf16.mxu0 0
      %776 = vmatpush2.bf16.msra.mxu0 0
      %777 = vmatprep.mubr.bf16.mxu0 0
      %778 = vmatmul.mubr.bf16.gmra.mxu0 %v657
      %v779 = vpop.f32.mrf.mxu0
      %v780 = vadd.f32 %v737, %v779
      %v781 = vpop.f32.mrf.mxu0
      %v782 = vadd.f32 %v739, %v781
      %v783 = vpop.f32.mrf.mxu0
      %v784 = vadd.f32 %v741, %v783
      %v785 = vpop.f32.mrf.mxu0
      %v786 = vadd.f32 %v743, %v785
      %787 = vdwg.mxu0
      %v788 = vlaneseq
      %v789 = vand.u32 %v788, 127
      %v790 = vadd.s32 %v789, 128
      %vm791 = vcmp.lt.s32.totalorder %v789, 128
      %vm792 = vcmp.lt.s32.totalorder %v790, 128
      %v793 = vmax.f32 %v780, 0.0
      %v794 = vmax.f32 %v782, 0.0
      %v795 = vmax.f32 %v784, 0.0
      %v796 = vmax.f32 %v786, 0.0
      %v797 = vsel %vm791, %v793, %v780
      %v798 = vsel %vm792, %v794, %v782
      %v799 = vsel %vm791, %v795, %v784
      %v800 = vsel %vm792, %v796, %v786
      %v801 = vpack.c.bf16 %v799, %v797
      %v802 = vpack.c.bf16 %v800, %v798
      %v805 = vunpack.c.l.b16 %v801
      %v806 = vunpack.c.l.b16 %v802
      %v807 = vunpack.c.h.b16 %v801
      %v808 = vunpack.c.h.b16 %v802
      %v809 = vpack.c.b16 %v806, %v805
      %v810 = vpack.c.b16 %v808, %v807
      %813 = vst [vmem:[%s177] sm:$0xff] %v809
      %814 = vst [vmem:[%s177 + $0x8] sm:$0xff] %v810
      %s815 = smul.u32 2, %s14
      %p816 = scmp.lt.s32.totalorder %s815, 3
      %s817 = scalar_select %p816, %s815, 3
      %s818 = smul.addr %s817, 2
      %s819 = smul.addr %s818, 4
      %s820 = scalar_lea.vmem %s3, %s819
      // Predicated region
      $region33: #{colornet_forward.16} parent=31 // pred_check
        %p821 = pneg %p100
      $region34: #{colornet_forward.16} parent=31 // pred_check_branch
        %823 = sbr.rel (%p821) target = $region36
      $region35: #{colornet_forward.16} parent=31 // pred_region
        %s824 = smul.u32 2, %s14
      $region36: #{colornet_forward.16} parent=31 // pred_fallthru
        _
    $region32: #{colornet_forward.16} parent=5 // pred_fallthru
      _
    %p825 = scmp.le.s32.totalorder 2, %s9
    // Predicated region
    $region37: #{colornet_forward.16} parent=5 // pred_check
      %p826 = pneg %p825
    $region38: #{colornet_forward.16} parent=5 // pred_check_branch
      %828 = sbr.rel (%p826) target = $region40
    $region39: #{colornet_forward.16} parent=5 // pred_region
      %s829 = ssub.s32 %s9, 2
      // Predicated region
      $region41: #{colornet_forward.16} parent=39 // pred_check
        %p830 = pneg %p106
      $region42: #{colornet_forward.16} parent=39 // pred_check_branch
        %832 = sbr.rel (%p830) target = $region44
      $region43: #{colornet_forward.16} parent=39 // pred_region
        %s833 = smul.u32 2, %s15
        %p834 = scmp.lt.s32.totalorder %s833, 3
        %s835 = scalar_select %p834, %s833, 3
        %s836 = smul.addr %s835, 2
        %s837 = smul.addr %s836, 4
        %s838 = scalar_lea.vmem %s3, %s837
      $region44: #{colornet_forward.16} parent=39 // pred_fallthru
        _
    $region40: #{colornet_forward.16} parent=5 // pred_fallthru
      _
  $region6: #{colornet_forward.16} parent=0 // loop_footer
    %s13 = sadd.s32 1, %s9
  $region7: #{colornet_forward.16} parent=0 // loop_footer_branch
    %8 = sbr.rel target = $region3
  $region8: #{colornet_forward.16} parent=0 // loop_exit
    _

// kernel: colornet_forward.18
$region0: #{colornet_forward.18}
  #allocation0 [shape = 'u32[]', space=smem, size = 0x4, offset = 0x4, fixed_abs, tag = 'smem constant byte address 0x4 - core index']
  #allocation1 [shape = 'u32[144,128]{1,0:T(1,128)}', space=vmem, size = 0x12000, scoped, tag = 'internal scratch']
  %s0 = inlined_call_operand.vmem [shape: bf16[2,42,128], index: 0, kind: input, shape index: {}]
  %s1 = inlined_call_operand.vmem [shape: bf16[1152,128], index: 1, kind: input, shape index: {}]
  %s2 = inlined_call_operand.vmem [shape: f32[1,128], index: 2, kind: input, shape index: {}]
  %s3 = inlined_call_operand.vmem [shape: f32[24,1], index: 3, kind: input, shape index: {}]
  %s4 = inlined_call_operand.vmem [shape: bf16[2,42,128], index: 4, kind: output, shape index: {}]
  %s5 = sld [smem:[#allocation0]]
  $region49: #{colornet_forward.18} parent=0
    _
  %s7 = ssub.s32 1, %s5
  %s8 = scalar_select 0, %s7, %s5
  loop: start=0, step=1, limit=4
  $region2: #{colornet_forward.18} parent=0 // loop_pre_header
    _
  $region3: #{colornet_forward.18} parent=0 // loop_header
    %s10 = sphi 0, %s14
    %p11 = scmp.ge.s32.totalorder %s10, 4
    %s20 = sphi 0, %s22
    %s23 = sphi 0, %s20
    %s24 = sphi 0, %s23
    %s40 = sphi 0, %s24
    %s44 = sphi 0, %s44
    %s46 = sphi 0, %s44
    %s47 = sphi 0, %s46
    %s61 = sphi 0, %s47
    %s65 = sphi 0, %s65
    %s67 = sphi 0, %s65
    %s68 = sphi 0, %s67
    %s82 = sphi 0, %s68
    %s86 = sphi 0, %s86
    %s88 = sphi 0, %s86
    %s89 = sphi 0, %s88
    %s103 = sphi 0, %s89
    %s109 = sphi 0, %s111
    %s112 = sphi 0, %s109
    %s113 = sphi 0, %s112
    %s129 = sphi 0, %s113
  $region4: #{colornet_forward.18} parent=0 // loop_header_branch
    %13 = sbr.rel (%p11) target = $region8
  $region5: #{colornet_forward.18} parent=0 // loop_body
    %s15 = ssub.s32 %s10, 1
    %s16 = ssub.s32 %s10, 2
    %s17 = sadd.s32 %s10, 1
    %s18 = ssub.s32 %s10, %s17
    %p19 = scmp.eq.s32.totalorder %s18, 0
    %s21 = sadd.s32 %s20, 1
    %s22 = scalar_select %p19, %s20, %s21
    %p25 = pneg %p19
    %p26 = scmp.eq.s32.totalorder %s10, 1
    %p27 = por %p25, %p26
    %p28 = scmp.ne.s32.totalorder %s20, %s23
    %p29 = scmp.eq.s32.totalorder %s10, 0
    %p30 = por %p28, %p29
    %p31 = scmp.ne.s32.totalorder %s20, %s23
    %p32 = scmp.eq.s32.totalorder %s15, 1
    %p33 = por %p31, %p32
    %p34 = scmp.ne.s32.totalorder %s23, %s24
    %p35 = scmp.eq.s32.totalorder %s15, 0
    %p36 = por %p34, %p35
    %p37 = scmp.ne.s32.totalorder %s23, %s24
    %p38 = scmp.eq.s32.totalorder %s16, 1
    %p39 = por %p37, %p38
    %p41 = scmp.ne.s32.totalorder %s24, %s40
    %p42 = scmp.eq.s32.totalorder %s16, 0
    %p43 = por %p41, %p42
    %s45 = sadd.s32 %s44, 1
    %p48 = scmp.eq.s32.totalorder %s10, 1
    %p49 = scmp.ne.s32.totalorder %s44, %s46
    %p50 = scmp.eq.s32.totalorder %s10, 0
    %p51 = por %p49, %p50
    %p52 = scmp.ne.s32.totalorder %s44, %s46
    %p53 = scmp.eq.s32.totalorder %s15, 1
    %p54 = por %p52, %p53
    %p55 = scmp.ne.s32.totalorder %s46, %s47
    %p56 = scmp.eq.s32.totalorder %s15, 0
    %p57 = por %p55, %p56
    %p58 = scmp.ne.s32.totalorder %s46, %s47
    %p59 = scmp.eq.s32.totalorder %s16, 1
    %p60 = por %p58, %p59
    %p62 = scmp.ne.s32.totalorder %s47, %s61
    %p63 = scmp.eq.s32.totalorder %s16, 0
    %p64 = por %p62, %p63
    %s66 = sadd.s32 %s65, 1
    %p69 = scmp.eq.s32.totalorder %s10, 1
    %p70 = scmp.ne.s32.totalorder %s65, %s67
    %p71 = scmp.eq.s32.totalorder %s10, 0
    %p72 = por %p70, %p71
    %p73 = scmp.ne.s32.totalorder %s65, %s67
    %p74 = scmp.eq.s32.totalorder %s15, 1
    %p75 = por %p73, %p74
    %p76 = scmp.ne.s32.totalorder %s67, %s68
    %p77 = scmp.eq.s32.totalorder %s15, 0
    %p78 = por %p76, %p77
    %p79 = scmp.ne.s32.totalorder %s67, %s68
    %p80 = scmp.eq.s32.totalorder %s16, 1
    %p81 = por %p79, %p80
    %p83 = scmp.ne.s32.totalorder %s68, %s82
    %p84 = scmp.eq.s32.totalorder %s16, 0
    %p85 = por %p83, %p84
    %s87 = sadd.s32 %s86, 1
    %p90 = scmp.eq.s32.totalorder %s10, 1
    %p91 = scmp.ne.s32.totalorder %s86, %s88
    %p92 = scmp.eq.s32.totalorder %s10, 0
    %p93 = por %p91, %p92
    %p94 = scmp.ne.s32.totalorder %s86, %s88
    %p95 = scmp.eq.s32.totalorder %s15, 1
    %p96 = por %p94, %p95
    %p97 = scmp.ne.s32.totalorder %s88, %s89
    %p98 = scmp.eq.s32.totalorder %s15, 0
    %p99 = por %p97, %p98
    %p100 = scmp.ne.s32.totalorder %s88, %s89
    %p101 = scmp.eq.s32.totalorder %s16, 1
    %p102 = por %p100, %p101
    %p104 = scmp.ne.s32.totalorder %s89, %s103
    %p105 = scmp.eq.s32.totalorder %s16, 0
    %p106 = por %p104, %p105
    %s107 = ssub.s32 %s10, %s17
    %p108 = scmp.eq.s32.totalorder %s107, 0
    %s110 = sadd.s32 %s109, 1
    %s111 = scalar_select %p108, %s109, %s110
    %p114 = pneg %p108
    %p115 = scmp.eq.s32.totalorder %s10, 1
    %p116 = por %p114, %p115
    %p117 = scmp.ne.s32.totalorder %s109, %s112
    %p118 = scmp.eq.s32.totalorder %s10, 0
    %p119 = por %p117, %p118
    %p120 = scmp.ne.s32.totalorder %s109, %s112
    %p121 = scmp.eq.s32.totalorder %s15, 1
    %p122 = por %p120, %p121
    %p123 = scmp.ne.s32.totalorder %s112, %s113
    %p124 = scmp.eq.s32.totalorder %s15, 0
    %p125 = por %p123, %p124
    %p126 = scmp.ne.s32.totalorder %s112, %s113
    %p127 = scmp.eq.s32.totalorder %s16, 1
    %p128 = por %p126, %p127
    %p130 = scmp.ne.s32.totalorder %s113, %s129
    %p131 = scmp.eq.s32.totalorder %s16, 0
    %p132 = por %p130, %p131
    %p133 = scmp.le.s32.totalorder 1, %s10
    %p134 = scmp.lt.s32.totalorder %s10, 3
    %p135 = pnand %p133, %p134
    %p136 = pneg %p135
    // Predicated region
    $region9: #{colornet_forward.18} parent=5 // pred_check
      _
    $region10: #{colornet_forward.18} parent=5 // pred_check_branch
      %138 = sbr.rel (%p135) target = $region12
    $region11: #{colornet_forward.18} parent=5 // pred_region
      %s139 = ssub.s32 %s10, 1
      // Predicated region
      $region13: #{colornet_forward.18} parent=11 // pred_check
        %p140 = pneg %p57
      $region14: #{colornet_forward.18} parent=11 // pred_check_branch
        %142 = sbr.rel (%p140) target = $region16
      $region15: #{colornet_forward.18} parent=11 // pred_region
        _
      $region16: #{colornet_forward.18} parent=11 // pred_fallthru
        _
      // Predicated region
      $region17: #{colornet_forward.18} parent=11 // pred_check
        %p143 = pneg %p78
      $region18: #{colornet_forward.18} parent=11 // pred_check_branch
        %145 = sbr.rel (%p143) target = $region20
      $region19: #{colornet_forward.18} parent=11 // pred_region
        _
      $region20: #{colornet_forward.18} parent=11 // pred_fallthru
        _
      // Predicated region
      $region21: #{colornet_forward.18} parent=11 // pred_check
        %p146 = pneg %p99
      $region22: #{colornet_forward.18} parent=11 // pred_check_branch
        %148 = sbr.rel (%p146) target = $region24
      $region23: #{colornet_forward.18} parent=11 // pred_region
        _
      $region24: #{colornet_forward.18} parent=11 // pred_fallthru
        _
    $region12: #{colornet_forward.18} parent=5 // pred_fallthru
      _
    %p149 = scmp.lt.s32.totalorder %s10, 2
    // Predicated region
    $region25: #{colornet_forward.18} parent=5 // pred_check
      %p150 = pneg %p149
    $region26: #{colornet_forward.18} parent=5 // pred_check_branch
      %152 = sbr.rel (%p150) target = $region28
    $region27: #{colornet_forward.18} parent=5 // pred_region
      // Predicated region
      $region29: #{colornet_forward.18} parent=27 // pred_check
        %p153 = pneg %p30
      $region30: #{colornet_forward.18} parent=27 // pred_check_branch
        %155 = sbr.rel (%p153) target = $region32
      $region31: #{colornet_forward.18} parent=27 // pred_region
        %p156 = scmp.lt.s32.totalorder %s10, 1
        %s157 = scalar_select %p156, %s10, 1
        %s158 = smul.addr %s157, 6
        %s159 = smul.addr %s158, 4
        %s160 = scalar_lea.vmem %s0, %s159
      $region32: #{colornet_forward.18} parent=27 // pred_fallthru
        _
    $region28: #{colornet_forward.18} parent=5 // pred_fallthru
      _
    %p161 = scmp.le.s32.totalorder 1, %s10
    %p162 = scmp.lt.s32.totalorder %s10, 3
    %p163 = pnand %p161, %p162
    %p164 = pneg %p163
    // Predicated region
    $region33: #{colornet_forward.18} parent=5 // pred_check
      _
    $region34: #{colornet_forward.18} parent=5 // pred_check_branch
      %166 = sbr.rel (%p163) target = $region36
    $region35: #{colornet_forward.18} parent=5 // pred_region
      %s167 = ssub.s32 %s10, 1
      %p168 = scmp.lt.s32.totalorder %s15, 1
      %s169 = scalar_select %p168, %s15, 1
      %s170 = smul.addr %s169, 6
      %s171 = smul.addr %s170, 4
      %s172 = scalar_lea.vmem %s0, %s171
      %p173 = pneg %p36
      %p174 = pneg %p33
      %p175 = pneg %p57
      %p176 = pneg %p54
      %p177 = pneg %p78
      %p178 = pneg %p75
      %p179 = pneg %p99
      %p180 = pneg %p96
      %p181 = pneg %p125
      %p182 = pneg %p122
      %p183 = scmp.lt.s32.totalorder %s15, 1
      %s184 = scalar_select %p183, %s15, 1
      %s185 = smul.addr %s184, 6
      %s186 = smul.addr %s185, 4
      %s187 = scalar_lea.vmem %s4, %s186
      %p188 = scmp.lt.s32.totalorder %s15, 1
      %s189 = scalar_select %p188, %s15, 1
      %s190 = smul.addr %s189, 6
      %s191 = smul.addr %s190, 4
      %s192 = scalar_lea.vmem %s0, %s191
      %p193 = scmp.lt.s32.totalorder %s15, 1
      %s194 = scalar_select %p193, %s15, 1
      %s195 = smul.addr %s194, 6
      %s196 = smul.addr %s195, 4
      %s197 = scalar_lea.vmem %s4, %s196
      %v199 = vld [vmem:[%s192] sm:$0xf]
      %v200 = vld [vmem:[%s192 + $0x4] sm:$0xf]
      %v201 = vld [vmem:[%s192 + $0x8] sm:$0xf]
      %v202 = vld [vmem:[%s1] sm:$0xf]
      %v203 = vld [vmem:[%s1 + $0x4] sm:$0xf]
      %v204 = vld [vmem:[%s1 + $0x8] sm:$0xf]
      %v205 = vld [vmem:[%s1 + $0xc] sm:$0xf]
      %v206 = vld [vmem:[%s1 + $0x10] sm:$0xf]
      %v207 = vld [vmem:[%s1 + $0x14] sm:$0xf]
      %v208 = vld [vmem:[%s1 + $0x18] sm:$0xf]
      %v209 = vld [vmem:[%s1 + $0x1c] sm:$0xf]
      %v210 = vld [vmem:[%s1 + $0x20] sm:$0xf]
      %v211 = vld [vmem:[%s1 + $0x24] sm:$0xf]
      %v212 = vld [vmem:[%s1 + $0x28] sm:$0xf]
      %v213 = vld [vmem:[%s1 + $0x2c] sm:$0xf]
      %v214 = vld [vmem:[%s1 + $0x30] sm:$0xf]
      %v215 = vld [vmem:[%s1 + $0x34] sm:$0xf]
      %v216 = vld [vmem:[%s1 + $0x38] sm:$0xf]
      %v217 = vld [vmem:[%s1 + $0x3c] sm:$0xf]
      %v218 = vld [vmem:[%s192 + $0xc] sm:$0x1]
      %v219 = vld [vmem:[%s1 + $0x40] sm:$0xf]
      %v220 = vld [vmem:[%s1 + $0x44] sm:$0xf]
      %v221 = vld [vmem:[%s1 + $0x48] sm:$0xf]
      %v222 = vld [vmem:[%s1 + $0x4c] sm:$0xf]
      %v223 = vld [vmem:[%s1 + $0x50] sm:$0xf]
      %v224 = vld [vmem:[%s1 + $0x54] sm:$0xf]
      %v225 = vld [vmem:[%s1 + $0x58] sm:$0xf]
      %v226 = vld [vmem:[%s1 + $0x5c] sm:$0xf]
      %v227 = vld [vmem:[%s1 + $0x60] sm:$0xf]
      %v228 = vld [vmem:[%s1 + $0x64] sm:$0xf]
      %v229 = vld [vmem:[%s1 + $0x68] sm:$0xf]
      %v230 = vld [vmem:[%s1 + $0x6c] sm:$0xf]
      %v231 = vld [vmem:[%s1 + $0x70] sm:$0xf]
      %v232 = vld [vmem:[%s1 + $0x74] sm:$0xf]
      %v233 = vld [vmem:[%s1 + $0x78] sm:$0xf]
      %v234 = vld [vmem:[%s1 + $0x7c] sm:$0xf]
      %v239 = vunpack.c.l.b16 %v199
      %v240 = vunpack.c.l.b16 %v200
      %v241 = vunpack.c.l.b16 %v201
      %v242 = vunpack.c.l.b16 %v218
      %v243 = vpack.c.b16 %v240, %v239
      %v244 = vpack.c.b16 %v242, %v241
      %vm245 = vsmask.f32 7424
      %v247 = vshrl.u32 %v243, 16
      %v249 = vshll.u32 %v243, 16
      %v251 = vrot.slane %v249, 1
      %v252 = vor.u32 %v247, %v251
      %v254 = vshll.u32 %v244, 16
      %v256 = vrot.slane %v254, 1
      %v257 = vsel %vm245, %v252, %v256
      %v258 = vshrl.u32 %v244, 16
      %v260 = vor.u32 %v258, %v256
      %v279 = vunpack.c.l.b16 %v219
      %v280 = vunpack.c.l.b16 %v220
      %v281 = vunpack.c.l.b16 %v221
      %v282 = vunpack.c.l.b16 %v222
      %v283 = vunpack.c.l.b16 %v223
      %v284 = vunpack.c.l.b16 %v224
      %v285 = vunpack.c.l.b16 %v225
      %v286 = vunpack.c.l.b16 %v226
      %v287 = vunpack.c.l.b16 %v227
      %v288 = vunpack.c.l.b16 %v228
      %v289 = vunpack.c.l.b16 %v229
      %v290 = vunpack.c.l.b16 %v230
      %v291 = vunpack.c.l.b16 %v231
      %v292 = vunpack.c.l.b16 %v232
      %v293 = vunpack.c.l.b16 %v233
      %v294 = vunpack.c.l.b16 %v234
      %v295 = vpack.c.b16 %v280, %v279
      %v296 = vpack.c.b16 %v282, %v281
      %v297 = vpack.c.b16 %v284, %v283
      %v298 = vpack.c.b16 %v286, %v285
      %v299 = vpack.c.b16 %v288, %v287
      %v300 = vpack.c.b16 %v290, %v289
      %v301 = vpack.c.b16 %v292, %v291
      %v302 = vpack.c.b16 %v294, %v293
      %311 = vmatprep.subr.bf16.mxu0 0
      %312 = vmatpush1.bf16.msra.mxu0 %v302
      %313 = vmatprep.subr.bf16.mxu0 0
      %314 = vmatpush1.bf16.msra.mxu0 %v301
      %315 = vmatprep.subr.bf16.mxu0 0
      %316 = vmatpush1.bf16.msra.mxu0 %v300
      %317 = vmatprep.subr.bf16.mxu0 0
      %318 = vmatpush1.bf16.msra.mxu0 %v299
      %319 = vmatprep.subr.bf16.mxu0 0
      %320 = vmatpush1.bf16.msra.mxu0 %v298
      %321 = vmatprep.subr.bf16.mxu0 0
      %322 = vmatpush1.bf16.msra.mxu0 %v297
      %323 = vmatprep.subr.bf16.mxu0 0
      %324 = vmatpush1.bf16.msra.mxu0 %v296
      %325 = vmatprep.subr.bf16.mxu0 0
      %326 = vmatpush1.bf16.msra.mxu0 %v295
      %327 = vmatprep.subr.bf16.mxu0 0
      %328 = vmatpush2.bf16.msra.mxu0 0
      %329 = vmatprep.subr.bf16.mxu0 0
      %330 = vmatpush2.bf16.msra.mxu0 0
      %331 = vmatprep.subr.bf16.mxu0 0
      %332 = vmatpush2.bf16.msra.mxu0 0
      %333 = vmatprep.subr.bf16.mxu0 0
      %334 = vmatpush2.bf16.msra.mxu0 0
      %335 = vmatprep.subr.bf16.mxu0 0
      %336 = vmatpush2.bf16.msra.mxu0 0
      %337 = vmatprep.subr.bf16.mxu0 0
      %338 = vmatpush2.bf16.msra.mxu0 0
      %339 = vmatprep.subr.bf16.mxu0 0
      %340 = vmatpush2.bf16.msra.mxu0 0
      %341 = vmatprep.subr.bf16.mxu0 0
      %342 = vmatpush2.bf16.msra.mxu0 0
      %343 = vmatprep.mubr.bf16.mxu0 0
      %344 = vmatmul.mubr.bf16.gmra.mxu0 %v257
      %v345 = vpop.f32.mrf.mxu0
      %v346 = vadd.f32 0.0, %v345
      %v347 = vpop.f32.mrf.mxu0
      %v348 = vpop.f32.mrf.mxu0
      %v349 = vadd.f32 0.0, %v348
      %v350 = vpop.f32.mrf.mxu0
      %351 = vmatprep.mubr.bf16.mxu0 0
      %352 = vmatmul.mubr.bf16.gmra.mxu0 %v260
      %v353 = vpop.f32.mrf.mxu0
      %v354 = vadd.f32 0.0, %v353
      %v355 = vpop.f32.mrf.mxu0
      %v356 = vpop.f32.mrf.mxu0
      %v357 = vpop.f32.mrf.mxu0
      %358 = vdwg.mxu0
      %v359 = vpack.c.b16 %v241, %v241
      %v378 = vunpack.c.l.b16 %v202
      %v379 = vunpack.c.l.b16 %v203
      %v380 = vunpack.c.l.b16 %v204
      %v381 = vunpack.c.l.b16 %v205
      %v382 = vunpack.c.l.b16 %v206
      %v383 = vunpack.c.l.b16 %v207
      %v384 = vunpack.c.l.b16 %v208
      %v385 = vunpack.c.l.b16 %v209
      %v386 = vunpack.c.l.b16 %v210
      %v387 = vunpack.c.l.b16 %v211
      %v388 = vunpack.c.l.b16 %v212
      %v389 = vunpack.c.l.b16 %v213
      %v390 = vunpack.c.l.b16 %v214
      %v391 = vunpack.c.l.b16 %v215
      %v392 = vunpack.c.l.b16 %v216
      %v393 = vunpack.c.l.b16 %v217
      %v394 = vpack.c.b16 %v379, %v378
      %v395 = vpack.c.b16 %v381, %v380
      %v396 = vpack.c.b16 %v383, %v382
      %v397 = vpack.c.b16 %v385, %v384
      %v398 = vpack.c.b16 %v387, %v386
      %v399 = vpack.c.b16 %v389, %v388
      %v400 = vpack.c.b16 %v391, %v390
      %v401 = vpack.c.b16 %v393, %v392
      %410 = vmatprep.subr.bf16.mxu0 0
      %411 = vmatpush1.bf16.msra.mxu0 %v401
      %412 = vmatprep.subr.bf16.mxu0 0
      %413 = vmatpush1.bf16.msra.mxu0 %v400
      %414 = vmatprep.subr.bf16.mxu0 0
      %415 = vmatpush1.bf16.msra.mxu0 %v399
      %416 = vmatprep.subr.bf16.mxu0 0
      %417 = vmatpush1.bf16.msra.mxu0 %v398
      %418 = vmatprep.subr.bf16.mxu0 0
      %419 = vmatpush1.bf16.msra.mxu0 %v397
      %420 = vmatprep.subr.bf16.mxu0 0
      %421 = vmatpush1.bf16.msra.mxu0 %v396
      %422 = vmatprep.subr.bf16.mxu0 0
      %423 = vmatpush1.bf16.msra.mxu0 %v395
      %424 = vmatprep.subr.bf16.mxu0 0
      %425 = vmatpush1.bf16.msra.mxu0 %v394
      %426 = vmatprep.subr.bf16.mxu0 0
      %427 = vmatpush2.bf16.msra.mxu0 0
      %428 = vmatprep.subr.bf16.mxu0 0
      %429 = vmatpush2.bf16.msra.mxu0 0
      %430 = vmatprep.subr.bf16.mxu0 0
      %431 = vmatpush2.bf16.msra.mxu0 0
      %432 = vmatprep.subr.bf16.mxu0 0
      %433 = vmatpush2.bf16.msra.mxu0 0
      %434 = vmatprep.subr.bf16.mxu0 0
      %435 = vmatpush2.bf16.msra.mxu0 0
      %436 = vmatprep.subr.bf16.mxu0 0
      %437 = vmatpush2.bf16.msra.mxu0 0
      %438 = vmatprep.subr.bf16.mxu0 0
      %439 = vmatpush2.bf16.msra.mxu0 0
      %440 = vmatprep.subr.bf16.mxu0 0
      %441 = vmatpush2.bf16.msra.mxu0 0
      %442 = vmatprep.mubr.bf16.mxu0 0
      %443 = vmatmul.mubr.bf16.gmra.mxu0 %v243
      %v444 = vpop.f32.mrf.mxu0
      %v445 = vadd.f32 %v346, %v444
      %v446 = vpop.f32.mrf.mxu0
      %v447 = vpop.f32.mrf.mxu0
      %v448 = vadd.f32 %v349, %v447
      %v449 = vpop.f32.mrf.mxu0
      %450 = vmatprep.mubr.bf16.mxu0 0
      %451 = vmatmul.mubr.bf16.gmra.mxu0 %v359
      %v452 = vpop.f32.mrf.mxu0
      %v453 = vadd.f32 %v354, %v452
      %v454 = vpop.f32.mrf.mxu0
      %v455 = vpop.f32.mrf.mxu0
      %v456 = vpop.f32.mrf.mxu0
      %457 = vdwg.mxu0
      %v458 = vld [vmem:[%s192] sm:$0xe]
      %v459 = vld [vmem:[%s1 + $0x80] sm:$0xf]
      %v460 = vld [vmem:[%s1 + $0x84] sm:$0xf]
      %v461 = vld [vmem:[%s1 + $0x88] sm:$0xf]
      %v462 = vld [vmem:[%s1 + $0x8c] sm:$0xf]
      %v463 = vld [vmem:[%s1 + $0x90] sm:$0xf]
      %v464 = vld [vmem:[%s1 + $0x94] sm:$0xf]
      %v465 = vld [vmem:[%s1 + $0x98] sm:$0xf]
      %v466 = vld [vmem:[%s1 + $0x9c] sm:$0xf]
      %v467 = vld [vmem:[%s1 + $0xa0] sm:$0xf]
      %v468 = vld [vmem:[%s1 + $0xa4] sm:$0xf]
      %v469 = vld [vmem:[%s1 + $0xa8] sm:$0xf]
      %v470 = vld [vmem:[%s1 + $0xac] sm:$0xf]
      %v471 = vld [vmem:[%s1 + $0xb0] sm:$0xf]
      %v472 = vld [vmem:[%s1 + $0xb4] sm:$0xf]
      %v473 = vld [vmem:[%s1 + $0xb8] sm:$0xf]
      %v474 = vld [vmem:[%s1 + $0xbc] sm:$0xf]
      %v476 = vunpack.c.l.b16 %v458
      %v477 = vpack.c.b16 %v240, %v476
      %vm478 = vcmask 1046528
      %v479 = vrot.slane %v477, 1
      %v480 = vrot.slane %v244, 1
      %v481 = vsel %vm478, %v479, %v480
      %v500 = vunpack.c.l.b16 %v459
      %v501 = vunpack.c.l.b16 %v460
      %v502 = vunpack.c.l.b16 %v461
      %v503 = vunpack.c.l.b16 %v462
      %v504 = vunpack.c.l.b16 %v463
      %v505 = vunpack.c.l.b16 %v464
      %v506 = vunpack.c.l.b16 %v465
      %v507 = vunpack.c.l.b16 %v466
      %v508 = vunpack.c.l.b16 %v467
      %v509 = vunpack.c.l.b16 %v468
      %v510 = vunpack.c.l.b16 %v469
      %v511 = vunpack.c.l.b16 %v470
      %v512 = vunpack.c.l.b16 %v471
      %v513 = vunpack.c.l.b16 %v472
      %v514 = vunpack.c.l.b16 %v473
      %v515 = vunpack.c.l.b16 %v474
      %v516 = vpack.c.b16 %v501, %v500
      %v517 = vpack.c.b16 %v503, %v502
      %v518 = vpack.c.b16 %v505, %v504
      %v519 = vpack.c.b16 %v507, %v506
      %v520 = vpack.c.b16 %v509, %v508
      %v521 = vpack.c.b16 %v511, %v510
      %v522 = vpack.c.b16 %v513, %v512
      %v523 = vpack.c.b16 %v515, %v514
      %532 = vmatprep.subr.bf16.mxu0 0
      %533 = vmatpush1.bf16.msra.mxu0 %v523
      %534 = vmatprep.subr.bf16.mxu0 0
      %535 = vmatpush1.bf16.msra.mxu0 %v522
      %536 = vmatprep.subr.bf16.mxu0 0
      %537 = vmatpush1.bf16.msra.mxu0 %v521
      %538 = vmatprep.subr.bf16.mxu0 0
      %539 = vmatpush1.bf16.msra.mxu0 %v520
      %540 = vmatprep.subr.bf16.mxu0 0
      %541 = vmatpush1.bf16.msra.mxu0 %v519
      %542 = vmatprep.subr.bf16.mxu0 0
      %543 = vmatpush1.bf16.msra.mxu0 %v518
      %544 = vmatprep.subr.bf16.mxu0 0
      %545 = vmatpush1.bf16.msra.mxu0 %v517
      %546 = vmatprep.subr.bf16.mxu0 0
      %547 = vmatpush1.bf16.msra.mxu0 %v516
      %548 = vmatprep.subr.bf16.mxu0 0
      %549 = vmatpush2.bf16.msra.mxu0 0
      %550 = vmatprep.subr.bf16.mxu0 0
      %551 = vmatpush2.bf16.msra.mxu0 0
      %552 = vmatprep.subr.bf16.mxu0 0
      %553 = vmatpush2.bf16.msra.mxu0 0
      %554 = vmatprep.subr.bf16.mxu0 0
      %555 = vmatpush2.bf16.msra.mxu0 0
      %556 = vmatprep.subr.bf16.mxu0 0
      %557 = vmatpush2.bf16.msra.mxu0 0
      %558 = vmatprep.subr.bf16.mxu0 0
      %559 = vmatpush2.bf16.msra.mxu0 0
      %560 = vmatprep.subr.bf16.mxu0 0
      %561 = vmatpush2.bf16.msra.mxu0 0
      %562 = vmatprep.subr.bf16.mxu0 0
      %563 = vmatpush2.bf16.msra.mxu0 0
      %564 = vmatprep.mubr.bf16.mxu0 0
      %565 = vmatmul.mubr.bf16.gmra.mxu0 %v481
      %v566 = vpop.f32.mrf.mxu0
      %v567 = vadd.f32 0.0, %v566
      %v568 = vpop.f32.mrf.mxu0
      %v569 = vpop.f32.mrf.mxu0
      %v570 = vadd.f32 0.0, %v569
      %v571 = vpop.f32.mrf.mxu0
      %572 = vmatprep.mubr.bf16.mxu0 0
      %573 = vmatmul.mubr.bf16.gmra.mxu0 %v480
      %v574 = vpop.f32.mrf.mxu0
      %v575 = vadd.f32 0.0, %v574
      %v576 = vpop.f32.mrf.mxu0
      %v577 = vpop.f32.mrf.mxu0
      %v578 = vpop.f32.mrf.mxu0
      %579 = vdwg.mxu0
      %v580 = vadd.f32 %v445, %v567
      %v581 = vadd.f32 %v448, %v570
      %v582 = vadd.f32 %v453, %v575
      %v583 = vld [vmem:[%s192] sm:$0x8]
      %v584 = vld [vmem:[%s192 + $0xc] sm:$0x7]
      %v585 = vld [vmem:[%s1 + $0xc0] sm:$0xf]
      %v586 = vld [vmem:[%s1 + $0xc4] sm:$0xf]
      %v587 = vld [vmem:[%s1 + $0xc8] sm:$0xf]
      %v588 = vld [vmem:[%s1 + $0xcc] sm:$0xf]
      %v589 = vld [vmem:[%s1 + $0xd0] sm:$0xf]
      %v590 = vld [vmem:[%s1 + $0xd4] sm:$0xf]
      %v591 = vld [vmem:[%s1 + $0xd8] sm:$0xf]
      %v592 = vld [vmem:[%s1 + $0xdc] sm:$0xf]
      %v593 = vld [vmem:[%s1 + $0xe0] sm:$0xf]
      %v594 = vld [vmem:[%s1 + $0xe4] sm:$0xf]
      %v595 = vld [vmem:[%s1 + $0xe8] sm:$0xf]
      %v596 = vld [vmem:[%s1 + $0xec] sm:$0xf]
      %v597 = vld [vmem:[%s1 + $0xf0] sm:$0xf]
      %v598 = vld [vmem:[%s1 + $0xf4] sm:$0xf]
      %v599 = vld [vmem:[%s1 + $0xf8] sm:$0xf]
      %v600 = vld [vmem:[%s1 + $0xfc] sm:$0xf]
      %v603 = vunpack.c.l.b16 %v583
      %v604 = vunpack.c.l.b16 %v584
      %v605 = vpack.c.b16 %v240, %v603
      %v606 = vpack.c.b16 %v604, %v241
      %vm607 = vcmask 1044480
      %v608 = vrot.slane %v605, 3
      %v609 = vrot.slane %v606, 3
      %v610 = vsel %vm607, %v608, %v609
      %v629 = vunpack.c.l.b16 %v585
      %v630 = vunpack.c.l.b16 %v586
      %v631 = vunpack.c.l.b16 %v587
      %v632 = vunpack.c.l.b16 %v588
      %v633 = vunpack.c.l.b16 %v589
      %v634 = vunpack.c.l.b16 %v590
      %v635 = vunpack.c.l.b16 %v591
      %v636 = vunpack.c.l.b16 %v592
      %v637 = vunpack.c.l.b16 %v593
      %v638 = vunpack.c.l.b16 %v594
      %v639 = vunpack.c.l.b16 %v595
      %v640 = vunpack.c.l.b16 %v596
      %v641 = vunpack.c.l.b16 %v597
      %v642 = vunpack.c.l.b16 %v598
      %v643 = vunpack.c.l.b16 %v599
      %v644 = vunpack.c.l.b16 %v600
      %v645 = vpack.c.b16 %v630, %v629
      %v646 = vpack.c.b16 %v632, %v631
      %v647 = vpack.c.b16 %v634, %v633
      %v648 = vpack.c.b16 %v636, %v635
      %v649 = vpack.c.b16 %v638, %v637
      %v650 = vpack.c.b16 %v640, %v639
      %v651 = vpack.c.b16 %v642, %v641
      %v652 = vpack.c.b16 %v644, %v643
      %661 = vmatprep.subr.bf16.mxu0 0
      %662 = vmatpush1.bf16.msra.mxu0 %v652
      %663 = vmatprep.subr.bf16.mxu0 0
      %664 = vmatpush1.bf16.msra.mxu0 %v651
      %665 = vmatprep.subr.bf16.mxu0 0
      %666 = vmatpush1.bf16.msra.mxu0 %v650
      %667 = vmatprep.subr.bf16.mxu0 0
      %668 = vmatpush1.bf16.msra.mxu0 %v649
      %669 = vmatprep.subr.bf16.mxu0 0
      %670 = vmatpush1.bf16.msra.mxu0 %v648
      %671 = vmatprep.subr.bf16.mxu0 0
      %672 = vmatpush1.bf16.msra.mxu0 %v647
      %673 = vmatprep.subr.bf16.mxu0 0
      %674 = vmatpush1.bf16.msra.mxu0 %v646
      %675 = vmatprep.subr.bf16.mxu0 0
      %676 = vmatpush1.bf16.msra.mxu0 %v645
      %677 = vmatprep.subr.bf16.mxu0 0
      %678 = vmatpush2.bf16.msra.mxu0 0
      %679 = vmatprep.subr.bf16.mxu0 0
      %680 = vmatpush2.bf16.msra.mxu0 0
      %681 = vmatprep.subr.bf16.mxu0 0
      %682 = vmatpush2.bf16.msra.mxu0 0
      %683 = vmatprep.subr.bf16.mxu0 0
      %684 = vmatpush2.bf16.msra.mxu0 0
      %685 = vmatprep.subr.bf16.mxu0 0
      %686 = vmatpush2.bf16.msra.mxu0 0
      %687 = vmatprep.subr.bf16.mxu0 0
      %688 = vmatpush2.bf16.msra.mxu0 0
      %689 = vmatprep.subr.bf16.mxu0 0
      %690 = vmatpush2.bf16.msra.mxu0 0
      %691 = vmatprep.subr.bf16.mxu0 0
      %692 = vmatpush2.bf16.msra.mxu0 0
      %693 = vmatprep.mubr.bf16.mxu0 0
      %694 = vmatmul.mubr.bf16.gmra.mxu0 %v610
      %v695 = vpop.f32.mrf.mxu0
      %v696 = vadd.f32 0.0, %v695
      %v697 = vpop.f32.mrf.mxu0
      %v698 = vpop.f32.mrf.mxu0
      %v699 = vadd.f32 0.0, %v698
      %v700 = vpop.f32.mrf.mxu0
      %701 = vmatprep.mubr.bf16.mxu0 0
      %702 = vmatmul.mubr.bf16.gmra.mxu0 %v609
      %v703 = vpop.f32.mrf.mxu0
      %v704 = vadd.f32 0.0, %v703
      %v705 = vpop.f32.mrf.mxu0
      %v706 = vpop.f32.mrf.mxu0
      %v707 = vpop.f32.mrf.mxu0
      %708 = vdwg.mxu0
      %v709 = vadd.f32 %v580, %v696
      %v710 = vadd.f32 %v581, %v699
      %v711 = vadd.f32 %v582, %v704
      %v712 = vld [vmem:[%s192 + $0xc] sm:$0xf]
      %v713 = vld [vmem:[%s1 + $0x100] sm:$0xf]
      %v714 = vld [vmem:[%s1 + $0x104] sm:$0xf]
      %v715 = vld [vmem:[%s1 + $0x108] sm:$0xf]
      %v716 = vld [vmem:[%s1 + $0x10c] sm:$0xf]
      %v717 = vld [vmem:[%s1 + $0x110] sm:$0xf]
      %v718 = vld [vmem:[%s1 + $0x114] sm:$0xf]
      %v719 = vld [vmem:[%s1 + $0x118] sm:$0xf]
      %v720 = vld [vmem:[%s1 + $0x11c] sm:$0xf]
      %v721 = vld [vmem:[%s1 + $0x120] sm:$0xf]
      %v722 = vld [vmem:[%s1 + $0x124] sm:$0xf]
      %v723 = vld [vmem:[%s1 + $0x128] sm:$0xf]
      %v724 = vld [vmem:[%s1 + $0x12c] sm:$0xf]
      %v725 = vld [vmem:[%s1 + $0x130] sm:$0xf]
      %v726 = vld [vmem:[%s1 + $0x134] sm:$0xf]
      %v727 = vld [vmem:[%s1 + $0x138] sm:$0xf]
      %v728 = vld [vmem:[%s1 + $0x13c] sm:$0xf]
      %v730 = vunpack.c.l.b16 %v712
      %v731 = vpack.c.b16 %v730, %v241
      %vm732 = vsmask.f32 4352
      %v734 = vshrl.u32 %v605, 16
      %v736 = vrot.slane %v734, 3
      %v737 = vshll.u32 %v605, 16
      %v739 = vrot.slane %v737, 4
      %v740 = vor.u32 %v736, %v739
      %v742 = vshrl.u32 %v731, 16
      %v744 = vrot.slane %v742, 3
      %v745 = vshll.u32 %v731, 16
      %v747 = vrot.slane %v745, 4
      %v748 = vor.u32 %v744, %v747
      %v749 = vsel %vm732, %v740, %v748
      %v768 = vunpack.c.l.b16 %v713
      %v769 = vunpack.c.l.b16 %v714
      %v770 = vunpack.c.l.b16 %v715
      %v771 = vunpack.c.l.b16 %v716
      %v772 = vunpack.c.l.b16 %v717
      %v773 = vunpack.c.l.b16 %v718
      %v774 = vunpack.c.l.b16 %v719
      %v775 = vunpack.c.l.b16 %v720
      %v776 = vunpack.c.l.b16 %v721
      %v777 = vunpack.c.l.b16 %v722
      %v778 = vunpack.c.l.b16 %v723
      %v779 = vunpack.c.l.b16 %v724
      %v780 = vunpack.c.l.b16 %v725
      %v781 = vunpack.c.l.b16 %v726
      %v782 = vunpack.c.l.b16 %v727
      %v783 = vunpack.c.l.b16 %v728
      %v784 = vpack.c.b16 %v769, %v768
      %v785 = vpack.c.b16 %v771, %v770
      %v786 = vpack.c.b16 %v773, %v772
      %v787 = vpack.c.b16 %v775, %v774
      %v788 = vpack.c.b16 %v777, %v776
      %v789 = vpack.c.b16 %v779, %v778
      %v790 = vpack.c.b16 %v781, %v780
      %v791 = vpack.c.b16 %v783, %v782
      %800 = vmatprep.subr.bf16.mxu0 0
      %801 = vmatpush1.bf16.msra.mxu0 %v791
      %802 = vmatprep.subr.bf16.mxu0 0
      %803 = vmatpush1.bf16.msra.mxu0 %v790
      %804 = vmatprep.subr.bf16.mxu0 0
      %805 = vmatpush1.bf16.msra.mxu0 %v789
      %806 = vmatprep.subr.bf16.mxu0 0
      %807 = vmatpush1.bf16.msra.mxu0 %v788
      %808 = vmatprep.subr.bf16.mxu0 0
      %809 = vmatpush1.bf16.msra.mxu0 %v787
      %810 = vmatprep.subr.bf16.mxu0 0
      %811 = vmatpush1.bf16.msra.mxu0 %v786
      %812 = vmatprep.subr.bf16.mxu0 0
      %813 = vmatpush1.bf16.msra.mxu0 %v785
      %814 = vmatprep.subr.bf16.mxu0 0
      %815 = vmatpush1.bf16.msra.mxu0 %v784
      %816 = vmatprep.subr.bf16.mxu0 0
      %817 = vmatpush2.bf16.msra.mxu0 0
      %818 = vmatprep.subr.bf16.mxu0 0
      %819 = vmatpush2.bf16.msra.mxu0 0
      %820 = vmatprep.subr.bf16.mxu0 0
      %821 = vmatpush2.bf16.msra.mxu0 0
      %822 = vmatprep.subr.bf16.mxu0 0
      %823 = vmatpush2.bf16.msra.mxu0 0
      %824 = vmatprep.subr.bf16.mxu0 0
      %825 = vmatpush2.bf16.msra.mxu0 0
      %826 = vmatprep.subr.bf16.mxu0 0
      %827 = vmatpush2.bf16.msra.mxu0 0
      %828 = vmatprep.subr.bf16.mxu0 0
      %829 = vmatpush2.bf16.msra.mxu0 0
      %830 = vmatprep.subr.bf16.mxu0 0
      %831 = vmatpush2.bf16.msra.mxu0 0
      %832 = vmatprep.mubr.bf16.mxu0 0
      %833 = vmatmul.mubr.bf16.gmra.mxu0 %v749
      %v834 = vpop.f32.mrf.mxu0
      %v835 = vadd.f32 0.0, %v834
      %v836 = vpop.f32.mrf.mxu0
      %v837 = vpop.f32.mrf.mxu0
      %v838 = vadd.f32 0.0, %v837
      %v839 = vpop.f32.mrf.mxu0
      %840 = vmatprep.mubr.bf16.mxu0 0
      %841 = vmatmul.mubr.bf16.gmra.mxu0 %v748
      %v842 = vpop.f32.mrf.mxu0
      %v843 = vadd.f32 0.0, %v842
      %v844 = vpop.f32.mrf.mxu0
      %v845 = vpop.f32.mrf.mxu0
      %v846 = vpop.f32.mrf.mxu0
      %847 = vdwg.mxu0
      %v848 = vadd.f32 %v709, %v835
      %v849 = vadd.f32 %v710, %v838
      %v850 = vadd.f32 %v711, %v843
      %v851 = vld [vmem:[%s1 + $0x140] sm:$0xf]
      %v852 = vld [vmem:[%s1 + $0x144] sm:$0xf]
      %v853 = vld [vmem:[%s1 + $0x148] sm:$0xf]
      %v854 = vld [vmem:[%s1 + $0x14c] sm:$0xf]
      %v855 = vld [vmem:[%s1 + $0x150] sm:$0xf]
      %v856 = vld [vmem:[%s1 + $0x154] sm:$0xf]
      %v857 = vld [vmem:[%s1 + $0x158] sm:$0xf]
      %v858 = vld [vmem:[%s1 + $0x15c] sm:$0xf]
      %v859 = vld [vmem:[%s1 + $0x160] sm:$0xf]
      %v860 = vld [vmem:[%s1 + $0x164] sm:$0xf]
      %v861 = vld [vmem:[%s1 + $0x168] sm:$0xf]
      %v862 = vld [vmem:[%s1 + $0x16c] sm:$0xf]
      %v863 = vld [vmem:[%s1 + $0x170] sm:$0xf]
      %v864 = vld [vmem:[%s1 + $0x174] sm:$0xf]
      %v865 = vld [vmem:[%s1 + $0x178] sm:$0xf]
      %v866 = vld [vmem:[%s1 + $0x17c] sm:$0xf]
      %v867 = vpack.c.b16 %v241, %v240
      %v868 = vpack.c.b16 %v730, %v730
      %v887 = vunpack.c.l.b16 %v851
      %v888 = vunpack.c.l.b16 %v852
      %v889 = vunpack.c.l.b16 %v853
      %v890 = vunpack.c.l.b16 %v854
      %v891 = vunpack.c.l.b16 %v855
      %v892 = vunpack.c.l.b16 %v856
      %v893 = vunpack.c.l.b16 %v857
      %v894 = vunpack.c.l.b16 %v858
      %v895 = vunpack.c.l.b16 %v859
      %v896 = vunpack.c.l.b16 %v860
      %v897 = vunpack.c.l.b16 %v861
      %v898 = vunpack.c.l.b16 %v862
      %v899 = vunpack.c.l.b16 %v863
      %v900 = vunpack.c.l.b16 %v864
      %v901 = vunpack.c.l.b16 %v865
      %v902 = vunpack.c.l.b16 %v866
      %v903 = vpack.c.b16 %v888, %v887
      %v904 = vpack.c.b16 %v890, %v889
      %v905 = vpack.c.b16 %v892, %v891
      %v906 = vpack.c.b16 %v894, %v893
      %v907 = vpack.c.b16 %v896, %v895
      %v908 = vpack.c.b16 %v898, %v897
      %v909 = vpack.c.b16 %v900, %v899
      %v910 = vpack.c.b16 %v902, %v901
      %919 = vmatprep.subr.bf16.mxu0 0
      %920 = vmatpush1.bf16.msra.mxu0 %v910
      %921 = vmatprep.subr.bf16.mxu0 0
      %922 = vmatpush1.bf16.msra.mxu0 %v909
      %923 = vmatprep.subr.bf16.mxu0 0
      %924 = vmatpush1.bf16.msra.mxu0 %v908
      %925 = vmatprep.subr.bf16.mxu0 0
      %926 = vmatpush1.bf16.msra.mxu0 %v907
      %927 = vmatprep.subr.bf16.mxu0 0
      %928 = vmatpush1.bf16.msra.mxu0 %v906
      %929 = vmatprep.subr.bf16.mxu0 0
      %930 = vmatpush1.bf16.msra.mxu0 %v905
      %931 = vmatprep.subr.bf16.mxu0 0
      %932 = vmatpush1.bf16.msra.mxu0 %v904
      %933 = vmatprep.subr.bf16.mxu0 0
      %934 = vmatpush1.bf16.msra.mxu0 %v903
      %935 = vmatprep.subr.bf16.mxu0 0
      %936 = vmatpush2.bf16.msra.mxu0 0
      %937 = vmatprep.subr.bf16.mxu0 0
      %938 = vmatpush2.bf16.msra.mxu0 0
      %939 = vmatprep.subr.bf16.mxu0 0
      %940 = vmatpush2.bf16.msra.mxu0 0
      %941 = vmatprep.subr.bf16.mxu0 0
      %942 = vmatpush2.bf16.msra.mxu0 0
      %943 = vmatprep.subr.bf16.mxu0 0
      %944 = vmatpush2.bf16.msra.mxu0 0
      %945 = vmatprep.subr.bf16.mxu0 0
      %946 = vmatpush2.bf16.msra.mxu0 0
      %947 = vmatprep.subr.bf16.mxu0 0
      %948 = vmatpush2.bf16.msra.mxu0 0
      %949 = vmatprep.subr.bf16.mxu0 0
      %950 = vmatpush2.bf16.msra.mxu0 0
      %951 = vmatprep.mubr.bf16.mxu0 0
      %952 = vmatmul.mubr.bf16.gmra.mxu0 %v867
      %v953 = vpop.f32.mrf.mxu0
      %v954 = vadd.f32 0.0, %v953
      %v955 = vpop.f32.mrf.mxu0
      %v956 = vpop.f32.mrf.mxu0
      %v957 = vadd.f32 0.0, %v956
      %v958 = vpop.f32.mrf.mxu0
      %959 = vmatprep.mubr.bf16.mxu0 0
      %960 = vmatmul.mubr.bf16.gmra.mxu0 %v868
      %v961 = vpop.f32.mrf.mxu0
      %v962 = vadd.f32 0.0, %v961
      %v963 = vpop.f32.mrf.mxu0
      %v964 = vpop.f32.mrf.mxu0
      %v965 = vpop.f32.mrf.mxu0
      %966 = vdwg.mxu0
      %v967 = vadd.f32 %v848, %v954
      %v968 = vadd.f32 %v849, %v957
      %v969 = vadd.f32 %v850, %v962
      %v970 = vld [vmem:[%s192 + $0x4] sm:$0xc]
      %v971 = vld [vmem:[%s192 + $0x8] sm:$0xf]
      %v972 = vld [vmem:[%s192 + $0xc] sm:$0xf]
      %v973 = vld [vmem:[%s192 + $0x10] sm:$0x3]
      %v974 = vld [vmem:[%s1 + $0x180] sm:$0xf]
      %v975 = vld [vmem:[%s1 + $0x184] sm:$0xf]
      %v976 = vld [vmem:[%s1 + $0x188] sm:$0xf]
      %v977 = vld [vmem:[%s1 + $0x18c] sm:$0xf]
      %v978 = vld [vmem:[%s1 + $0x190] sm:$0xf]
      %v979 = vld [vmem:[%s1 + $0x194] sm:$0xf]
      %v980 = vld [vmem:[%s1 + $0x198] sm:$0xf]
      %v981 = vld [vmem:[%s1 + $0x19c] sm:$0xf]
      %v982 = vld [vmem:[%s1 + $0x1a0] sm:$0xf]
      %v983 = vld [vmem:[%s1 + $0x1a4] sm:$0xf]
      %v984 = vld [vmem:[%s1 + $0x1a8] sm:$0xf]
      %v985 = vld [vmem:[%s1 + $0x1ac] sm:$0xf]
      %v986 = vld [vmem:[%s1 + $0x1b0] sm:$0xf]
      %v987 = vld [vmem:[%s1 + $0x1b4] sm:$0xf]
      %v988 = vld [vmem:[%s1 + $0x1b8] sm:$0xf]
      %v989 = vld [vmem:[%s1 + $0x1bc] sm:$0xf]
      %v994 = vunpack.c.l.b16 %v970
      %v995 = vunpack.c.l.b16 %v971
      %v996 = vunpack.c.l.b16 %v972
      %v997 = vunpack.c.l.b16 %v973
      %v998 = vpack.c.b16 %v995, %v994
      %v999 = vpack.c.b16 %v997, %v996
      %vm1000 = vcmask 1045504
      %v1001 = vrot.slane %v998, 2
      %v1002 = vrot.slane %v999, 2
      %v1003 = vsel %vm1000, %v1001, %v1002
      %v1022 = vunpack.c.l.b16 %v974
      %v1023 = vunpack.c.l.b16 %v975
      %v1024 = vunpack.c.l.b16 %v976
      %v1025 = vunpack.c.l.b16 %v977
      %v1026 = vunpack.c.l.b16 %v978
      %v1027 = vunpack.c.l.b16 %v979
      %v1028 = vunpack.c.l.b16 %v980
      %v1029 = vunpack.c.l.b16 %v981
      %v1030 = vunpack.c.l.b16 %v982
      %v1031 = vunpack.c.l.b16 %v983
      %v1032 = vunpack.c.l.b16 %v984
      %v1033 = vunpack.c.l.b16 %v985
      %v1034 = vunpack.c.l.b16 %v986
      %v1035 = vunpack.c.l.b16 %v987
      %v1036 = vunpack.c.l.b16 %v988
      %v1037 = vunpack.c.l.b16 %v989
      %v1038 = vpack.c.b16 %v1023, %v1022
      %v1039 = vpack.c.b16 %v1025, %v1024
      %v1040 = vpack.c.b16 %v1027, %v1026
      %v1041 = vpack.c.b16 %v1029, %v1028
      %v1042 = vpack.c.b16 %v1031, %v1030
      %v1043 = vpack.c.b16 %v1033, %v1032
      %v1044 = vpack.c.b16 %v1035, %v1034
      %v1045 = vpack.c.b16 %v1037, %v1036
      %1054 = vmatprep.subr.bf16.mxu0 0
      %1055 = vmatpush1.bf16.msra.mxu0 %v1045
      %1056 = vmatprep.subr.bf16.mxu0 0
      %1057 = vmatpush1.bf16.msra.mxu0 %v1044
      %1058 = vmatprep.subr.bf16.mxu0 0
      %1059 = vmatpush1.bf16.msra.mxu0 %v1043
      %1060 = vmatprep.subr.bf16.mxu0 0
      %1061 = vmatpush1.bf16.msra.mxu0 %v1042
      %1062 = vmatprep.subr.bf16.mxu0 0
      %1063 = vmatpush1.bf16.msra.mxu0 %v1041
      %1064 = vmatprep.subr.bf16.mxu0 0
      %1065 = vmatpush1.bf16.msra.mxu0 %v1040
      %1066 = vmatprep.subr.bf16.mxu0 0
      %1067 = vmatpush1.bf16.msra.mxu0 %v1039
      %1068 = vmatprep.subr.bf16.mxu0 0
      %1069 = vmatpush1.bf16.msra.mxu0 %v1038
      %1070 = vmatprep.subr.bf16.mxu0 0
      %1071 = vmatpush2.bf16.msra.mxu0 0
      %1072 = vmatprep.subr.bf16.mxu0 0
      %1073 = vmatpush2.bf16.msra.mxu0 0
      %1074 = vmatprep.subr.bf16.mxu0 0
      %1075 = vmatpush2.bf16.msra.mxu0 0
      %1076 = vmatprep.subr.bf16.mxu0 0
      %1077 = vmatpush2.bf16.msra.mxu0 0
      %1078 = vmatprep.subr.bf16.mxu0 0
      %1079 = vmatpush2.bf16.msra.mxu0 0
      %1080 = vmatprep.subr.bf16.mxu0 0
      %1081 = vmatpush2.bf16.msra.mxu0 0
      %1082 = vmatprep.subr.bf16.mxu0 0
      %1083 = vmatpush2.bf16.msra.mxu0 0
      %1084 = vmatprep.subr.bf16.mxu0 0
      %1085 = vmatpush2.bf16.msra.mxu0 0
      %1086 = vmatprep.mubr.bf16.mxu0 0
      %1087 = vmatmul.mubr.bf16.gmra.mxu0 %v1003
      %v1088 = vpop.f32.mrf.mxu0
      %v1089 = vadd.f32 0.0, %v1088
      %v1090 = vpop.f32.mrf.mxu0
      %v1091 = vpop.f32.mrf.mxu0
      %v1092 = vadd.f32 0.0, %v1091
      %v1093 = vpop.f32.mrf.mxu0
      %1094 = vmatprep.mubr.bf16.mxu0 0
      %1095 = vmatmul.mubr.bf16.gmra.mxu0 %v1002
      %v1096 = vpop.f32.mrf.mxu0
      %v1097 = vadd.f32 0.0, %v1096
      %v1098 = vpop.f32.mrf.mxu0
      %v1099 = vpop.f32.mrf.mxu0
      %v1100 = vpop.f32.mrf.mxu0
      %1101 = vdwg.mxu0
      %v1102 = vadd.f32 %v967, %v1089
      %v1103 = vadd.f32 %v968, %v1092
      %v1104 = vadd.f32 %v969, %v1097
      %v1105 = vld [vmem:[%s192 + $0x10] sm:$0x7]
      %v1106 = vld [vmem:[%s1 + $0x1c0] sm:$0xf]
      %v1107 = vld [vmem:[%s1 + $0x1c4] sm:$0xf]
      %v1108 = vld [vmem:[%s1 + $0x1c8] sm:$0xf]
      %v1109 = vld [vmem:[%s1 + $0x1cc] sm:$0xf]
      %v1110 = vld [vmem:[%s1 + $0x1d0] sm:$0xf]
      %v1111 = vld [vmem:[%s1 + $0x1d4] sm:$0xf]
      %v1112 = vld [vmem:[%s1 + $0x1d8] sm:$0xf]
      %v1113 = vld [vmem:[%s1 + $0x1dc] sm:$0xf]
      %v1114 = vld [vmem:[%s1 + $0x1e0] sm:$0xf]
      %v1115 = vld [vmem:[%s1 + $0x1e4] sm:$0xf]
      %v1116 = vld [vmem:[%s1 + $0x1e8] sm:$0xf]
      %v1117 = vld [vmem:[%s1 + $0x1ec] sm:$0xf]
      %v1118 = vld [vmem:[%s1 + $0x1f0] sm:$0xf]
      %v1119 = vld [vmem:[%s1 + $0x1f4] sm:$0xf]
      %v1120 = vld [vmem:[%s1 + $0x1f8] sm:$0xf]
      %v1121 = vld [vmem:[%s1 + $0x1fc] sm:$0xf]
      %v1123 = vunpack.c.l.b16 %v1105
      %v1124 = vpack.c.b16 %v1123, %v996
      %vm1125 = vsmask.f32 5376
      %v1127 = vshrl.u32 %v998, 16
      %v1129 = vrot.slane %v1127, 2
      %v1130 = vshll.u32 %v998, 16
      %v1132 = vrot.slane %v1130, 3
      %v1133 = vor.u32 %v1129, %v1132
      %v1135 = vshrl.u32 %v1124, 16
      %v1137 = vrot.slane %v1135, 2
      %v1138 = vshll.u32 %v1124, 16
      %v1140 = vrot.slane %v1138, 3
      %v1141 = vor.u32 %v1137, %v1140
      %v1142 = vsel %vm1125, %v1133, %v1141
      %v1161 = vunpack.c.l.b16 %v1106
      %v1162 = vunpack.c.l.b16 %v1107
      %v1163 = vunpack.c.l.b16 %v1108
      %v1164 = vunpack.c.l.b16 %v1109
      %v1165 = vunpack.c.l.b16 %v1110
      %v1166 = vunpack.c.l.b16 %v1111
      %v1167 = vunpack.c.l.b16 %v1112
      %v1168 = vunpack.c.l.b16 %v1113
      %v1169 = vunpack.c.l.b16 %v1114
      %v1170 = vunpack.c.l.b16 %v1115
      %v1171 = vunpack.c.l.b16 %v1116
      %v1172 = vunpack.c.l.b16 %v1117
      %v1173 = vunpack.c.l.b16 %v1118
      %v1174 = vunpack.c.l.b16 %v1119
      %v1175 = vunpack.c.l.b16 %v1120
      %v1176 = vunpack.c.l.b16 %v1121
      %v1177 = vpack.c.b16 %v1162, %v1161
      %v1178 = vpack.c.b16 %v1164, %v1163
      %v1179 = vpack.c.b16 %v1166, %v1165
      %v1180 = vpack.c.b16 %v1168, %v1167
      %v1181 = vpack.c.b16 %v1170, %v1169
      %v1182 = vpack.c.b16 %v1172, %v1171
      %v1183 = vpack.c.b16 %v1174, %v1173
      %v1184 = vpack.c.b16 %v1176, %v1175
      %1193 = vmatprep.subr.bf16.mxu0 0
      %1194 = vmatpush1.bf16.msra.mxu0 %v1184
      %1195 = vmatprep.subr.bf16.mxu0 0
      %1196 = vmatpush1.bf16.msra.mxu0 %v1183
      %1197 = vmatprep.subr.bf16.mxu0 0
      %1198 = vmatpush1.bf16.msra.mxu0 %v1182
      %1199 = vmatprep.subr.bf16.mxu0 0
      %1200 = vmatpush1.bf16.msra.mxu0 %v1181
      %1201 = vmatprep.subr.bf16.mxu0 0
      %1202 = vmatpush1.bf16.msra.mxu0 %v1180
      %1203 = vmatprep.subr.bf16.mxu0 0
      %1204 = vmatpush1.bf16.msra.mxu0 %v1179
      %1205 = vmatprep.subr.bf16.mxu0 0
      %1206 = vmatpush1.bf16.msra.mxu0 %v1178
      %1207 = vmatprep.subr.bf16.mxu0 0
      %1208 = vmatpush1.bf16.msra.mxu0 %v1177
      %1209 = vmatprep.subr.bf16.mxu0 0
      %1210 = vmatpush2.bf16.msra.mxu0 0
      %1211 = vmatprep.subr.bf16.mxu0 0
      %1212 = vmatpush2.bf16.msra.mxu0 0
      %1213 = vmatprep.subr.bf16.mxu0 0
      %1214 = vmatpush2.bf16.msra.mxu0 0
      %1215 = vmatprep.subr.bf16.mxu0 0
      %1216 = vmatpush2.bf16.msra.mxu0 0
      %1217 = vmatprep.subr.bf16.mxu0 0
      %1218 = vmatpush2.bf16.msra.mxu0 0
      %1219 = vmatprep.subr.bf16.mxu0 0
      %1220 = vmatpush2.bf16.msra.mxu0 0
      %1221 = vmatprep.subr.bf16.mxu0 0
      %1222 = vmatpush2.bf16.msra.mxu0 0
      %1223 = vmatprep.subr.bf16.mxu0 0
      %1224 = vmatpush2.bf16.msra.mxu0 0
      %1225 = vmatprep.mubr.bf16.mxu0 0
      %1226 = vmatmul.mubr.bf16.gmra.mxu0 %v1142
      %v1227 = vpop.f32.mrf.mxu0
      %v1228 = vadd.f32 0.0, %v1227
      %v1229 = vpop.f32.mrf.mxu0
      %v1230 = vpop.f32.mrf.mxu0
      %v1231 = vadd.f32 0.0, %v1230
      %v1232 = vpop.f32.mrf.mxu0
      %1233 = vmatprep.mubr.bf16.mxu0 0
      %1234 = vmatmul.mubr.bf16.gmra.mxu0 %v1141
      %v1235 = vpop.f32.mrf.mxu0
      %v1236 = vadd.f32 0.0, %v1235
      %v1237 = vpop.f32.mrf.mxu0
      %v1238 = vpop.f32.mrf.mxu0
      %v1239 = vpop.f32.mrf.mxu0
      %1240 = vdwg.mxu0
      %v1241 = vadd.f32 %v1102, %v1228
      %v1242 = vadd.f32 %v1103, %v1231
      %v1243 = vadd.f32 %v1104, %v1236
      %v1244 = vld [vmem:[%s192 + $0x4] sm:$0x8]
      %v1245 = vld [vmem:[%s1 + $0x200] sm:$0xf]
      %v1246 = vld [vmem:[%s1 + $0x204] sm:$0xf]
      %v1247 = vld [vmem:[%s1 + $0x208] sm:$0xf]
      %v1248 = vld [vmem:[%s1 + $0x20c] sm:$0xf]
      %v1249 = vld [vmem:[%s1 + $0x210] sm:$0xf]
      %v1250 = vld [vmem:[%s1 + $0x214] sm:$0xf]
      %v1251 = vld [vmem:[%s1 + $0x218] sm:$0xf]
      %v1252 = vld [vmem:[%s1 + $0x21c] sm:$0xf]
      %v1253 = vld [vmem:[%s1 + $0x220] sm:$0xf]
      %v1254 = vld [vmem:[%s1 + $0x224] sm:$0xf]
      %v1255 = vld [vmem:[%s1 + $0x228] sm:$0xf]
      %v1256 = vld [vmem:[%s1 + $0x22c] sm:$0xf]
      %v1257 = vld [vmem:[%s1 + $0x230] sm:$0xf]
      %v1258 = vld [vmem:[%s1 + $0x234] sm:$0xf]
      %v1259 = vld [vmem:[%s1 + $0x238] sm:$0xf]
      %v1260 = vld [vmem:[%s1 + $0x23c] sm:$0xf]
      %v1262 = vunpack.c.l.b16 %v1244
      %v1263 = vpack.c.b16 %v995, %v1262
      %v1264 = vrot.slane %v1263, 3
      %v1265 = vrot.slane %v1124, 3
      %v1266 = vsel %vm607, %v1264, %v1265
      %v1285 = vunpack.c.l.b16 %v1245
      %v1286 = vunpack.c.l.b16 %v1246
      %v1287 = vunpack.c.l.b16 %v1247
      %v1288 = vunpack.c.l.b16 %v1248
      %v1289 = vunpack.c.l.b16 %v1249
      %v1290 = vunpack.c.l.b16 %v1250
      %v1291 = vunpack.c.l.b16 %v1251
      %v1292 = vunpack.c.l.b16 %v1252
      %v1293 = vunpack.c.l.b16 %v1253
      %v1294 = vunpack.c.l.b16 %v1254
      %v1295 = vunpack.c.l.b16 %v1255
      %v1296 = vunpack.c.l.b16 %v1256
      %v1297 = vunpack.c.l.b16 %v1257
      %v1298 = vunpack.c.l.b16 %v1258
      %v1299 = vunpack.c.l.b16 %v1259
      %v1300 = vunpack.c.l.b16 %v1260
      %v1301 = vpack.c.b16 %v1286, %v1285
      %v1302 = vpack.c.b16 %v1288, %v1287
      %v1303 = vpack.c.b16 %v1290, %v1289
      %v1304 = vpack.c.b16 %v1292, %v1291
      %v1305 = vpack.c.b16 %v1294, %v1293
      %v1306 = vpack.c.b16 %v1296, %v1295
      %v1307 = vpack.c.b16 %v1298, %v1297
      %v1308 = vpack.c.b16 %v1300, %v1299
      %1317 = vmatprep.subr.bf16.mxu0 0
      %1318 = vmatpush1.bf16.msra.mxu0 %v1308
      %1319 = vmatprep.subr.bf16.mxu0 0
      %1320 = vmatpush1.bf16.msra.mxu0 %v1307
      %1321 = vmatprep.subr.bf16.mxu0 0
      %1322 = vmatpush1.bf16.msra.mxu0 %v1306
      %1323 = vmatprep.subr.bf16.mxu0 0
      %1324 = vmatpush1.bf16.msra.mxu0 %v1305
      %1325 = vmatprep.subr.bf16.mxu0 0
      %1326 = vmatpush1.bf16.msra.mxu0 %v1304
      %1327 = vmatprep.subr.bf16.mxu0 0
      %1328 = vmatpush1.bf16.msra.mxu0 %v1303
      %1329 = vmatprep.subr.bf16.mxu0 0
      %1330 = vmatpush1.bf16.msra.mxu0 %v1302
      %1331 = vmatprep.subr.bf16.mxu0 0
      %1332 = vmatpush1.bf16.msra.mxu0 %v1301
      %1333 = vmatprep.subr.bf16.mxu0 0
      %1334 = vmatpush2.bf16.msra.mxu0 0
      %1335 = vmatprep.subr.bf16.mxu0 0
      %1336 = vmatpush2.bf16.msra.mxu0 0
      %1337 = vmatprep.subr.bf16.mxu0 0
      %1338 = vmatpush2.bf16.msra.mxu0 0
      %1339 = vmatprep.subr.bf16.mxu0 0
      %1340 = vmatpush2.bf16.msra.mxu0 0
      %1341 = vmatprep.subr.bf16.mxu0 0
      %1342 = vmatpush2.bf16.msra.mxu0 0
      %1343 = vmatprep.subr.bf16.mxu0 0
      %1344 = vmatpush2.bf16.msra.mxu0 0
      %1345 = vmatprep.subr.bf16.mxu0 0
      %1346 = vmatpush2.bf16.msra.mxu0 0
      %1347 = vmatprep.subr.bf16.mxu0 0
      %1348 = vmatpush2.bf16.msra.mxu0 0
      %1349 = vmatprep.mubr.bf16.mxu0 0
      %1350 = vmatmul.mubr.bf16.gmra.mxu0 %v1266
      %v1351 = vpop.f32.mrf.mxu0
      %v1352 = vadd.f32 0.0, %v1351
      %v1353 = vpop.f32.mrf.mxu0
      %v1354 = vpop.f32.mrf.mxu0
      %v1355 = vadd.f32 0.0, %v1354
      %v1356 = vpop.f32.mrf.mxu0
      %1357 = vmatprep.mubr.bf16.mxu0 0
      %1358 = vmatmul.mubr.bf16.gmra.mxu0 %v1265
      %v1359 = vpop.f32.mrf.mxu0
      %v1360 = vadd.f32 0.0, %v1359
      %v1361 = vpop.f32.mrf.mxu0
      %v1362 = vpop.f32.mrf.mxu0
      %v1363 = vpop.f32.mrf.mxu0
      %1364 = vdwg.mxu0
      %v1365 = vadd.f32 %v1241, %v1352
      %v1366 = vadd.f32 %v1242, %v1355
      %v1367 = vadd.f32 %v1243, %v1360
      %v1368 = vld [vmem:[%s2] sm:$0x1]
      %v1370 = vlaneseq
      %v1371 = vshrl.u32 %v1370, 7
      %v1372 = vsub.s32 0, %v1371
      %v1373 = vrot.slane %v1368, %v1372
      %v1375 = vadd.f32 %v1365, %v1373
      %v1376 = vadd.f32 %v1366, %v1373
      %v1377 = vadd.f32 %v1367, %v1373
      %v1378 = vmax.f32 %v1375, 0.0
      %v1379 = vmax.f32 %v1376, 0.0
      %v1380 = vmax.f32 %v1377, 0.0
      %v1381 = vld [vmem:[%s3] sm:$0xff]
      %v1382 = vld [vmem:[%s3 + $0x8] sm:$0xff]
      %v1383 = vld [vmem:[%s3 + $0x10] sm:$0xff]
      %1385 = vset.pattern.permute.xlu0 0
      %1386 = vperm.xlu0 %1385, %v1381
      %v1387 = vpop.permute.xlu0 %1386
      %1390 = vset.pattern.permute.xlu0 0
      %1391 = vperm.xlu0 %1390, %v1382
      %v1392 = vpop.permute.xlu0 %1391
      %1395 = vset.pattern.permute.xlu0 0
      %1396 = vperm.xlu0 %1395, %v1383
      %v1397 = vpop.permute.xlu0 %1396
      %v1399 = vmul.f32 %v1378, %v1387
      %v1400 = vmul.f32 %v1379, %v1392
      %v1401 = vmul.f32 %v1380, %v1397
      %vm1402 = vcmask 1043456
      %vm1403 = vsmask.f32 3328
      %vm1404 = vmand %vm1402, %vm1403
      %v1405 = vld [vmem:[%s197] sm:$0xf]
      %v1406 = vsel %vm1404, 0, %v1405
      %1407 = vst [vmem:[%s197] sm:$0xf] %v1406
      %v1408 = vpack.c.bf16 %v1400, %v1399
      %v1409 = vpack.c.bf16 %v1401, %v1401
      %v1412 = vunpack.c.l.b16 %v1408
      %v1413 = vunpack.c.h.b16 %v1408
      %v1414 = vunpack.c.l.b16 %v1409
      %v1415 = vpack.c.b16 %v1412, %v1412
      %v1416 = vpack.c.b16 %v1413, %v1413
      %v1417 = vpack.c.b16 %v1414, %v1414
      %vm1418 = vsmask.f32 7440
      %vm1419 = vmor %vm1403, %vm1418
      %v1421 = vshll.u32 %v1415, 16
      %v1423 = vrot.slane %v1421, 5
      %v1424 = vshrl.u32 %v1415, 16
      %v1426 = vrot.slane %v1424, 4
      %v1427 = vor.u32 %v1426, %v1423
      %v1428 = vrot.slane %v1427, 4
      %v1430 = vshll.u32 %v1416, 16
      %v1432 = vrot.slane %v1430, 5
      %v1433 = vsel %vm1419, %v1428, %v1432
      %v1434 = vshrl.u32 %v1416, 16
      %v1436 = vrot.slane %v1434, 4
      %v1437 = vor.u32 %v1436, %v1432
      %v1438 = vrot.slane %v1437, 4
      %v1440 = vshll.u32 %v1417, 16
      %v1442 = vrot.slane %v1440, 5
      %v1443 = vsel %vm1419, %v1438, %v1442
      %v1444 = vshrl.u32 %v1417, 16
      %v1446 = vrot.slane %v1444, 4
      %v1447 = vor.u32 %v1446, %v1442
      %v1448 = vrot.slane %v1447, 4
      %vm1453 = vcmask 1043459
      %vm1454 = vsmask.f32 7950
      %vm1455 = vmand %vm1453, %vm1454
      %v1456 = vld [vmem:[%s197] sm:$0x8]
      %v1457 = vsel %vm1455, %v1423, %v1456
      %1458 = vst [vmem:[%s197] sm:$0x8] %v1457
      %1459 = vst [vmem:[%s197 + $0x4] sm:$0xf] %v1433
      %1460 = vst [vmem:[%s197 + $0x8] sm:$0xf] %v1443
      %v1461 = vld [vmem:[%s197 + $0xc] sm:$0xf]
      %v1462 = vsel %vm1404, %v1448, %v1461
      %1463 = vst [vmem:[%s197 + $0xc] sm:$0xf] %v1462
      %v1464 = vld [vmem:[%s197 + $0xc] sm:$0x8]
      %v1465 = vsel %vm1455, 0, %v1464
      %1466 = vst [vmem:[%s197 + $0xc] sm:$0x8] %v1465
      %1467 = vst [vmem:[%s197 + $0x10] sm:$0xf] 0
      %1468 = vst [vmem:[%s197 + $0x14] sm:$0x1] 0
      %p1469 = scmp.lt.s32.totalorder %s15, 1
      %s1470 = scalar_select %p1469, %s15, 1
      %s1471 = smul.addr %s1470, 6
      %s1472 = smul.addr %s1471, 4
      %s1473 = scalar_lea.vmem %s4, %s1472
      // Predicated region
      $region37: #{colornet_forward.18} parent=35 // pred_check
        %p1474 = pneg %p122
      $region38: #{colornet_forward.18} parent=35 // pred_check_branch
        %1476 = sbr.rel (%p1474) target = $region40
      $region39: #{colornet_forward.18} parent=35 // pred_region
        _
      $region40: #{colornet_forward.18} parent=35 // pred_fallthru
        _
    $region36: #{colornet_forward.18} parent=5 // pred_fallthru
      _
    %p1477 = scmp.le.s32.totalorder 2, %s10
    // Predicated region
    $region41: #{colornet_forward.18} parent=5 // pred_check
      %p1478 = pneg %p1477
    $region42: #{colornet_forward.18} parent=5 // pred_check_branch
      %1480 = sbr.rel (%p1478) target = $region44
    $region43: #{colornet_forward.18} parent=5 // pred_region
      %s1481 = ssub.s32 %s10, 2
      // Predicated region
      $region45: #{colornet_forward.18} parent=43 // pred_check
        %p1482 = pneg %p128
      $region46: #{colornet_forward.18} parent=43 // pred_check_branch
        %1484 = sbr.rel (%p1482) target = $region48
      $region47: #{colornet_forward.18} parent=43 // pred_region
        %p1485 = scmp.lt.s32.totalorder %s16, 1
        %s1486 = scalar_select %p1485, %s16, 1
        %s1487 = smul.addr %s1486, 6
        %s1488 = smul.addr %s1487, 4
        %s1489 = scalar_lea.vmem %s4, %s1488
      $region48: #{colornet_forward.18} parent=43 // pred_fallthru
        _
    $region44: #{colornet_forward.18} parent=5 // pred_fallthru
      _
  $region6: #{colornet_forward.18} parent=0 // loop_footer
    %s14 = sadd.s32 1, %s10
  $region7: #{colornet_forward.18} parent=0 // loop_footer_branch
    %9 = sbr.rel target = $region3
  $region8: #{colornet_forward.18} parent=0 // loop_exit
    _

// kernel: colornet_forward.17
$region0: #{colornet_forward.17}
  #allocation0 [shape = 'u32[]', space=smem, size = 0x4, offset = 0x4, fixed_abs, tag = 'smem constant byte address 0x4 - core index']
  #allocation1 [shape = 'u32[144,128]{1,0:T(1,128)}', space=vmem, size = 0x12000, scoped, tag = 'internal scratch']
  %s0 = inlined_call_operand.vmem [shape: bf16[2,42,128], index: 0, kind: input, shape index: {}]
  %s1 = inlined_call_operand.vmem [shape: bf16[1152,128], index: 1, kind: input, shape index: {}]
  %s2 = inlined_call_operand.vmem [shape: f32[1,128], index: 2, kind: input, shape index: {}]
  %s3 = inlined_call_operand.vmem [shape: f32[24,1], index: 3, kind: input, shape index: {}]
  %s4 = inlined_call_operand.vmem [shape: bf16[2,42,128], index: 4, kind: input, shape index: {}]
  %s5 = inlined_call_operand.vmem [shape: bf16[2,42,128], index: 5, kind: output, shape index: {}]
  %s6 = sld [smem:[#allocation0]]
  $region53: #{colornet_forward.17} parent=0
    _
  %s8 = ssub.s32 1, %s6
  %s9 = scalar_select 0, %s8, %s6
  loop: start=0, step=1, limit=4
  $region2: #{colornet_forward.17} parent=0 // loop_pre_header
    _
  $region3: #{colornet_forward.17} parent=0 // loop_header
    %s11 = sphi 0, %s15
    %p12 = scmp.ge.s32.totalorder %s11, 4
    %s21 = sphi 0, %s23
    %s24 = sphi 0, %s21
    %s25 = sphi 0, %s24
    %s41 = sphi 0, %s25
    %s45 = sphi 0, %s45
    %s47 = sphi 0, %s45
    %s48 = sphi 0, %s47
    %s62 = sphi 0, %s48
    %s66 = sphi 0, %s66
    %s68 = sphi 0, %s66
    %s69 = sphi 0, %s68
    %s83 = sphi 0, %s69
    %s87 = sphi 0, %s87
    %s89 = sphi 0, %s87
    %s90 = sphi 0, %s89
    %s104 = sphi 0, %s90
    %s110 = sphi 0, %s112
    %s113 = sphi 0, %s110
    %s114 = sphi 0, %s113
    %s130 = sphi 0, %s114
    %s136 = sphi 0, %s138
    %s139 = sphi 0, %s136
    %s140 = sphi 0, %s139
    %s156 = sphi 0, %s140
  $region4: #{colornet_forward.17} parent=0 // loop_header_branch
    %14 = sbr.rel (%p12) target = $region8
  $region5: #{colornet_forward.17} parent=0 // loop_body
    %s16 = ssub.s32 %s11, 1
    %s17 = ssub.s32 %s11, 2
    %s18 = sadd.s32 %s11, 1
    %s19 = ssub.s32 %s11, %s18
    %p20 = scmp.eq.s32.totalorder %s19, 0
    %s22 = sadd.s32 %s21, 1
    %s23 = scalar_select %p20, %s21, %s22
    %p26 = pneg %p20
    %p27 = scmp.eq.s32.totalorder %s11, 1
    %p28 = por %p26, %p27
    %p29 = scmp.ne.s32.totalorder %s21, %s24
    %p30 = scmp.eq.s32.totalorder %s11, 0
    %p31 = por %p29, %p30
    %p32 = scmp.ne.s32.totalorder %s21, %s24
    %p33 = scmp.eq.s32.totalorder %s16, 1
    %p34 = por %p32, %p33
    %p35 = scmp.ne.s32.totalorder %s24, %s25
    %p36 = scmp.eq.s32.totalorder %s16, 0
    %p37 = por %p35, %p36
    %p38 = scmp.ne.s32.totalorder %s24, %s25
    %p39 = scmp.eq.s32.totalorder %s17, 1
    %p40 = por %p38, %p39
    %p42 = scmp.ne.s32.totalorder %s25, %s41
    %p43 = scmp.eq.s32.totalorder %s17, 0
    %p44 = por %p42, %p43
    %s46 = sadd.s32 %s45, 1
    %p49 = scmp.eq.s32.totalorder %s11, 1
    %p50 = scmp.ne.s32.totalorder %s45, %s47
    %p51 = scmp.eq.s32.totalorder %s11, 0
    %p52 = por %p50, %p51
    %p53 = scmp.ne.s32.totalorder %s45, %s47
    %p54 = scmp.eq.s32.totalorder %s16, 1
    %p55 = por %p53, %p54
    %p56 = scmp.ne.s32.totalorder %s47, %s48
    %p57 = scmp.eq.s32.totalorder %s16, 0
    %p58 = por %p56, %p57
    %p59 = scmp.ne.s32.totalorder %s47, %s48
    %p60 = scmp.eq.s32.totalorder %s17, 1
    %p61 = por %p59, %p60
    %p63 = scmp.ne.s32.totalorder %s48, %s62
    %p64 = scmp.eq.s32.totalorder %s17, 0
    %p65 = por %p63, %p64
    %s67 = sadd.s32 %s66, 1
    %p70 = scmp.eq.s32.totalorder %s11, 1
    %p71 = scmp.ne.s32.totalorder %s66, %s68
    %p72 = scmp.eq.s32.totalorder %s11, 0
    %p73 = por %p71, %p72
    %p74 = scmp.ne.s32.totalorder %s66, %s68
    %p75 = scmp.eq.s32.totalorder %s16, 1
    %p76 = por %p74, %p75
    %p77 = scmp.ne.s32.totalorder %s68, %s69
    %p78 = scmp.eq.s32.totalorder %s16, 0
    %p79 = por %p77, %p78
    %p80 = scmp.ne.s32.totalorder %s68, %s69
    %p81 = scmp.eq.s32.totalorder %s17, 1
    %p82 = por %p80, %p81
    %p84 = scmp.ne.s32.totalorder %s69, %s83
    %p85 = scmp.eq.s32.totalorder %s17, 0
    %p86 = por %p84, %p85
    %s88 = sadd.s32 %s87, 1
    %p91 = scmp.eq.s32.totalorder %s11, 1
    %p92 = scmp.ne.s32.totalorder %s87, %s89
    %p93 = scmp.eq.s32.totalorder %s11, 0
    %p94 = por %p92, %p93
    %p95 = scmp.ne.s32.totalorder %s87, %s89
    %p96 = scmp.eq.s32.totalorder %s16, 1
    %p97 = por %p95, %p96
    %p98 = scmp.ne.s32.totalorder %s89, %s90
    %p99 = scmp.eq.s32.totalorder %s16, 0
    %p100 = por %p98, %p99
    %p101 = scmp.ne.s32.totalorder %s89, %s90
    %p102 = scmp.eq.s32.totalorder %s17, 1
    %p103 = por %p101, %p102
    %p105 = scmp.ne.s32.totalorder %s90, %s104
    %p106 = scmp.eq.s32.totalorder %s17, 0
    %p107 = por %p105, %p106
    %s108 = ssub.s32 %s11, %s18
    %p109 = scmp.eq.s32.totalorder %s108, 0
    %s111 = sadd.s32 %s110, 1
    %s112 = scalar_select %p109, %s110, %s111
    %p115 = pneg %p109
    %p116 = scmp.eq.s32.totalorder %s11, 1
    %p117 = por %p115, %p116
    %p118 = scmp.ne.s32.totalorder %s110, %s113
    %p119 = scmp.eq.s32.totalorder %s11, 0
    %p120 = por %p118, %p119
    %p121 = scmp.ne.s32.totalorder %s110, %s113
    %p122 = scmp.eq.s32.totalorder %s16, 1
    %p123 = por %p121, %p122
    %p124 = scmp.ne.s32.totalorder %s113, %s114
    %p125 = scmp.eq.s32.totalorder %s16, 0
    %p126 = por %p124, %p125
    %p127 = scmp.ne.s32.totalorder %s113, %s114
    %p128 = scmp.eq.s32.totalorder %s17, 1
    %p129 = por %p127, %p128
    %p131 = scmp.ne.s32.totalorder %s114, %s130
    %p132 = scmp.eq.s32.totalorder %s17, 0
    %p133 = por %p131, %p132
    %s134 = ssub.s32 %s11, %s18
    %p135 = scmp.eq.s32.totalorder %s134, 0
    %s137 = sadd.s32 %s136, 1
    %s138 = scalar_select %p135, %s136, %s137
    %p141 = pneg %p135
    %p142 = scmp.eq.s32.totalorder %s11, 1
    %p143 = por %p141, %p142
    %p144 = scmp.ne.s32.totalorder %s136, %s139
    %p145 = scmp.eq.s32.totalorder %s11, 0
    %p146 = por %p144, %p145
    %p147 = scmp.ne.s32.totalorder %s136, %s139
    %p148 = scmp.eq.s32.totalorder %s16, 1
    %p149 = por %p147, %p148
    %p150 = scmp.ne.s32.totalorder %s139, %s140
    %p151 = scmp.eq.s32.totalorder %s16, 0
    %p152 = por %p150, %p151
    %p153 = scmp.ne.s32.totalorder %s139, %s140
    %p154 = scmp.eq.s32.totalorder %s17, 1
    %p155 = por %p153, %p154
    %p157 = scmp.ne.s32.totalorder %s140, %s156
    %p158 = scmp.eq.s32.totalorder %s17, 0
    %p159 = por %p157, %p158
    %p160 = scmp.le.s32.totalorder 1, %s11
    %p161 = scmp.lt.s32.totalorder %s11, 3
    %p162 = pnand %p160, %p161
    %p163 = pneg %p162
    // Predicated region
    $region9: #{colornet_forward.17} parent=5 // pred_check
      _
    $region10: #{colornet_forward.17} parent=5 // pred_check_branch
      %165 = sbr.rel (%p162) target = $region12
    $region11: #{colornet_forward.17} parent=5 // pred_region
      %s166 = ssub.s32 %s11, 1
      // Predicated region
      $region13: #{colornet_forward.17} parent=11 // pred_check
        %p167 = pneg %p58
      $region14: #{colornet_forward.17} parent=11 // pred_check_branch
        %169 = sbr.rel (%p167) target = $region16
      $region15: #{colornet_forward.17} parent=11 // pred_region
        _
      $region16: #{colornet_forward.17} parent=11 // pred_fallthru
        _
      // Predicated region
      $region17: #{colornet_forward.17} parent=11 // pred_check
        %p170 = pneg %p79
      $region18: #{colornet_forward.17} parent=11 // pred_check_branch
        %172 = sbr.rel (%p170) target = $region20
      $region19: #{colornet_forward.17} parent=11 // pred_region
        _
      $region20: #{colornet_forward.17} parent=11 // pred_fallthru
        _
      // Predicated region
      $region21: #{colornet_forward.17} parent=11 // pred_check
        %p173 = pneg %p100
      $region22: #{colornet_forward.17} parent=11 // pred_check_branch
        %175 = sbr.rel (%p173) target = $region24
      $region23: #{colornet_forward.17} parent=11 // pred_region
        _
      $region24: #{colornet_forward.17} parent=11 // pred_fallthru
        _
    $region12: #{colornet_forward.17} parent=5 // pred_fallthru
      _
    %p176 = scmp.lt.s32.totalorder %s11, 2
    // Predicated region
    $region25: #{colornet_forward.17} parent=5 // pred_check
      %p177 = pneg %p176
    $region26: #{colornet_forward.17} parent=5 // pred_check_branch
      %179 = sbr.rel (%p177) target = $region28
    $region27: #{colornet_forward.17} parent=5 // pred_region
      // Predicated region
      $region29: #{colornet_forward.17} parent=27 // pred_check
        %p180 = pneg %p31
      $region30: #{colornet_forward.17} parent=27 // pred_check_branch
        %182 = sbr.rel (%p180) target = $region32
      $region31: #{colornet_forward.17} parent=27 // pred_region
        %p183 = scmp.lt.s32.totalorder %s11, 1
        %s184 = scalar_select %p183, %s11, 1
        %s185 = smul.addr %s184, 6
        %s186 = smul.addr %s185, 4
        %s187 = scalar_lea.vmem %s0, %s186
      $region32: #{colornet_forward.17} parent=27 // pred_fallthru
        _
      // Predicated region
      $region33: #{colornet_forward.17} parent=27 // pred_check
        %p188 = pneg %p120
      $region34: #{colornet_forward.17} parent=27 // pred_check_branch
        %190 = sbr.rel (%p188) target = $region36
      $region35: #{colornet_forward.17} parent=27 // pred_region
        %p191 = scmp.lt.s32.totalorder %s11, 1
        %s192 = scalar_select %p191, %s11, 1
        %s193 = smul.addr %s192, 6
        %s194 = smul.addr %s193, 4
        %s195 = scalar_lea.vmem %s4, %s194
      $region36: #{colornet_forward.17} parent=27 // pred_fallthru
        _
    $region28: #{colornet_forward.17} parent=5 // pred_fallthru
      _
    %p196 = scmp.le.s32.totalorder 1, %s11
    %p197 = scmp.lt.s32.totalorder %s11, 3
    %p198 = pnand %p196, %p197
    %p199 = pneg %p198
    // Predicated region
    $region37: #{colornet_forward.17} parent=5 // pred_check
      _
    $region38: #{colornet_forward.17} parent=5 // pred_check_branch
      %201 = sbr.rel (%p198) target = $region40
    $region39: #{colornet_forward.17} parent=5 // pred_region
      %s202 = ssub.s32 %s11, 1
      %p203 = scmp.lt.s32.totalorder %s16, 1
      %s204 = scalar_select %p203, %s16, 1
      %s205 = smul.addr %s204, 6
      %s206 = smul.addr %s205, 4
      %s207 = scalar_lea.vmem %s0, %s206
      %p208 = pneg %p37
      %p209 = pneg %p34
      %p210 = pneg %p58
      %p211 = pneg %p55
      %p212 = pneg %p79
      %p213 = pneg %p76
      %p214 = pneg %p100
      %p215 = pneg %p97
      %p216 = scmp.lt.s32.totalorder %s16, 1
      %s217 = scalar_select %p216, %s16, 1
      %s218 = smul.addr %s217, 6
      %s219 = smul.addr %s218, 4
      %s220 = scalar_lea.vmem %s4, %s219
      %p221 = pneg %p126
      %p222 = pneg %p123
      %p223 = pneg %p152
      %p224 = pneg %p149
      %p225 = scmp.lt.s32.totalorder %s16, 1
      %s226 = scalar_select %p225, %s16, 1
      %s227 = smul.addr %s226, 6
      %s228 = smul.addr %s227, 4
      %s229 = scalar_lea.vmem %s5, %s228
      %p230 = scmp.lt.s32.totalorder %s16, 1
      %s231 = scalar_select %p230, %s16, 1
      %s232 = smul.addr %s231, 6
      %s233 = smul.addr %s232, 4
      %s234 = scalar_lea.vmem %s0, %s233
      %p235 = scmp.lt.s32.totalorder %s16, 1
      %s236 = scalar_select %p235, %s16, 1
      %s237 = smul.addr %s236, 6
      %s238 = smul.addr %s237, 4
      %s239 = scalar_lea.vmem %s4, %s238
      %p240 = scmp.lt.s32.totalorder %s16, 1
      %s241 = scalar_select %p240, %s16, 1
      %s242 = smul.addr %s241, 6
      %s243 = smul.addr %s242, 4
      %s244 = scalar_lea.vmem %s5, %s243
      %v246 = vld [vmem:[%s234] sm:$0xf]
      %v247 = vld [vmem:[%s234 + $0x4] sm:$0xf]
      %v248 = vld [vmem:[%s234 + $0x8] sm:$0xf]
      %v249 = vld [vmem:[%s1] sm:$0xf]
      %v250 = vld [vmem:[%s1 + $0x4] sm:$0xf]
      %v251 = vld [vmem:[%s1 + $0x8] sm:$0xf]
      %v252 = vld [vmem:[%s1 + $0xc] sm:$0xf]
      %v253 = vld [vmem:[%s1 + $0x10] sm:$0xf]
      %v254 = vld [vmem:[%s1 + $0x14] sm:$0xf]
      %v255 = vld [vmem:[%s1 + $0x18] sm:$0xf]
      %v256 = vld [vmem:[%s1 + $0x1c] sm:$0xf]
      %v257 = vld [vmem:[%s1 + $0x20] sm:$0xf]
      %v258 = vld [vmem:[%s1 + $0x24] sm:$0xf]
      %v259 = vld [vmem:[%s1 + $0x28] sm:$0xf]
      %v260 = vld [vmem:[%s1 + $0x2c] sm:$0xf]
      %v261 = vld [vmem:[%s1 + $0x30] sm:$0xf]
      %v262 = vld [vmem:[%s1 + $0x34] sm:$0xf]
      %v263 = vld [vmem:[%s1 + $0x38] sm:$0xf]
      %v264 = vld [vmem:[%s1 + $0x3c] sm:$0xf]
      %v265 = vld [vmem:[%s234 + $0xc] sm:$0x1]
      %v266 = vld [vmem:[%s1 + $0x40] sm:$0xf]
      %v267 = vld [vmem:[%s1 + $0x44] sm:$0xf]
      %v268 = vld [vmem:[%s1 + $0x48] sm:$0xf]
      %v269 = vld [vmem:[%s1 + $0x4c] sm:$0xf]
      %v270 = vld [vmem:[%s1 + $0x50] sm:$0xf]
      %v271 = vld [vmem:[%s1 + $0x54] sm:$0xf]
      %v272 = vld [vmem:[%s1 + $0x58] sm:$0xf]
      %v273 = vld [vmem:[%s1 + $0x5c] sm:$0xf]
      %v274 = vld [vmem:[%s1 + $0x60] sm:$0xf]
      %v275 = vld [vmem:[%s1 + $0x64] sm:$0xf]
      %v276 = vld [vmem:[%s1 + $0x68] sm:$0xf]
      %v277 = vld [vmem:[%s1 + $0x6c] sm:$0xf]
      %v278 = vld [vmem:[%s1 + $0x70] sm:$0xf]
      %v279 = vld [vmem:[%s1 + $0x74] sm:$0xf]
      %v280 = vld [vmem:[%s1 + $0x78] sm:$0xf]
      %v281 = vld [vmem:[%s1 + $0x7c] sm:$0xf]
      %v286 = vunpack.c.l.b16 %v246
      %v287 = vunpack.c.l.b16 %v247
      %v288 = vunpack.c.l.b16 %v248
      %v289 = vunpack.c.l.b16 %v265
      %v290 = vpack.c.b16 %v287, %v286
      %v291 = vpack.c.b16 %v289, %v288
      %vm292 = vsmask.f32 7424
      %v294 = vshrl.u32 %v290, 16
      %v296 = vshll.u32 %v290, 16
      %v298 = vrot.slane %v296, 1
      %v299 = vor.u32 %v294, %v298
      %v301 = vshll.u32 %v291, 16
      %v303 = vrot.slane %v301, 1
      %v304 = vsel %vm292, %v299, %v303
      %v305 = vshrl.u32 %v291, 16
      %v307 = vor.u32 %v305, %v303
      %v326 = vunpack.c.l.b16 %v266
      %v327 = vunpack.c.l.b16 %v267
      %v328 = vunpack.c.l.b16 %v268
      %v329 = vunpack.c.l.b16 %v269
      %v330 = vunpack.c.l.b16 %v270
      %v331 = vunpack.c.l.b16 %v271
      %v332 = vunpack.c.l.b16 %v272
      %v333 = vunpack.c.l.b16 %v273
      %v334 = vunpack.c.l.b16 %v274
      %v335 = vunpack.c.l.b16 %v275
      %v336 = vunpack.c.l.b16 %v276
      %v337 = vunpack.c.l.b16 %v277
      %v338 = vunpack.c.l.b16 %v278
      %v339 = vunpack.c.l.b16 %v279
      %v340 = vunpack.c.l.b16 %v280
      %v341 = vunpack.c.l.b16 %v281
      %v342 = vpack.c.b16 %v327, %v326
      %v343 = vpack.c.b16 %v329, %v328
      %v344 = vpack.c.b16 %v331, %v330
      %v345 = vpack.c.b16 %v333, %v332
      %v346 = vpack.c.b16 %v335, %v334
      %v347 = vpack.c.b16 %v337, %v336
      %v348 = vpack.c.b16 %v339, %v338
      %v349 = vpack.c.b16 %v341, %v340
      %358 = vmatprep.subr.bf16.mxu0 0
      %359 = vmatpush1.bf16.msra.mxu0 %v349
      %360 = vmatprep.subr.bf16.mxu0 0
      %361 = vmatpush1.bf16.msra.mxu0 %v348
      %362 = vmatprep.subr.bf16.mxu0 0
      %363 = vmatpush1.bf16.msra.mxu0 %v347
      %364 = vmatprep.subr.bf16.mxu0 0
      %365 = vmatpush1.bf16.msra.mxu0 %v346
      %366 = vmatprep.subr.bf16.mxu0 0
      %367 = vmatpush1.bf16.msra.mxu0 %v345
      %368 = vmatprep.subr.bf16.mxu0 0
      %369 = vmatpush1.bf16.msra.mxu0 %v344
      %370 = vmatprep.subr.bf16.mxu0 0
      %371 = vmatpush1.bf16.msra.mxu0 %v343
      %372 = vmatprep.subr.bf16.mxu0 0
      %373 = vmatpush1.bf16.msra.mxu0 %v342
      %374 = vmatprep.subr.bf16.mxu0 0
      %375 = vmatpush2.bf16.msra.mxu0 0
      %376 = vmatprep.subr.bf16.mxu0 0
      %377 = vmatpush2.bf16.msra.mxu0 0
      %378 = vmatprep.subr.bf16.mxu0 0
      %379 = vmatpush2.bf16.msra.mxu0 0
      %380 = vmatprep.subr.bf16.mxu0 0
      %381 = vmatpush2.bf16.msra.mxu0 0
      %382 = vmatprep.subr.bf16.mxu0 0
      %383 = vmatpush2.bf16.msra.mxu0 0
      %384 = vmatprep.subr.bf16.mxu0 0
      %385 = vmatpush2.bf16.msra.mxu0 0
      %386 = vmatprep.subr.bf16.mxu0 0
      %387 = vmatpush2.bf16.msra.mxu0 0
      %388 = vmatprep.subr.bf16.mxu0 0
      %389 = vmatpush2.bf16.msra.mxu0 0
      %390 = vmatprep.mubr.bf16.mxu0 0
      %391 = vmatmul.mubr.bf16.gmra.mxu0 %v304
      %v392 = vpop.f32.mrf.mxu0
      %v393 = vadd.f32 0.0, %v392
      %v394 = vpop.f32.mrf.mxu0
      %v395 = vpop.f32.mrf.mxu0
      %v396 = vadd.f32 0.0, %v395
      %v397 = vpop.f32.mrf.mxu0
      %398 = vmatprep.mubr.bf16.mxu0 0
      %399 = vmatmul.mubr.bf16.gmra.mxu0 %v307
      %v400 = vpop.f32.mrf.mxu0
      %v401 = vadd.f32 0.0, %v400
      %v402 = vpop.f32.mrf.mxu0
      %v403 = vpop.f32.mrf.mxu0
      %v404 = vpop.f32.mrf.mxu0
      %405 = vdwg.mxu0
      %v406 = vpack.c.b16 %v288, %v288
      %v425 = vunpack.c.l.b16 %v249
      %v426 = vunpack.c.l.b16 %v250
      %v427 = vunpack.c.l.b16 %v251
      %v428 = vunpack.c.l.b16 %v252
      %v429 = vunpack.c.l.b16 %v253
      %v430 = vunpack.c.l.b16 %v254
      %v431 = vunpack.c.l.b16 %v255
      %v432 = vunpack.c.l.b16 %v256
      %v433 = vunpack.c.l.b16 %v257
      %v434 = vunpack.c.l.b16 %v258
      %v435 = vunpack.c.l.b16 %v259
      %v436 = vunpack.c.l.b16 %v260
      %v437 = vunpack.c.l.b16 %v261
      %v438 = vunpack.c.l.b16 %v262
      %v439 = vunpack.c.l.b16 %v263
      %v440 = vunpack.c.l.b16 %v264
      %v441 = vpack.c.b16 %v426, %v425
      %v442 = vpack.c.b16 %v428, %v427
      %v443 = vpack.c.b16 %v430, %v429
      %v444 = vpack.c.b16 %v432, %v431
      %v445 = vpack.c.b16 %v434, %v433
      %v446 = vpack.c.b16 %v436, %v435
      %v447 = vpack.c.b16 %v438, %v437
      %v448 = vpack.c.b16 %v440, %v439
      %457 = vmatprep.subr.bf16.mxu0 0
      %458 = vmatpush1.bf16.msra.mxu0 %v448
      %459 = vmatprep.subr.bf16.mxu0 0
      %460 = vmatpush1.bf16.msra.mxu0 %v447
      %461 = vmatprep.subr.bf16.mxu0 0
      %462 = vmatpush1.bf16.msra.mxu0 %v446
      %463 = vmatprep.subr.bf16.mxu0 0
      %464 = vmatpush1.bf16.msra.mxu0 %v445
      %465 = vmatprep.subr.bf16.mxu0 0
      %466 = vmatpush1.bf16.msra.mxu0 %v444
      %467 = vmatprep.subr.bf16.mxu0 0
      %468 = vmatpush1.bf16.msra.mxu0 %v443
      %469 = vmatprep.subr.bf16.mxu0 0
      %470 = vmatpush1.bf16.msra.mxu0 %v442
      %471 = vmatprep.subr.bf16.mxu0 0
      %472 = vmatpush1.bf16.msra.mxu0 %v441
      %473 = vmatprep.subr.bf16.mxu0 0
      %474 = vmatpush2.bf16.msra.mxu0 0
      %475 = vmatprep.subr.bf16.mxu0 0
      %476 = vmatpush2.bf16.msra.mxu0 0
      %477 = vmatprep.subr.bf16.mxu0 0
      %478 = vmatpush2.bf16.msra.mxu0 0
      %479 = vmatprep.subr.bf16.mxu0 0
      %480 = vmatpush2.bf16.msra.mxu0 0
      %481 = vmatprep.subr.bf16.mxu0 0
      %482 = vmatpush2.bf16.msra.mxu0 0
      %483 = vmatprep.subr.bf16.mxu0 0
      %484 = vmatpush2.bf16.msra.mxu0 0
      %485 = vmatprep.subr.bf16.mxu0 0
      %486 = vmatpush2.bf16.msra.mxu0 0
      %487 = vmatprep.subr.bf16.mxu0 0
      %488 = vmatpush2.bf16.msra.mxu0 0
      %489 = vmatprep.mubr.bf16.mxu0 0
      %490 = vmatmul.mubr.bf16.gmra.mxu0 %v290
      %v491 = vpop.f32.mrf.mxu0
      %v492 = vadd.f32 %v393, %v491
      %v493 = vpop.f32.mrf.mxu0
      %v494 = vpop.f32.mrf.mxu0
      %v495 = vadd.f32 %v396, %v494
      %v496 = vpop.f32.mrf.mxu0
      %497 = vmatprep.mubr.bf16.mxu0 0
      %498 = vmatmul.mubr.bf16.gmra.mxu0 %v406
      %v499 = vpop.f32.mrf.mxu0
      %v500 = vadd.f32 %v401, %v499
      %v501 = vpop.f32.mrf.mxu0
      %v502 = vpop.f32.mrf.mxu0
      %v503 = vpop.f32.mrf.mxu0
      %504 = vdwg.mxu0
      %v505 = vld [vmem:[%s234] sm:$0xe]
      %v506 = vld [vmem:[%s1 + $0x80] sm:$0xf]
      %v507 = vld [vmem:[%s1 + $0x84] sm:$0xf]
      %v508 = vld [vmem:[%s1 + $0x88] sm:$0xf]
      %v509 = vld [vmem:[%s1 + $0x8c] sm:$0xf]
      %v510 = vld [vmem:[%s1 + $0x90] sm:$0xf]
      %v511 = vld [vmem:[%s1 + $0x94] sm:$0xf]
      %v512 = vld [vmem:[%s1 + $0x98] sm:$0xf]
      %v513 = vld [vmem:[%s1 + $0x9c] sm:$0xf]
      %v514 = vld [vmem:[%s1 + $0xa0] sm:$0xf]
      %v515 = vld [vmem:[%s1 + $0xa4] sm:$0xf]
      %v516 = vld [vmem:[%s1 + $0xa8] sm:$0xf]
      %v517 = vld [vmem:[%s1 + $0xac] sm:$0xf]
      %v518 = vld [vmem:[%s1 + $0xb0] sm:$0xf]
      %v519 = vld [vmem:[%s1 + $0xb4] sm:$0xf]
      %v520 = vld [vmem:[%s1 + $0xb8] sm:$0xf]
      %v521 = vld [vmem:[%s1 + $0xbc] sm:$0xf]
      %v523 = vunpack.c.l.b16 %v505
      %v524 = vpack.c.b16 %v287, %v523
      %vm525 = vcmask 1046528
      %v526 = vrot.slane %v524, 1
      %v527 = vrot.slane %v291, 1
      %v528 = vsel %vm525, %v526, %v527
      %v547 = vunpack.c.l.b16 %v506
      %v548 = vunpack.c.l.b16 %v507
      %v549 = vunpack.c.l.b16 %v508
      %v550 = vunpack.c.l.b16 %v509
      %v551 = vunpack.c.l.b16 %v510
      %v552 = vunpack.c.l.b16 %v511
      %v553 = vunpack.c.l.b16 %v512
      %v554 = vunpack.c.l.b16 %v513
      %v555 = vunpack.c.l.b16 %v514
      %v556 = vunpack.c.l.b16 %v515
      %v557 = vunpack.c.l.b16 %v516
      %v558 = vunpack.c.l.b16 %v517
      %v559 = vunpack.c.l.b16 %v518
      %v560 = vunpack.c.l.b16 %v519
      %v561 = vunpack.c.l.b16 %v520
      %v562 = vunpack.c.l.b16 %v521
      %v563 = vpack.c.b16 %v548, %v547
      %v564 = vpack.c.b16 %v550, %v549
      %v565 = vpack.c.b16 %v552, %v551
      %v566 = vpack.c.b16 %v554, %v553
      %v567 = vpack.c.b16 %v556, %v555
      %v568 = vpack.c.b16 %v558, %v557
      %v569 = vpack.c.b16 %v560, %v559
      %v570 = vpack.c.b16 %v562, %v561
      %579 = vmatprep.subr.bf16.mxu0 0
      %580 = vmatpush1.bf16.msra.mxu0 %v570
      %581 = vmatprep.subr.bf16.mxu0 0
      %582 = vmatpush1.bf16.msra.mxu0 %v569
      %583 = vmatprep.subr.bf16.mxu0 0
      %584 = vmatpush1.bf16.msra.mxu0 %v568
      %585 = vmatprep.subr.bf16.mxu0 0
      %586 = vmatpush1.bf16.msra.mxu0 %v567
      %587 = vmatprep.subr.bf16.mxu0 0
      %588 = vmatpush1.bf16.msra.mxu0 %v566
      %589 = vmatprep.subr.bf16.mxu0 0
      %590 = vmatpush1.bf16.msra.mxu0 %v565
      %591 = vmatprep.subr.bf16.mxu0 0
      %592 = vmatpush1.bf16.msra.mxu0 %v564
      %593 = vmatprep.subr.bf16.mxu0 0
      %594 = vmatpush1.bf16.msra.mxu0 %v563
      %595 = vmatprep.subr.bf16.mxu0 0
      %596 = vmatpush2.bf16.msra.mxu0 0
      %597 = vmatprep.subr.bf16.mxu0 0
      %598 = vmatpush2.bf16.msra.mxu0 0
      %599 = vmatprep.subr.bf16.mxu0 0
      %600 = vmatpush2.bf16.msra.mxu0 0
      %601 = vmatprep.subr.bf16.mxu0 0
      %602 = vmatpush2.bf16.msra.mxu0 0
      %603 = vmatprep.subr.bf16.mxu0 0
      %604 = vmatpush2.bf16.msra.mxu0 0
      %605 = vmatprep.subr.bf16.mxu0 0
      %606 = vmatpush2.bf16.msra.mxu0 0
      %607 = vmatprep.subr.bf16.mxu0 0
      %608 = vmatpush2.bf16.msra.mxu0 0
      %609 = vmatprep.subr.bf16.mxu0 0
      %610 = vmatpush2.bf16.msra.mxu0 0
      %611 = vmatprep.mubr.bf16.mxu0 0
      %612 = vmatmul.mubr.bf16.gmra.mxu0 %v528
      %v613 = vpop.f32.mrf.mxu0
      %v614 = vadd.f32 0.0, %v613
      %v615 = vpop.f32.mrf.mxu0
      %v616 = vpop.f32.mrf.mxu0
      %v617 = vadd.f32 0.0, %v616
      %v618 = vpop.f32.mrf.mxu0
      %619 = vmatprep.mubr.bf16.mxu0 0
      %620 = vmatmul.mubr.bf16.gmra.mxu0 %v527
      %v621 = vpop.f32.mrf.mxu0
      %v622 = vadd.f32 0.0, %v621
      %v623 = vpop.f32.mrf.mxu0
      %v624 = vpop.f32.mrf.mxu0
      %v625 = vpop.f32.mrf.mxu0
      %626 = vdwg.mxu0
      %v627 = vadd.f32 %v492, %v614
      %v628 = vadd.f32 %v495, %v617
      %v629 = vadd.f32 %v500, %v622
      %v630 = vld [vmem:[%s234] sm:$0x8]
      %v631 = vld [vmem:[%s234 + $0xc] sm:$0x7]
      %v632 = vld [vmem:[%s1 + $0xc0] sm:$0xf]
      %v633 = vld [vmem:[%s1 + $0xc4] sm:$0xf]
      %v634 = vld [vmem:[%s1 + $0xc8] sm:$0xf]
      %v635 = vld [vmem:[%s1 + $0xcc] sm:$0xf]
      %v636 = vld [vmem:[%s1 + $0xd0] sm:$0xf]
      %v637 = vld [vmem:[%s1 + $0xd4] sm:$0xf]
      %v638 = vld [vmem:[%s1 + $0xd8] sm:$0xf]
      %v639 = vld [vmem:[%s1 + $0xdc] sm:$0xf]
      %v640 = vld [vmem:[%s1 + $0xe0] sm:$0xf]
      %v641 = vld [vmem:[%s1 + $0xe4] sm:$0xf]
      %v642 = vld [vmem:[%s1 + $0xe8] sm:$0xf]
      %v643 = vld [vmem:[%s1 + $0xec] sm:$0xf]
      %v644 = vld [vmem:[%s1 + $0xf0] sm:$0xf]
      %v645 = vld [vmem:[%s1 + $0xf4] sm:$0xf]
      %v646 = vld [vmem:[%s1 + $0xf8] sm:$0xf]
      %v647 = vld [vmem:[%s1 + $0xfc] sm:$0xf]
      %v650 = vunpack.c.l.b16 %v630
      %v651 = vunpack.c.l.b16 %v631
      %v652 = vpack.c.b16 %v287, %v650
      %v653 = vpack.c.b16 %v651, %v288
      %vm654 = vcmask 1044480
      %v655 = vrot.slane %v652, 3
      %v656 = vrot.slane %v653, 3
      %v657 = vsel %vm654, %v655, %v656
      %v676 = vunpack.c.l.b16 %v632
      %v677 = vunpack.c.l.b16 %v633
      %v678 = vunpack.c.l.b16 %v634
      %v679 = vunpack.c.l.b16 %v635
      %v680 = vunpack.c.l.b16 %v636
      %v681 = vunpack.c.l.b16 %v637
      %v682 = vunpack.c.l.b16 %v638
      %v683 = vunpack.c.l.b16 %v639
      %v684 = vunpack.c.l.b16 %v640
      %v685 = vunpack.c.l.b16 %v641
      %v686 = vunpack.c.l.b16 %v642
      %v687 = vunpack.c.l.b16 %v643
      %v688 = vunpack.c.l.b16 %v644
      %v689 = vunpack.c.l.b16 %v645
      %v690 = vunpack.c.l.b16 %v646
      %v691 = vunpack.c.l.b16 %v647
      %v692 = vpack.c.b16 %v677, %v676
      %v693 = vpack.c.b16 %v679, %v678
      %v694 = vpack.c.b16 %v681, %v680
      %v695 = vpack.c.b16 %v683, %v682
      %v696 = vpack.c.b16 %v685, %v684
      %v697 = vpack.c.b16 %v687, %v686
      %v698 = vpack.c.b16 %v689, %v688
      %v699 = vpack.c.b16 %v691, %v690
      %708 = vmatprep.subr.bf16.mxu0 0
      %709 = vmatpush1.bf16.msra.mxu0 %v699
      %710 = vmatprep.subr.bf16.mxu0 0
      %711 = vmatpush1.bf16.msra.mxu0 %v698
      %712 = vmatprep.subr.bf16.mxu0 0
      %713 = vmatpush1.bf16.msra.mxu0 %v697
      %714 = vmatprep.subr.bf16.mxu0 0
      %715 = vmatpush1.bf16.msra.mxu0 %v696
      %716 = vmatprep.subr.bf16.mxu0 0
      %717 = vmatpush1.bf16.msra.mxu0 %v695
      %718 = vmatprep.subr.bf16.mxu0 0
      %719 = vmatpush1.bf16.msra.mxu0 %v694
      %720 = vmatprep.subr.bf16.mxu0 0
      %721 = vmatpush1.bf16.msra.mxu0 %v693
      %722 = vmatprep.subr.bf16.mxu0 0
      %723 = vmatpush1.bf16.msra.mxu0 %v692
      %724 = vmatprep.subr.bf16.mxu0 0
      %725 = vmatpush2.bf16.msra.mxu0 0
      %726 = vmatprep.subr.bf16.mxu0 0
      %727 = vmatpush2.bf16.msra.mxu0 0
      %728 = vmatprep.subr.bf16.mxu0 0
      %729 = vmatpush2.bf16.msra.mxu0 0
      %730 = vmatprep.subr.bf16.mxu0 0
      %731 = vmatpush2.bf16.msra.mxu0 0
      %732 = vmatprep.subr.bf16.mxu0 0
      %733 = vmatpush2.bf16.msra.mxu0 0
      %734 = vmatprep.subr.bf16.mxu0 0
      %735 = vmatpush2.bf16.msra.mxu0 0
      %736 = vmatprep.subr.bf16.mxu0 0
      %737 = vmatpush2.bf16.msra.mxu0 0
      %738 = vmatprep.subr.bf16.mxu0 0
      %739 = vmatpush2.bf16.msra.mxu0 0
      %740 = vmatprep.mubr.bf16.mxu0 0
      %741 = vmatmul.mubr.bf16.gmra.mxu0 %v657
      %v742 = vpop.f32.mrf.mxu0
      %v743 = vadd.f32 0.0, %v742
      %v744 = vpop.f32.mrf.mxu0
      %v745 = vpop.f32.mrf.mxu0
      %v746 = vadd.f32 0.0, %v745
      %v747 = vpop.f32.mrf.mxu0
      %748 = vmatprep.mubr.bf16.mxu0 0
      %749 = vmatmul.mubr.bf16.gmra.mxu0 %v656
      %v750 = vpop.f32.mrf.mxu0
      %v751 = vadd.f32 0.0, %v750
      %v752 = vpop.f32.mrf.mxu0
      %v753 = vpop.f32.mrf.mxu0
      %v754 = vpop.f32.mrf.mxu0
      %755 = vdwg.mxu0
      %v756 = vadd.f32 %v627, %v743
      %v757 = vadd.f32 %v628, %v746
      %v758 = vadd.f32 %v629, %v751
      %v759 = vld [vmem:[%s234 + $0xc] sm:$0xf]
      %v760 = vld [vmem:[%s1 + $0x100] sm:$0xf]
      %v761 = vld [vmem:[%s1 + $0x104] sm:$0xf]
      %v762 = vld [vmem:[%s1 + $0x108] sm:$0xf]
      %v763 = vld [vmem:[%s1 + $0x10c] sm:$0xf]
      %v764 = vld [vmem:[%s1 + $0x110] sm:$0xf]
      %v765 = vld [vmem:[%s1 + $0x114] sm:$0xf]
      %v766 = vld [vmem:[%s1 + $0x118] sm:$0xf]
      %v767 = vld [vmem:[%s1 + $0x11c] sm:$0xf]
      %v768 = vld [vmem:[%s1 + $0x120] sm:$0xf]
      %v769 = vld [vmem:[%s1 + $0x124] sm:$0xf]
      %v770 = vld [vmem:[%s1 + $0x128] sm:$0xf]
      %v771 = vld [vmem:[%s1 + $0x12c] sm:$0xf]
      %v772 = vld [vmem:[%s1 + $0x130] sm:$0xf]
      %v773 = vld [vmem:[%s1 + $0x134] sm:$0xf]
      %v774 = vld [vmem:[%s1 + $0x138] sm:$0xf]
      %v775 = vld [vmem:[%s1 + $0x13c] sm:$0xf]
      %v777 = vunpack.c.l.b16 %v759
      %v778 = vpack.c.b16 %v777, %v288
      %vm779 = vsmask.f32 4352
      %v781 = vshrl.u32 %v652, 16
      %v783 = vrot.slane %v781, 3
      %v784 = vshll.u32 %v652, 16
      %v786 = vrot.slane %v784, 4
      %v787 = vor.u32 %v783, %v786
      %v789 = vshrl.u32 %v778, 16
      %v791 = vrot.slane %v789, 3
      %v792 = vshll.u32 %v778, 16
      %v794 = vrot.slane %v792, 4
      %v795 = vor.u32 %v791, %v794
      %v796 = vsel %vm779, %v787, %v795
      %v815 = vunpack.c.l.b16 %v760
      %v816 = vunpack.c.l.b16 %v761
      %v817 = vunpack.c.l.b16 %v762
      %v818 = vunpack.c.l.b16 %v763
      %v819 = vunpack.c.l.b16 %v764
      %v820 = vunpack.c.l.b16 %v765
      %v821 = vunpack.c.l.b16 %v766
      %v822 = vunpack.c.l.b16 %v767
      %v823 = vunpack.c.l.b16 %v768
      %v824 = vunpack.c.l.b16 %v769
      %v825 = vunpack.c.l.b16 %v770
      %v826 = vunpack.c.l.b16 %v771
      %v827 = vunpack.c.l.b16 %v772
      %v828 = vunpack.c.l.b16 %v773
      %v829 = vunpack.c.l.b16 %v774
      %v830 = vunpack.c.l.b16 %v775
      %v831 = vpack.c.b16 %v816, %v815
      %v832 = vpack.c.b16 %v818, %v817
      %v833 = vpack.c.b16 %v820, %v819
      %v834 = vpack.c.b16 %v822, %v821
      %v835 = vpack.c.b16 %v824, %v823
      %v836 = vpack.c.b16 %v826, %v825
      %v837 = vpack.c.b16 %v828, %v827
      %v838 = vpack.c.b16 %v830, %v829
      %847 = vmatprep.subr.bf16.mxu0 0
      %848 = vmatpush1.bf16.msra.mxu0 %v838
      %849 = vmatprep.subr.bf16.mxu0 0
      %850 = vmatpush1.bf16.msra.mxu0 %v837
      %851 = vmatprep.subr.bf16.mxu0 0
      %852 = vmatpush1.bf16.msra.mxu0 %v836
      %853 = vmatprep.subr.bf16.mxu0 0
      %854 = vmatpush1.bf16.msra.mxu0 %v835
      %855 = vmatprep.subr.bf16.mxu0 0
      %856 = vmatpush1.bf16.msra.mxu0 %v834
      %857 = vmatprep.subr.bf16.mxu0 0
      %858 = vmatpush1.bf16.msra.mxu0 %v833
      %859 = vmatprep.subr.bf16.mxu0 0
      %860 = vmatpush1.bf16.msra.mxu0 %v832
      %861 = vmatprep.subr.bf16.mxu0 0
      %862 = vmatpush1.bf16.msra.mxu0 %v831
      %863 = vmatprep.subr.bf16.mxu0 0
      %864 = vmatpush2.bf16.msra.mxu0 0
      %865 = vmatprep.subr.bf16.mxu0 0
      %866 = vmatpush2.bf16.msra.mxu0 0
      %867 = vmatprep.subr.bf16.mxu0 0
      %868 = vmatpush2.bf16.msra.mxu0 0
      %869 = vmatprep.subr.bf16.mxu0 0
      %870 = vmatpush2.bf16.msra.mxu0 0
      %871 = vmatprep.subr.bf16.mxu0 0
      %872 = vmatpush2.bf16.msra.mxu0 0
      %873 = vmatprep.subr.bf16.mxu0 0
      %874 = vmatpush2.bf16.msra.mxu0 0
      %875 = vmatprep.subr.bf16.mxu0 0
      %876 = vmatpush2.bf16.msra.mxu0 0
      %877 = vmatprep.subr.bf16.mxu0 0
      %878 = vmatpush2.bf16.msra.mxu0 0
      %879 = vmatprep.mubr.bf16.mxu0 0
      %880 = vmatmul.mubr.bf16.gmra.mxu0 %v796
      %v881 = vpop.f32.mrf.mxu0
      %v882 = vadd.f32 0.0, %v881
      %v883 = vpop.f32.mrf.mxu0
      %v884 = vpop.f32.mrf.mxu0
      %v885 = vadd.f32 0.0, %v884
      %v886 = vpop.f32.mrf.mxu0
      %887 = vmatprep.mubr.bf16.mxu0 0
      %888 = vmatmul.mubr.bf16.gmra.mxu0 %v795
      %v889 = vpop.f32.mrf.mxu0
      %v890 = vadd.f32 0.0, %v889
      %v891 = vpop.f32.mrf.mxu0
      %v892 = vpop.f32.mrf.mxu0
      %v893 = vpop.f32.mrf.mxu0
      %894 = vdwg.mxu0
      %v895 = vadd.f32 %v756, %v882
      %v896 = vadd.f32 %v757, %v885
      %v897 = vadd.f32 %v758, %v890
      %v898 = vld [vmem:[%s1 + $0x140] sm:$0xf]
      %v899 = vld [vmem:[%s1 + $0x144] sm:$0xf]
      %v900 = vld [vmem:[%s1 + $0x148] sm:$0xf]
      %v901 = vld [vmem:[%s1 + $0x14c] sm:$0xf]
      %v902 = vld [vmem:[%s1 + $0x150] sm:$0xf]
      %v903 = vld [vmem:[%s1 + $0x154] sm:$0xf]
      %v904 = vld [vmem:[%s1 + $0x158] sm:$0xf]
      %v905 = vld [vmem:[%s1 + $0x15c] sm:$0xf]
      %v906 = vld [vmem:[%s1 + $0x160] sm:$0xf]
      %v907 = vld [vmem:[%s1 + $0x164] sm:$0xf]
      %v908 = vld [vmem:[%s1 + $0x168] sm:$0xf]
      %v909 = vld [vmem:[%s1 + $0x16c] sm:$0xf]
      %v910 = vld [vmem:[%s1 + $0x170] sm:$0xf]
      %v911 = vld [vmem:[%s1 + $0x174] sm:$0xf]
      %v912 = vld [vmem:[%s1 + $0x178] sm:$0xf]
      %v913 = vld [vmem:[%s1 + $0x17c] sm:$0xf]
      %v914 = vpack.c.b16 %v288, %v287
      %v915 = vpack.c.b16 %v777, %v777
      %v934 = vunpack.c.l.b16 %v898
      %v935 = vunpack.c.l.b16 %v899
      %v936 = vunpack.c.l.b16 %v900
      %v937 = vunpack.c.l.b16 %v901
      %v938 = vunpack.c.l.b16 %v902
      %v939 = vunpack.c.l.b16 %v903
      %v940 = vunpack.c.l.b16 %v904
      %v941 = vunpack.c.l.b16 %v905
      %v942 = vunpack.c.l.b16 %v906
      %v943 = vunpack.c.l.b16 %v907
      %v944 = vunpack.c.l.b16 %v908
      %v945 = vunpack.c.l.b16 %v909
      %v946 = vunpack.c.l.b16 %v910
      %v947 = vunpack.c.l.b16 %v911
      %v948 = vunpack.c.l.b16 %v912
      %v949 = vunpack.c.l.b16 %v913
      %v950 = vpack.c.b16 %v935, %v934
      %v951 = vpack.c.b16 %v937, %v936
      %v952 = vpack.c.b16 %v939, %v938
      %v953 = vpack.c.b16 %v941, %v940
      %v954 = vpack.c.b16 %v943, %v942
      %v955 = vpack.c.b16 %v945, %v944
      %v956 = vpack.c.b16 %v947, %v946
      %v957 = vpack.c.b16 %v949, %v948
      %966 = vmatprep.subr.bf16.mxu0 0
      %967 = vmatpush1.bf16.msra.mxu0 %v957
      %968 = vmatprep.subr.bf16.mxu0 0
      %969 = vmatpush1.bf16.msra.mxu0 %v956
      %970 = vmatprep.subr.bf16.mxu0 0
      %971 = vmatpush1.bf16.msra.mxu0 %v955
      %972 = vmatprep.subr.bf16.mxu0 0
      %973 = vmatpush1.bf16.msra.mxu0 %v954
      %974 = vmatprep.subr.bf16.mxu0 0
      %975 = vmatpush1.bf16.msra.mxu0 %v953
      %976 = vmatprep.subr.bf16.mxu0 0
      %977 = vmatpush1.bf16.msra.mxu0 %v952
      %978 = vmatprep.subr.bf16.mxu0 0
      %979 = vmatpush1.bf16.msra.mxu0 %v951
      %980 = vmatprep.subr.bf16.mxu0 0
      %981 = vmatpush1.bf16.msra.mxu0 %v950
      %982 = vmatprep.subr.bf16.mxu0 0
      %983 = vmatpush2.bf16.msra.mxu0 0
      %984 = vmatprep.subr.bf16.mxu0 0
      %985 = vmatpush2.bf16.msra.mxu0 0
      %986 = vmatprep.subr.bf16.mxu0 0
      %987 = vmatpush2.bf16.msra.mxu0 0
      %988 = vmatprep.subr.bf16.mxu0 0
      %989 = vmatpush2.bf16.msra.mxu0 0
      %990 = vmatprep.subr.bf16.mxu0 0
      %991 = vmatpush2.bf16.msra.mxu0 0
      %992 = vmatprep.subr.bf16.mxu0 0
      %993 = vmatpush2.bf16.msra.mxu0 0
      %994 = vmatprep.subr.bf16.mxu0 0
      %995 = vmatpush2.bf16.msra.mxu0 0
      %996 = vmatprep.subr.bf16.mxu0 0
      %997 = vmatpush2.bf16.msra.mxu0 0
      %998 = vmatprep.mubr.bf16.mxu0 0
      %999 = vmatmul.mubr.bf16.gmra.mxu0 %v914
      %v1000 = vpop.f32.mrf.mxu0
      %v1001 = vadd.f32 0.0, %v1000
      %v1002 = vpop.f32.mrf.mxu0
      %v1003 = vpop.f32.mrf.mxu0
      %v1004 = vadd.f32 0.0, %v1003
      %v1005 = vpop.f32.mrf.mxu0
      %1006 = vmatprep.mubr.bf16.mxu0 0
      %1007 = vmatmul.mubr.bf16.gmra.mxu0 %v915
      %v1008 = vpop.f32.mrf.mxu0
      %v1009 = vadd.f32 0.0, %v1008
      %v1010 = vpop.f32.mrf.mxu0
      %v1011 = vpop.f32.mrf.mxu0
      %v1012 = vpop.f32.mrf.mxu0
      %1013 = vdwg.mxu0
      %v1014 = vadd.f32 %v895, %v1001
      %v1015 = vadd.f32 %v896, %v1004
      %v1016 = vadd.f32 %v897, %v1009
      %v1017 = vld [vmem:[%s234 + $0x4] sm:$0xc]
      %v1018 = vld [vmem:[%s234 + $0x8] sm:$0xf]
      %v1019 = vld [vmem:[%s234 + $0xc] sm:$0xf]
      %v1020 = vld [vmem:[%s234 + $0x10] sm:$0x3]
      %v1021 = vld [vmem:[%s1 + $0x180] sm:$0xf]
      %v1022 = vld [vmem:[%s1 + $0x184] sm:$0xf]
      %v1023 = vld [vmem:[%s1 + $0x188] sm:$0xf]
      %v1024 = vld [vmem:[%s1 + $0x18c] sm:$0xf]
      %v1025 = vld [vmem:[%s1 + $0x190] sm:$0xf]
      %v1026 = vld [vmem:[%s1 + $0x194] sm:$0xf]
      %v1027 = vld [vmem:[%s1 + $0x198] sm:$0xf]
      %v1028 = vld [vmem:[%s1 + $0x19c] sm:$0xf]
      %v1029 = vld [vmem:[%s1 + $0x1a0] sm:$0xf]
      %v1030 = vld [vmem:[%s1 + $0x1a4] sm:$0xf]
      %v1031 = vld [vmem:[%s1 + $0x1a8] sm:$0xf]
      %v1032 = vld [vmem:[%s1 + $0x1ac] sm:$0xf]
      %v1033 = vld [vmem:[%s1 + $0x1b0] sm:$0xf]
      %v1034 = vld [vmem:[%s1 + $0x1b4] sm:$0xf]
      %v1035 = vld [vmem:[%s1 + $0x1b8] sm:$0xf]
      %v1036 = vld [vmem:[%s1 + $0x1bc] sm:$0xf]
      %v1041 = vunpack.c.l.b16 %v1017
      %v1042 = vunpack.c.l.b16 %v1018
      %v1043 = vunpack.c.l.b16 %v1019
      %v1044 = vunpack.c.l.b16 %v1020
      %v1045 = vpack.c.b16 %v1042, %v1041
      %v1046 = vpack.c.b16 %v1044, %v1043
      %vm1047 = vcmask 1045504
      %v1048 = vrot.slane %v1045, 2
      %v1049 = vrot.slane %v1046, 2
      %v1050 = vsel %vm1047, %v1048, %v1049
      %v1069 = vunpack.c.l.b16 %v1021
      %v1070 = vunpack.c.l.b16 %v1022
      %v1071 = vunpack.c.l.b16 %v1023
      %v1072 = vunpack.c.l.b16 %v1024
      %v1073 = vunpack.c.l.b16 %v1025
      %v1074 = vunpack.c.l.b16 %v1026
      %v1075 = vunpack.c.l.b16 %v1027
      %v1076 = vunpack.c.l.b16 %v1028
      %v1077 = vunpack.c.l.b16 %v1029
      %v1078 = vunpack.c.l.b16 %v1030
      %v1079 = vunpack.c.l.b16 %v1031
      %v1080 = vunpack.c.l.b16 %v1032
      %v1081 = vunpack.c.l.b16 %v1033
      %v1082 = vunpack.c.l.b16 %v1034
      %v1083 = vunpack.c.l.b16 %v1035
      %v1084 = vunpack.c.l.b16 %v1036
      %v1085 = vpack.c.b16 %v1070, %v1069
      %v1086 = vpack.c.b16 %v1072, %v1071
      %v1087 = vpack.c.b16 %v1074, %v1073
      %v1088 = vpack.c.b16 %v1076, %v1075
      %v1089 = vpack.c.b16 %v1078, %v1077
      %v1090 = vpack.c.b16 %v1080, %v1079
      %v1091 = vpack.c.b16 %v1082, %v1081
      %v1092 = vpack.c.b16 %v1084, %v1083
      %1101 = vmatprep.subr.bf16.mxu0 0
      %1102 = vmatpush1.bf16.msra.mxu0 %v1092
      %1103 = vmatprep.subr.bf16.mxu0 0
      %1104 = vmatpush1.bf16.msra.mxu0 %v1091
      %1105 = vmatprep.subr.bf16.mxu0 0
      %1106 = vmatpush1.bf16.msra.mxu0 %v1090
      %1107 = vmatprep.subr.bf16.mxu0 0
      %1108 = vmatpush1.bf16.msra.mxu0 %v1089
      %1109 = vmatprep.subr.bf16.mxu0 0
      %1110 = vmatpush1.bf16.msra.mxu0 %v1088
      %1111 = vmatprep.subr.bf16.mxu0 0
      %1112 = vmatpush1.bf16.msra.mxu0 %v1087
      %1113 = vmatprep.subr.bf16.mxu0 0
      %1114 = vmatpush1.bf16.msra.mxu0 %v1086
      %1115 = vmatprep.subr.bf16.mxu0 0
      %1116 = vmatpush1.bf16.msra.mxu0 %v1085
      %1117 = vmatprep.subr.bf16.mxu0 0
      %1118 = vmatpush2.bf16.msra.mxu0 0
      %1119 = vmatprep.subr.bf16.mxu0 0
      %1120 = vmatpush2.bf16.msra.mxu0 0
      %1121 = vmatprep.subr.bf16.mxu0 0
      %1122 = vmatpush2.bf16.msra.mxu0 0
      %1123 = vmatprep.subr.bf16.mxu0 0
      %1124 = vmatpush2.bf16.msra.mxu0 0
      %1125 = vmatprep.subr.bf16.mxu0 0
      %1126 = vmatpush2.bf16.msra.mxu0 0
      %1127 = vmatprep.subr.bf16.mxu0 0
      %1128 = vmatpush2.bf16.msra.mxu0 0
      %1129 = vmatprep.subr.bf16.mxu0 0
      %1130 = vmatpush2.bf16.msra.mxu0 0
      %1131 = vmatprep.subr.bf16.mxu0 0
      %1132 = vmatpush2.bf16.msra.mxu0 0
      %1133 = vmatprep.mubr.bf16.mxu0 0
      %1134 = vmatmul.mubr.bf16.gmra.mxu0 %v1050
      %v1135 = vpop.f32.mrf.mxu0
      %v1136 = vadd.f32 0.0, %v1135
      %v1137 = vpop.f32.mrf.mxu0
      %v1138 = vpop.f32.mrf.mxu0
      %v1139 = vadd.f32 0.0, %v1138
      %v1140 = vpop.f32.mrf.mxu0
      %1141 = vmatprep.mubr.bf16.mxu0 0
      %1142 = vmatmul.mubr.bf16.gmra.mxu0 %v1049
      %v1143 = vpop.f32.mrf.mxu0
      %v1144 = vadd.f32 0.0, %v1143
      %v1145 = vpop.f32.mrf.mxu0
      %v1146 = vpop.f32.mrf.mxu0
      %v1147 = vpop.f32.mrf.mxu0
      %1148 = vdwg.mxu0
      %v1149 = vadd.f32 %v1014, %v1136
      %v1150 = vadd.f32 %v1015, %v1139
      %v1151 = vadd.f32 %v1016, %v1144
      %v1152 = vld [vmem:[%s234 + $0x10] sm:$0x7]
      %v1153 = vld [vmem:[%s1 + $0x1c0] sm:$0xf]
      %v1154 = vld [vmem:[%s1 + $0x1c4] sm:$0xf]
      %v1155 = vld [vmem:[%s1 + $0x1c8] sm:$0xf]
      %v1156 = vld [vmem:[%s1 + $0x1cc] sm:$0xf]
      %v1157 = vld [vmem:[%s1 + $0x1d0] sm:$0xf]
      %v1158 = vld [vmem:[%s1 + $0x1d4] sm:$0xf]
      %v1159 = vld [vmem:[%s1 + $0x1d8] sm:$0xf]
      %v1160 = vld [vmem:[%s1 + $0x1dc] sm:$0xf]
      %v1161 = vld [vmem:[%s1 + $0x1e0] sm:$0xf]
      %v1162 = vld [vmem:[%s1 + $0x1e4] sm:$0xf]
      %v1163 = vld [vmem:[%s1 + $0x1e8] sm:$0xf]
      %v1164 = vld [vmem:[%s1 + $0x1ec] sm:$0xf]
      %v1165 = vld [vmem:[%s1 + $0x1f0] sm:$0xf]
      %v1166 = vld [vmem:[%s1 + $0x1f4] sm:$0xf]
      %v1167 = vld [vmem:[%s1 + $0x1f8] sm:$0xf]
      %v1168 = vld [vmem:[%s1 + $0x1fc] sm:$0xf]
      %v1170 = vunpack.c.l.b16 %v1152
      %v1171 = vpack.c.b16 %v1170, %v1043
      %vm1172 = vsmask.f32 5376
      %v1174 = vshrl.u32 %v1045, 16
      %v1176 = vrot.slane %v1174, 2
      %v1177 = vshll.u32 %v1045, 16
      %v1179 = vrot.slane %v1177, 3
      %v1180 = vor.u32 %v1176, %v1179
      %v1182 = vshrl.u32 %v1171, 16
      %v1184 = vrot.slane %v1182, 2
      %v1185 = vshll.u32 %v1171, 16
      %v1187 = vrot.slane %v1185, 3
      %v1188 = vor.u32 %v1184, %v1187
      %v1189 = vsel %vm1172, %v1180, %v1188
      %v1208 = vunpack.c.l.b16 %v1153
      %v1209 = vunpack.c.l.b16 %v1154
      %v1210 = vunpack.c.l.b16 %v1155
      %v1211 = vunpack.c.l.b16 %v1156
      %v1212 = vunpack.c.l.b16 %v1157
      %v1213 = vunpack.c.l.b16 %v1158
      %v1214 = vunpack.c.l.b16 %v1159
      %v1215 = vunpack.c.l.b16 %v1160
      %v1216 = vunpack.c.l.b16 %v1161
      %v1217 = vunpack.c.l.b16 %v1162
      %v1218 = vunpack.c.l.b16 %v1163
      %v1219 = vunpack.c.l.b16 %v1164
      %v1220 = vunpack.c.l.b16 %v1165
      %v1221 = vunpack.c.l.b16 %v1166
      %v1222 = vunpack.c.l.b16 %v1167
      %v1223 = vunpack.c.l.b16 %v1168
      %v1224 = vpack.c.b16 %v1209, %v1208
      %v1225 = vpack.c.b16 %v1211, %v1210
      %v1226 = vpack.c.b16 %v1213, %v1212
      %v1227 = vpack.c.b16 %v1215, %v1214
      %v1228 = vpack.c.b16 %v1217, %v1216
      %v1229 = vpack.c.b16 %v1219, %v1218
      %v1230 = vpack.c.b16 %v1221, %v1220
      %v1231 = vpack.c.b16 %v1223, %v1222
      %1240 = vmatprep.subr.bf16.mxu0 0
      %1241 = vmatpush1.bf16.msra.mxu0 %v1231
      %1242 = vmatprep.subr.bf16.mxu0 0
      %1243 = vmatpush1.bf16.msra.mxu0 %v1230
      %1244 = vmatprep.subr.bf16.mxu0 0
      %1245 = vmatpush1.bf16.msra.mxu0 %v1229
      %1246 = vmatprep.subr.bf16.mxu0 0
      %1247 = vmatpush1.bf16.msra.mxu0 %v1228
      %1248 = vmatprep.subr.bf16.mxu0 0
      %1249 = vmatpush1.bf16.msra.mxu0 %v1227
      %1250 = vmatprep.subr.bf16.mxu0 0
      %1251 = vmatpush1.bf16.msra.mxu0 %v1226
      %1252 = vmatprep.subr.bf16.mxu0 0
      %1253 = vmatpush1.bf16.msra.mxu0 %v1225
      %1254 = vmatprep.subr.bf16.mxu0 0
      %1255 = vmatpush1.bf16.msra.mxu0 %v1224
      %1256 = vmatprep.subr.bf16.mxu0 0
      %1257 = vmatpush2.bf16.msra.mxu0 0
      %1258 = vmatprep.subr.bf16.mxu0 0
      %1259 = vmatpush2.bf16.msra.mxu0 0
      %1260 = vmatprep.subr.bf16.mxu0 0
      %1261 = vmatpush2.bf16.msra.mxu0 0
      %1262 = vmatprep.subr.bf16.mxu0 0
      %1263 = vmatpush2.bf16.msra.mxu0 0
      %1264 = vmatprep.subr.bf16.mxu0 0
      %1265 = vmatpush2.bf16.msra.mxu0 0
      %1266 = vmatprep.subr.bf16.mxu0 0
      %1267 = vmatpush2.bf16.msra.mxu0 0
      %1268 = vmatprep.subr.bf16.mxu0 0
      %1269 = vmatpush2.bf16.msra.mxu0 0
      %1270 = vmatprep.subr.bf16.mxu0 0
      %1271 = vmatpush2.bf16.msra.mxu0 0
      %1272 = vmatprep.mubr.bf16.mxu0 0
      %1273 = vmatmul.mubr.bf16.gmra.mxu0 %v1189
      %v1274 = vpop.f32.mrf.mxu0
      %v1275 = vadd.f32 0.0, %v1274
      %v1276 = vpop.f32.mrf.mxu0
      %v1277 = vpop.f32.mrf.mxu0
      %v1278 = vadd.f32 0.0, %v1277
      %v1279 = vpop.f32.mrf.mxu0
      %1280 = vmatprep.mubr.bf16.mxu0 0
      %1281 = vmatmul.mubr.bf16.gmra.mxu0 %v1188
      %v1282 = vpop.f32.mrf.mxu0
      %v1283 = vadd.f32 0.0, %v1282
      %v1284 = vpop.f32.mrf.mxu0
      %v1285 = vpop.f32.mrf.mxu0
      %v1286 = vpop.f32.mrf.mxu0
      %1287 = vdwg.mxu0
      %v1288 = vadd.f32 %v1149, %v1275
      %v1289 = vadd.f32 %v1150, %v1278
      %v1290 = vadd.f32 %v1151, %v1283
      %v1291 = vld [vmem:[%s234 + $0x4] sm:$0x8]
      %v1292 = vld [vmem:[%s1 + $0x200] sm:$0xf]
      %v1293 = vld [vmem:[%s1 + $0x204] sm:$0xf]
      %v1294 = vld [vmem:[%s1 + $0x208] sm:$0xf]
      %v1295 = vld [vmem:[%s1 + $0x20c] sm:$0xf]
      %v1296 = vld [vmem:[%s1 + $0x210] sm:$0xf]
      %v1297 = vld [vmem:[%s1 + $0x214] sm:$0xf]
      %v1298 = vld [vmem:[%s1 + $0x218] sm:$0xf]
      %v1299 = vld [vmem:[%s1 + $0x21c] sm:$0xf]
      %v1300 = vld [vmem:[%s1 + $0x220] sm:$0xf]
      %v1301 = vld [vmem:[%s1 + $0x224] sm:$0xf]
      %v1302 = vld [vmem:[%s1 + $0x228] sm:$0xf]
      %v1303 = vld [vmem:[%s1 + $0x22c] sm:$0xf]
      %v1304 = vld [vmem:[%s1 + $0x230] sm:$0xf]
      %v1305 = vld [vmem:[%s1 + $0x234] sm:$0xf]
      %v1306 = vld [vmem:[%s1 + $0x238] sm:$0xf]
      %v1307 = vld [vmem:[%s1 + $0x23c] sm:$0xf]
      %v1309 = vunpack.c.l.b16 %v1291
      %v1310 = vpack.c.b16 %v1042, %v1309
      %v1311 = vrot.slane %v1310, 3
      %v1312 = vrot.slane %v1171, 3
      %v1313 = vsel %vm654, %v1311, %v1312
      %v1332 = vunpack.c.l.b16 %v1292
      %v1333 = vunpack.c.l.b16 %v1293
      %v1334 = vunpack.c.l.b16 %v1294
      %v1335 = vunpack.c.l.b16 %v1295
      %v1336 = vunpack.c.l.b16 %v1296
      %v1337 = vunpack.c.l.b16 %v1297
      %v1338 = vunpack.c.l.b16 %v1298
      %v1339 = vunpack.c.l.b16 %v1299
      %v1340 = vunpack.c.l.b16 %v1300
      %v1341 = vunpack.c.l.b16 %v1301
      %v1342 = vunpack.c.l.b16 %v1302
      %v1343 = vunpack.c.l.b16 %v1303
      %v1344 = vunpack.c.l.b16 %v1304
      %v1345 = vunpack.c.l.b16 %v1305
      %v1346 = vunpack.c.l.b16 %v1306
      %v1347 = vunpack.c.l.b16 %v1307
      %v1348 = vpack.c.b16 %v1333, %v1332
      %v1349 = vpack.c.b16 %v1335, %v1334
      %v1350 = vpack.c.b16 %v1337, %v1336
      %v1351 = vpack.c.b16 %v1339, %v1338
      %v1352 = vpack.c.b16 %v1341, %v1340
      %v1353 = vpack.c.b16 %v1343, %v1342
      %v1354 = vpack.c.b16 %v1345, %v1344
      %v1355 = vpack.c.b16 %v1347, %v1346
      %1364 = vmatprep.subr.bf16.mxu0 0
      %1365 = vmatpush1.bf16.msra.mxu0 %v1355
      %1366 = vmatprep.subr.bf16.mxu0 0
      %1367 = vmatpush1.bf16.msra.mxu0 %v1354
      %1368 = vmatprep.subr.bf16.mxu0 0
      %1369 = vmatpush1.bf16.msra.mxu0 %v1353
      %1370 = vmatprep.subr.bf16.mxu0 0
      %1371 = vmatpush1.bf16.msra.mxu0 %v1352
      %1372 = vmatprep.subr.bf16.mxu0 0
      %1373 = vmatpush1.bf16.msra.mxu0 %v1351
      %1374 = vmatprep.subr.bf16.mxu0 0
      %1375 = vmatpush1.bf16.msra.mxu0 %v1350
      %1376 = vmatprep.subr.bf16.mxu0 0
      %1377 = vmatpush1.bf16.msra.mxu0 %v1349
      %1378 = vmatprep.subr.bf16.mxu0 0
      %1379 = vmatpush1.bf16.msra.mxu0 %v1348
      %1380 = vmatprep.subr.bf16.mxu0 0
      %1381 = vmatpush2.bf16.msra.mxu0 0
      %1382 = vmatprep.subr.bf16.mxu0 0
      %1383 = vmatpush2.bf16.msra.mxu0 0
      %1384 = vmatprep.subr.bf16.mxu0 0
      %1385 = vmatpush2.bf16.msra.mxu0 0
      %1386 = vmatprep.subr.bf16.mxu0 0
      %1387 = vmatpush2.bf16.msra.mxu0 0
      %1388 = vmatprep.subr.bf16.mxu0 0
      %1389 = vmatpush2.bf16.msra.mxu0 0
      %1390 = vmatprep.subr.bf16.mxu0 0
      %1391 = vmatpush2.bf16.msra.mxu0 0
      %1392 = vmatprep.subr.bf16.mxu0 0
      %1393 = vmatpush2.bf16.msra.mxu0 0
      %1394 = vmatprep.subr.bf16.mxu0 0
      %1395 = vmatpush2.bf16.msra.mxu0 0
      %1396 = vmatprep.mubr.bf16.mxu0 0
      %1397 = vmatmul.mubr.bf16.gmra.mxu0 %v1313
      %v1398 = vpop.f32.mrf.mxu0
      %v1399 = vadd.f32 0.0, %v1398
      %v1400 = vpop.f32.mrf.mxu0
      %v1401 = vpop.f32.mrf.mxu0
      %v1402 = vadd.f32 0.0, %v1401
      %v1403 = vpop.f32.mrf.mxu0
      %1404 = vmatprep.mubr.bf16.mxu0 0
      %1405 = vmatmul.mubr.bf16.gmra.mxu0 %v1312
      %v1406 = vpop.f32.mrf.mxu0
      %v1407 = vadd.f32 0.0, %v1406
      %v1408 = vpop.f32.mrf.mxu0
      %v1409 = vpop.f32.mrf.mxu0
      %v1410 = vpop.f32.mrf.mxu0
      %1411 = vdwg.mxu0
      %v1412 = vadd.f32 %v1288, %v1399
      %v1413 = vadd.f32 %v1289, %v1402
      %v1414 = vadd.f32 %v1290, %v1407
      %v1415 = vld [vmem:[%s2] sm:$0x1]
      %v1417 = vlaneseq
      %v1418 = vshrl.u32 %v1417, 7
      %v1419 = vsub.s32 0, %v1418
      %v1420 = vrot.slane %v1415, %v1419
      %v1422 = vadd.f32 %v1412, %v1420
      %v1423 = vadd.f32 %v1413, %v1420
      %v1424 = vadd.f32 %v1414, %v1420
      %v1425 = vld [vmem:[%s239] sm:$0x8]
      %v1426 = vld [vmem:[%s239 + $0x4] sm:$0xf]
      %v1427 = vld [vmem:[%s239 + $0x8] sm:$0xf]
      %v1428 = vld [vmem:[%s239 + $0xc] sm:$0xf]
      %v1429 = vunpack.c.l.bf16 %v1425
      %v1430 = vunpack.c.l.bf16 %v1426
      %v1431 = vunpack.c.l.bf16 %v1427
      %v1432 = vunpack.c.l.bf16 %v1428
      %vm1437 = vcmask 1040384
      %v1438 = vrot.slane %v1429, 7
      %v1439 = vrot.slane %v1430, 7
      %v1440 = vsel %vm1437, %v1438, %v1439
      %v1441 = vrot.slane %v1431, 7
      %v1442 = vsel %vm1437, %v1439, %v1441
      %v1443 = vrot.slane %v1432, 7
      %v1444 = vsel %vm1437, %v1441, %v1443
      %v1448 = vadd.f32 %v1422, %v1440
      %v1449 = vadd.f32 %v1423, %v1442
      %v1450 = vadd.f32 %v1424, %v1444
      %v1451 = vmax.f32 %v1448, 0.0
      %v1452 = vmax.f32 %v1449, 0.0
      %v1453 = vmax.f32 %v1450, 0.0
      %v1454 = vld [vmem:[%s3] sm:$0xff]
      %v1455 = vld [vmem:[%s3 + $0x8] sm:$0xff]
      %v1456 = vld [vmem:[%s3 + $0x10] sm:$0xff]
      %1458 = vset.pattern.permute.xlu0 0
      %1459 = vperm.xlu0 %1458, %v1454
      %v1460 = vpop.permute.xlu0 %1459
      %1463 = vset.pattern.permute.xlu0 0
      %1464 = vperm.xlu0 %1463, %v1455
      %v1465 = vpop.permute.xlu0 %1464
      %1468 = vset.pattern.permute.xlu0 0
      %1469 = vperm.xlu0 %1468, %v1456
      %v1470 = vpop.permute.xlu0 %1469
      %v1472 = vmul.f32 %v1451, %v1460
      %v1473 = vmul.f32 %v1452, %v1465
      %v1474 = vmul.f32 %v1453, %v1470
      %vm1475 = vcmask 1043456
      %vm1476 = vsmask.f32 3328
      %vm1477 = vmand %vm1475, %vm1476
      %v1478 = vld [vmem:[%s244] sm:$0xf]
      %v1479 = vsel %vm1477, 0, %v1478
      %1480 = vst [vmem:[%s244] sm:$0xf] %v1479
      %v1481 = vpack.c.bf16 %v1473, %v1472
      %v1482 = vpack.c.bf16 %v1474, %v1474
      %v1485 = vunpack.c.l.b16 %v1481
      %v1486 = vunpack.c.h.b16 %v1481
      %v1487 = vunpack.c.l.b16 %v1482
      %v1488 = vpack.c.b16 %v1485, %v1485
      %v1489 = vpack.c.b16 %v1486, %v1486
      %v1490 = vpack.c.b16 %v1487, %v1487
      %vm1491 = vsmask.f32 7440
      %vm1492 = vmor %vm1476, %vm1491
      %v1494 = vshll.u32 %v1488, 16
      %v1496 = vrot.slane %v1494, 5
      %v1497 = vshrl.u32 %v1488, 16
      %v1499 = vrot.slane %v1497, 4
      %v1500 = vor.u32 %v1499, %v1496
      %v1501 = vrot.slane %v1500, 4
      %v1503 = vshll.u32 %v1489, 16
      %v1505 = vrot.slane %v1503, 5
      %v1506 = vsel %vm1492, %v1501, %v1505
      %v1507 = vshrl.u32 %v1489, 16
      %v1509 = vrot.slane %v1507, 4
      %v1510 = vor.u32 %v1509, %v1505
      %v1511 = vrot.slane %v1510, 4
      %v1513 = vshll.u32 %v1490, 16
      %v1515 = vrot.slane %v1513, 5
      %v1516 = vsel %vm1492, %v1511, %v1515
      %v1517 = vshrl.u32 %v1490, 16
      %v1519 = vrot.slane %v1517, 4
      %v1520 = vor.u32 %v1519, %v1515
      %v1521 = vrot.slane %v1520, 4
      %vm1526 = vcmask 1043459
      %vm1527 = vsmask.f32 7950
      %vm1528 = vmand %vm1526, %vm1527
      %v1529 = vld [vmem:[%s244] sm:$0x8]
      %v1530 = vsel %vm1528, %v1496, %v1529
      %1531 = vst [vmem:[%s244] sm:$0x8] %v1530
      %1532 = vst [vmem:[%s244 + $0x4] sm:$0xf] %v1506
      %1533 = vst [vmem:[%s244 + $0x8] sm:$0xf] %v1516
      %v1534 = vld [vmem:[%s244 + $0xc] sm:$0xf]
      %v1535 = vsel %vm1477, %v1521, %v1534
      %1536 = vst [vmem:[%s244 + $0xc] sm:$0xf] %v1535
      %v1537 = vld [vmem:[%s244 + $0xc] sm:$0x8]
      %v1538 = vsel %vm1528, 0, %v1537
      %1539 = vst [vmem:[%s244 + $0xc] sm:$0x8] %v1538
      %1540 = vst [vmem:[%s244 + $0x10] sm:$0xf] 0
      %1541 = vst [vmem:[%s244 + $0x14] sm:$0x1] 0
      %p1542 = scmp.lt.s32.totalorder %s16, 1
      %s1543 = scalar_select %p1542, %s16, 1
      %s1544 = smul.addr %s1543, 6
      %s1545 = smul.addr %s1544, 4
      %s1546 = scalar_lea.vmem %s5, %s1545
      // Predicated region
      $region41: #{colornet_forward.17} parent=39 // pred_check
        %p1547 = pneg %p149
      $region42: #{colornet_forward.17} parent=39 // pred_check_branch
        %1549 = sbr.rel (%p1547) target = $region44
      $region43: #{colornet_forward.17} parent=39 // pred_region
        _
      $region44: #{colornet_forward.17} parent=39 // pred_fallthru
        _
    $region40: #{colornet_forward.17} parent=5 // pred_fallthru
      _
    %p1550 = scmp.le.s32.totalorder 2, %s11
    // Predicated region
    $region45: #{colornet_forward.17} parent=5 // pred_check
      %p1551 = pneg %p1550
    $region46: #{colornet_forward.17} parent=5 // pred_check_branch
      %1553 = sbr.rel (%p1551) target = $region48
    $region47: #{colornet_forward.17} parent=5 // pred_region
      %s1554 = ssub.s32 %s11, 2
      // Predicated region
      $region49: #{colornet_forward.17} parent=47 // pred_check
        %p1555 = pneg %p155
      $region50: #{colornet_forward.17} parent=47 // pred_check_branch
        %1557 = sbr.rel (%p1555) target = $region52
      $region51: #{colornet_forward.17} parent=47 // pred_region
        %p1558 = scmp.lt.s32.totalorder %s17, 1
        %s1559 = scalar_select %p1558, %s17, 1
        %s1560 = smul.addr %s1559, 6
        %s1561 = smul.addr %s1560, 4
        %s1562 = scalar_lea.vmem %s5, %s1561
      $region52: #{colornet_forward.17} parent=47 // pred_fallthru
        _
    $region48: #{colornet_forward.17} parent=5 // pred_fallthru
      _
  $region6: #{colornet_forward.17} parent=0 // loop_footer
    %s15 = sadd.s32 1, %s11
  $region7: #{colornet_forward.17} parent=0 // loop_footer_branch
    %10 = sbr.rel target = $region3
  $region8: #{colornet_forward.17} parent=0 // loop_exit
    _

</llo_original>
